<compile_context>
chip_gen: v7x
topology: tpu7x:2x2x1
jax: 0.10.0
libtpu: 0.0.40
codegen_flags: <defaults>
</compile_context>

<pallas_src>
import functools
import math

import jax
import jax.numpy as jnp
from jax import lax
from jax.experimental import pallas as pl
from jax.experimental.pallas import tpu as pltpu


def _mhsa_kernel(*refs, H, D, TB, S, Ep, compute_dtype, has_mask):
    if has_mask:
        x_ref, mask_ref, wqkv_ref, wo_ref, o_ref = refs
    else:
        x_ref, wqkv_ref, wo_ref, o_ref = refs

    HD = H * D
    # Exact f32 products when operands are f32; native bf16 MXU otherwise.
    prec = lax.Precision.HIGHEST if compute_dtype == jnp.float32 else lax.Precision.DEFAULT

    # Fused lane-dense QKV projection for all heads, with TB batch rows folded into M.
    x2d = x_ref[...].reshape(TB * S, Ep)                                   # leading-dim merge: free
    qkv = jnp.dot(x2d, wqkv_ref[...], preferred_element_type=jnp.float32,
                  precision=prec)                                          # (TB*S, 3*H*D) f32 acc
    qkv_c = qkv.astype(compute_dtype)                                      # one cast for all heads

    if has_mask:
        # Hoisted out of the head loop (broadcast_in_dim is not CSE'd across a static unroll).
        mask_b = jnp.broadcast_to(mask_ref[...].astype(jnp.float32), (TB, S, S))

    # TODO(synk): static unroll is fine for small H; for large H (or D<128) stage qkv head-major
    # in VMEM / group heads into 128-lane groups and use lax.fori_loop to bound live ranges.
    # TODO(synk): flash-style KV tiling (online softmax over an 'arbitrary' KV grid axis with
    # m/l/acc scratch) is required before scaling S; this full-(S,S)-scores path is for short S.
    ctxs = []
    for h in range(H):
        q = qkv_c[:, h * D:(h + 1) * D].reshape(TB, S, D)        # 1/sqrt(D) pre-folded into W_q
        k = qkv_c[:, HD + h * D:HD + (h + 1) * D].reshape(TB, S, D)
        v = qkv_c[:, 2 * HD + h * D:2 * HD + (h + 1) * D].reshape(TB, S, D)

        # (TB,S,S) scores: batched over TB, contract D directly (no transpose of k).
        s = lax.dot_general(q, k, (((2,), (2,)), ((0,), (0,))),
                            preferred_element_type=jnp.float32, precision=prec)
        if has_mask:
            s = s + mask_b

        # Softmax in f32; divide on the EUP.
        m = jnp.max(s, axis=-1, keepdims=True)
        e = jnp.exp(s - m)
        p = e * pl.reciprocal(jnp.sum(e, axis=-1, keepdims=True), approx=True)

        ctx = lax.dot_general(p.astype(compute_dtype), v, (((2,), (1,)), ((0,), (0,))),
                              preferred_element_type=jnp.float32, precision=prec)   # (TB,S,D)
        ctxs.append(ctx.reshape(TB * S, D).astype(compute_dtype))  # gate pre-folded into W_o

    # Single fused, lane-dense output projection for all heads (gates already in wo rows).
    ctx_all = jnp.concatenate(ctxs, axis=-1)                                # (TB*S, H*D)
    out2d = jnp.dot(ctx_all, wo_ref[...], preferred_element_type=jnp.float32,
                    precision=prec)                                         # (TB*S, Ep)
    o_ref[...] = out2d.reshape(TB, S, Ep).astype(o_ref.dtype)


def gated_mhsa(x, gates, wq, wk, wv, wo, attention_mask=None, *, mxu_dtype=jnp.bfloat16):
    """Gated multi-head self-attention forward pass.

    x: [B,S,E] f32; gates: [H]; wq/wk/wv: [H,E,D]; wo: [H,D,E].
    attention_mask: optional ADDITIVE key-side bias, shape [B,1,S] (a [B,1,1,S] / [B,S] mask is
    reshaped).  Returns [B,S,E] f32.
    """
    B, S, E = x.shape
    H, _, D = wq.shape
    assert E == H * D

    # Pad embed dim to a lane-dense multiple of 128 so x/out blocks and the output matmul are
    # unmasked full-lane stores.
    # TODO(synk): in a real pipeline keep activations E-padded across layers instead of the
    # pad / [:, :, :E] slice here (each is a full B*S*Ep HBM round trip).
    Ep = ((E + 127) // 128) * 128

    # Batch rows per grid step: target >=256 M rows for the 256-wide v6e/v7x MXU, but keep
    # >=2 grid steps (both v7x TensorCores fed) when that still leaves >=128 rows per step.
    tb = min(B, max(1, 256 // max(S, 1)))
    if B // tb < 2 and B >= 2 and (B // 2) * S >= 128:
        tb = B // 2
    while B % tb:
        tb -= 1
    TB, nb = tb, B // tb

    f32 = jnp.float32
    scale = 1.0 / math.sqrt(D)

    def stack_in(w):                      # (H,E,D) -> (E,H*D), head-major columns
        return jnp.transpose(w.astype(f32), (1, 0, 2)).reshape(E, H * D)

    # Fused weights; scale folded into W_q, gates folded into W_o (free constant folds).
    wqkv = jnp.concatenate([stack_in(wq) * scale, stack_in(wk), stack_in(wv)], axis=1)  # (E,3HD)
    if Ep != E:
        wqkv = jnp.pad(wqkv, ((0, Ep - E), (0, 0)))
    wo_f = (wo.astype(f32) * gates.astype(f32)[:, None, None]).reshape(H * D, E)        # (HD,E)
    if Ep != E:
        wo_f = jnp.pad(wo_f, ((0, 0), (0, Ep - E)))

    x_p = x.astype(f32)
    if Ep != E:
        x_p = jnp.pad(x_p, ((0, 0), (0, 0), (0, Ep - E)))

    # bf16 MXU operands by default (f32 accumulation in-kernel); softmax stays f32.
    x_p = x_p.astype(mxu_dtype)
    wqkv = wqkv.astype(mxu_dtype)
    wo_f = wo_f.astype(mxu_dtype)

    has_mask = attention_mask is not None
    args = [x_p]
    in_specs = [pl.BlockSpec((TB, S, Ep), lambda b: (b, 0, 0))]
    if has_mask:
        mask = jnp.asarray(attention_mask, f32).reshape(B, 1, S)
        args.append(mask)
        in_specs.append(pl.BlockSpec((TB, 1, S), lambda b: (b, 0, 0)))
    # Constant index_maps -> fused weights DMA'd once, VMEM-resident across the grid.
    # TODO(synk): single-buffer these constant blocks (pipeline_mode=pl.Buffered(1)) on jax
    # versions that accept buffer_count=1 to halve their resident VMEM (matters on v7x).
    args.append(wqkv)
    in_specs.append(pl.BlockSpec((Ep, 3 * H * D), lambda b: (0, 0)))
    args.append(wo_f)
    in_specs.append(pl.BlockSpec((H * D, Ep), lambda b: (0, 0)))

    # Explicit VMEM budget (v5e default scoped limit is only 16 MiB; v7x physical is 64 MiB).
    cdb = jnp.dtype(mxu_dtype).itemsize
    blocks = (2 * TB * S * Ep * cdb            # x (double-buffered)
              + 2 * TB * S * Ep * 4            # out (f32)
              + 2 * Ep * 3 * H * D * cdb       # fused wqkv
              + 2 * H * D * Ep * cdb           # fused wo
              + (2 * TB * S * 4 if has_mask else 0))
    interm = (TB * S * 3 * H * D * (4 + cdb)   # qkv f32 + compute-dtype copy
              + 2 * TB * S * S * 4             # scores / exp
              + TB * S * H * D * (4 + cdb)     # per-head contexts + concat
              + TB * S * Ep * 4)
    vmem_limit = int(min(48 * 2 ** 20, max(32 * 2 ** 20, 2 * (blocks + interm))))

    kernel = functools.partial(_mhsa_kernel, H=H, D=D, TB=TB, S=S, Ep=Ep,
                               compute_dtype=mxu_dtype, has_mask=has_mask)

    # TODO(synk): head_mask ([B,H,S,S]) with its data-dependent "sum() > 0" guard, the
    # agency-signal utilization EMA, consent logging, and store_attention_weights are
    # host-side / data-dependent Python state with no clean in-kernel equivalent.
    out_p = pl.pallas_call(
        kernel,
        out_shape=jax.ShapeDtypeStruct((B, S, Ep), jnp.float32),
        grid=(nb,),
        in_specs=in_specs,
        out_specs=pl.BlockSpec((TB, S, Ep), lambda b: (b, 0, 0)),
        compiler_params=pltpu.CompilerParams(
            dimension_semantics=("parallel",),
            vmem_limit_bytes=vmem_limit),
    )(*args)

    return out_p[:, :, :E] if Ep != E else out_p


def _reference(x, gates, wq, wk, wv, wo, attention_mask=None):
    """Pure-JAX reference at HIGHEST matmul precision (matches the PyTorch forward)."""
    H, _, D = wq.shape
    hp = lax.Precision.HIGHEST
    out = jnp.zeros_like(x, dtype=jnp.float32)
    for h in range(H):
        q = jnp.matmul(x, wq[h], precision=hp)
        k = jnp.matmul(x, wk[h], precision=hp)
        v = jnp.matmul(x, wv[h], precision=hp)
        s = jnp.matmul(q, jnp.swapaxes(k, -1, -2), precision=hp) / math.sqrt(D)
        if attention_mask is not None:
            s = s + attention_mask
        p = jax.nn.softmax(s, axis=-1)
        out = out + gates[h] * jnp.matmul(jnp.matmul(p, v, precision=hp), wo[h], precision=hp)
    # The module's "/ max(1.0, active_gates/num_heads)" is always a divide by 1.0 -> omitted.
    return out


if __name__ == "__main__":
    B, S, E, H = 2, 8, 32, 4
    D = E // H

    key = jax.random.PRNGKey(0)
    kx, kq, kk, kv, ko = jax.random.split(key, 5)

    x = jax.random.normal(kx, (B, S, E), jnp.float32)
    wq = jax.random.normal(kq, (H, E, D), jnp.float32) / math.sqrt(E)
    wk = jax.random.normal(kk, (H, E, D), jnp.float32) / math.sqrt(E)
    wv = jax.random.normal(kv, (H, E, D), jnp.float32) / math.sqrt(E)
    wo = jax.random.normal(ko, (H, D, E), jnp.float32) / math.sqrt(D)
    gates = jnp.ones((H,), jnp.float32)          # nn.Parameter(torch.ones(num_heads))

    # Additive key-side attention mask: last two key positions disabled (shape [B,1,S]).
    attn_mask = jnp.broadcast_to(
        jnp.where(jnp.arange(S) < S - 2, 0.0, -1e9).astype(jnp.float32), (B, 1, S))

    # 1) f32 MXU operands, no mask: tight check against the HIGHEST-precision reference.
    out_f32 = jax.block_until_ready(
        gated_mhsa(x, gates, wq, wk, wv, wo, None, mxu_dtype=jnp.float32))
    ref = _reference(x, gates, wq, wk, wv, wo, None)
    assert out_f32.shape == (B, S, E)
    assert jnp.allclose(out_f32, ref, atol=1e-2, rtol=1e-2), (
        "f32 kernel mismatch, max abs err = %e" % float(jnp.max(jnp.abs(out_f32 - ref))))

    # 2) bf16 MXU operands (perf default) with the mask: bf16-level tolerance.
    out_bf16 = jax.block_until_ready(
        gated_mhsa(x, gates, wq, wk, wv, wo, attn_mask, mxu_dtype=jnp.bfloat16))
    ref_m = _reference(x, gates, wq, wk, wv, wo, attn_mask)
    assert out_bf16.shape == (B, S, E)
    assert jnp.allclose(out_bf16, ref_m, atol=1e-1, rtol=1e-1), (
        "bf16 kernel mismatch, max abs err = %e" % float(jnp.max(jnp.abs(out_bf16 - ref_m))))

    print("KERNEL_OK")
</pallas_src>

<mosaic_0001>
module attributes {stable_mosaic.version = 11 : i64} {
  func.func @_mhsa_kernel(%arg0: i32, %arg1: memref<2x8x128xf32, #tpu.memory_space<vmem>>, %arg2: memref<128x96xf32, #tpu.memory_space<vmem>>, %arg3: memref<32x128xf32, #tpu.memory_space<vmem>>, %arg4: memref<2x8x128xf32, #tpu.memory_space<vmem>>) attributes {dimension_semantics = [#tpu.dimension_semantics<parallel>], iteration_bounds = array<i64: 1>, scalar_prefetch = 0 : i64, scratch_operands = 0 : i64, tpu.core_type = #tpu.core_type<tc>, window_params = [{transform_indices = @transform_0, window_bounds = array<i64: 2, 8, 128>}, {pipeline_mode = #tpu.pipeline_mode<synchronous>, transform_indices = @transform_1, window_bounds = array<i64: 128, 96>}, {pipeline_mode = #tpu.pipeline_mode<synchronous>, transform_indices = @transform_2, window_bounds = array<i64: 32, 128>}, {transform_indices = @transform_3, window_bounds = array<i64: 2, 8, 128>}]} {
    %c0 = arith.constant 0 : index
    %c0_0 = arith.constant 0 : index
    %c0_1 = arith.constant 0 : index
    %0 = vector.load %arg1[%c0, %c0_0, %c0_1] : memref<2x8x128xf32, #tpu.memory_space<vmem>>, vector<2x8x128xf32>
    %1 = vector.shape_cast %0 : vector<2x8x128xf32> to vector<16x128xf32>
    %c0_2 = arith.constant 0 : index
    %c0_3 = arith.constant 0 : index
    %2 = vector.load %arg2[%c0_2, %c0_3] : memref<128x96xf32, #tpu.memory_space<vmem>>, vector<128x96xf32>
    %cst = arith.constant dense<0.000000e+00> : vector<16x96xf32>
    %3 = tpu.matmul %1, %2, %cst {dimension_numbers = #tpu.dot_dimension_numbers<[1], [0], [0], [1], [0, 0, 1, 1], [], []>, precision = #tpu.contract_precision<fp32>} : vector<16x128xf32>, vector<128x96xf32>, vector<16x96xf32> -> vector<16x96xf32>
    %4 = vector.extract_strided_slice %3 {offsets = [0, 0], sizes = [16, 8], strides = [1, 1]} : vector<16x96xf32> to vector<16x8xf32>
    %5 = vector.shape_cast %4 : vector<16x8xf32> to vector<2x8x8xf32>
    %6 = vector.extract_strided_slice %3 {offsets = [0, 32], sizes = [16, 8], strides = [1, 1]} : vector<16x96xf32> to vector<16x8xf32>
    %7 = vector.shape_cast %6 : vector<16x8xf32> to vector<2x8x8xf32>
    %8 = vector.extract_strided_slice %3 {offsets = [0, 64], sizes = [16, 8], strides = [1, 1]} : vector<16x96xf32> to vector<16x8xf32>
    %9 = vector.shape_cast %8 : vector<16x8xf32> to vector<2x8x8xf32>
    %cst_4 = arith.constant dense<0.000000e+00> : vector<2x8x8xf32>
    %10 = tpu.matmul %5, %7, %cst_4 {dimension_numbers = #tpu.dot_dimension_numbers<[2], [2], [1], [1], [0, 0, 0, 1, 1, 1], [0], [0]>, precision = #tpu.contract_precision<fp32>} : vector<2x8x8xf32>, vector<2x8x8xf32>, vector<2x8x8xf32> -> vector<2x8x8xf32>
    %cst_5 = arith.constant dense<0xFF800000> : vector<2x8xf32>
    %11 = vector.multi_reduction <maximumf>, %10, %cst_5 [2] : vector<2x8x8xf32> to vector<2x8xf32>
    %12 = vector.shape_cast %11 : vector<2x8xf32> to vector<2x8x1xf32>
    %13 = vector.broadcast %12 : vector<2x8x1xf32> to vector<2x8x8xf32>
    %14 = arith.subf %10, %13 : vector<2x8x8xf32>
    %15 = math.exp %14 : vector<2x8x8xf32>
    %cst_6 = arith.constant dense<0.000000e+00> : vector<2x8xf32>
    %16 = vector.multi_reduction <add>, %15, %cst_6 [2] : vector<2x8x8xf32> to vector<2x8xf32>
    %17 = vector.shape_cast %16 : vector<2x8xf32> to vector<2x8x1xf32>
    %18 = tpu.reciprocal %17 {approx = true} : vector<2x8x1xf32> -> vector<2x8x1xf32>
    %19 = vector.broadcast %18 : vector<2x8x1xf32> to vector<2x8x8xf32>
    %20 = arith.mulf %15, %19 : vector<2x8x8xf32>
    %cst_7 = arith.constant dense<0.000000e+00> : vector<2x8x8xf32>
    %21 = tpu.matmul %20, %9, %cst_7 {dimension_numbers = #tpu.dot_dimension_numbers<[2], [1], [1], [2], [0, 0, 0, 1, 1, 2], [0], [0]>, precision = #tpu.contract_precision<fp32>} : vector<2x8x8xf32>, vector<2x8x8xf32>, vector<2x8x8xf32> -> vector<2x8x8xf32>
    %22 = vector.shape_cast %21 : vector<2x8x8xf32> to vector<16x8xf32>
    %23 = vector.extract_strided_slice %3 {offsets = [0, 8], sizes = [16, 8], strides = [1, 1]} : vector<16x96xf32> to vector<16x8xf32>
    %24 = vector.shape_cast %23 : vector<16x8xf32> to vector<2x8x8xf32>
    %25 = vector.extract_strided_slice %3 {offsets = [0, 40], sizes = [16, 8], strides = [1, 1]} : vector<16x96xf32> to vector<16x8xf32>
    %26 = vector.shape_cast %25 : vector<16x8xf32> to vector<2x8x8xf32>
    %27 = vector.extract_strided_slice %3 {offsets = [0, 72], sizes = [16, 8], strides = [1, 1]} : vector<16x96xf32> to vector<16x8xf32>
    %28 = vector.shape_cast %27 : vector<16x8xf32> to vector<2x8x8xf32>
    %cst_8 = arith.constant dense<0.000000e+00> : vector<2x8x8xf32>
    %29 = tpu.matmul %24, %26, %cst_8 {dimension_numbers = #tpu.dot_dimension_numbers<[2], [2], [1], [1], [0, 0, 0, 1, 1, 1], [0], [0]>, precision = #tpu.contract_precision<fp32>} : vector<2x8x8xf32>, vector<2x8x8xf32>, vector<2x8x8xf32> -> vector<2x8x8xf32>
    %cst_9 = arith.constant dense<0xFF800000> : vector<2x8xf32>
    %30 = vector.multi_reduction <maximumf>, %29, %cst_9 [2] : vector<2x8x8xf32> to vector<2x8xf32>
    %31 = vector.shape_cast %30 : vector<2x8xf32> to vector<2x8x1xf32>
    %32 = vector.broadcast %31 : vector<2x8x1xf32> to vector<2x8x8xf32>
    %33 = arith.subf %29, %32 : vector<2x8x8xf32>
    %34 = math.exp %33 : vector<2x8x8xf32>
    %cst_10 = arith.constant dense<0.000000e+00> : vector<2x8xf32>
    %35 = vector.multi_reduction <add>, %34, %cst_10 [2] : vector<2x8x8xf32> to vector<2x8xf32>
    %36 = vector.shape_cast %35 : vector<2x8xf32> to vector<2x8x1xf32>
    %37 = tpu.reciprocal %36 {approx = true} : vector<2x8x1xf32> -> vector<2x8x1xf32>
    %38 = vector.broadcast %37 : vector<2x8x1xf32> to vector<2x8x8xf32>
    %39 = arith.mulf %34, %38 : vector<2x8x8xf32>
    %cst_11 = arith.constant dense<0.000000e+00> : vector<2x8x8xf32>
    %40 = tpu.matmul %39, %28, %cst_11 {dimension_numbers = #tpu.dot_dimension_numbers<[2], [1], [1], [2], [0, 0, 0, 1, 1, 2], [0], [0]>, precision = #tpu.contract_precision<fp32>} : vector<2x8x8xf32>, vector<2x8x8xf32>, vector<2x8x8xf32> -> vector<2x8x8xf32>
    %41 = vector.shape_cast %40 : vector<2x8x8xf32> to vector<16x8xf32>
    %42 = vector.extract_strided_slice %3 {offsets = [0, 16], sizes = [16, 8], strides = [1, 1]} : vector<16x96xf32> to vector<16x8xf32>
    %43 = vector.shape_cast %42 : vector<16x8xf32> to vector<2x8x8xf32>
    %44 = vector.extract_strided_slice %3 {offsets = [0, 48], sizes = [16, 8], strides = [1, 1]} : vector<16x96xf32> to vector<16x8xf32>
    %45 = vector.shape_cast %44 : vector<16x8xf32> to vector<2x8x8xf32>
    %46 = vector.extract_strided_slice %3 {offsets = [0, 80], sizes = [16, 8], strides = [1, 1]} : vector<16x96xf32> to vector<16x8xf32>
    %47 = vector.shape_cast %46 : vector<16x8xf32> to vector<2x8x8xf32>
    %cst_12 = arith.constant dense<0.000000e+00> : vector<2x8x8xf32>
    %48 = tpu.matmul %43, %45, %cst_12 {dimension_numbers = #tpu.dot_dimension_numbers<[2], [2], [1], [1], [0, 0, 0, 1, 1, 1], [0], [0]>, precision = #tpu.contract_precision<fp32>} : vector<2x8x8xf32>, vector<2x8x8xf32>, vector<2x8x8xf32> -> vector<2x8x8xf32>
    %cst_13 = arith.constant dense<0xFF800000> : vector<2x8xf32>
    %49 = vector.multi_reduction <maximumf>, %48, %cst_13 [2] : vector<2x8x8xf32> to vector<2x8xf32>
    %50 = vector.shape_cast %49 : vector<2x8xf32> to vector<2x8x1xf32>
    %51 = vector.broadcast %50 : vector<2x8x1xf32> to vector<2x8x8xf32>
    %52 = arith.subf %48, %51 : vector<2x8x8xf32>
    %53 = math.exp %52 : vector<2x8x8xf32>
    %cst_14 = arith.constant dense<0.000000e+00> : vector<2x8xf32>
    %54 = vector.multi_reduction <add>, %53, %cst_14 [2] : vector<2x8x8xf32> to vector<2x8xf32>
    %55 = vector.shape_cast %54 : vector<2x8xf32> to vector<2x8x1xf32>
    %56 = tpu.reciprocal %55 {approx = true} : vector<2x8x1xf32> -> vector<2x8x1xf32>
    %57 = vector.broadcast %56 : vector<2x8x1xf32> to vector<2x8x8xf32>
    %58 = arith.mulf %53, %57 : vector<2x8x8xf32>
    %cst_15 = arith.constant dense<0.000000e+00> : vector<2x8x8xf32>
    %59 = tpu.matmul %58, %47, %cst_15 {dimension_numbers = #tpu.dot_dimension_numbers<[2], [1], [1], [2], [0, 0, 0, 1, 1, 2], [0], [0]>, precision = #tpu.contract_precision<fp32>} : vector<2x8x8xf32>, vector<2x8x8xf32>, vector<2x8x8xf32> -> vector<2x8x8xf32>
    %60 = vector.shape_cast %59 : vector<2x8x8xf32> to vector<16x8xf32>
    %61 = vector.extract_strided_slice %3 {offsets = [0, 24], sizes = [16, 8], strides = [1, 1]} : vector<16x96xf32> to vector<16x8xf32>
    %62 = vector.shape_cast %61 : vector<16x8xf32> to vector<2x8x8xf32>
    %63 = vector.extract_strided_slice %3 {offsets = [0, 56], sizes = [16, 8], strides = [1, 1]} : vector<16x96xf32> to vector<16x8xf32>
    %64 = vector.shape_cast %63 : vector<16x8xf32> to vector<2x8x8xf32>
    %65 = vector.extract_strided_slice %3 {offsets = [0, 88], sizes = [16, 8], strides = [1, 1]} : vector<16x96xf32> to vector<16x8xf32>
    %66 = vector.shape_cast %65 : vector<16x8xf32> to vector<2x8x8xf32>
    %cst_16 = arith.constant dense<0.000000e+00> : vector<2x8x8xf32>
    %67 = tpu.matmul %62, %64, %cst_16 {dimension_numbers = #tpu.dot_dimension_numbers<[2], [2], [1], [1], [0, 0, 0, 1, 1, 1], [0], [0]>, precision = #tpu.contract_precision<fp32>} : vector<2x8x8xf32>, vector<2x8x8xf32>, vector<2x8x8xf32> -> vector<2x8x8xf32>
    %cst_17 = arith.constant dense<0xFF800000> : vector<2x8xf32>
    %68 = vector.multi_reduction <maximumf>, %67, %cst_17 [2] : vector<2x8x8xf32> to vector<2x8xf32>
    %69 = vector.shape_cast %68 : vector<2x8xf32> to vector<2x8x1xf32>
    %70 = vector.broadcast %69 : vector<2x8x1xf32> to vector<2x8x8xf32>
    %71 = arith.subf %67, %70 : vector<2x8x8xf32>
    %72 = math.exp %71 : vector<2x8x8xf32>
    %cst_18 = arith.constant dense<0.000000e+00> : vector<2x8xf32>
    %73 = vector.multi_reduction <add>, %72, %cst_18 [2] : vector<2x8x8xf32> to vector<2x8xf32>
    %74 = vector.shape_cast %73 : vector<2x8xf32> to vector<2x8x1xf32>
    %75 = tpu.reciprocal %74 {approx = true} : vector<2x8x1xf32> -> vector<2x8x1xf32>
    %76 = vector.broadcast %75 : vector<2x8x1xf32> to vector<2x8x8xf32>
    %77 = arith.mulf %72, %76 : vector<2x8x8xf32>
    %cst_19 = arith.constant dense<0.000000e+00> : vector<2x8x8xf32>
    %78 = tpu.matmul %77, %66, %cst_19 {dimension_numbers = #tpu.dot_dimension_numbers<[2], [1], [1], [2], [0, 0, 0, 1, 1, 2], [0], [0]>, precision = #tpu.contract_precision<fp32>} : vector<2x8x8xf32>, vector<2x8x8xf32>, vector<2x8x8xf32> -> vector<2x8x8xf32>
    %79 = vector.shape_cast %78 : vector<2x8x8xf32> to vector<16x8xf32>
    %80 = tpu.concatenate %22, %41, %60, %79 in 1 : vector<16x8xf32>, vector<16x8xf32>, vector<16x8xf32>, vector<16x8xf32> -> vector<16x32xf32>
    %c0_20 = arith.constant 0 : index
    %c0_21 = arith.constant 0 : index
    %81 = vector.load %arg3[%c0_20, %c0_21] : memref<32x128xf32, #tpu.memory_space<vmem>>, vector<32x128xf32>
    %cst_22 = arith.constant dense<0.000000e+00> : vector<16x128xf32>
    %82 = tpu.matmul %80, %81, %cst_22 {dimension_numbers = #tpu.dot_dimension_numbers<[1], [0], [0], [1], [0, 0, 1, 1], [], []>, precision = #tpu.contract_precision<fp32>} : vector<16x32xf32>, vector<32x128xf32>, vector<16x128xf32> -> vector<16x128xf32>
    %83 = vector.shape_cast %82 : vector<16x128xf32> to vector<2x8x128xf32>
    %c0_23 = arith.constant 0 : index
    %c0_24 = arith.constant 0 : index
    %c0_25 = arith.constant 0 : index
    %84 = vector.load %arg4[%c0_23, %c0_24, %c0_25] : memref<2x8x128xf32, #tpu.memory_space<vmem>>, vector<2x8x128xf32>
    tpu.vector_store %arg4[%c0_23, %c0_24, %c0_25], %83 {strides = array<i32>} : memref<2x8x128xf32, #tpu.memory_space<vmem>>, vector<2x8x128xf32>,
    return
  }
  func.func @transform_0(%arg0: i32) -> (i32, i32, i32) {
    %c0_i32 = arith.constant 0 : i32
    %c0_i32_0 = arith.constant 0 : i32
    %c0_i32_1 = arith.constant 0 : i32
    return %arg0, %c0_i32, %c0_i32_0 : i32, i32, i32
  }
  func.func @transform_1(%arg0: i32) -> (i32, i32) {
    %c0_i32 = arith.constant 0 : i32
    %c0_i32_0 = arith.constant 0 : i32
    %c0_i32_1 = arith.constant 0 : i32
    return %c0_i32, %c0_i32_0 : i32, i32
  }
  func.func @transform_2(%arg0: i32) -> (i32, i32) {
    %c0_i32 = arith.constant 0 : i32
    %c0_i32_0 = arith.constant 0 : i32
    %c0_i32_1 = arith.constant 0 : i32
    return %c0_i32, %c0_i32_0 : i32, i32
  }
  func.func @transform_3(%arg0: i32) -> (i32, i32, i32) {
    %c0_i32 = arith.constant 0 : i32
    %c0_i32_0 = arith.constant 0 : i32
    %c0_i32_1 = arith.constant 0 : i32
    return %arg0, %c0_i32, %c0_i32_0 : i32, i32, i32
  }
}

</mosaic_0001>

<llo_original>
// kernel: tpu_custom_call.1
$region0: #{tpu_custom_call.1}
  #allocation0 [shape = 'u32[]', space=smem, size = 0x4, offset = 0x4, fixed_abs, tag = 'smem constant byte address 0x4 - core index']
  #allocation1 [shape = 'u32[144,128]{1,0:T(1,128)}', space=vmem, size = 0x12000, scoped, tag = 'internal scratch']
  %s0 = inlined_call_operand.vmem [shape: f32[2,8,128], index: 0, kind: input, shape index: {}]
  %s1 = inlined_call_operand.vmem [shape: f32[128,96], index: 1, kind: input, shape index: {}]
  %s2 = inlined_call_operand.vmem [shape: f32[32,128], index: 2, kind: input, shape index: {}]
  %s3 = inlined_call_operand.hbm [shape: f32[2,8,128], index: 3, kind: output, shape index: {}]
  %s4 = sld [smem:[#allocation0]]
  $region22: #{tpu_custom_call.1} parent=0
    _
  %s6 = ssub.s32 1, %s4
  %s7 = scalar_select 0, %s6, %s4
  $region1: #{tpu_custom_call.1} parent=0
    #allocation2 [shape = 'u8[8192]{0}', space=vmem, size = 0x2000, scoped, tag = 'output window, operand 0, single buffered']
    #allocation3 [shape = 's32[1]{0}', space=sflag, size = 0x4, scoped, tag = 'scoped memory for tpu_custom_call.1']
    %8 = vsyncpa [#allocation3], 0
    // Predicated region
    $region2: #{tpu_custom_call.1} parent=1 // pred_check
      _
    $region3: #{tpu_custom_call.1} parent=1 // pred_check_branch
      %10 = sbr.rel (0) target = $region5
    $region4: #{tpu_custom_call.1} parent=1 // pred_region
      _
    $region5: #{tpu_custom_call.1} parent=1 // pred_fallthru
      _
    // Predicated region
    $region6: #{tpu_custom_call.1} parent=1 // pred_check
      _
    $region7: #{tpu_custom_call.1} parent=1 // pred_check_branch
      %12 = sbr.rel (0) target = $region9
    $region8: #{tpu_custom_call.1} parent=1 // pred_region
      _
    $region9: #{tpu_custom_call.1} parent=1 // pred_fallthru
      _
    // Predicated region
    $region10: #{tpu_custom_call.1} parent=1 // pred_check
      _
    $region11: #{tpu_custom_call.1} parent=1 // pred_check_branch
      %14 = sbr.rel (0) target = $region13
    $region12: #{tpu_custom_call.1} parent=1 // pred_region
      _
    $region13: #{tpu_custom_call.1} parent=1 // pred_fallthru
      _
    %v15 = vld [vmem:[%s0] sm:$0xff]
    %v16 = vld [vmem:[%s0 + $0x8] sm:$0xff]
    %v17 = vld [vmem:[%s1] sm:$0xff]
    %v18 = vld [vmem:[%s1 + $0x8] sm:$0xff]
    %v19 = vld [vmem:[%s1 + $0x10] sm:$0xff]
    %v20 = vld [vmem:[%s1 + $0x18] sm:$0xff]
    %v21 = vld [vmem:[%s1 + $0x20] sm:$0xff]
    %v22 = vld [vmem:[%s1 + $0x28] sm:$0xff]
    %v23 = vld [vmem:[%s1 + $0x30] sm:$0xff]
    %v24 = vld [vmem:[%s1 + $0x38] sm:$0xff]
    %v25 = vld [vmem:[%s1 + $0x40] sm:$0xff]
    %v26 = vld [vmem:[%s1 + $0x48] sm:$0xff]
    %v27 = vld [vmem:[%s1 + $0x50] sm:$0xff]
    %v28 = vld [vmem:[%s1 + $0x58] sm:$0xff]
    %v29 = vld [vmem:[%s1 + $0x60] sm:$0xff]
    %v30 = vld [vmem:[%s1 + $0x68] sm:$0xff]
    %v31 = vld [vmem:[%s1 + $0x70] sm:$0xff]
    %v32 = vld [vmem:[%s1 + $0x78] sm:$0xff]
    %33 = vmatprep.subr.mxu0 0.0
    %v34 = vand.u32 %v17, 4294901760
    %35 = vmatpush1.msra.mxu0 %v34
    %36 = vmatprep.subr.mxu0 0.0
    %v37 = vand.u32 %v18, 4294901760
    %38 = vmatpush1.msra.mxu0 %v37
    %39 = vmatprep.subr.mxu0 0.0
    %v40 = vand.u32 %v19, 4294901760
    %41 = vmatpush1.msra.mxu0 %v40
    %42 = vmatprep.subr.mxu0 0.0
    %v43 = vand.u32 %v20, 4294901760
    %44 = vmatpush1.msra.mxu0 %v43
    %45 = vmatprep.subr.mxu0 0.0
    %v46 = vand.u32 %v21, 4294901760
    %47 = vmatpush1.msra.mxu0 %v46
    %48 = vmatprep.subr.mxu0 0.0
    %v49 = vand.u32 %v22, 4294901760
    %50 = vmatpush1.msra.mxu0 %v49
    %51 = vmatprep.subr.mxu0 0.0
    %v52 = vand.u32 %v23, 4294901760
    %53 = vmatpush1.msra.mxu0 %v52
    %54 = vmatprep.subr.mxu0 0.0
    %v55 = vand.u32 %v24, 4294901760
    %56 = vmatpush1.msra.mxu0 %v55
    %57 = vmatprep.subr.mxu0 0.0
    %v58 = vand.u32 %v25, 4294901760
    %59 = vmatpush1.msra.mxu0 %v58
    %60 = vmatprep.subr.mxu0 0.0
    %v61 = vand.u32 %v26, 4294901760
    %62 = vmatpush1.msra.mxu0 %v61
    %63 = vmatprep.subr.mxu0 0.0
    %v64 = vand.u32 %v27, 4294901760
    %65 = vmatpush1.msra.mxu0 %v64
    %66 = vmatprep.subr.mxu0 0.0
    %v67 = vand.u32 %v28, 4294901760
    %68 = vmatpush1.msra.mxu0 %v67
    %69 = vmatprep.subr.mxu0 0.0
    %v70 = vand.u32 %v29, 4294901760
    %71 = vmatpush1.msra.mxu0 %v70
    %72 = vmatprep.subr.mxu0 0.0
    %v73 = vand.u32 %v30, 4294901760
    %74 = vmatpush1.msra.mxu0 %v73
    %75 = vmatprep.subr.mxu0 0.0
    %v76 = vand.u32 %v31, 4294901760
    %77 = vmatpush1.msra.mxu0 %v76
    %78 = vmatprep.subr.mxu0 0.0
    %v79 = vand.u32 %v32, 4294901760
    %80 = vmatpush1.msra.mxu0 %v79
    %81 = vmatprep.subr.mxu0 0.0
    %82 = vmatpush1.msra.mxu0 0.0
    %83 = vmatprep.subr.mxu0 0.0
    %84 = vmatpush1.msra.mxu0 0.0
    %85 = vmatprep.subr.mxu0 0.0
    %86 = vmatpush1.msra.mxu0 0.0
    %87 = vmatprep.subr.mxu0 0.0
    %88 = vmatpush1.msra.mxu0 0.0
    %89 = vmatprep.subr.mxu0 0.0
    %90 = vmatpush1.msra.mxu0 0.0
    %91 = vmatprep.subr.mxu0 0.0
    %92 = vmatpush1.msra.mxu0 0.0
    %93 = vmatprep.subr.mxu0 0.0
    %94 = vmatpush1.msra.mxu0 0.0
    %95 = vmatprep.subr.mxu0 0.0
    %96 = vmatpush1.msra.mxu0 0.0
    %97 = vmatprep.subr.mxu0 0.0
    %98 = vmatpush1.msra.mxu0 0.0
    %99 = vmatprep.subr.mxu0 0.0
    %100 = vmatpush1.msra.mxu0 0.0
    %101 = vmatprep.subr.mxu0 0.0
    %102 = vmatpush1.msra.mxu0 0.0
    %103 = vmatprep.subr.mxu0 0.0
    %104 = vmatpush1.msra.mxu0 0.0
    %105 = vmatprep.subr.mxu0 0.0
    %106 = vmatpush1.msra.mxu0 0.0
    %107 = vmatprep.subr.mxu0 0.0
    %108 = vmatpush1.msra.mxu0 0.0
    %109 = vmatprep.subr.mxu0 0.0
    %110 = vmatpush1.msra.mxu0 0.0
    %111 = vmatprep.subr.mxu0 0.0
    %112 = vmatpush1.msra.mxu0 0.0
    %113 = vmatprep.mubr.f32.mxu0 0.0
    %v114 = vand.u32 %v15, 4294901760
    %v115 = vsub.f32 %v15, %v114
    %v116 = vand.u32 %v115, 4294901760
    %v117 = vsub.f32 %v115, %v116
    %v118 = vand.u32 %v117, 4294901760
    %119 = vmatmul.mubr.f32.gmra.mrb[0].mxu0 %v118
    %v120 = vpop.f32.mrb[0].mxu0
    %v121 = vadd.f32 0.0, %v120
    %v122 = vpop.f32.mrb[0].mxu0
    %123 = vmatprep.mubr.f32.mxu0 0.0
    %v124 = vand.u32 %v16, 4294901760
    %v125 = vsub.f32 %v16, %v124
    %v126 = vand.u32 %v125, 4294901760
    %v127 = vsub.f32 %v125, %v126
    %v128 = vand.u32 %v127, 4294901760
    %129 = vmatmul.mubr.f32.gmra.mrb[0].mxu0 %v128
    %v130 = vpop.f32.mrb[0].mxu0
    %v131 = vadd.f32 0.0, %v130
    %v132 = vpop.f32.mrb[0].mxu0
    %133 = vdwg.mxu0
    %134 = vmatprep.subr.mxu0 0.0
    %v135 = vand.u32 %v17, 4294901760
    %v136 = vsub.f32 %v17, %v135
    %v137 = vand.u32 %v136, 4294901760
    %v138 = vsub.f32 %v136, %v137
    %v139 = vand.u32 %v138, 4294901760
    %140 = vmatpush1.msra.mxu0 %v139
    %141 = vmatprep.subr.mxu0 0.0
    %v142 = vand.u32 %v18, 4294901760
    %v143 = vsub.f32 %v18, %v142
    %v144 = vand.u32 %v143, 4294901760
    %v145 = vsub.f32 %v143, %v144
    %v146 = vand.u32 %v145, 4294901760
    %147 = vmatpush1.msra.mxu0 %v146
    %148 = vmatprep.subr.mxu0 0.0
    %v149 = vand.u32 %v19, 4294901760
    %v150 = vsub.f32 %v19, %v149
    %v151 = vand.u32 %v150, 4294901760
    %v152 = vsub.f32 %v150, %v151
    %v153 = vand.u32 %v152, 4294901760
    %154 = vmatpush1.msra.mxu0 %v153
    %155 = vmatprep.subr.mxu0 0.0
    %v156 = vand.u32 %v20, 4294901760
    %v157 = vsub.f32 %v20, %v156
    %v158 = vand.u32 %v157, 4294901760
    %v159 = vsub.f32 %v157, %v158
    %v160 = vand.u32 %v159, 4294901760
    %161 = vmatpush1.msra.mxu0 %v160
    %162 = vmatprep.subr.mxu0 0.0
    %v163 = vand.u32 %v21, 4294901760
    %v164 = vsub.f32 %v21, %v163
    %v165 = vand.u32 %v164, 4294901760
    %v166 = vsub.f32 %v164, %v165
    %v167 = vand.u32 %v166, 4294901760
    %168 = vmatpush1.msra.mxu0 %v167
    %169 = vmatprep.subr.mxu0 0.0
    %v170 = vand.u32 %v22, 4294901760
    %v171 = vsub.f32 %v22, %v170
    %v172 = vand.u32 %v171, 4294901760
    %v173 = vsub.f32 %v171, %v172
    %v174 = vand.u32 %v173, 4294901760
    %175 = vmatpush1.msra.mxu0 %v174
    %176 = vmatprep.subr.mxu0 0.0
    %v177 = vand.u32 %v23, 4294901760
    %v178 = vsub.f32 %v23, %v177
    %v179 = vand.u32 %v178, 4294901760
    %v180 = vsub.f32 %v178, %v179
    %v181 = vand.u32 %v180, 4294901760
    %182 = vmatpush1.msra.mxu0 %v181
    %183 = vmatprep.subr.mxu0 0.0
    %v184 = vand.u32 %v24, 4294901760
    %v185 = vsub.f32 %v24, %v184
    %v186 = vand.u32 %v185, 4294901760
    %v187 = vsub.f32 %v185, %v186
    %v188 = vand.u32 %v187, 4294901760
    %189 = vmatpush1.msra.mxu0 %v188
    %190 = vmatprep.subr.mxu0 0.0
    %v191 = vand.u32 %v25, 4294901760
    %v192 = vsub.f32 %v25, %v191
    %v193 = vand.u32 %v192, 4294901760
    %v194 = vsub.f32 %v192, %v193
    %v195 = vand.u32 %v194, 4294901760
    %196 = vmatpush1.msra.mxu0 %v195
    %197 = vmatprep.subr.mxu0 0.0
    %v198 = vand.u32 %v26, 4294901760
    %v199 = vsub.f32 %v26, %v198
    %v200 = vand.u32 %v199, 4294901760
    %v201 = vsub.f32 %v199, %v200
    %v202 = vand.u32 %v201, 4294901760
    %203 = vmatpush1.msra.mxu0 %v202
    %204 = vmatprep.subr.mxu0 0.0
    %v205 = vand.u32 %v27, 4294901760
    %v206 = vsub.f32 %v27, %v205
    %v207 = vand.u32 %v206, 4294901760
    %v208 = vsub.f32 %v206, %v207
    %v209 = vand.u32 %v208, 4294901760
    %210 = vmatpush1.msra.mxu0 %v209
    %211 = vmatprep.subr.mxu0 0.0
    %v212 = vand.u32 %v28, 4294901760
    %v213 = vsub.f32 %v28, %v212
    %v214 = vand.u32 %v213, 4294901760
    %v215 = vsub.f32 %v213, %v214
    %v216 = vand.u32 %v215, 4294901760
    %217 = vmatpush1.msra.mxu0 %v216
    %218 = vmatprep.subr.mxu0 0.0
    %v219 = vand.u32 %v29, 4294901760
    %v220 = vsub.f32 %v29, %v219
    %v221 = vand.u32 %v220, 4294901760
    %v222 = vsub.f32 %v220, %v221
    %v223 = vand.u32 %v222, 4294901760
    %224 = vmatpush1.msra.mxu0 %v223
    %225 = vmatprep.subr.mxu0 0.0
    %v226 = vand.u32 %v30, 4294901760
    %v227 = vsub.f32 %v30, %v226
    %v228 = vand.u32 %v227, 4294901760
    %v229 = vsub.f32 %v227, %v228
    %v230 = vand.u32 %v229, 4294901760
    %231 = vmatpush1.msra.mxu0 %v230
    %232 = vmatprep.subr.mxu0 0.0
    %v233 = vand.u32 %v31, 4294901760
    %v234 = vsub.f32 %v31, %v233
    %v235 = vand.u32 %v234, 4294901760
    %v236 = vsub.f32 %v234, %v235
    %v237 = vand.u32 %v236, 4294901760
    %238 = vmatpush1.msra.mxu0 %v237
    %239 = vmatprep.subr.mxu0 0.0
    %v240 = vand.u32 %v32, 4294901760
    %v241 = vsub.f32 %v32, %v240
    %v242 = vand.u32 %v241, 4294901760
    %v243 = vsub.f32 %v241, %v242
    %v244 = vand.u32 %v243, 4294901760
    %245 = vmatpush1.msra.mxu0 %v244
    %246 = vmatprep.subr.mxu0 0.0
    %247 = vmatpush1.msra.mxu0 0.0
    %248 = vmatprep.subr.mxu0 0.0
    %249 = vmatpush1.msra.mxu0 0.0
    %250 = vmatprep.subr.mxu0 0.0
    %251 = vmatpush1.msra.mxu0 0.0
    %252 = vmatprep.subr.mxu0 0.0
    %253 = vmatpush1.msra.mxu0 0.0
    %254 = vmatprep.subr.mxu0 0.0
    %255 = vmatpush1.msra.mxu0 0.0
    %256 = vmatprep.subr.mxu0 0.0
    %257 = vmatpush1.msra.mxu0 0.0
    %258 = vmatprep.subr.mxu0 0.0
    %259 = vmatpush1.msra.mxu0 0.0
    %260 = vmatprep.subr.mxu0 0.0
    %261 = vmatpush1.msra.mxu0 0.0
    %262 = vmatprep.subr.mxu0 0.0
    %263 = vmatpush1.msra.mxu0 0.0
    %264 = vmatprep.subr.mxu0 0.0
    %265 = vmatpush1.msra.mxu0 0.0
    %266 = vmatprep.subr.mxu0 0.0
    %267 = vmatpush1.msra.mxu0 0.0
    %268 = vmatprep.subr.mxu0 0.0
    %269 = vmatpush1.msra.mxu0 0.0
    %270 = vmatprep.subr.mxu0 0.0
    %271 = vmatpush1.msra.mxu0 0.0
    %272 = vmatprep.subr.mxu0 0.0
    %273 = vmatpush1.msra.mxu0 0.0
    %274 = vmatprep.subr.mxu0 0.0
    %275 = vmatpush1.msra.mxu0 0.0
    %276 = vmatprep.subr.mxu0 0.0
    %277 = vmatpush1.msra.mxu0 0.0
    %278 = vmatprep.mubr.f32.mxu0 0.0
    %v279 = vand.u32 %v15, 4294901760
    %280 = vmatmul.mubr.f32.gmra.mrb[0].mxu0 %v279
    %v281 = vpop.f32.mrb[0].mxu0
    %v282 = vadd.f32 %v121, %v281
    %v283 = vpop.f32.mrb[0].mxu0
    %284 = vmatprep.mubr.f32.mxu0 0.0
    %v285 = vand.u32 %v16, 4294901760
    %286 = vmatmul.mubr.f32.gmra.mrb[0].mxu0 %v285
    %v287 = vpop.f32.mrb[0].mxu0
    %v288 = vadd.f32 %v131, %v287
    %v289 = vpop.f32.mrb[0].mxu0
    %290 = vdwg.mxu0
    %291 = vmatprep.subr.mxu0 0.0
    %v292 = vand.u32 %v17, 4294901760
    %v293 = vsub.f32 %v17, %v292
    %294 = vmatpush1.msra.mxu0 %v293
    %295 = vmatprep.subr.mxu0 0.0
    %v296 = vand.u32 %v18, 4294901760
    %v297 = vsub.f32 %v18, %v296
    %298 = vmatpush1.msra.mxu0 %v297
    %299 = vmatprep.subr.mxu0 0.0
    %v300 = vand.u32 %v19, 4294901760
    %v301 = vsub.f32 %v19, %v300
    %302 = vmatpush1.msra.mxu0 %v301
    %303 = vmatprep.subr.mxu0 0.0
    %v304 = vand.u32 %v20, 4294901760
    %v305 = vsub.f32 %v20, %v304
    %306 = vmatpush1.msra.mxu0 %v305
    %307 = vmatprep.subr.mxu0 0.0
    %v308 = vand.u32 %v21, 4294901760
    %v309 = vsub.f32 %v21, %v308
    %310 = vmatpush1.msra.mxu0 %v309
    %311 = vmatprep.subr.mxu0 0.0
    %v312 = vand.u32 %v22, 4294901760
    %v313 = vsub.f32 %v22, %v312
    %314 = vmatpush1.msra.mxu0 %v313
    %315 = vmatprep.subr.mxu0 0.0
    %v316 = vand.u32 %v23, 4294901760
    %v317 = vsub.f32 %v23, %v316
    %318 = vmatpush1.msra.mxu0 %v317
    %319 = vmatprep.subr.mxu0 0.0
    %v320 = vand.u32 %v24, 4294901760
    %v321 = vsub.f32 %v24, %v320
    %322 = vmatpush1.msra.mxu0 %v321
    %323 = vmatprep.subr.mxu0 0.0
    %v324 = vand.u32 %v25, 4294901760
    %v325 = vsub.f32 %v25, %v324
    %326 = vmatpush1.msra.mxu0 %v325
    %327 = vmatprep.subr.mxu0 0.0
    %v328 = vand.u32 %v26, 4294901760
    %v329 = vsub.f32 %v26, %v328
    %330 = vmatpush1.msra.mxu0 %v329
    %331 = vmatprep.subr.mxu0 0.0
    %v332 = vand.u32 %v27, 4294901760
    %v333 = vsub.f32 %v27, %v332
    %334 = vmatpush1.msra.mxu0 %v333
    %335 = vmatprep.subr.mxu0 0.0
    %v336 = vand.u32 %v28, 4294901760
    %v337 = vsub.f32 %v28, %v336
    %338 = vmatpush1.msra.mxu0 %v337
    %339 = vmatprep.subr.mxu0 0.0
    %v340 = vand.u32 %v29, 4294901760
    %v341 = vsub.f32 %v29, %v340
    %342 = vmatpush1.msra.mxu0 %v341
    %343 = vmatprep.subr.mxu0 0.0
    %v344 = vand.u32 %v30, 4294901760
    %v345 = vsub.f32 %v30, %v344
    %346 = vmatpush1.msra.mxu0 %v345
    %347 = vmatprep.subr.mxu0 0.0
    %v348 = vand.u32 %v31, 4294901760
    %v349 = vsub.f32 %v31, %v348
    %350 = vmatpush1.msra.mxu0 %v349
    %351 = vmatprep.subr.mxu0 0.0
    %v352 = vand.u32 %v32, 4294901760
    %v353 = vsub.f32 %v32, %v352
    %354 = vmatpush1.msra.mxu0 %v353
    %355 = vmatprep.subr.mxu0 0.0
    %356 = vmatpush1.msra.mxu0 0.0
    %357 = vmatprep.subr.mxu0 0.0
    %358 = vmatpush1.msra.mxu0 0.0
    %359 = vmatprep.subr.mxu0 0.0
    %360 = vmatpush1.msra.mxu0 0.0
    %361 = vmatprep.subr.mxu0 0.0
    %362 = vmatpush1.msra.mxu0 0.0
    %363 = vmatprep.subr.mxu0 0.0
    %364 = vmatpush1.msra.mxu0 0.0
    %365 = vmatprep.subr.mxu0 0.0
    %366 = vmatpush1.msra.mxu0 0.0
    %367 = vmatprep.subr.mxu0 0.0
    %368 = vmatpush1.msra.mxu0 0.0
    %369 = vmatprep.subr.mxu0 0.0
    %370 = vmatpush1.msra.mxu0 0.0
    %371 = vmatprep.subr.mxu0 0.0
    %372 = vmatpush1.msra.mxu0 0.0
    %373 = vmatprep.subr.mxu0 0.0
    %374 = vmatpush1.msra.mxu0 0.0
    %375 = vmatprep.subr.mxu0 0.0
    %376 = vmatpush1.msra.mxu0 0.0
    %377 = vmatprep.subr.mxu0 0.0
    %378 = vmatpush1.msra.mxu0 0.0
    %379 = vmatprep.subr.mxu0 0.0
    %380 = vmatpush1.msra.mxu0 0.0
    %381 = vmatprep.subr.mxu0 0.0
    %382 = vmatpush1.msra.mxu0 0.0
    %383 = vmatprep.subr.mxu0 0.0
    %384 = vmatpush1.msra.mxu0 0.0
    %385 = vmatprep.subr.mxu0 0.0
    %386 = vmatpush1.msra.mxu0 0.0
    %387 = vmatprep.mubr.f32.mxu0 0.0
    %v388 = vand.u32 %v15, 4294901760
    %v389 = vsub.f32 %v15, %v388
    %390 = vmatmul.mubr.f32.gmra.mrb[0].mxu0 %v389
    %v391 = vpop.f32.mrb[0].mxu0
    %v392 = vadd.f32 %v282, %v391
    %v393 = vpop.f32.mrb[0].mxu0
    %394 = vmatprep.mubr.f32.mxu0 0.0
    %v395 = vand.u32 %v16, 4294901760
    %v396 = vsub.f32 %v16, %v395
    %397 = vmatmul.mubr.f32.gmra.mrb[0].mxu0 %v396
    %v398 = vpop.f32.mrb[0].mxu0
    %v399 = vadd.f32 %v288, %v398
    %v400 = vpop.f32.mrb[0].mxu0
    %401 = vdwg.mxu0
    %402 = vmatprep.subr.mxu0 0.0
    %v403 = vand.u32 %v17, 4294901760
    %404 = vmatpush1.msra.mxu0 %v403
    %405 = vmatprep.subr.mxu0 0.0
    %v406 = vand.u32 %v18, 4294901760
    %407 = vmatpush1.msra.mxu0 %v406
    %408 = vmatprep.subr.mxu0 0.0
    %v409 = vand.u32 %v19, 4294901760
    %410 = vmatpush1.msra.mxu0 %v409
    %411 = vmatprep.subr.mxu0 0.0
    %v412 = vand.u32 %v20, 4294901760
    %413 = vmatpush1.msra.mxu0 %v412
    %414 = vmatprep.subr.mxu0 0.0
    %v415 = vand.u32 %v21, 4294901760
    %416 = vmatpush1.msra.mxu0 %v415
    %417 = vmatprep.subr.mxu0 0.0
    %v418 = vand.u32 %v22, 4294901760
    %419 = vmatpush1.msra.mxu0 %v418
    %420 = vmatprep.subr.mxu0 0.0
    %v421 = vand.u32 %v23, 4294901760
    %422 = vmatpush1.msra.mxu0 %v421
    %423 = vmatprep.subr.mxu0 0.0
    %v424 = vand.u32 %v24, 4294901760
    %425 = vmatpush1.msra.mxu0 %v424
    %426 = vmatprep.subr.mxu0 0.0
    %v427 = vand.u32 %v25, 4294901760
    %428 = vmatpush1.msra.mxu0 %v427
    %429 = vmatprep.subr.mxu0 0.0
    %v430 = vand.u32 %v26, 4294901760
    %431 = vmatpush1.msra.mxu0 %v430
    %432 = vmatprep.subr.mxu0 0.0
    %v433 = vand.u32 %v27, 4294901760
    %434 = vmatpush1.msra.mxu0 %v433
    %435 = vmatprep.subr.mxu0 0.0
    %v436 = vand.u32 %v28, 4294901760
    %437 = vmatpush1.msra.mxu0 %v436
    %438 = vmatprep.subr.mxu0 0.0
    %v439 = vand.u32 %v29, 4294901760
    %440 = vmatpush1.msra.mxu0 %v439
    %441 = vmatprep.subr.mxu0 0.0
    %v442 = vand.u32 %v30, 4294901760
    %443 = vmatpush1.msra.mxu0 %v442
    %444 = vmatprep.subr.mxu0 0.0
    %v445 = vand.u32 %v31, 4294901760
    %446 = vmatpush1.msra.mxu0 %v445
    %447 = vmatprep.subr.mxu0 0.0
    %v448 = vand.u32 %v32, 4294901760
    %449 = vmatpush1.msra.mxu0 %v448
    %450 = vmatprep.subr.mxu0 0.0
    %451 = vmatpush1.msra.mxu0 0.0
    %452 = vmatprep.subr.mxu0 0.0
    %453 = vmatpush1.msra.mxu0 0.0
    %454 = vmatprep.subr.mxu0 0.0
    %455 = vmatpush1.msra.mxu0 0.0
    %456 = vmatprep.subr.mxu0 0.0
    %457 = vmatpush1.msra.mxu0 0.0
    %458 = vmatprep.subr.mxu0 0.0
    %459 = vmatpush1.msra.mxu0 0.0
    %460 = vmatprep.subr.mxu0 0.0
    %461 = vmatpush1.msra.mxu0 0.0
    %462 = vmatprep.subr.mxu0 0.0
    %463 = vmatpush1.msra.mxu0 0.0
    %464 = vmatprep.subr.mxu0 0.0
    %465 = vmatpush1.msra.mxu0 0.0
    %466 = vmatprep.subr.mxu0 0.0
    %467 = vmatpush1.msra.mxu0 0.0
    %468 = vmatprep.subr.mxu0 0.0
    %469 = vmatpush1.msra.mxu0 0.0
    %470 = vmatprep.subr.mxu0 0.0
    %471 = vmatpush1.msra.mxu0 0.0
    %472 = vmatprep.subr.mxu0 0.0
    %473 = vmatpush1.msra.mxu0 0.0
    %474 = vmatprep.subr.mxu0 0.0
    %475 = vmatpush1.msra.mxu0 0.0
    %476 = vmatprep.subr.mxu0 0.0
    %477 = vmatpush1.msra.mxu0 0.0
    %478 = vmatprep.subr.mxu0 0.0
    %479 = vmatpush1.msra.mxu0 0.0
    %480 = vmatprep.subr.mxu0 0.0
    %481 = vmatpush1.msra.mxu0 0.0
    %482 = vmatprep.mubr.f32.mxu0 0.0
    %v483 = vand.u32 %v15, 4294901760
    %v484 = vsub.f32 %v15, %v483
    %v485 = vand.u32 %v484, 4294901760
    %486 = vmatmul.mubr.f32.gmra.mrb[0].mxu0 %v485
    %v487 = vpop.f32.mrb[0].mxu0
    %v488 = vadd.f32 %v392, %v487
    %v489 = vpop.f32.mrb[0].mxu0
    %490 = vmatprep.mubr.f32.mxu0 0.0
    %v491 = vand.u32 %v16, 4294901760
    %v492 = vsub.f32 %v16, %v491
    %v493 = vand.u32 %v492, 4294901760
    %494 = vmatmul.mubr.f32.gmra.mrb[0].mxu0 %v493
    %v495 = vpop.f32.mrb[0].mxu0
    %v496 = vadd.f32 %v399, %v495
    %v497 = vpop.f32.mrb[0].mxu0
    %498 = vdwg.mxu0
    %499 = vmatprep.subr.mxu0 0.0
    %v500 = vand.u32 %v17, 4294901760
    %v501 = vsub.f32 %v17, %v500
    %v502 = vand.u32 %v501, 4294901760
    %503 = vmatpush1.msra.mxu0 %v502
    %504 = vmatprep.subr.mxu0 0.0
    %v505 = vand.u32 %v18, 4294901760
    %v506 = vsub.f32 %v18, %v505
    %v507 = vand.u32 %v506, 4294901760
    %508 = vmatpush1.msra.mxu0 %v507
    %509 = vmatprep.subr.mxu0 0.0
    %v510 = vand.u32 %v19, 4294901760
    %v511 = vsub.f32 %v19, %v510
    %v512 = vand.u32 %v511, 4294901760
    %513 = vmatpush1.msra.mxu0 %v512
    %514 = vmatprep.subr.mxu0 0.0
    %v515 = vand.u32 %v20, 4294901760
    %v516 = vsub.f32 %v20, %v515
    %v517 = vand.u32 %v516, 4294901760
    %518 = vmatpush1.msra.mxu0 %v517
    %519 = vmatprep.subr.mxu0 0.0
    %v520 = vand.u32 %v21, 4294901760
    %v521 = vsub.f32 %v21, %v520
    %v522 = vand.u32 %v521, 4294901760
    %523 = vmatpush1.msra.mxu0 %v522
    %524 = vmatprep.subr.mxu0 0.0
    %v525 = vand.u32 %v22, 4294901760
    %v526 = vsub.f32 %v22, %v525
    %v527 = vand.u32 %v526, 4294901760
    %528 = vmatpush1.msra.mxu0 %v527
    %529 = vmatprep.subr.mxu0 0.0
    %v530 = vand.u32 %v23, 4294901760
    %v531 = vsub.f32 %v23, %v530
    %v532 = vand.u32 %v531, 4294901760
    %533 = vmatpush1.msra.mxu0 %v532
    %534 = vmatprep.subr.mxu0 0.0
    %v535 = vand.u32 %v24, 4294901760
    %v536 = vsub.f32 %v24, %v535
    %v537 = vand.u32 %v536, 4294901760
    %538 = vmatpush1.msra.mxu0 %v537
    %539 = vmatprep.subr.mxu0 0.0
    %v540 = vand.u32 %v25, 4294901760
    %v541 = vsub.f32 %v25, %v540
    %v542 = vand.u32 %v541, 4294901760
    %543 = vmatpush1.msra.mxu0 %v542
    %544 = vmatprep.subr.mxu0 0.0
    %v545 = vand.u32 %v26, 4294901760
    %v546 = vsub.f32 %v26, %v545
    %v547 = vand.u32 %v546, 4294901760
    %548 = vmatpush1.msra.mxu0 %v547
    %549 = vmatprep.subr.mxu0 0.0
    %v550 = vand.u32 %v27, 4294901760
    %v551 = vsub.f32 %v27, %v550
    %v552 = vand.u32 %v551, 4294901760
    %553 = vmatpush1.msra.mxu0 %v552
    %554 = vmatprep.subr.mxu0 0.0
    %v555 = vand.u32 %v28, 4294901760
    %v556 = vsub.f32 %v28, %v555
    %v557 = vand.u32 %v556, 4294901760
    %558 = vmatpush1.msra.mxu0 %v557
    %559 = vmatprep.subr.mxu0 0.0
    %v560 = vand.u32 %v29, 4294901760
    %v561 = vsub.f32 %v29, %v560
    %v562 = vand.u32 %v561, 4294901760
    %563 = vmatpush1.msra.mxu0 %v562
    %564 = vmatprep.subr.mxu0 0.0
    %v565 = vand.u32 %v30, 4294901760
    %v566 = vsub.f32 %v30, %v565
    %v567 = vand.u32 %v566, 4294901760
    %568 = vmatpush1.msra.mxu0 %v567
    %569 = vmatprep.subr.mxu0 0.0
    %v570 = vand.u32 %v31, 4294901760
    %v571 = vsub.f32 %v31, %v570
    %v572 = vand.u32 %v571, 4294901760
    %573 = vmatpush1.msra.mxu0 %v572
    %574 = vmatprep.subr.mxu0 0.0
    %v575 = vand.u32 %v32, 4294901760
    %v576 = vsub.f32 %v32, %v575
    %v577 = vand.u32 %v576, 4294901760
    %578 = vmatpush1.msra.mxu0 %v577
    %579 = vmatprep.subr.mxu0 0.0
    %580 = vmatpush1.msra.mxu0 0.0
    %581 = vmatprep.subr.mxu0 0.0
    %582 = vmatpush1.msra.mxu0 0.0
    %583 = vmatprep.subr.mxu0 0.0
    %584 = vmatpush1.msra.mxu0 0.0
    %585 = vmatprep.subr.mxu0 0.0
    %586 = vmatpush1.msra.mxu0 0.0
    %587 = vmatprep.subr.mxu0 0.0
    %588 = vmatpush1.msra.mxu0 0.0
    %589 = vmatprep.subr.mxu0 0.0
    %590 = vmatpush1.msra.mxu0 0.0
    %591 = vmatprep.subr.mxu0 0.0
    %592 = vmatpush1.msra.mxu0 0.0
    %593 = vmatprep.subr.mxu0 0.0
    %594 = vmatpush1.msra.mxu0 0.0
    %595 = vmatprep.subr.mxu0 0.0
    %596 = vmatpush1.msra.mxu0 0.0
    %597 = vmatprep.subr.mxu0 0.0
    %598 = vmatpush1.msra.mxu0 0.0
    %599 = vmatprep.subr.mxu0 0.0
    %600 = vmatpush1.msra.mxu0 0.0
    %601 = vmatprep.subr.mxu0 0.0
    %602 = vmatpush1.msra.mxu0 0.0
    %603 = vmatprep.subr.mxu0 0.0
    %604 = vmatpush1.msra.mxu0 0.0
    %605 = vmatprep.subr.mxu0 0.0
    %606 = vmatpush1.msra.mxu0 0.0
    %607 = vmatprep.subr.mxu0 0.0
    %608 = vmatpush1.msra.mxu0 0.0
    %609 = vmatprep.subr.mxu0 0.0
    %610 = vmatpush1.msra.mxu0 0.0
    %611 = vmatprep.mubr.f32.mxu0 0.0
    %v612 = vand.u32 %v15, 4294901760
    %613 = vmatmul.mubr.f32.gmra.mrb[0].mxu0 %v612
    %v614 = vpop.f32.mrb[0].mxu0
    %v615 = vadd.f32 %v488, %v614
    %v616 = vpop.f32.mrb[0].mxu0
    %617 = vmatprep.mubr.f32.mxu0 0.0
    %v618 = vand.u32 %v16, 4294901760
    %619 = vmatmul.mubr.f32.gmra.mrb[0].mxu0 %v618
    %v620 = vpop.f32.mrb[0].mxu0
    %v621 = vadd.f32 %v496, %v620
    %v622 = vpop.f32.mrb[0].mxu0
    %623 = vdwg.mxu0
    %624 = vmatprep.subr.mxu0 0.0
    %v625 = vand.u32 %v17, 4294901760
    %626 = vmatpush1.msra.mxu0 %v625
    %627 = vmatprep.subr.mxu0 0.0
    %v628 = vand.u32 %v18, 4294901760
    %629 = vmatpush1.msra.mxu0 %v628
    %630 = vmatprep.subr.mxu0 0.0
    %v631 = vand.u32 %v19, 4294901760
    %632 = vmatpush1.msra.mxu0 %v631
    %633 = vmatprep.subr.mxu0 0.0
    %v634 = vand.u32 %v20, 4294901760
    %635 = vmatpush1.msra.mxu0 %v634
    %636 = vmatprep.subr.mxu0 0.0
    %v637 = vand.u32 %v21, 4294901760
    %638 = vmatpush1.msra.mxu0 %v637
    %639 = vmatprep.subr.mxu0 0.0
    %v640 = vand.u32 %v22, 4294901760
    %641 = vmatpush1.msra.mxu0 %v640
    %642 = vmatprep.subr.mxu0 0.0
    %v643 = vand.u32 %v23, 4294901760
    %644 = vmatpush1.msra.mxu0 %v643
    %645 = vmatprep.subr.mxu0 0.0
    %v646 = vand.u32 %v24, 4294901760
    %647 = vmatpush1.msra.mxu0 %v646
    %648 = vmatprep.subr.mxu0 0.0
    %v649 = vand.u32 %v25, 4294901760
    %650 = vmatpush1.msra.mxu0 %v649
    %651 = vmatprep.subr.mxu0 0.0
    %v652 = vand.u32 %v26, 4294901760
    %653 = vmatpush1.msra.mxu0 %v652
    %654 = vmatprep.subr.mxu0 0.0
    %v655 = vand.u32 %v27, 4294901760
    %656 = vmatpush1.msra.mxu0 %v655
    %657 = vmatprep.subr.mxu0 0.0
    %v658 = vand.u32 %v28, 4294901760
    %659 = vmatpush1.msra.mxu0 %v658
    %660 = vmatprep.subr.mxu0 0.0
    %v661 = vand.u32 %v29, 4294901760
    %662 = vmatpush1.msra.mxu0 %v661
    %663 = vmatprep.subr.mxu0 0.0
    %v664 = vand.u32 %v30, 4294901760
    %665 = vmatpush1.msra.mxu0 %v664
    %666 = vmatprep.subr.mxu0 0.0
    %v667 = vand.u32 %v31, 4294901760
    %668 = vmatpush1.msra.mxu0 %v667
    %669 = vmatprep.subr.mxu0 0.0
    %v670 = vand.u32 %v32, 4294901760
    %671 = vmatpush1.msra.mxu0 %v670
    %672 = vmatprep.subr.mxu0 0.0
    %673 = vmatpush1.msra.mxu0 0.0
    %674 = vmatprep.subr.mxu0 0.0
    %675 = vmatpush1.msra.mxu0 0.0
    %676 = vmatprep.subr.mxu0 0.0
    %677 = vmatpush1.msra.mxu0 0.0
    %678 = vmatprep.subr.mxu0 0.0
    %679 = vmatpush1.msra.mxu0 0.0
    %680 = vmatprep.subr.mxu0 0.0
    %681 = vmatpush1.msra.mxu0 0.0
    %682 = vmatprep.subr.mxu0 0.0
    %683 = vmatpush1.msra.mxu0 0.0
    %684 = vmatprep.subr.mxu0 0.0
    %685 = vmatpush1.msra.mxu0 0.0
    %686 = vmatprep.subr.mxu0 0.0
    %687 = vmatpush1.msra.mxu0 0.0
    %688 = vmatprep.subr.mxu0 0.0
    %689 = vmatpush1.msra.mxu0 0.0
    %690 = vmatprep.subr.mxu0 0.0
    %691 = vmatpush1.msra.mxu0 0.0
    %692 = vmatprep.subr.mxu0 0.0
    %693 = vmatpush1.msra.mxu0 0.0
    %694 = vmatprep.subr.mxu0 0.0
    %695 = vmatpush1.msra.mxu0 0.0
    %696 = vmatprep.subr.mxu0 0.0
    %697 = vmatpush1.msra.mxu0 0.0
    %698 = vmatprep.subr.mxu0 0.0
    %699 = vmatpush1.msra.mxu0 0.0
    %700 = vmatprep.subr.mxu0 0.0
    %701 = vmatpush1.msra.mxu0 0.0
    %702 = vmatprep.subr.mxu0 0.0
    %703 = vmatpush1.msra.mxu0 0.0
    %704 = vmatprep.mubr.f32.mxu0 0.0
    %v705 = vand.u32 %v15, 4294901760
    %706 = vmatmul.mubr.f32.gmra.mrb[0].mxu0 %v705
    %v707 = vpop.f32.mrb[0].mxu0
    %v708 = vadd.f32 %v615, %v707
    %v709 = vpop.f32.mrb[0].mxu0
    %710 = vmatprep.mubr.f32.mxu0 0.0
    %v711 = vand.u32 %v16, 4294901760
    %712 = vmatmul.mubr.f32.gmra.mrb[0].mxu0 %v711
    %v713 = vpop.f32.mrb[0].mxu0
    %v714 = vadd.f32 %v621, %v713
    %v715 = vpop.f32.mrb[0].mxu0
    %716 = vdwg.mxu0
    %718 = vrot.lane.b32.xlu0 %v708, 96
    %v719 = vpop.permute.xlu0 %718
    %vm720 = vcmask 64512
    %v721 = vsel %vm720, %v708, 0
    %v723 = vsel %vm720, %v719, 0
    %725 = vmatprep.subr.mxu0 0.0
    %v726 = vand.u32 %v723, 4294901760
    %727 = vmatpush1.xpose.msra.mxu0 %v726
    %728 = vmatprep.subr.mxu0 0.0
    %729 = vmatpush1.xpose.msra.mxu0 0.0
    %730 = vmatprep.subr.mxu0 0.0
    %731 = vmatpush1.xpose.msra.mxu0 0.0
    %732 = vmatprep.subr.mxu0 0.0
    %733 = vmatpush1.xpose.msra.mxu0 0.0
    %734 = vmatprep.subr.mxu0 0.0
    %735 = vmatpush1.xpose.msra.mxu0 0.0
    %736 = vmatprep.subr.mxu0 0.0
    %737 = vmatpush1.xpose.msra.mxu0 0.0
    %738 = vmatprep.subr.mxu0 0.0
    %739 = vmatpush1.xpose.msra.mxu0 0.0
    %740 = vmatprep.subr.mxu0 0.0
    %741 = vmatpush1.xpose.msra.mxu0 0.0
    %742 = vmatprep.subr.mxu0 0.0
    %743 = vmatpush1.xpose.msra.mxu0 0.0
    %744 = vmatprep.subr.mxu0 0.0
    %745 = vmatpush1.xpose.msra.mxu0 0.0
    %746 = vmatprep.subr.mxu0 0.0
    %747 = vmatpush1.xpose.msra.mxu0 0.0
    %748 = vmatprep.subr.mxu0 0.0
    %749 = vmatpush1.xpose.msra.mxu0 0.0
    %750 = vmatprep.subr.mxu0 0.0
    %751 = vmatpush1.xpose.msra.mxu0 0.0
    %752 = vmatprep.subr.mxu0 0.0
    %753 = vmatpush1.xpose.msra.mxu0 0.0
    %754 = vmatprep.subr.mxu0 0.0
    %755 = vmatpush1.xpose.msra.mxu0 0.0
    %756 = vmatprep.subr.mxu0 0.0
    %757 = vmatpush1.xpose.msra.mxu0 0.0
    %758 = vmatprep.subr.mxu0 0.0
    %759 = vmatpush1.xpose.msra.mxu0 0.0
    %760 = vmatprep.subr.mxu0 0.0
    %761 = vmatpush1.xpose.msra.mxu0 0.0
    %762 = vmatprep.subr.mxu0 0.0
    %763 = vmatpush1.xpose.msra.mxu0 0.0
    %764 = vmatprep.subr.mxu0 0.0
    %765 = vmatpush1.xpose.msra.mxu0 0.0
    %766 = vmatprep.subr.mxu0 0.0
    %767 = vmatpush1.xpose.msra.mxu0 0.0
    %768 = vmatprep.subr.mxu0 0.0
    %769 = vmatpush1.xpose.msra.mxu0 0.0
    %770 = vmatprep.subr.mxu0 0.0
    %771 = vmatpush1.xpose.msra.mxu0 0.0
    %772 = vmatprep.subr.mxu0 0.0
    %773 = vmatpush1.xpose.msra.mxu0 0.0
    %774 = vmatprep.subr.mxu0 0.0
    %775 = vmatpush1.xpose.msra.mxu0 0.0
    %776 = vmatprep.subr.mxu0 0.0
    %777 = vmatpush1.xpose.msra.mxu0 0.0
    %778 = vmatprep.subr.mxu0 0.0
    %779 = vmatpush1.xpose.msra.mxu0 0.0
    %780 = vmatprep.subr.mxu0 0.0
    %781 = vmatpush1.xpose.msra.mxu0 0.0
    %782 = vmatprep.subr.mxu0 0.0
    %783 = vmatpush1.xpose.msra.mxu0 0.0
    %784 = vmatprep.subr.mxu0 0.0
    %785 = vmatpush1.xpose.msra.mxu0 0.0
    %786 = vmatprep.subr.mxu0 0.0
    %787 = vmatpush1.xpose.msra.mxu0 0.0
    %788 = vmatprep.subr.mxu0 0.0
    %789 = vmatpush1.xpose.msra.mxu0 0.0
    %790 = vmatprep.mubr.f32.mxu0 0.0
    %v791 = vand.u32 %v721, 4294901760
    %v792 = vsub.f32 %v721, %v791
    %v793 = vand.u32 %v792, 4294901760
    %v794 = vsub.f32 %v792, %v793
    %v795 = vand.u32 %v794, 4294901760
    %796 = vmatmul.mubr.f32.gmra.mrb[0].mxu0 %v795
    %v797 = vpop.f32.mrb[0].mxu0
    %v798 = vadd.f32 0.0, %v797
    %v799 = vpop.f32.mrb[0].mxu0
    %800 = vdwg.mxu0
    %801 = vmatprep.subr.mxu0 0.0
    %v802 = vand.u32 %v723, 4294901760
    %v803 = vsub.f32 %v723, %v802
    %v804 = vand.u32 %v803, 4294901760
    %v805 = vsub.f32 %v803, %v804
    %v806 = vand.u32 %v805, 4294901760
    %807 = vmatpush1.xpose.msra.mxu0 %v806
    %808 = vmatprep.subr.mxu0 0.0
    %809 = vmatpush1.xpose.msra.mxu0 0.0
    %810 = vmatprep.subr.mxu0 0.0
    %811 = vmatpush1.xpose.msra.mxu0 0.0
    %812 = vmatprep.subr.mxu0 0.0
    %813 = vmatpush1.xpose.msra.mxu0 0.0
    %814 = vmatprep.subr.mxu0 0.0
    %815 = vmatpush1.xpose.msra.mxu0 0.0
    %816 = vmatprep.subr.mxu0 0.0
    %817 = vmatpush1.xpose.msra.mxu0 0.0
    %818 = vmatprep.subr.mxu0 0.0
    %819 = vmatpush1.xpose.msra.mxu0 0.0
    %820 = vmatprep.subr.mxu0 0.0
    %821 = vmatpush1.xpose.msra.mxu0 0.0
    %822 = vmatprep.subr.mxu0 0.0
    %823 = vmatpush1.xpose.msra.mxu0 0.0
    %824 = vmatprep.subr.mxu0 0.0
    %825 = vmatpush1.xpose.msra.mxu0 0.0
    %826 = vmatprep.subr.mxu0 0.0
    %827 = vmatpush1.xpose.msra.mxu0 0.0
    %828 = vmatprep.subr.mxu0 0.0
    %829 = vmatpush1.xpose.msra.mxu0 0.0
    %830 = vmatprep.subr.mxu0 0.0
    %831 = vmatpush1.xpose.msra.mxu0 0.0
    %832 = vmatprep.subr.mxu0 0.0
    %833 = vmatpush1.xpose.msra.mxu0 0.0
    %834 = vmatprep.subr.mxu0 0.0
    %835 = vmatpush1.xpose.msra.mxu0 0.0
    %836 = vmatprep.subr.mxu0 0.0
    %837 = vmatpush1.xpose.msra.mxu0 0.0
    %838 = vmatprep.subr.mxu0 0.0
    %839 = vmatpush1.xpose.msra.mxu0 0.0
    %840 = vmatprep.subr.mxu0 0.0
    %841 = vmatpush1.xpose.msra.mxu0 0.0
    %842 = vmatprep.subr.mxu0 0.0
    %843 = vmatpush1.xpose.msra.mxu0 0.0
    %844 = vmatprep.subr.mxu0 0.0
    %845 = vmatpush1.xpose.msra.mxu0 0.0
    %846 = vmatprep.subr.mxu0 0.0
    %847 = vmatpush1.xpose.msra.mxu0 0.0
    %848 = vmatprep.subr.mxu0 0.0
    %849 = vmatpush1.xpose.msra.mxu0 0.0
    %850 = vmatprep.subr.mxu0 0.0
    %851 = vmatpush1.xpose.msra.mxu0 0.0
    %852 = vmatprep.subr.mxu0 0.0
    %853 = vmatpush1.xpose.msra.mxu0 0.0
    %854 = vmatprep.subr.mxu0 0.0
    %855 = vmatpush1.xpose.msra.mxu0 0.0
    %856 = vmatprep.subr.mxu0 0.0
    %857 = vmatpush1.xpose.msra.mxu0 0.0
    %858 = vmatprep.subr.mxu0 0.0
    %859 = vmatpush1.xpose.msra.mxu0 0.0
    %860 = vmatprep.subr.mxu0 0.0
    %861 = vmatpush1.xpose.msra.mxu0 0.0
    %862 = vmatprep.subr.mxu0 0.0
    %863 = vmatpush1.xpose.msra.mxu0 0.0
    %864 = vmatprep.subr.mxu0 0.0
    %865 = vmatpush1.xpose.msra.mxu0 0.0
    %866 = vmatprep.subr.mxu0 0.0
    %867 = vmatpush1.xpose.msra.mxu0 0.0
    %868 = vmatprep.subr.mxu0 0.0
    %869 = vmatpush1.xpose.msra.mxu0 0.0
    %870 = vmatprep.mubr.f32.mxu0 0.0
    %v871 = vand.u32 %v721, 4294901760
    %872 = vmatmul.mubr.f32.gmra.mrb[0].mxu0 %v871
    %v873 = vpop.f32.mrb[0].mxu0
    %v874 = vadd.f32 %v798, %v873
    %v875 = vpop.f32.mrb[0].mxu0
    %876 = vdwg.mxu0
    %877 = vmatprep.subr.mxu0 0.0
    %v878 = vand.u32 %v723, 4294901760
    %v879 = vsub.f32 %v723, %v878
    %880 = vmatpush1.xpose.msra.mxu0 %v879
    %881 = vmatprep.subr.mxu0 0.0
    %882 = vmatpush1.xpose.msra.mxu0 0.0
    %883 = vmatprep.subr.mxu0 0.0
    %884 = vmatpush1.xpose.msra.mxu0 0.0
    %885 = vmatprep.subr.mxu0 0.0
    %886 = vmatpush1.xpose.msra.mxu0 0.0
    %887 = vmatprep.subr.mxu0 0.0
    %888 = vmatpush1.xpose.msra.mxu0 0.0
    %889 = vmatprep.subr.mxu0 0.0
    %890 = vmatpush1.xpose.msra.mxu0 0.0
    %891 = vmatprep.subr.mxu0 0.0
    %892 = vmatpush1.xpose.msra.mxu0 0.0
    %893 = vmatprep.subr.mxu0 0.0
    %894 = vmatpush1.xpose.msra.mxu0 0.0
    %895 = vmatprep.subr.mxu0 0.0
    %896 = vmatpush1.xpose.msra.mxu0 0.0
    %897 = vmatprep.subr.mxu0 0.0
    %898 = vmatpush1.xpose.msra.mxu0 0.0
    %899 = vmatprep.subr.mxu0 0.0
    %900 = vmatpush1.xpose.msra.mxu0 0.0
    %901 = vmatprep.subr.mxu0 0.0
    %902 = vmatpush1.xpose.msra.mxu0 0.0
    %903 = vmatprep.subr.mxu0 0.0
    %904 = vmatpush1.xpose.msra.mxu0 0.0
    %905 = vmatprep.subr.mxu0 0.0
    %906 = vmatpush1.xpose.msra.mxu0 0.0
    %907 = vmatprep.subr.mxu0 0.0
    %908 = vmatpush1.xpose.msra.mxu0 0.0
    %909 = vmatprep.subr.mxu0 0.0
    %910 = vmatpush1.xpose.msra.mxu0 0.0
    %911 = vmatprep.subr.mxu0 0.0
    %912 = vmatpush1.xpose.msra.mxu0 0.0
    %913 = vmatprep.subr.mxu0 0.0
    %914 = vmatpush1.xpose.msra.mxu0 0.0
    %915 = vmatprep.subr.mxu0 0.0
    %916 = vmatpush1.xpose.msra.mxu0 0.0
    %917 = vmatprep.subr.mxu0 0.0
    %918 = vmatpush1.xpose.msra.mxu0 0.0
    %919 = vmatprep.subr.mxu0 0.0
    %920 = vmatpush1.xpose.msra.mxu0 0.0
    %921 = vmatprep.subr.mxu0 0.0
    %922 = vmatpush1.xpose.msra.mxu0 0.0
    %923 = vmatprep.subr.mxu0 0.0
    %924 = vmatpush1.xpose.msra.mxu0 0.0
    %925 = vmatprep.subr.mxu0 0.0
    %926 = vmatpush1.xpose.msra.mxu0 0.0
    %927 = vmatprep.subr.mxu0 0.0
    %928 = vmatpush1.xpose.msra.mxu0 0.0
    %929 = vmatprep.subr.mxu0 0.0
    %930 = vmatpush1.xpose.msra.mxu0 0.0
    %931 = vmatprep.subr.mxu0 0.0
    %932 = vmatpush1.xpose.msra.mxu0 0.0
    %933 = vmatprep.subr.mxu0 0.0
    %934 = vmatpush1.xpose.msra.mxu0 0.0
    %935 = vmatprep.subr.mxu0 0.0
    %936 = vmatpush1.xpose.msra.mxu0 0.0
    %937 = vmatprep.subr.mxu0 0.0
    %938 = vmatpush1.xpose.msra.mxu0 0.0
    %939 = vmatprep.subr.mxu0 0.0
    %940 = vmatpush1.xpose.msra.mxu0 0.0
    %941 = vmatprep.subr.mxu0 0.0
    %942 = vmatpush1.xpose.msra.mxu0 0.0
    %943 = vmatprep.mubr.f32.mxu0 0.0
    %v944 = vand.u32 %v721, 4294901760
    %v945 = vsub.f32 %v721, %v944
    %946 = vmatmul.mubr.f32.gmra.mrb[0].mxu0 %v945
    %v947 = vpop.f32.mrb[0].mxu0
    %v948 = vadd.f32 %v874, %v947
    %v949 = vpop.f32.mrb[0].mxu0
    %950 = vdwg.mxu0
    %951 = vmatprep.subr.mxu0 0.0
    %v952 = vand.u32 %v723, 4294901760
    %953 = vmatpush1.xpose.msra.mxu0 %v952
    %954 = vmatprep.subr.mxu0 0.0
    %955 = vmatpush1.xpose.msra.mxu0 0.0
    %956 = vmatprep.subr.mxu0 0.0
    %957 = vmatpush1.xpose.msra.mxu0 0.0
    %958 = vmatprep.subr.mxu0 0.0
    %959 = vmatpush1.xpose.msra.mxu0 0.0
    %960 = vmatprep.subr.mxu0 0.0
    %961 = vmatpush1.xpose.msra.mxu0 0.0
    %962 = vmatprep.subr.mxu0 0.0
    %963 = vmatpush1.xpose.msra.mxu0 0.0
    %964 = vmatprep.subr.mxu0 0.0
    %965 = vmatpush1.xpose.msra.mxu0 0.0
    %966 = vmatprep.subr.mxu0 0.0
    %967 = vmatpush1.xpose.msra.mxu0 0.0
    %968 = vmatprep.subr.mxu0 0.0
    %969 = vmatpush1.xpose.msra.mxu0 0.0
    %970 = vmatprep.subr.mxu0 0.0
    %971 = vmatpush1.xpose.msra.mxu0 0.0
    %972 = vmatprep.subr.mxu0 0.0
    %973 = vmatpush1.xpose.msra.mxu0 0.0
    %974 = vmatprep.subr.mxu0 0.0
    %975 = vmatpush1.xpose.msra.mxu0 0.0
    %976 = vmatprep.subr.mxu0 0.0
    %977 = vmatpush1.xpose.msra.mxu0 0.0
    %978 = vmatprep.subr.mxu0 0.0
    %979 = vmatpush1.xpose.msra.mxu0 0.0
    %980 = vmatprep.subr.mxu0 0.0
    %981 = vmatpush1.xpose.msra.mxu0 0.0
    %982 = vmatprep.subr.mxu0 0.0
    %983 = vmatpush1.xpose.msra.mxu0 0.0
    %984 = vmatprep.subr.mxu0 0.0
    %985 = vmatpush1.xpose.msra.mxu0 0.0
    %986 = vmatprep.subr.mxu0 0.0
    %987 = vmatpush1.xpose.msra.mxu0 0.0
    %988 = vmatprep.subr.mxu0 0.0
    %989 = vmatpush1.xpose.msra.mxu0 0.0
    %990 = vmatprep.subr.mxu0 0.0
    %991 = vmatpush1.xpose.msra.mxu0 0.0
    %992 = vmatprep.subr.mxu0 0.0
    %993 = vmatpush1.xpose.msra.mxu0 0.0
    %994 = vmatprep.subr.mxu0 0.0
    %995 = vmatpush1.xpose.msra.mxu0 0.0
    %996 = vmatprep.subr.mxu0 0.0
    %997 = vmatpush1.xpose.msra.mxu0 0.0
    %998 = vmatprep.subr.mxu0 0.0
    %999 = vmatpush1.xpose.msra.mxu0 0.0
    %1000 = vmatprep.subr.mxu0 0.0
    %1001 = vmatpush1.xpose.msra.mxu0 0.0
    %1002 = vmatprep.subr.mxu0 0.0
    %1003 = vmatpush1.xpose.msra.mxu0 0.0
    %1004 = vmatprep.subr.mxu0 0.0
    %1005 = vmatpush1.xpose.msra.mxu0 0.0
    %1006 = vmatprep.subr.mxu0 0.0
    %1007 = vmatpush1.xpose.msra.mxu0 0.0
    %1008 = vmatprep.subr.mxu0 0.0
    %1009 = vmatpush1.xpose.msra.mxu0 0.0
    %1010 = vmatprep.subr.mxu0 0.0
    %1011 = vmatpush1.xpose.msra.mxu0 0.0
    %1012 = vmatprep.subr.mxu0 0.0
    %1013 = vmatpush1.xpose.msra.mxu0 0.0
    %1014 = vmatprep.subr.mxu0 0.0
    %1015 = vmatpush1.xpose.msra.mxu0 0.0
    %1016 = vmatprep.mubr.f32.mxu0 0.0
    %v1017 = vand.u32 %v721, 4294901760
    %v1018 = vsub.f32 %v721, %v1017
    %v1019 = vand.u32 %v1018, 4294901760
    %1020 = vmatmul.mubr.f32.gmra.mrb[0].mxu0 %v1019
    %v1021 = vpop.f32.mrb[0].mxu0
    %v1022 = vadd.f32 %v948, %v1021
    %v1023 = vpop.f32.mrb[0].mxu0
    %1024 = vdwg.mxu0
    %1025 = vmatprep.subr.mxu0 0.0
    %v1026 = vand.u32 %v723, 4294901760
    %v1027 = vsub.f32 %v723, %v1026
    %v1028 = vand.u32 %v1027, 4294901760
    %1029 = vmatpush1.xpose.msra.mxu0 %v1028
    %1030 = vmatprep.subr.mxu0 0.0
    %1031 = vmatpush1.xpose.msra.mxu0 0.0
    %1032 = vmatprep.subr.mxu0 0.0
    %1033 = vmatpush1.xpose.msra.mxu0 0.0
    %1034 = vmatprep.subr.mxu0 0.0
    %1035 = vmatpush1.xpose.msra.mxu0 0.0
    %1036 = vmatprep.subr.mxu0 0.0
    %1037 = vmatpush1.xpose.msra.mxu0 0.0
    %1038 = vmatprep.subr.mxu0 0.0
    %1039 = vmatpush1.xpose.msra.mxu0 0.0
    %1040 = vmatprep.subr.mxu0 0.0
    %1041 = vmatpush1.xpose.msra.mxu0 0.0
    %1042 = vmatprep.subr.mxu0 0.0
    %1043 = vmatpush1.xpose.msra.mxu0 0.0
    %1044 = vmatprep.subr.mxu0 0.0
    %1045 = vmatpush1.xpose.msra.mxu0 0.0
    %1046 = vmatprep.subr.mxu0 0.0
    %1047 = vmatpush1.xpose.msra.mxu0 0.0
    %1048 = vmatprep.subr.mxu0 0.0
    %1049 = vmatpush1.xpose.msra.mxu0 0.0
    %1050 = vmatprep.subr.mxu0 0.0
    %1051 = vmatpush1.xpose.msra.mxu0 0.0
    %1052 = vmatprep.subr.mxu0 0.0
    %1053 = vmatpush1.xpose.msra.mxu0 0.0
    %1054 = vmatprep.subr.mxu0 0.0
    %1055 = vmatpush1.xpose.msra.mxu0 0.0
    %1056 = vmatprep.subr.mxu0 0.0
    %1057 = vmatpush1.xpose.msra.mxu0 0.0
    %1058 = vmatprep.subr.mxu0 0.0
    %1059 = vmatpush1.xpose.msra.mxu0 0.0
    %1060 = vmatprep.subr.mxu0 0.0
    %1061 = vmatpush1.xpose.msra.mxu0 0.0
    %1062 = vmatprep.subr.mxu0 0.0
    %1063 = vmatpush1.xpose.msra.mxu0 0.0
    %1064 = vmatprep.subr.mxu0 0.0
    %1065 = vmatpush1.xpose.msra.mxu0 0.0
    %1066 = vmatprep.subr.mxu0 0.0
    %1067 = vmatpush1.xpose.msra.mxu0 0.0
    %1068 = vmatprep.subr.mxu0 0.0
    %1069 = vmatpush1.xpose.msra.mxu0 0.0
    %1070 = vmatprep.subr.mxu0 0.0
    %1071 = vmatpush1.xpose.msra.mxu0 0.0
    %1072 = vmatprep.subr.mxu0 0.0
    %1073 = vmatpush1.xpose.msra.mxu0 0.0
    %1074 = vmatprep.subr.mxu0 0.0
    %1075 = vmatpush1.xpose.msra.mxu0 0.0
    %1076 = vmatprep.subr.mxu0 0.0
    %1077 = vmatpush1.xpose.msra.mxu0 0.0
    %1078 = vmatprep.subr.mxu0 0.0
    %1079 = vmatpush1.xpose.msra.mxu0 0.0
    %1080 = vmatprep.subr.mxu0 0.0
    %1081 = vmatpush1.xpose.msra.mxu0 0.0
    %1082 = vmatprep.subr.mxu0 0.0
    %1083 = vmatpush1.xpose.msra.mxu0 0.0
    %1084 = vmatprep.subr.mxu0 0.0
    %1085 = vmatpush1.xpose.msra.mxu0 0.0
    %1086 = vmatprep.subr.mxu0 0.0
    %1087 = vmatpush1.xpose.msra.mxu0 0.0
    %1088 = vmatprep.subr.mxu0 0.0
    %1089 = vmatpush1.xpose.msra.mxu0 0.0
    %1090 = vmatprep.subr.mxu0 0.0
    %1091 = vmatpush1.xpose.msra.mxu0 0.0
    %1092 = vmatprep.mubr.f32.mxu0 0.0
    %v1093 = vand.u32 %v721, 4294901760
    %1094 = vmatmul.mubr.f32.gmra.mrb[0].mxu0 %v1093
    %v1095 = vpop.f32.mrb[0].mxu0
    %v1096 = vadd.f32 %v1022, %v1095
    %v1097 = vpop.f32.mrb[0].mxu0
    %1098 = vdwg.mxu0
    %1099 = vmatprep.subr.mxu0 0.0
    %v1100 = vand.u32 %v723, 4294901760
    %1101 = vmatpush1.xpose.msra.mxu0 %v1100
    %1102 = vmatprep.subr.mxu0 0.0
    %1103 = vmatpush1.xpose.msra.mxu0 0.0
    %1104 = vmatprep.subr.mxu0 0.0
    %1105 = vmatpush1.xpose.msra.mxu0 0.0
    %1106 = vmatprep.subr.mxu0 0.0
    %1107 = vmatpush1.xpose.msra.mxu0 0.0
    %1108 = vmatprep.subr.mxu0 0.0
    %1109 = vmatpush1.xpose.msra.mxu0 0.0
    %1110 = vmatprep.subr.mxu0 0.0
    %1111 = vmatpush1.xpose.msra.mxu0 0.0
    %1112 = vmatprep.subr.mxu0 0.0
    %1113 = vmatpush1.xpose.msra.mxu0 0.0
    %1114 = vmatprep.subr.mxu0 0.0
    %1115 = vmatpush1.xpose.msra.mxu0 0.0
    %1116 = vmatprep.subr.mxu0 0.0
    %1117 = vmatpush1.xpose.msra.mxu0 0.0
    %1118 = vmatprep.subr.mxu0 0.0
    %1119 = vmatpush1.xpose.msra.mxu0 0.0
    %1120 = vmatprep.subr.mxu0 0.0
    %1121 = vmatpush1.xpose.msra.mxu0 0.0
    %1122 = vmatprep.subr.mxu0 0.0
    %1123 = vmatpush1.xpose.msra.mxu0 0.0
    %1124 = vmatprep.subr.mxu0 0.0
    %1125 = vmatpush1.xpose.msra.mxu0 0.0
    %1126 = vmatprep.subr.mxu0 0.0
    %1127 = vmatpush1.xpose.msra.mxu0 0.0
    %1128 = vmatprep.subr.mxu0 0.0
    %1129 = vmatpush1.xpose.msra.mxu0 0.0
    %1130 = vmatprep.subr.mxu0 0.0
    %1131 = vmatpush1.xpose.msra.mxu0 0.0
    %1132 = vmatprep.subr.mxu0 0.0
    %1133 = vmatpush1.xpose.msra.mxu0 0.0
    %1134 = vmatprep.subr.mxu0 0.0
    %1135 = vmatpush1.xpose.msra.mxu0 0.0
    %1136 = vmatprep.subr.mxu0 0.0
    %1137 = vmatpush1.xpose.msra.mxu0 0.0
    %1138 = vmatprep.subr.mxu0 0.0
    %1139 = vmatpush1.xpose.msra.mxu0 0.0
    %1140 = vmatprep.subr.mxu0 0.0
    %1141 = vmatpush1.xpose.msra.mxu0 0.0
    %1142 = vmatprep.subr.mxu0 0.0
    %1143 = vmatpush1.xpose.msra.mxu0 0.0
    %1144 = vmatprep.subr.mxu0 0.0
    %1145 = vmatpush1.xpose.msra.mxu0 0.0
    %1146 = vmatprep.subr.mxu0 0.0
    %1147 = vmatpush1.xpose.msra.mxu0 0.0
    %1148 = vmatprep.subr.mxu0 0.0
    %1149 = vmatpush1.xpose.msra.mxu0 0.0
    %1150 = vmatprep.subr.mxu0 0.0
    %1151 = vmatpush1.xpose.msra.mxu0 0.0
    %1152 = vmatprep.subr.mxu0 0.0
    %1153 = vmatpush1.xpose.msra.mxu0 0.0
    %1154 = vmatprep.subr.mxu0 0.0
    %1155 = vmatpush1.xpose.msra.mxu0 0.0
    %1156 = vmatprep.subr.mxu0 0.0
    %1157 = vmatpush1.xpose.msra.mxu0 0.0
    %1158 = vmatprep.subr.mxu0 0.0
    %1159 = vmatpush1.xpose.msra.mxu0 0.0
    %1160 = vmatprep.subr.mxu0 0.0
    %1161 = vmatpush1.xpose.msra.mxu0 0.0
    %1162 = vmatprep.subr.mxu0 0.0
    %1163 = vmatpush1.xpose.msra.mxu0 0.0
    %1164 = vmatprep.mubr.f32.mxu0 0.0
    %v1165 = vand.u32 %v721, 4294901760
    %1166 = vmatmul.mubr.f32.gmra.mrb[0].mxu0 %v1165
    %v1167 = vpop.f32.mrb[0].mxu0
    %v1168 = vadd.f32 %v1096, %v1167
    %v1169 = vpop.f32.mrb[0].mxu0
    %1170 = vdwg.mxu0
    %1172 = vrot.lane.b32.xlu0 %v714, 96
    %v1173 = vpop.permute.xlu0 %1172
    %v1174 = vsel %vm720, %v714, 0
    %v1176 = vsel %vm720, %v1173, 0
    %1178 = vmatprep.subr.mxu0 0.0
    %v1179 = vand.u32 %v1176, 4294901760
    %1180 = vmatpush1.xpose.msra.mxu0 %v1179
    %1181 = vmatprep.subr.mxu0 0.0
    %1182 = vmatpush1.xpose.msra.mxu0 0.0
    %1183 = vmatprep.subr.mxu0 0.0
    %1184 = vmatpush1.xpose.msra.mxu0 0.0
    %1185 = vmatprep.subr.mxu0 0.0
    %1186 = vmatpush1.xpose.msra.mxu0 0.0
    %1187 = vmatprep.subr.mxu0 0.0
    %1188 = vmatpush1.xpose.msra.mxu0 0.0
    %1189 = vmatprep.subr.mxu0 0.0
    %1190 = vmatpush1.xpose.msra.mxu0 0.0
    %1191 = vmatprep.subr.mxu0 0.0
    %1192 = vmatpush1.xpose.msra.mxu0 0.0
    %1193 = vmatprep.subr.mxu0 0.0
    %1194 = vmatpush1.xpose.msra.mxu0 0.0
    %1195 = vmatprep.subr.mxu0 0.0
    %1196 = vmatpush1.xpose.msra.mxu0 0.0
    %1197 = vmatprep.subr.mxu0 0.0
    %1198 = vmatpush1.xpose.msra.mxu0 0.0
    %1199 = vmatprep.subr.mxu0 0.0
    %1200 = vmatpush1.xpose.msra.mxu0 0.0
    %1201 = vmatprep.subr.mxu0 0.0
    %1202 = vmatpush1.xpose.msra.mxu0 0.0
    %1203 = vmatprep.subr.mxu0 0.0
    %1204 = vmatpush1.xpose.msra.mxu0 0.0
    %1205 = vmatprep.subr.mxu0 0.0
    %1206 = vmatpush1.xpose.msra.mxu0 0.0
    %1207 = vmatprep.subr.mxu0 0.0
    %1208 = vmatpush1.xpose.msra.mxu0 0.0
    %1209 = vmatprep.subr.mxu0 0.0
    %1210 = vmatpush1.xpose.msra.mxu0 0.0
    %1211 = vmatprep.subr.mxu0 0.0
    %1212 = vmatpush1.xpose.msra.mxu0 0.0
    %1213 = vmatprep.subr.mxu0 0.0
    %1214 = vmatpush1.xpose.msra.mxu0 0.0
    %1215 = vmatprep.subr.mxu0 0.0
    %1216 = vmatpush1.xpose.msra.mxu0 0.0
    %1217 = vmatprep.subr.mxu0 0.0
    %1218 = vmatpush1.xpose.msra.mxu0 0.0
    %1219 = vmatprep.subr.mxu0 0.0
    %1220 = vmatpush1.xpose.msra.mxu0 0.0
    %1221 = vmatprep.subr.mxu0 0.0
    %1222 = vmatpush1.xpose.msra.mxu0 0.0
    %1223 = vmatprep.subr.mxu0 0.0
    %1224 = vmatpush1.xpose.msra.mxu0 0.0
    %1225 = vmatprep.subr.mxu0 0.0
    %1226 = vmatpush1.xpose.msra.mxu0 0.0
    %1227 = vmatprep.subr.mxu0 0.0
    %1228 = vmatpush1.xpose.msra.mxu0 0.0
    %1229 = vmatprep.subr.mxu0 0.0
    %1230 = vmatpush1.xpose.msra.mxu0 0.0
    %1231 = vmatprep.subr.mxu0 0.0
    %1232 = vmatpush1.xpose.msra.mxu0 0.0
    %1233 = vmatprep.subr.mxu0 0.0
    %1234 = vmatpush1.xpose.msra.mxu0 0.0
    %1235 = vmatprep.subr.mxu0 0.0
    %1236 = vmatpush1.xpose.msra.mxu0 0.0
    %1237 = vmatprep.subr.mxu0 0.0
    %1238 = vmatpush1.xpose.msra.mxu0 0.0
    %1239 = vmatprep.subr.mxu0 0.0
    %1240 = vmatpush1.xpose.msra.mxu0 0.0
    %1241 = vmatprep.subr.mxu0 0.0
    %1242 = vmatpush1.xpose.msra.mxu0 0.0
    %1243 = vmatprep.mubr.f32.mxu0 0.0
    %v1244 = vand.u32 %v1174, 4294901760
    %v1245 = vsub.f32 %v1174, %v1244
    %v1246 = vand.u32 %v1245, 4294901760
    %v1247 = vsub.f32 %v1245, %v1246
    %v1248 = vand.u32 %v1247, 4294901760
    %1249 = vmatmul.mubr.f32.gmra.mrb[0].mxu0 %v1248
    %v1250 = vpop.f32.mrb[0].mxu0
    %v1251 = vadd.f32 0.0, %v1250
    %v1252 = vpop.f32.mrb[0].mxu0
    %1253 = vdwg.mxu0
    %1254 = vmatprep.subr.mxu0 0.0
    %v1255 = vand.u32 %v1176, 4294901760
    %v1256 = vsub.f32 %v1176, %v1255
    %v1257 = vand.u32 %v1256, 4294901760
    %v1258 = vsub.f32 %v1256, %v1257
    %v1259 = vand.u32 %v1258, 4294901760
    %1260 = vmatpush1.xpose.msra.mxu0 %v1259
    %1261 = vmatprep.subr.mxu0 0.0
    %1262 = vmatpush1.xpose.msra.mxu0 0.0
    %1263 = vmatprep.subr.mxu0 0.0
    %1264 = vmatpush1.xpose.msra.mxu0 0.0
    %1265 = vmatprep.subr.mxu0 0.0
    %1266 = vmatpush1.xpose.msra.mxu0 0.0
    %1267 = vmatprep.subr.mxu0 0.0
    %1268 = vmatpush1.xpose.msra.mxu0 0.0
    %1269 = vmatprep.subr.mxu0 0.0
    %1270 = vmatpush1.xpose.msra.mxu0 0.0
    %1271 = vmatprep.subr.mxu0 0.0
    %1272 = vmatpush1.xpose.msra.mxu0 0.0
    %1273 = vmatprep.subr.mxu0 0.0
    %1274 = vmatpush1.xpose.msra.mxu0 0.0
    %1275 = vmatprep.subr.mxu0 0.0
    %1276 = vmatpush1.xpose.msra.mxu0 0.0
    %1277 = vmatprep.subr.mxu0 0.0
    %1278 = vmatpush1.xpose.msra.mxu0 0.0
    %1279 = vmatprep.subr.mxu0 0.0
    %1280 = vmatpush1.xpose.msra.mxu0 0.0
    %1281 = vmatprep.subr.mxu0 0.0
    %1282 = vmatpush1.xpose.msra.mxu0 0.0
    %1283 = vmatprep.subr.mxu0 0.0
    %1284 = vmatpush1.xpose.msra.mxu0 0.0
    %1285 = vmatprep.subr.mxu0 0.0
    %1286 = vmatpush1.xpose.msra.mxu0 0.0
    %1287 = vmatprep.subr.mxu0 0.0
    %1288 = vmatpush1.xpose.msra.mxu0 0.0
    %1289 = vmatprep.subr.mxu0 0.0
    %1290 = vmatpush1.xpose.msra.mxu0 0.0
    %1291 = vmatprep.subr.mxu0 0.0
    %1292 = vmatpush1.xpose.msra.mxu0 0.0
    %1293 = vmatprep.subr.mxu0 0.0
    %1294 = vmatpush1.xpose.msra.mxu0 0.0
    %1295 = vmatprep.subr.mxu0 0.0
    %1296 = vmatpush1.xpose.msra.mxu0 0.0
    %1297 = vmatprep.subr.mxu0 0.0
    %1298 = vmatpush1.xpose.msra.mxu0 0.0
    %1299 = vmatprep.subr.mxu0 0.0
    %1300 = vmatpush1.xpose.msra.mxu0 0.0
    %1301 = vmatprep.subr.mxu0 0.0
    %1302 = vmatpush1.xpose.msra.mxu0 0.0
    %1303 = vmatprep.subr.mxu0 0.0
    %1304 = vmatpush1.xpose.msra.mxu0 0.0
    %1305 = vmatprep.subr.mxu0 0.0
    %1306 = vmatpush1.xpose.msra.mxu0 0.0
    %1307 = vmatprep.subr.mxu0 0.0
    %1308 = vmatpush1.xpose.msra.mxu0 0.0
    %1309 = vmatprep.subr.mxu0 0.0
    %1310 = vmatpush1.xpose.msra.mxu0 0.0
    %1311 = vmatprep.subr.mxu0 0.0
    %1312 = vmatpush1.xpose.msra.mxu0 0.0
    %1313 = vmatprep.subr.mxu0 0.0
    %1314 = vmatpush1.xpose.msra.mxu0 0.0
    %1315 = vmatprep.subr.mxu0 0.0
    %1316 = vmatpush1.xpose.msra.mxu0 0.0
    %1317 = vmatprep.subr.mxu0 0.0
    %1318 = vmatpush1.xpose.msra.mxu0 0.0
    %1319 = vmatprep.subr.mxu0 0.0
    %1320 = vmatpush1.xpose.msra.mxu0 0.0
    %1321 = vmatprep.subr.mxu0 0.0
    %1322 = vmatpush1.xpose.msra.mxu0 0.0
    %1323 = vmatprep.mubr.f32.mxu0 0.0
    %v1324 = vand.u32 %v1174, 4294901760
    %1325 = vmatmul.mubr.f32.gmra.mrb[0].mxu0 %v1324
    %v1326 = vpop.f32.mrb[0].mxu0
    %v1327 = vadd.f32 %v1251, %v1326
    %v1328 = vpop.f32.mrb[0].mxu0
    %1329 = vdwg.mxu0
    %1330 = vmatprep.subr.mxu0 0.0
    %v1331 = vand.u32 %v1176, 4294901760
    %v1332 = vsub.f32 %v1176, %v1331
    %1333 = vmatpush1.xpose.msra.mxu0 %v1332
    %1334 = vmatprep.subr.mxu0 0.0
    %1335 = vmatpush1.xpose.msra.mxu0 0.0
    %1336 = vmatprep.subr.mxu0 0.0
    %1337 = vmatpush1.xpose.msra.mxu0 0.0
    %1338 = vmatprep.subr.mxu0 0.0
    %1339 = vmatpush1.xpose.msra.mxu0 0.0
    %1340 = vmatprep.subr.mxu0 0.0
    %1341 = vmatpush1.xpose.msra.mxu0 0.0
    %1342 = vmatprep.subr.mxu0 0.0
    %1343 = vmatpush1.xpose.msra.mxu0 0.0
    %1344 = vmatprep.subr.mxu0 0.0
    %1345 = vmatpush1.xpose.msra.mxu0 0.0
    %1346 = vmatprep.subr.mxu0 0.0
    %1347 = vmatpush1.xpose.msra.mxu0 0.0
    %1348 = vmatprep.subr.mxu0 0.0
    %1349 = vmatpush1.xpose.msra.mxu0 0.0
    %1350 = vmatprep.subr.mxu0 0.0
    %1351 = vmatpush1.xpose.msra.mxu0 0.0
    %1352 = vmatprep.subr.mxu0 0.0
    %1353 = vmatpush1.xpose.msra.mxu0 0.0
    %1354 = vmatprep.subr.mxu0 0.0
    %1355 = vmatpush1.xpose.msra.mxu0 0.0
    %1356 = vmatprep.subr.mxu0 0.0
    %1357 = vmatpush1.xpose.msra.mxu0 0.0
    %1358 = vmatprep.subr.mxu0 0.0
    %1359 = vmatpush1.xpose.msra.mxu0 0.0
    %1360 = vmatprep.subr.mxu0 0.0
    %1361 = vmatpush1.xpose.msra.mxu0 0.0
    %1362 = vmatprep.subr.mxu0 0.0
    %1363 = vmatpush1.xpose.msra.mxu0 0.0
    %1364 = vmatprep.subr.mxu0 0.0
    %1365 = vmatpush1.xpose.msra.mxu0 0.0
    %1366 = vmatprep.subr.mxu0 0.0
    %1367 = vmatpush1.xpose.msra.mxu0 0.0
    %1368 = vmatprep.subr.mxu0 0.0
    %1369 = vmatpush1.xpose.msra.mxu0 0.0
    %1370 = vmatprep.subr.mxu0 0.0
    %1371 = vmatpush1.xpose.msra.mxu0 0.0
    %1372 = vmatprep.subr.mxu0 0.0
    %1373 = vmatpush1.xpose.msra.mxu0 0.0
    %1374 = vmatprep.subr.mxu0 0.0
    %1375 = vmatpush1.xpose.msra.mxu0 0.0
    %1376 = vmatprep.subr.mxu0 0.0
    %1377 = vmatpush1.xpose.msra.mxu0 0.0
    %1378 = vmatprep.subr.mxu0 0.0
    %1379 = vmatpush1.xpose.msra.mxu0 0.0
    %1380 = vmatprep.subr.mxu0 0.0
    %1381 = vmatpush1.xpose.msra.mxu0 0.0
    %1382 = vmatprep.subr.mxu0 0.0
    %1383 = vmatpush1.xpose.msra.mxu0 0.0
    %1384 = vmatprep.subr.mxu0 0.0
    %1385 = vmatpush1.xpose.msra.mxu0 0.0
    %1386 = vmatprep.subr.mxu0 0.0
    %1387 = vmatpush1.xpose.msra.mxu0 0.0
    %1388 = vmatprep.subr.mxu0 0.0
    %1389 = vmatpush1.xpose.msra.mxu0 0.0
    %1390 = vmatprep.subr.mxu0 0.0
    %1391 = vmatpush1.xpose.msra.mxu0 0.0
    %1392 = vmatprep.subr.mxu0 0.0
    %1393 = vmatpush1.xpose.msra.mxu0 0.0
    %1394 = vmatprep.subr.mxu0 0.0
    %1395 = vmatpush1.xpose.msra.mxu0 0.0
    %1396 = vmatprep.mubr.f32.mxu0 0.0
    %v1397 = vand.u32 %v1174, 4294901760
    %v1398 = vsub.f32 %v1174, %v1397
    %1399 = vmatmul.mubr.f32.gmra.mrb[0].mxu0 %v1398
    %v1400 = vpop.f32.mrb[0].mxu0
    %v1401 = vadd.f32 %v1327, %v1400
    %v1402 = vpop.f32.mrb[0].mxu0
    %1403 = vdwg.mxu0
    %1404 = vmatprep.subr.mxu0 0.0
    %v1405 = vand.u32 %v1176, 4294901760
    %1406 = vmatpush1.xpose.msra.mxu0 %v1405
    %1407 = vmatprep.subr.mxu0 0.0
    %1408 = vmatpush1.xpose.msra.mxu0 0.0
    %1409 = vmatprep.subr.mxu0 0.0
    %1410 = vmatpush1.xpose.msra.mxu0 0.0
    %1411 = vmatprep.subr.mxu0 0.0
    %1412 = vmatpush1.xpose.msra.mxu0 0.0
    %1413 = vmatprep.subr.mxu0 0.0
    %1414 = vmatpush1.xpose.msra.mxu0 0.0
    %1415 = vmatprep.subr.mxu0 0.0
    %1416 = vmatpush1.xpose.msra.mxu0 0.0
    %1417 = vmatprep.subr.mxu0 0.0
    %1418 = vmatpush1.xpose.msra.mxu0 0.0
    %1419 = vmatprep.subr.mxu0 0.0
    %1420 = vmatpush1.xpose.msra.mxu0 0.0
    %1421 = vmatprep.subr.mxu0 0.0
    %1422 = vmatpush1.xpose.msra.mxu0 0.0
    %1423 = vmatprep.subr.mxu0 0.0
    %1424 = vmatpush1.xpose.msra.mxu0 0.0
    %1425 = vmatprep.subr.mxu0 0.0
    %1426 = vmatpush1.xpose.msra.mxu0 0.0
    %1427 = vmatprep.subr.mxu0 0.0
    %1428 = vmatpush1.xpose.msra.mxu0 0.0
    %1429 = vmatprep.subr.mxu0 0.0
    %1430 = vmatpush1.xpose.msra.mxu0 0.0
    %1431 = vmatprep.subr.mxu0 0.0
    %1432 = vmatpush1.xpose.msra.mxu0 0.0
    %1433 = vmatprep.subr.mxu0 0.0
    %1434 = vmatpush1.xpose.msra.mxu0 0.0
    %1435 = vmatprep.subr.mxu0 0.0
    %1436 = vmatpush1.xpose.msra.mxu0 0.0
    %1437 = vmatprep.subr.mxu0 0.0
    %1438 = vmatpush1.xpose.msra.mxu0 0.0
    %1439 = vmatprep.subr.mxu0 0.0
    %1440 = vmatpush1.xpose.msra.mxu0 0.0
    %1441 = vmatprep.subr.mxu0 0.0
    %1442 = vmatpush1.xpose.msra.mxu0 0.0
    %1443 = vmatprep.subr.mxu0 0.0
    %1444 = vmatpush1.xpose.msra.mxu0 0.0
    %1445 = vmatprep.subr.mxu0 0.0
    %1446 = vmatpush1.xpose.msra.mxu0 0.0
    %1447 = vmatprep.subr.mxu0 0.0
    %1448 = vmatpush1.xpose.msra.mxu0 0.0
    %1449 = vmatprep.subr.mxu0 0.0
    %1450 = vmatpush1.xpose.msra.mxu0 0.0
    %1451 = vmatprep.subr.mxu0 0.0
    %1452 = vmatpush1.xpose.msra.mxu0 0.0
    %1453 = vmatprep.subr.mxu0 0.0
    %1454 = vmatpush1.xpose.msra.mxu0 0.0
    %1455 = vmatprep.subr.mxu0 0.0
    %1456 = vmatpush1.xpose.msra.mxu0 0.0
    %1457 = vmatprep.subr.mxu0 0.0
    %1458 = vmatpush1.xpose.msra.mxu0 0.0
    %1459 = vmatprep.subr.mxu0 0.0
    %1460 = vmatpush1.xpose.msra.mxu0 0.0
    %1461 = vmatprep.subr.mxu0 0.0
    %1462 = vmatpush1.xpose.msra.mxu0 0.0
    %1463 = vmatprep.subr.mxu0 0.0
    %1464 = vmatpush1.xpose.msra.mxu0 0.0
    %1465 = vmatprep.subr.mxu0 0.0
    %1466 = vmatpush1.xpose.msra.mxu0 0.0
    %1467 = vmatprep.subr.mxu0 0.0
    %1468 = vmatpush1.xpose.msra.mxu0 0.0
    %1469 = vmatprep.mubr.f32.mxu0 0.0
    %v1470 = vand.u32 %v1174, 4294901760
    %v1471 = vsub.f32 %v1174, %v1470
    %v1472 = vand.u32 %v1471, 4294901760
    %1473 = vmatmul.mubr.f32.gmra.mrb[0].mxu0 %v1472
    %v1474 = vpop.f32.mrb[0].mxu0
    %v1475 = vadd.f32 %v1401, %v1474
    %v1476 = vpop.f32.mrb[0].mxu0
    %1477 = vdwg.mxu0
    %1478 = vmatprep.subr.mxu0 0.0
    %v1479 = vand.u32 %v1176, 4294901760
    %v1480 = vsub.f32 %v1176, %v1479
    %v1481 = vand.u32 %v1480, 4294901760
    %1482 = vmatpush1.xpose.msra.mxu0 %v1481
    %1483 = vmatprep.subr.mxu0 0.0
    %1484 = vmatpush1.xpose.msra.mxu0 0.0
    %1485 = vmatprep.subr.mxu0 0.0
    %1486 = vmatpush1.xpose.msra.mxu0 0.0
    %1487 = vmatprep.subr.mxu0 0.0
    %1488 = vmatpush1.xpose.msra.mxu0 0.0
    %1489 = vmatprep.subr.mxu0 0.0
    %1490 = vmatpush1.xpose.msra.mxu0 0.0
    %1491 = vmatprep.subr.mxu0 0.0
    %1492 = vmatpush1.xpose.msra.mxu0 0.0
    %1493 = vmatprep.subr.mxu0 0.0
    %1494 = vmatpush1.xpose.msra.mxu0 0.0
    %1495 = vmatprep.subr.mxu0 0.0
    %1496 = vmatpush1.xpose.msra.mxu0 0.0
    %1497 = vmatprep.subr.mxu0 0.0
    %1498 = vmatpush1.xpose.msra.mxu0 0.0
    %1499 = vmatprep.subr.mxu0 0.0
    %1500 = vmatpush1.xpose.msra.mxu0 0.0
    %1501 = vmatprep.subr.mxu0 0.0
    %1502 = vmatpush1.xpose.msra.mxu0 0.0
    %1503 = vmatprep.subr.mxu0 0.0
    %1504 = vmatpush1.xpose.msra.mxu0 0.0
    %1505 = vmatprep.subr.mxu0 0.0
    %1506 = vmatpush1.xpose.msra.mxu0 0.0
    %1507 = vmatprep.subr.mxu0 0.0
    %1508 = vmatpush1.xpose.msra.mxu0 0.0
    %1509 = vmatprep.subr.mxu0 0.0
    %1510 = vmatpush1.xpose.msra.mxu0 0.0
    %1511 = vmatprep.subr.mxu0 0.0
    %1512 = vmatpush1.xpose.msra.mxu0 0.0
    %1513 = vmatprep.subr.mxu0 0.0
    %1514 = vmatpush1.xpose.msra.mxu0 0.0
    %1515 = vmatprep.subr.mxu0 0.0
    %1516 = vmatpush1.xpose.msra.mxu0 0.0
    %1517 = vmatprep.subr.mxu0 0.0
    %1518 = vmatpush1.xpose.msra.mxu0 0.0
    %1519 = vmatprep.subr.mxu0 0.0
    %1520 = vmatpush1.xpose.msra.mxu0 0.0
    %1521 = vmatprep.subr.mxu0 0.0
    %1522 = vmatpush1.xpose.msra.mxu0 0.0
    %1523 = vmatprep.subr.mxu0 0.0
    %1524 = vmatpush1.xpose.msra.mxu0 0.0
    %1525 = vmatprep.subr.mxu0 0.0
    %1526 = vmatpush1.xpose.msra.mxu0 0.0
    %1527 = vmatprep.subr.mxu0 0.0
    %1528 = vmatpush1.xpose.msra.mxu0 0.0
    %1529 = vmatprep.subr.mxu0 0.0
    %1530 = vmatpush1.xpose.msra.mxu0 0.0
    %1531 = vmatprep.subr.mxu0 0.0
    %1532 = vmatpush1.xpose.msra.mxu0 0.0
    %1533 = vmatprep.subr.mxu0 0.0
    %1534 = vmatpush1.xpose.msra.mxu0 0.0
    %1535 = vmatprep.subr.mxu0 0.0
    %1536 = vmatpush1.xpose.msra.mxu0 0.0
    %1537 = vmatprep.subr.mxu0 0.0
    %1538 = vmatpush1.xpose.msra.mxu0 0.0
    %1539 = vmatprep.subr.mxu0 0.0
    %1540 = vmatpush1.xpose.msra.mxu0 0.0
    %1541 = vmatprep.subr.mxu0 0.0
    %1542 = vmatpush1.xpose.msra.mxu0 0.0
    %1543 = vmatprep.subr.mxu0 0.0
    %1544 = vmatpush1.xpose.msra.mxu0 0.0
    %1545 = vmatprep.mubr.f32.mxu0 0.0
    %v1546 = vand.u32 %v1174, 4294901760
    %1547 = vmatmul.mubr.f32.gmra.mrb[0].mxu0 %v1546
    %v1548 = vpop.f32.mrb[0].mxu0
    %v1549 = vadd.f32 %v1475, %v1548
    %v1550 = vpop.f32.mrb[0].mxu0
    %1551 = vdwg.mxu0
    %1552 = vmatprep.subr.mxu0 0.0
    %v1553 = vand.u32 %v1176, 4294901760
    %1554 = vmatpush1.xpose.msra.mxu0 %v1553
    %1555 = vmatprep.subr.mxu0 0.0
    %1556 = vmatpush1.xpose.msra.mxu0 0.0
    %1557 = vmatprep.subr.mxu0 0.0
    %1558 = vmatpush1.xpose.msra.mxu0 0.0
    %1559 = vmatprep.subr.mxu0 0.0
    %1560 = vmatpush1.xpose.msra.mxu0 0.0
    %1561 = vmatprep.subr.mxu0 0.0
    %1562 = vmatpush1.xpose.msra.mxu0 0.0
    %1563 = vmatprep.subr.mxu0 0.0
    %1564 = vmatpush1.xpose.msra.mxu0 0.0
    %1565 = vmatprep.subr.mxu0 0.0
    %1566 = vmatpush1.xpose.msra.mxu0 0.0
    %1567 = vmatprep.subr.mxu0 0.0
    %1568 = vmatpush1.xpose.msra.mxu0 0.0
    %1569 = vmatprep.subr.mxu0 0.0
    %1570 = vmatpush1.xpose.msra.mxu0 0.0
    %1571 = vmatprep.subr.mxu0 0.0
    %1572 = vmatpush1.xpose.msra.mxu0 0.0
    %1573 = vmatprep.subr.mxu0 0.0
    %1574 = vmatpush1.xpose.msra.mxu0 0.0
    %1575 = vmatprep.subr.mxu0 0.0
    %1576 = vmatpush1.xpose.msra.mxu0 0.0
    %1577 = vmatprep.subr.mxu0 0.0
    %1578 = vmatpush1.xpose.msra.mxu0 0.0
    %1579 = vmatprep.subr.mxu0 0.0
    %1580 = vmatpush1.xpose.msra.mxu0 0.0
    %1581 = vmatprep.subr.mxu0 0.0
    %1582 = vmatpush1.xpose.msra.mxu0 0.0
    %1583 = vmatprep.subr.mxu0 0.0
    %1584 = vmatpush1.xpose.msra.mxu0 0.0
    %1585 = vmatprep.subr.mxu0 0.0
    %1586 = vmatpush1.xpose.msra.mxu0 0.0
    %1587 = vmatprep.subr.mxu0 0.0
    %1588 = vmatpush1.xpose.msra.mxu0 0.0
    %1589 = vmatprep.subr.mxu0 0.0
    %1590 = vmatpush1.xpose.msra.mxu0 0.0
    %1591 = vmatprep.subr.mxu0 0.0
    %1592 = vmatpush1.xpose.msra.mxu0 0.0
    %1593 = vmatprep.subr.mxu0 0.0
    %1594 = vmatpush1.xpose.msra.mxu0 0.0
    %1595 = vmatprep.subr.mxu0 0.0
    %1596 = vmatpush1.xpose.msra.mxu0 0.0
    %1597 = vmatprep.subr.mxu0 0.0
    %1598 = vmatpush1.xpose.msra.mxu0 0.0
    %1599 = vmatprep.subr.mxu0 0.0
    %1600 = vmatpush1.xpose.msra.mxu0 0.0
    %1601 = vmatprep.subr.mxu0 0.0
    %1602 = vmatpush1.xpose.msra.mxu0 0.0
    %1603 = vmatprep.subr.mxu0 0.0
    %1604 = vmatpush1.xpose.msra.mxu0 0.0
    %1605 = vmatprep.subr.mxu0 0.0
    %1606 = vmatpush1.xpose.msra.mxu0 0.0
    %1607 = vmatprep.subr.mxu0 0.0
    %1608 = vmatpush1.xpose.msra.mxu0 0.0
    %1609 = vmatprep.subr.mxu0 0.0
    %1610 = vmatpush1.xpose.msra.mxu0 0.0
    %1611 = vmatprep.subr.mxu0 0.0
    %1612 = vmatpush1.xpose.msra.mxu0 0.0
    %1613 = vmatprep.subr.mxu0 0.0
    %1614 = vmatpush1.xpose.msra.mxu0 0.0
    %1615 = vmatprep.subr.mxu0 0.0
    %1616 = vmatpush1.xpose.msra.mxu0 0.0
    %1617 = vmatprep.mubr.f32.mxu0 0.0
    %v1618 = vand.u32 %v1174, 4294901760
    %1619 = vmatmul.mubr.f32.gmra.mrb[0].mxu0 %v1618
    %v1620 = vpop.f32.mrb[0].mxu0
    %v1621 = vadd.f32 %v1549, %v1620
    %v1622 = vpop.f32.mrb[0].mxu0
    %1623 = vdwg.mxu0
    %v1624 = vsel %vm720, %v1168, -inf
    %1625 = vmax.xlane.f32.xlu0 %v1624
    %v1626 = vpop.xlane.xlu0 %1625
    %v1627 = vsel %vm720, %v1621, -inf
    %1628 = vmax.xlane.f32.xlu0 %v1627
    %v1629 = vpop.xlane.xlu0 %1628
    %v1630 = vsub.f32 %v1168, %v1626
    %v1631 = vsub.f32 %v1621, %v1629
    %v1632 = vmul.f32 %v1630, 1.442695
    %v1633 = vpow.pop %v1632
    %v1634 = vmul.f32 %v1631, 1.442695
    %v1635 = vpow.pop %v1634
    %v1636 = vsel %vm720, %v1633, 0.0
    %1637 = vadd.xlane.f32.xlu0 %v1636
    %v1638 = vpop.xlane.xlu0 %1637
    %v1639 = vsel %vm720, %v1635, 0.0
    %1640 = vadd.xlane.f32.xlu0 %v1639
    %v1641 = vpop.xlane.xlu0 %1640
    %v1642 = vrcp.pop %v1638
    %v1643 = vrcp.pop %v1641
    %v1644 = vmul.f32 %v1633, %v1642
    %v1645 = vmul.f32 %v1635, %v1643
    %1646 = vrot.lane.b32.xlu0 %v708, 64
    %v1647 = vpop.permute.xlu0 %1646
    %v1650 = vsel %vm720, %v1644, 0
    %1652 = vmatprep.subr.mxu0 0.0
    %v1653 = vand.u32 %v1647, 4294901760
    %1654 = vmatpush1.msra.mxu0 %v1653
    %1655 = vmatprep.subr.mxu0 0.0
    %1656 = vmatpush1.msra.mxu0 0.0
    %1657 = vmatprep.subr.mxu0 0.0
    %1658 = vmatpush1.msra.mxu0 0.0
    %1659 = vmatprep.subr.mxu0 0.0
    %1660 = vmatpush1.msra.mxu0 0.0
    %1661 = vmatprep.subr.mxu0 0.0
    %1662 = vmatpush1.msra.mxu0 0.0
    %1663 = vmatprep.subr.mxu0 0.0
    %1664 = vmatpush1.msra.mxu0 0.0
    %1665 = vmatprep.subr.mxu0 0.0
    %1666 = vmatpush1.msra.mxu0 0.0
    %1667 = vmatprep.subr.mxu0 0.0
    %1668 = vmatpush1.msra.mxu0 0.0
    %1669 = vmatprep.subr.mxu0 0.0
    %1670 = vmatpush1.msra.mxu0 0.0
    %1671 = vmatprep.subr.mxu0 0.0
    %1672 = vmatpush1.msra.mxu0 0.0
    %1673 = vmatprep.subr.mxu0 0.0
    %1674 = vmatpush1.msra.mxu0 0.0
    %1675 = vmatprep.subr.mxu0 0.0
    %1676 = vmatpush1.msra.mxu0 0.0
    %1677 = vmatprep.subr.mxu0 0.0
    %1678 = vmatpush1.msra.mxu0 0.0
    %1679 = vmatprep.subr.mxu0 0.0
    %1680 = vmatpush1.msra.mxu0 0.0
    %1681 = vmatprep.subr.mxu0 0.0
    %1682 = vmatpush1.msra.mxu0 0.0
    %1683 = vmatprep.subr.mxu0 0.0
    %1684 = vmatpush1.msra.mxu0 0.0
    %1685 = vmatprep.subr.mxu0 0.0
    %1686 = vmatpush1.msra.mxu0 0.0
    %1687 = vmatprep.subr.mxu0 0.0
    %1688 = vmatpush1.msra.mxu0 0.0
    %1689 = vmatprep.subr.mxu0 0.0
    %1690 = vmatpush1.msra.mxu0 0.0
    %1691 = vmatprep.subr.mxu0 0.0
    %1692 = vmatpush1.msra.mxu0 0.0
    %1693 = vmatprep.subr.mxu0 0.0
    %1694 = vmatpush1.msra.mxu0 0.0
    %1695 = vmatprep.subr.mxu0 0.0
    %1696 = vmatpush1.msra.mxu0 0.0
    %1697 = vmatprep.subr.mxu0 0.0
    %1698 = vmatpush1.msra.mxu0 0.0
    %1699 = vmatprep.subr.mxu0 0.0
    %1700 = vmatpush1.msra.mxu0 0.0
    %1701 = vmatprep.subr.mxu0 0.0
    %1702 = vmatpush1.msra.mxu0 0.0
    %1703 = vmatprep.subr.mxu0 0.0
    %1704 = vmatpush1.msra.mxu0 0.0
    %1705 = vmatprep.subr.mxu0 0.0
    %1706 = vmatpush1.msra.mxu0 0.0
    %1707 = vmatprep.subr.mxu0 0.0
    %1708 = vmatpush1.msra.mxu0 0.0
    %1709 = vmatprep.subr.mxu0 0.0
    %1710 = vmatpush1.msra.mxu0 0.0
    %1711 = vmatprep.subr.mxu0 0.0
    %1712 = vmatpush1.msra.mxu0 0.0
    %1713 = vmatprep.subr.mxu0 0.0
    %1714 = vmatpush1.msra.mxu0 0.0
    %1715 = vmatprep.subr.mxu0 0.0
    %1716 = vmatpush1.msra.mxu0 0.0
    %1717 = vmatprep.mubr.f32.mxu0 0.0
    %v1718 = vand.u32 %v1650, 4294901760
    %v1719 = vsub.f32 %v1650, %v1718
    %v1720 = vand.u32 %v1719, 4294901760
    %v1721 = vsub.f32 %v1719, %v1720
    %v1722 = vand.u32 %v1721, 4294901760
    %1723 = vmatmul.mubr.f32.gmra.mrb[0].mxu0 %v1722
    %v1724 = vpop.f32.mrb[0].mxu0
    %v1725 = vadd.f32 0.0, %v1724
    %v1726 = vpop.f32.mrb[0].mxu0
    %1727 = vdwg.mxu0
    %1728 = vmatprep.subr.mxu0 0.0
    %v1729 = vand.u32 %v1647, 4294901760
    %v1730 = vsub.f32 %v1647, %v1729
    %v1731 = vand.u32 %v1730, 4294901760
    %v1732 = vsub.f32 %v1730, %v1731
    %v1733 = vand.u32 %v1732, 4294901760
    %1734 = vmatpush1.msra.mxu0 %v1733
    %1735 = vmatprep.subr.mxu0 0.0
    %1736 = vmatpush1.msra.mxu0 0.0
    %1737 = vmatprep.subr.mxu0 0.0
    %1738 = vmatpush1.msra.mxu0 0.0
    %1739 = vmatprep.subr.mxu0 0.0
    %1740 = vmatpush1.msra.mxu0 0.0
    %1741 = vmatprep.subr.mxu0 0.0
    %1742 = vmatpush1.msra.mxu0 0.0
    %1743 = vmatprep.subr.mxu0 0.0
    %1744 = vmatpush1.msra.mxu0 0.0
    %1745 = vmatprep.subr.mxu0 0.0
    %1746 = vmatpush1.msra.mxu0 0.0
    %1747 = vmatprep.subr.mxu0 0.0
    %1748 = vmatpush1.msra.mxu0 0.0
    %1749 = vmatprep.subr.mxu0 0.0
    %1750 = vmatpush1.msra.mxu0 0.0
    %1751 = vmatprep.subr.mxu0 0.0
    %1752 = vmatpush1.msra.mxu0 0.0
    %1753 = vmatprep.subr.mxu0 0.0
    %1754 = vmatpush1.msra.mxu0 0.0
    %1755 = vmatprep.subr.mxu0 0.0
    %1756 = vmatpush1.msra.mxu0 0.0
    %1757 = vmatprep.subr.mxu0 0.0
    %1758 = vmatpush1.msra.mxu0 0.0
    %1759 = vmatprep.subr.mxu0 0.0
    %1760 = vmatpush1.msra.mxu0 0.0
    %1761 = vmatprep.subr.mxu0 0.0
    %1762 = vmatpush1.msra.mxu0 0.0
    %1763 = vmatprep.subr.mxu0 0.0
    %1764 = vmatpush1.msra.mxu0 0.0
    %1765 = vmatprep.subr.mxu0 0.0
    %1766 = vmatpush1.msra.mxu0 0.0
    %1767 = vmatprep.subr.mxu0 0.0
    %1768 = vmatpush1.msra.mxu0 0.0
    %1769 = vmatprep.subr.mxu0 0.0
    %1770 = vmatpush1.msra.mxu0 0.0
    %1771 = vmatprep.subr.mxu0 0.0
    %1772 = vmatpush1.msra.mxu0 0.0
    %1773 = vmatprep.subr.mxu0 0.0
    %1774 = vmatpush1.msra.mxu0 0.0
    %1775 = vmatprep.subr.mxu0 0.0
    %1776 = vmatpush1.msra.mxu0 0.0
    %1777 = vmatprep.subr.mxu0 0.0
    %1778 = vmatpush1.msra.mxu0 0.0
    %1779 = vmatprep.subr.mxu0 0.0
    %1780 = vmatpush1.msra.mxu0 0.0
    %1781 = vmatprep.subr.mxu0 0.0
    %1782 = vmatpush1.msra.mxu0 0.0
    %1783 = vmatprep.subr.mxu0 0.0
    %1784 = vmatpush1.msra.mxu0 0.0
    %1785 = vmatprep.subr.mxu0 0.0
    %1786 = vmatpush1.msra.mxu0 0.0
    %1787 = vmatprep.subr.mxu0 0.0
    %1788 = vmatpush1.msra.mxu0 0.0
    %1789 = vmatprep.subr.mxu0 0.0
    %1790 = vmatpush1.msra.mxu0 0.0
    %1791 = vmatprep.subr.mxu0 0.0
    %1792 = vmatpush1.msra.mxu0 0.0
    %1793 = vmatprep.subr.mxu0 0.0
    %1794 = vmatpush1.msra.mxu0 0.0
    %1795 = vmatprep.subr.mxu0 0.0
    %1796 = vmatpush1.msra.mxu0 0.0
    %1797 = vmatprep.mubr.f32.mxu0 0.0
    %v1798 = vand.u32 %v1650, 4294901760
    %1799 = vmatmul.mubr.f32.gmra.mrb[0].mxu0 %v1798
    %v1800 = vpop.f32.mrb[0].mxu0
    %v1801 = vadd.f32 %v1725, %v1800
    %v1802 = vpop.f32.mrb[0].mxu0
    %1803 = vdwg.mxu0
    %1804 = vmatprep.subr.mxu0 0.0
    %v1805 = vand.u32 %v1647, 4294901760
    %v1806 = vsub.f32 %v1647, %v1805
    %1807 = vmatpush1.msra.mxu0 %v1806
    %1808 = vmatprep.subr.mxu0 0.0
    %1809 = vmatpush1.msra.mxu0 0.0
    %1810 = vmatprep.subr.mxu0 0.0
    %1811 = vmatpush1.msra.mxu0 0.0
    %1812 = vmatprep.subr.mxu0 0.0
    %1813 = vmatpush1.msra.mxu0 0.0
    %1814 = vmatprep.subr.mxu0 0.0
    %1815 = vmatpush1.msra.mxu0 0.0
    %1816 = vmatprep.subr.mxu0 0.0
    %1817 = vmatpush1.msra.mxu0 0.0
    %1818 = vmatprep.subr.mxu0 0.0
    %1819 = vmatpush1.msra.mxu0 0.0
    %1820 = vmatprep.subr.mxu0 0.0
    %1821 = vmatpush1.msra.mxu0 0.0
    %1822 = vmatprep.subr.mxu0 0.0
    %1823 = vmatpush1.msra.mxu0 0.0
    %1824 = vmatprep.subr.mxu0 0.0
    %1825 = vmatpush1.msra.mxu0 0.0
    %1826 = vmatprep.subr.mxu0 0.0
    %1827 = vmatpush1.msra.mxu0 0.0
    %1828 = vmatprep.subr.mxu0 0.0
    %1829 = vmatpush1.msra.mxu0 0.0
    %1830 = vmatprep.subr.mxu0 0.0
    %1831 = vmatpush1.msra.mxu0 0.0
    %1832 = vmatprep.subr.mxu0 0.0
    %1833 = vmatpush1.msra.mxu0 0.0
    %1834 = vmatprep.subr.mxu0 0.0
    %1835 = vmatpush1.msra.mxu0 0.0
    %1836 = vmatprep.subr.mxu0 0.0
    %1837 = vmatpush1.msra.mxu0 0.0
    %1838 = vmatprep.subr.mxu0 0.0
    %1839 = vmatpush1.msra.mxu0 0.0
    %1840 = vmatprep.subr.mxu0 0.0
    %1841 = vmatpush1.msra.mxu0 0.0
    %1842 = vmatprep.subr.mxu0 0.0
    %1843 = vmatpush1.msra.mxu0 0.0
    %1844 = vmatprep.subr.mxu0 0.0
    %1845 = vmatpush1.msra.mxu0 0.0
    %1846 = vmatprep.subr.mxu0 0.0
    %1847 = vmatpush1.msra.mxu0 0.0
    %1848 = vmatprep.subr.mxu0 0.0
    %1849 = vmatpush1.msra.mxu0 0.0
    %1850 = vmatprep.subr.mxu0 0.0
    %1851 = vmatpush1.msra.mxu0 0.0
    %1852 = vmatprep.subr.mxu0 0.0
    %1853 = vmatpush1.msra.mxu0 0.0
    %1854 = vmatprep.subr.mxu0 0.0
    %1855 = vmatpush1.msra.mxu0 0.0
    %1856 = vmatprep.subr.mxu0 0.0
    %1857 = vmatpush1.msra.mxu0 0.0
    %1858 = vmatprep.subr.mxu0 0.0
    %1859 = vmatpush1.msra.mxu0 0.0
    %1860 = vmatprep.subr.mxu0 0.0
    %1861 = vmatpush1.msra.mxu0 0.0
    %1862 = vmatprep.subr.mxu0 0.0
    %1863 = vmatpush1.msra.mxu0 0.0
    %1864 = vmatprep.subr.mxu0 0.0
    %1865 = vmatpush1.msra.mxu0 0.0
    %1866 = vmatprep.subr.mxu0 0.0
    %1867 = vmatpush1.msra.mxu0 0.0
    %1868 = vmatprep.subr.mxu0 0.0
    %1869 = vmatpush1.msra.mxu0 0.0
    %1870 = vmatprep.mubr.f32.mxu0 0.0
    %v1871 = vand.u32 %v1650, 4294901760
    %v1872 = vsub.f32 %v1650, %v1871
    %1873 = vmatmul.mubr.f32.gmra.mrb[0].mxu0 %v1872
    %v1874 = vpop.f32.mrb[0].mxu0
    %v1875 = vadd.f32 %v1801, %v1874
    %v1876 = vpop.f32.mrb[0].mxu0
    %1877 = vdwg.mxu0
    %1878 = vmatprep.subr.mxu0 0.0
    %v1879 = vand.u32 %v1647, 4294901760
    %1880 = vmatpush1.msra.mxu0 %v1879
    %1881 = vmatprep.subr.mxu0 0.0
    %1882 = vmatpush1.msra.mxu0 0.0
    %1883 = vmatprep.subr.mxu0 0.0
    %1884 = vmatpush1.msra.mxu0 0.0
    %1885 = vmatprep.subr.mxu0 0.0
    %1886 = vmatpush1.msra.mxu0 0.0
    %1887 = vmatprep.subr.mxu0 0.0
    %1888 = vmatpush1.msra.mxu0 0.0
    %1889 = vmatprep.subr.mxu0 0.0
    %1890 = vmatpush1.msra.mxu0 0.0
    %1891 = vmatprep.subr.mxu0 0.0
    %1892 = vmatpush1.msra.mxu0 0.0
    %1893 = vmatprep.subr.mxu0 0.0
    %1894 = vmatpush1.msra.mxu0 0.0
    %1895 = vmatprep.subr.mxu0 0.0
    %1896 = vmatpush1.msra.mxu0 0.0
    %1897 = vmatprep.subr.mxu0 0.0
    %1898 = vmatpush1.msra.mxu0 0.0
    %1899 = vmatprep.subr.mxu0 0.0
    %1900 = vmatpush1.msra.mxu0 0.0
    %1901 = vmatprep.subr.mxu0 0.0
    %1902 = vmatpush1.msra.mxu0 0.0
    %1903 = vmatprep.subr.mxu0 0.0
    %1904 = vmatpush1.msra.mxu0 0.0
    %1905 = vmatprep.subr.mxu0 0.0
    %1906 = vmatpush1.msra.mxu0 0.0
    %1907 = vmatprep.subr.mxu0 0.0
    %1908 = vmatpush1.msra.mxu0 0.0
    %1909 = vmatprep.subr.mxu0 0.0
    %1910 = vmatpush1.msra.mxu0 0.0
    %1911 = vmatprep.subr.mxu0 0.0
    %1912 = vmatpush1.msra.mxu0 0.0
    %1913 = vmatprep.subr.mxu0 0.0
    %1914 = vmatpush1.msra.mxu0 0.0
    %1915 = vmatprep.subr.mxu0 0.0
    %1916 = vmatpush1.msra.mxu0 0.0
    %1917 = vmatprep.subr.mxu0 0.0
    %1918 = vmatpush1.msra.mxu0 0.0
    %1919 = vmatprep.subr.mxu0 0.0
    %1920 = vmatpush1.msra.mxu0 0.0
    %1921 = vmatprep.subr.mxu0 0.0
    %1922 = vmatpush1.msra.mxu0 0.0
    %1923 = vmatprep.subr.mxu0 0.0
    %1924 = vmatpush1.msra.mxu0 0.0
    %1925 = vmatprep.subr.mxu0 0.0
    %1926 = vmatpush1.msra.mxu0 0.0
    %1927 = vmatprep.subr.mxu0 0.0
    %1928 = vmatpush1.msra.mxu0 0.0
    %1929 = vmatprep.subr.mxu0 0.0
    %1930 = vmatpush1.msra.mxu0 0.0
    %1931 = vmatprep.subr.mxu0 0.0
    %1932 = vmatpush1.msra.mxu0 0.0
    %1933 = vmatprep.subr.mxu0 0.0
    %1934 = vmatpush1.msra.mxu0 0.0
    %1935 = vmatprep.subr.mxu0 0.0
    %1936 = vmatpush1.msra.mxu0 0.0
    %1937 = vmatprep.subr.mxu0 0.0
    %1938 = vmatpush1.msra.mxu0 0.0
    %1939 = vmatprep.subr.mxu0 0.0
    %1940 = vmatpush1.msra.mxu0 0.0
    %1941 = vmatprep.subr.mxu0 0.0
    %1942 = vmatpush1.msra.mxu0 0.0
    %1943 = vmatprep.mubr.f32.mxu0 0.0
    %v1944 = vand.u32 %v1650, 4294901760
    %v1945 = vsub.f32 %v1650, %v1944
    %v1946 = vand.u32 %v1945, 4294901760
    %1947 = vmatmul.mubr.f32.gmra.mrb[0].mxu0 %v1946
    %v1948 = vpop.f32.mrb[0].mxu0
    %v1949 = vadd.f32 %v1875, %v1948
    %v1950 = vpop.f32.mrb[0].mxu0
    %1951 = vdwg.mxu0
    %1952 = vmatprep.subr.mxu0 0.0
    %v1953 = vand.u32 %v1647, 4294901760
    %v1954 = vsub.f32 %v1647, %v1953
    %v1955 = vand.u32 %v1954, 4294901760
    %1956 = vmatpush1.msra.mxu0 %v1955
    %1957 = vmatprep.subr.mxu0 0.0
    %1958 = vmatpush1.msra.mxu0 0.0
    %1959 = vmatprep.subr.mxu0 0.0
    %1960 = vmatpush1.msra.mxu0 0.0
    %1961 = vmatprep.subr.mxu0 0.0
    %1962 = vmatpush1.msra.mxu0 0.0
    %1963 = vmatprep.subr.mxu0 0.0
    %1964 = vmatpush1.msra.mxu0 0.0
    %1965 = vmatprep.subr.mxu0 0.0
    %1966 = vmatpush1.msra.mxu0 0.0
    %1967 = vmatprep.subr.mxu0 0.0
    %1968 = vmatpush1.msra.mxu0 0.0
    %1969 = vmatprep.subr.mxu0 0.0
    %1970 = vmatpush1.msra.mxu0 0.0
    %1971 = vmatprep.subr.mxu0 0.0
    %1972 = vmatpush1.msra.mxu0 0.0
    %1973 = vmatprep.subr.mxu0 0.0
    %1974 = vmatpush1.msra.mxu0 0.0
    %1975 = vmatprep.subr.mxu0 0.0
    %1976 = vmatpush1.msra.mxu0 0.0
    %1977 = vmatprep.subr.mxu0 0.0
    %1978 = vmatpush1.msra.mxu0 0.0
    %1979 = vmatprep.subr.mxu0 0.0
    %1980 = vmatpush1.msra.mxu0 0.0
    %1981 = vmatprep.subr.mxu0 0.0
    %1982 = vmatpush1.msra.mxu0 0.0
    %1983 = vmatprep.subr.mxu0 0.0
    %1984 = vmatpush1.msra.mxu0 0.0
    %1985 = vmatprep.subr.mxu0 0.0
    %1986 = vmatpush1.msra.mxu0 0.0
    %1987 = vmatprep.subr.mxu0 0.0
    %1988 = vmatpush1.msra.mxu0 0.0
    %1989 = vmatprep.subr.mxu0 0.0
    %1990 = vmatpush1.msra.mxu0 0.0
    %1991 = vmatprep.subr.mxu0 0.0
    %1992 = vmatpush1.msra.mxu0 0.0
    %1993 = vmatprep.subr.mxu0 0.0
    %1994 = vmatpush1.msra.mxu0 0.0
    %1995 = vmatprep.subr.mxu0 0.0
    %1996 = vmatpush1.msra.mxu0 0.0
    %1997 = vmatprep.subr.mxu0 0.0
    %1998 = vmatpush1.msra.mxu0 0.0
    %1999 = vmatprep.subr.mxu0 0.0
    %2000 = vmatpush1.msra.mxu0 0.0
    %2001 = vmatprep.subr.mxu0 0.0
    %2002 = vmatpush1.msra.mxu0 0.0
    %2003 = vmatprep.subr.mxu0 0.0
    %2004 = vmatpush1.msra.mxu0 0.0
    %2005 = vmatprep.subr.mxu0 0.0
    %2006 = vmatpush1.msra.mxu0 0.0
    %2007 = vmatprep.subr.mxu0 0.0
    %2008 = vmatpush1.msra.mxu0 0.0
    %2009 = vmatprep.subr.mxu0 0.0
    %2010 = vmatpush1.msra.mxu0 0.0
    %2011 = vmatprep.subr.mxu0 0.0
    %2012 = vmatpush1.msra.mxu0 0.0
    %2013 = vmatprep.subr.mxu0 0.0
    %2014 = vmatpush1.msra.mxu0 0.0
    %2015 = vmatprep.subr.mxu0 0.0
    %2016 = vmatpush1.msra.mxu0 0.0
    %2017 = vmatprep.subr.mxu0 0.0
    %2018 = vmatpush1.msra.mxu0 0.0
    %2019 = vmatprep.mubr.f32.mxu0 0.0
    %v2020 = vand.u32 %v1650, 4294901760
    %2021 = vmatmul.mubr.f32.gmra.mrb[0].mxu0 %v2020
    %v2022 = vpop.f32.mrb[0].mxu0
    %v2023 = vadd.f32 %v1949, %v2022
    %v2024 = vpop.f32.mrb[0].mxu0
    %2025 = vdwg.mxu0
    %2026 = vmatprep.subr.mxu0 0.0
    %v2027 = vand.u32 %v1647, 4294901760
    %2028 = vmatpush1.msra.mxu0 %v2027
    %2029 = vmatprep.subr.mxu0 0.0
    %2030 = vmatpush1.msra.mxu0 0.0
    %2031 = vmatprep.subr.mxu0 0.0
    %2032 = vmatpush1.msra.mxu0 0.0
    %2033 = vmatprep.subr.mxu0 0.0
    %2034 = vmatpush1.msra.mxu0 0.0
    %2035 = vmatprep.subr.mxu0 0.0
    %2036 = vmatpush1.msra.mxu0 0.0
    %2037 = vmatprep.subr.mxu0 0.0
    %2038 = vmatpush1.msra.mxu0 0.0
    %2039 = vmatprep.subr.mxu0 0.0
    %2040 = vmatpush1.msra.mxu0 0.0
    %2041 = vmatprep.subr.mxu0 0.0
    %2042 = vmatpush1.msra.mxu0 0.0
    %2043 = vmatprep.subr.mxu0 0.0
    %2044 = vmatpush1.msra.mxu0 0.0
    %2045 = vmatprep.subr.mxu0 0.0
    %2046 = vmatpush1.msra.mxu0 0.0
    %2047 = vmatprep.subr.mxu0 0.0
    %2048 = vmatpush1.msra.mxu0 0.0
    %2049 = vmatprep.subr.mxu0 0.0
    %2050 = vmatpush1.msra.mxu0 0.0
    %2051 = vmatprep.subr.mxu0 0.0
    %2052 = vmatpush1.msra.mxu0 0.0
    %2053 = vmatprep.subr.mxu0 0.0
    %2054 = vmatpush1.msra.mxu0 0.0
    %2055 = vmatprep.subr.mxu0 0.0
    %2056 = vmatpush1.msra.mxu0 0.0
    %2057 = vmatprep.subr.mxu0 0.0
    %2058 = vmatpush1.msra.mxu0 0.0
    %2059 = vmatprep.subr.mxu0 0.0
    %2060 = vmatpush1.msra.mxu0 0.0
    %2061 = vmatprep.subr.mxu0 0.0
    %2062 = vmatpush1.msra.mxu0 0.0
    %2063 = vmatprep.subr.mxu0 0.0
    %2064 = vmatpush1.msra.mxu0 0.0
    %2065 = vmatprep.subr.mxu0 0.0
    %2066 = vmatpush1.msra.mxu0 0.0
    %2067 = vmatprep.subr.mxu0 0.0
    %2068 = vmatpush1.msra.mxu0 0.0
    %2069 = vmatprep.subr.mxu0 0.0
    %2070 = vmatpush1.msra.mxu0 0.0
    %2071 = vmatprep.subr.mxu0 0.0
    %2072 = vmatpush1.msra.mxu0 0.0
    %2073 = vmatprep.subr.mxu0 0.0
    %2074 = vmatpush1.msra.mxu0 0.0
    %2075 = vmatprep.subr.mxu0 0.0
    %2076 = vmatpush1.msra.mxu0 0.0
    %2077 = vmatprep.subr.mxu0 0.0
    %2078 = vmatpush1.msra.mxu0 0.0
    %2079 = vmatprep.subr.mxu0 0.0
    %2080 = vmatpush1.msra.mxu0 0.0
    %2081 = vmatprep.subr.mxu0 0.0
    %2082 = vmatpush1.msra.mxu0 0.0
    %2083 = vmatprep.subr.mxu0 0.0
    %2084 = vmatpush1.msra.mxu0 0.0
    %2085 = vmatprep.subr.mxu0 0.0
    %2086 = vmatpush1.msra.mxu0 0.0
    %2087 = vmatprep.subr.mxu0 0.0
    %2088 = vmatpush1.msra.mxu0 0.0
    %2089 = vmatprep.subr.mxu0 0.0
    %2090 = vmatpush1.msra.mxu0 0.0
    %2091 = vmatprep.mubr.f32.mxu0 0.0
    %v2092 = vand.u32 %v1650, 4294901760
    %2093 = vmatmul.mubr.f32.gmra.mrb[0].mxu0 %v2092
    %v2094 = vpop.f32.mrb[0].mxu0
    %v2095 = vadd.f32 %v2023, %v2094
    %v2096 = vpop.f32.mrb[0].mxu0
    %2097 = vdwg.mxu0
    %2098 = vrot.lane.b32.xlu0 %v714, 64
    %v2099 = vpop.permute.xlu0 %2098
    %v2102 = vsel %vm720, %v1645, 0
    %2104 = vmatprep.subr.mxu0 0.0
    %v2105 = vand.u32 %v2099, 4294901760
    %2106 = vmatpush1.msra.mxu0 %v2105
    %2107 = vmatprep.subr.mxu0 0.0
    %2108 = vmatpush1.msra.mxu0 0.0
    %2109 = vmatprep.subr.mxu0 0.0
    %2110 = vmatpush1.msra.mxu0 0.0
    %2111 = vmatprep.subr.mxu0 0.0
    %2112 = vmatpush1.msra.mxu0 0.0
    %2113 = vmatprep.subr.mxu0 0.0
    %2114 = vmatpush1.msra.mxu0 0.0
    %2115 = vmatprep.subr.mxu0 0.0
    %2116 = vmatpush1.msra.mxu0 0.0
    %2117 = vmatprep.subr.mxu0 0.0
    %2118 = vmatpush1.msra.mxu0 0.0
    %2119 = vmatprep.subr.mxu0 0.0
    %2120 = vmatpush1.msra.mxu0 0.0
    %2121 = vmatprep.subr.mxu0 0.0
    %2122 = vmatpush1.msra.mxu0 0.0
    %2123 = vmatprep.subr.mxu0 0.0
    %2124 = vmatpush1.msra.mxu0 0.0
    %2125 = vmatprep.subr.mxu0 0.0
    %2126 = vmatpush1.msra.mxu0 0.0
    %2127 = vmatprep.subr.mxu0 0.0
    %2128 = vmatpush1.msra.mxu0 0.0
    %2129 = vmatprep.subr.mxu0 0.0
    %2130 = vmatpush1.msra.mxu0 0.0
    %2131 = vmatprep.subr.mxu0 0.0
    %2132 = vmatpush1.msra.mxu0 0.0
    %2133 = vmatprep.subr.mxu0 0.0
    %2134 = vmatpush1.msra.mxu0 0.0
    %2135 = vmatprep.subr.mxu0 0.0
    %2136 = vmatpush1.msra.mxu0 0.0
    %2137 = vmatprep.subr.mxu0 0.0
    %2138 = vmatpush1.msra.mxu0 0.0
    %2139 = vmatprep.subr.mxu0 0.0
    %2140 = vmatpush1.msra.mxu0 0.0
    %2141 = vmatprep.subr.mxu0 0.0
    %2142 = vmatpush1.msra.mxu0 0.0
    %2143 = vmatprep.subr.mxu0 0.0
    %2144 = vmatpush1.msra.mxu0 0.0
    %2145 = vmatprep.subr.mxu0 0.0
    %2146 = vmatpush1.msra.mxu0 0.0
    %2147 = vmatprep.subr.mxu0 0.0
    %2148 = vmatpush1.msra.mxu0 0.0
    %2149 = vmatprep.subr.mxu0 0.0
    %2150 = vmatpush1.msra.mxu0 0.0
    %2151 = vmatprep.subr.mxu0 0.0
    %2152 = vmatpush1.msra.mxu0 0.0
    %2153 = vmatprep.subr.mxu0 0.0
    %2154 = vmatpush1.msra.mxu0 0.0
    %2155 = vmatprep.subr.mxu0 0.0
    %2156 = vmatpush1.msra.mxu0 0.0
    %2157 = vmatprep.subr.mxu0 0.0
    %2158 = vmatpush1.msra.mxu0 0.0
    %2159 = vmatprep.subr.mxu0 0.0
    %2160 = vmatpush1.msra.mxu0 0.0
    %2161 = vmatprep.subr.mxu0 0.0
    %2162 = vmatpush1.msra.mxu0 0.0
    %2163 = vmatprep.subr.mxu0 0.0
    %2164 = vmatpush1.msra.mxu0 0.0
    %2165 = vmatprep.subr.mxu0 0.0
    %2166 = vmatpush1.msra.mxu0 0.0
    %2167 = vmatprep.subr.mxu0 0.0
    %2168 = vmatpush1.msra.mxu0 0.0
    %2169 = vmatprep.mubr.f32.mxu0 0.0
    %v2170 = vand.u32 %v2102, 4294901760
    %v2171 = vsub.f32 %v2102, %v2170
    %v2172 = vand.u32 %v2171, 4294901760
    %v2173 = vsub.f32 %v2171, %v2172
    %v2174 = vand.u32 %v2173, 4294901760
    %2175 = vmatmul.mubr.f32.gmra.mrb[0].mxu0 %v2174
    %v2176 = vpop.f32.mrb[0].mxu0
    %v2177 = vadd.f32 0.0, %v2176
    %v2178 = vpop.f32.mrb[0].mxu0
    %2179 = vdwg.mxu0
    %2180 = vmatprep.subr.mxu0 0.0
    %v2181 = vand.u32 %v2099, 4294901760
    %v2182 = vsub.f32 %v2099, %v2181
    %v2183 = vand.u32 %v2182, 4294901760
    %v2184 = vsub.f32 %v2182, %v2183
    %v2185 = vand.u32 %v2184, 4294901760
    %2186 = vmatpush1.msra.mxu0 %v2185
    %2187 = vmatprep.subr.mxu0 0.0
    %2188 = vmatpush1.msra.mxu0 0.0
    %2189 = vmatprep.subr.mxu0 0.0
    %2190 = vmatpush1.msra.mxu0 0.0
    %2191 = vmatprep.subr.mxu0 0.0
    %2192 = vmatpush1.msra.mxu0 0.0
    %2193 = vmatprep.subr.mxu0 0.0
    %2194 = vmatpush1.msra.mxu0 0.0
    %2195 = vmatprep.subr.mxu0 0.0
    %2196 = vmatpush1.msra.mxu0 0.0
    %2197 = vmatprep.subr.mxu0 0.0
    %2198 = vmatpush1.msra.mxu0 0.0
    %2199 = vmatprep.subr.mxu0 0.0
    %2200 = vmatpush1.msra.mxu0 0.0
    %2201 = vmatprep.subr.mxu0 0.0
    %2202 = vmatpush1.msra.mxu0 0.0
    %2203 = vmatprep.subr.mxu0 0.0
    %2204 = vmatpush1.msra.mxu0 0.0
    %2205 = vmatprep.subr.mxu0 0.0
    %2206 = vmatpush1.msra.mxu0 0.0
    %2207 = vmatprep.subr.mxu0 0.0
    %2208 = vmatpush1.msra.mxu0 0.0
    %2209 = vmatprep.subr.mxu0 0.0
    %2210 = vmatpush1.msra.mxu0 0.0
    %2211 = vmatprep.subr.mxu0 0.0
    %2212 = vmatpush1.msra.mxu0 0.0
    %2213 = vmatprep.subr.mxu0 0.0
    %2214 = vmatpush1.msra.mxu0 0.0
    %2215 = vmatprep.subr.mxu0 0.0
    %2216 = vmatpush1.msra.mxu0 0.0
    %2217 = vmatprep.subr.mxu0 0.0
    %2218 = vmatpush1.msra.mxu0 0.0
    %2219 = vmatprep.subr.mxu0 0.0
    %2220 = vmatpush1.msra.mxu0 0.0
    %2221 = vmatprep.subr.mxu0 0.0
    %2222 = vmatpush1.msra.mxu0 0.0
    %2223 = vmatprep.subr.mxu0 0.0
    %2224 = vmatpush1.msra.mxu0 0.0
    %2225 = vmatprep.subr.mxu0 0.0
    %2226 = vmatpush1.msra.mxu0 0.0
    %2227 = vmatprep.subr.mxu0 0.0
    %2228 = vmatpush1.msra.mxu0 0.0
    %2229 = vmatprep.subr.mxu0 0.0
    %2230 = vmatpush1.msra.mxu0 0.0
    %2231 = vmatprep.subr.mxu0 0.0
    %2232 = vmatpush1.msra.mxu0 0.0
    %2233 = vmatprep.subr.mxu0 0.0
    %2234 = vmatpush1.msra.mxu0 0.0
    %2235 = vmatprep.subr.mxu0 0.0
    %2236 = vmatpush1.msra.mxu0 0.0
    %2237 = vmatprep.subr.mxu0 0.0
    %2238 = vmatpush1.msra.mxu0 0.0
    %2239 = vmatprep.subr.mxu0 0.0
    %2240 = vmatpush1.msra.mxu0 0.0
    %2241 = vmatprep.subr.mxu0 0.0
    %2242 = vmatpush1.msra.mxu0 0.0
    %2243 = vmatprep.subr.mxu0 0.0
    %2244 = vmatpush1.msra.mxu0 0.0
    %2245 = vmatprep.subr.mxu0 0.0
    %2246 = vmatpush1.msra.mxu0 0.0
    %2247 = vmatprep.subr.mxu0 0.0
    %2248 = vmatpush1.msra.mxu0 0.0
    %2249 = vmatprep.mubr.f32.mxu0 0.0
    %v2250 = vand.u32 %v2102, 4294901760
    %2251 = vmatmul.mubr.f32.gmra.mrb[0].mxu0 %v2250
    %v2252 = vpop.f32.mrb[0].mxu0
    %v2253 = vadd.f32 %v2177, %v2252
    %v2254 = vpop.f32.mrb[0].mxu0
    %2255 = vdwg.mxu0
    %2256 = vmatprep.subr.mxu0 0.0
    %v2257 = vand.u32 %v2099, 4294901760
    %v2258 = vsub.f32 %v2099, %v2257
    %2259 = vmatpush1.msra.mxu0 %v2258
    %2260 = vmatprep.subr.mxu0 0.0
    %2261 = vmatpush1.msra.mxu0 0.0
    %2262 = vmatprep.subr.mxu0 0.0
    %2263 = vmatpush1.msra.mxu0 0.0
    %2264 = vmatprep.subr.mxu0 0.0
    %2265 = vmatpush1.msra.mxu0 0.0
    %2266 = vmatprep.subr.mxu0 0.0
    %2267 = vmatpush1.msra.mxu0 0.0
    %2268 = vmatprep.subr.mxu0 0.0
    %2269 = vmatpush1.msra.mxu0 0.0
    %2270 = vmatprep.subr.mxu0 0.0
    %2271 = vmatpush1.msra.mxu0 0.0
    %2272 = vmatprep.subr.mxu0 0.0
    %2273 = vmatpush1.msra.mxu0 0.0
    %2274 = vmatprep.subr.mxu0 0.0
    %2275 = vmatpush1.msra.mxu0 0.0
    %2276 = vmatprep.subr.mxu0 0.0
    %2277 = vmatpush1.msra.mxu0 0.0
    %2278 = vmatprep.subr.mxu0 0.0
    %2279 = vmatpush1.msra.mxu0 0.0
    %2280 = vmatprep.subr.mxu0 0.0
    %2281 = vmatpush1.msra.mxu0 0.0
    %2282 = vmatprep.subr.mxu0 0.0
    %2283 = vmatpush1.msra.mxu0 0.0
    %2284 = vmatprep.subr.mxu0 0.0
    %2285 = vmatpush1.msra.mxu0 0.0
    %2286 = vmatprep.subr.mxu0 0.0
    %2287 = vmatpush1.msra.mxu0 0.0
    %2288 = vmatprep.subr.mxu0 0.0
    %2289 = vmatpush1.msra.mxu0 0.0
    %2290 = vmatprep.subr.mxu0 0.0
    %2291 = vmatpush1.msra.mxu0 0.0
    %2292 = vmatprep.subr.mxu0 0.0
    %2293 = vmatpush1.msra.mxu0 0.0
    %2294 = vmatprep.subr.mxu0 0.0
    %2295 = vmatpush1.msra.mxu0 0.0
    %2296 = vmatprep.subr.mxu0 0.0
    %2297 = vmatpush1.msra.mxu0 0.0
    %2298 = vmatprep.subr.mxu0 0.0
    %2299 = vmatpush1.msra.mxu0 0.0
    %2300 = vmatprep.subr.mxu0 0.0
    %2301 = vmatpush1.msra.mxu0 0.0
    %2302 = vmatprep.subr.mxu0 0.0
    %2303 = vmatpush1.msra.mxu0 0.0
    %2304 = vmatprep.subr.mxu0 0.0
    %2305 = vmatpush1.msra.mxu0 0.0
    %2306 = vmatprep.subr.mxu0 0.0
    %2307 = vmatpush1.msra.mxu0 0.0
    %2308 = vmatprep.subr.mxu0 0.0
    %2309 = vmatpush1.msra.mxu0 0.0
    %2310 = vmatprep.subr.mxu0 0.0
    %2311 = vmatpush1.msra.mxu0 0.0
    %2312 = vmatprep.subr.mxu0 0.0
    %2313 = vmatpush1.msra.mxu0 0.0
    %2314 = vmatprep.subr.mxu0 0.0
    %2315 = vmatpush1.msra.mxu0 0.0
    %2316 = vmatprep.subr.mxu0 0.0
    %2317 = vmatpush1.msra.mxu0 0.0
    %2318 = vmatprep.subr.mxu0 0.0
    %2319 = vmatpush1.msra.mxu0 0.0
    %2320 = vmatprep.subr.mxu0 0.0
    %2321 = vmatpush1.msra.mxu0 0.0
    %2322 = vmatprep.mubr.f32.mxu0 0.0
    %v2323 = vand.u32 %v2102, 4294901760
    %v2324 = vsub.f32 %v2102, %v2323
    %2325 = vmatmul.mubr.f32.gmra.mrb[0].mxu0 %v2324
    %v2326 = vpop.f32.mrb[0].mxu0
    %v2327 = vadd.f32 %v2253, %v2326
    %v2328 = vpop.f32.mrb[0].mxu0
    %2329 = vdwg.mxu0
    %2330 = vmatprep.subr.mxu0 0.0
    %v2331 = vand.u32 %v2099, 4294901760
    %2332 = vmatpush1.msra.mxu0 %v2331
    %2333 = vmatprep.subr.mxu0 0.0
    %2334 = vmatpush1.msra.mxu0 0.0
    %2335 = vmatprep.subr.mxu0 0.0
    %2336 = vmatpush1.msra.mxu0 0.0
    %2337 = vmatprep.subr.mxu0 0.0
    %2338 = vmatpush1.msra.mxu0 0.0
    %2339 = vmatprep.subr.mxu0 0.0
    %2340 = vmatpush1.msra.mxu0 0.0
    %2341 = vmatprep.subr.mxu0 0.0
    %2342 = vmatpush1.msra.mxu0 0.0
    %2343 = vmatprep.subr.mxu0 0.0
    %2344 = vmatpush1.msra.mxu0 0.0
    %2345 = vmatprep.subr.mxu0 0.0
    %2346 = vmatpush1.msra.mxu0 0.0
    %2347 = vmatprep.subr.mxu0 0.0
    %2348 = vmatpush1.msra.mxu0 0.0
    %2349 = vmatprep.subr.mxu0 0.0
    %2350 = vmatpush1.msra.mxu0 0.0
    %2351 = vmatprep.subr.mxu0 0.0
    %2352 = vmatpush1.msra.mxu0 0.0
    %2353 = vmatprep.subr.mxu0 0.0
    %2354 = vmatpush1.msra.mxu0 0.0
    %2355 = vmatprep.subr.mxu0 0.0
    %2356 = vmatpush1.msra.mxu0 0.0
    %2357 = vmatprep.subr.mxu0 0.0
    %2358 = vmatpush1.msra.mxu0 0.0
    %2359 = vmatprep.subr.mxu0 0.0
    %2360 = vmatpush1.msra.mxu0 0.0
    %2361 = vmatprep.subr.mxu0 0.0
    %2362 = vmatpush1.msra.mxu0 0.0
    %2363 = vmatprep.subr.mxu0 0.0
    %2364 = vmatpush1.msra.mxu0 0.0
    %2365 = vmatprep.subr.mxu0 0.0
    %2366 = vmatpush1.msra.mxu0 0.0
    %2367 = vmatprep.subr.mxu0 0.0
    %2368 = vmatpush1.msra.mxu0 0.0
    %2369 = vmatprep.subr.mxu0 0.0
    %2370 = vmatpush1.msra.mxu0 0.0
    %2371 = vmatprep.subr.mxu0 0.0
    %2372 = vmatpush1.msra.mxu0 0.0
    %2373 = vmatprep.subr.mxu0 0.0
    %2374 = vmatpush1.msra.mxu0 0.0
    %2375 = vmatprep.subr.mxu0 0.0
    %2376 = vmatpush1.msra.mxu0 0.0
    %2377 = vmatprep.subr.mxu0 0.0
    %2378 = vmatpush1.msra.mxu0 0.0
    %2379 = vmatprep.subr.mxu0 0.0
    %2380 = vmatpush1.msra.mxu0 0.0
    %2381 = vmatprep.subr.mxu0 0.0
    %2382 = vmatpush1.msra.mxu0 0.0
    %2383 = vmatprep.subr.mxu0 0.0
    %2384 = vmatpush1.msra.mxu0 0.0
    %2385 = vmatprep.subr.mxu0 0.0
    %2386 = vmatpush1.msra.mxu0 0.0
    %2387 = vmatprep.subr.mxu0 0.0
    %2388 = vmatpush1.msra.mxu0 0.0
    %2389 = vmatprep.subr.mxu0 0.0
    %2390 = vmatpush1.msra.mxu0 0.0
    %2391 = vmatprep.subr.mxu0 0.0
    %2392 = vmatpush1.msra.mxu0 0.0
    %2393 = vmatprep.subr.mxu0 0.0
    %2394 = vmatpush1.msra.mxu0 0.0
    %2395 = vmatprep.mubr.f32.mxu0 0.0
    %v2396 = vand.u32 %v2102, 4294901760
    %v2397 = vsub.f32 %v2102, %v2396
    %v2398 = vand.u32 %v2397, 4294901760
    %2399 = vmatmul.mubr.f32.gmra.mrb[0].mxu0 %v2398
    %v2400 = vpop.f32.mrb[0].mxu0
    %v2401 = vadd.f32 %v2327, %v2400
    %v2402 = vpop.f32.mrb[0].mxu0
    %2403 = vdwg.mxu0
    %2404 = vmatprep.subr.mxu0 0.0
    %v2405 = vand.u32 %v2099, 4294901760
    %v2406 = vsub.f32 %v2099, %v2405
    %v2407 = vand.u32 %v2406, 4294901760
    %2408 = vmatpush1.msra.mxu0 %v2407
    %2409 = vmatprep.subr.mxu0 0.0
    %2410 = vmatpush1.msra.mxu0 0.0
    %2411 = vmatprep.subr.mxu0 0.0
    %2412 = vmatpush1.msra.mxu0 0.0
    %2413 = vmatprep.subr.mxu0 0.0
    %2414 = vmatpush1.msra.mxu0 0.0
    %2415 = vmatprep.subr.mxu0 0.0
    %2416 = vmatpush1.msra.mxu0 0.0
    %2417 = vmatprep.subr.mxu0 0.0
    %2418 = vmatpush1.msra.mxu0 0.0
    %2419 = vmatprep.subr.mxu0 0.0
    %2420 = vmatpush1.msra.mxu0 0.0
    %2421 = vmatprep.subr.mxu0 0.0
    %2422 = vmatpush1.msra.mxu0 0.0
    %2423 = vmatprep.subr.mxu0 0.0
    %2424 = vmatpush1.msra.mxu0 0.0
    %2425 = vmatprep.subr.mxu0 0.0
    %2426 = vmatpush1.msra.mxu0 0.0
    %2427 = vmatprep.subr.mxu0 0.0
    %2428 = vmatpush1.msra.mxu0 0.0
    %2429 = vmatprep.subr.mxu0 0.0
    %2430 = vmatpush1.msra.mxu0 0.0
    %2431 = vmatprep.subr.mxu0 0.0
    %2432 = vmatpush1.msra.mxu0 0.0
    %2433 = vmatprep.subr.mxu0 0.0
    %2434 = vmatpush1.msra.mxu0 0.0
    %2435 = vmatprep.subr.mxu0 0.0
    %2436 = vmatpush1.msra.mxu0 0.0
    %2437 = vmatprep.subr.mxu0 0.0
    %2438 = vmatpush1.msra.mxu0 0.0
    %2439 = vmatprep.subr.mxu0 0.0
    %2440 = vmatpush1.msra.mxu0 0.0
    %2441 = vmatprep.subr.mxu0 0.0
    %2442 = vmatpush1.msra.mxu0 0.0
    %2443 = vmatprep.subr.mxu0 0.0
    %2444 = vmatpush1.msra.mxu0 0.0
    %2445 = vmatprep.subr.mxu0 0.0
    %2446 = vmatpush1.msra.mxu0 0.0
    %2447 = vmatprep.subr.mxu0 0.0
    %2448 = vmatpush1.msra.mxu0 0.0
    %2449 = vmatprep.subr.mxu0 0.0
    %2450 = vmatpush1.msra.mxu0 0.0
    %2451 = vmatprep.subr.mxu0 0.0
    %2452 = vmatpush1.msra.mxu0 0.0
    %2453 = vmatprep.subr.mxu0 0.0
    %2454 = vmatpush1.msra.mxu0 0.0
    %2455 = vmatprep.subr.mxu0 0.0
    %2456 = vmatpush1.msra.mxu0 0.0
    %2457 = vmatprep.subr.mxu0 0.0
    %2458 = vmatpush1.msra.mxu0 0.0
    %2459 = vmatprep.subr.mxu0 0.0
    %2460 = vmatpush1.msra.mxu0 0.0
    %2461 = vmatprep.subr.mxu0 0.0
    %2462 = vmatpush1.msra.mxu0 0.0
    %2463 = vmatprep.subr.mxu0 0.0
    %2464 = vmatpush1.msra.mxu0 0.0
    %2465 = vmatprep.subr.mxu0 0.0
    %2466 = vmatpush1.msra.mxu0 0.0
    %2467 = vmatprep.subr.mxu0 0.0
    %2468 = vmatpush1.msra.mxu0 0.0
    %2469 = vmatprep.subr.mxu0 0.0
    %2470 = vmatpush1.msra.mxu0 0.0
    %2471 = vmatprep.mubr.f32.mxu0 0.0
    %v2472 = vand.u32 %v2102, 4294901760
    %2473 = vmatmul.mubr.f32.gmra.mrb[0].mxu0 %v2472
    %v2474 = vpop.f32.mrb[0].mxu0
    %v2475 = vadd.f32 %v2401, %v2474
    %v2476 = vpop.f32.mrb[0].mxu0
    %2477 = vdwg.mxu0
    %2478 = vmatprep.subr.mxu0 0.0
    %v2479 = vand.u32 %v2099, 4294901760
    %2480 = vmatpush1.msra.mxu0 %v2479
    %2481 = vmatprep.subr.mxu0 0.0
    %2482 = vmatpush1.msra.mxu0 0.0
    %2483 = vmatprep.subr.mxu0 0.0
    %2484 = vmatpush1.msra.mxu0 0.0
    %2485 = vmatprep.subr.mxu0 0.0
    %2486 = vmatpush1.msra.mxu0 0.0
    %2487 = vmatprep.subr.mxu0 0.0
    %2488 = vmatpush1.msra.mxu0 0.0
    %2489 = vmatprep.subr.mxu0 0.0
    %2490 = vmatpush1.msra.mxu0 0.0
    %2491 = vmatprep.subr.mxu0 0.0
    %2492 = vmatpush1.msra.mxu0 0.0
    %2493 = vmatprep.subr.mxu0 0.0
    %2494 = vmatpush1.msra.mxu0 0.0
    %2495 = vmatprep.subr.mxu0 0.0
    %2496 = vmatpush1.msra.mxu0 0.0
    %2497 = vmatprep.subr.mxu0 0.0
    %2498 = vmatpush1.msra.mxu0 0.0
    %2499 = vmatprep.subr.mxu0 0.0
    %2500 = vmatpush1.msra.mxu0 0.0
    %2501 = vmatprep.subr.mxu0 0.0
    %2502 = vmatpush1.msra.mxu0 0.0
    %2503 = vmatprep.subr.mxu0 0.0
    %2504 = vmatpush1.msra.mxu0 0.0
    %2505 = vmatprep.subr.mxu0 0.0
    %2506 = vmatpush1.msra.mxu0 0.0
    %2507 = vmatprep.subr.mxu0 0.0
    %2508 = vmatpush1.msra.mxu0 0.0
    %2509 = vmatprep.subr.mxu0 0.0
    %2510 = vmatpush1.msra.mxu0 0.0
    %2511 = vmatprep.subr.mxu0 0.0
    %2512 = vmatpush1.msra.mxu0 0.0
    %2513 = vmatprep.subr.mxu0 0.0
    %2514 = vmatpush1.msra.mxu0 0.0
    %2515 = vmatprep.subr.mxu0 0.0
    %2516 = vmatpush1.msra.mxu0 0.0
    %2517 = vmatprep.subr.mxu0 0.0
    %2518 = vmatpush1.msra.mxu0 0.0
    %2519 = vmatprep.subr.mxu0 0.0
    %2520 = vmatpush1.msra.mxu0 0.0
    %2521 = vmatprep.subr.mxu0 0.0
    %2522 = vmatpush1.msra.mxu0 0.0
    %2523 = vmatprep.subr.mxu0 0.0
    %2524 = vmatpush1.msra.mxu0 0.0
    %2525 = vmatprep.subr.mxu0 0.0
    %2526 = vmatpush1.msra.mxu0 0.0
    %2527 = vmatprep.subr.mxu0 0.0
    %2528 = vmatpush1.msra.mxu0 0.0
    %2529 = vmatprep.subr.mxu0 0.0
    %2530 = vmatpush1.msra.mxu0 0.0
    %2531 = vmatprep.subr.mxu0 0.0
    %2532 = vmatpush1.msra.mxu0 0.0
    %2533 = vmatprep.subr.mxu0 0.0
    %2534 = vmatpush1.msra.mxu0 0.0
    %2535 = vmatprep.subr.mxu0 0.0
    %2536 = vmatpush1.msra.mxu0 0.0
    %2537 = vmatprep.subr.mxu0 0.0
    %2538 = vmatpush1.msra.mxu0 0.0
    %2539 = vmatprep.subr.mxu0 0.0
    %2540 = vmatpush1.msra.mxu0 0.0
    %2541 = vmatprep.subr.mxu0 0.0
    %2542 = vmatpush1.msra.mxu0 0.0
    %2543 = vmatprep.mubr.f32.mxu0 0.0
    %v2544 = vand.u32 %v2102, 4294901760
    %2545 = vmatmul.mubr.f32.gmra.mrb[0].mxu0 %v2544
    %v2546 = vpop.f32.mrb[0].mxu0
    %v2547 = vadd.f32 %v2475, %v2546
    %v2548 = vpop.f32.mrb[0].mxu0
    %2549 = vdwg.mxu0
    %2550 = vrot.lane.b32.xlu0 %v708, 120
    %v2551 = vpop.permute.xlu0 %2550
    %2552 = vrot.lane.b32.xlu0 %v708, 88
    %v2553 = vpop.permute.xlu0 %2552
    %v2554 = vsel %vm720, %v2551, 0
    %v2556 = vsel %vm720, %v2553, 0
    %2558 = vmatprep.subr.mxu0 0.0
    %v2559 = vand.u32 %v2556, 4294901760
    %2560 = vmatpush1.xpose.msra.mxu0 %v2559
    %2561 = vmatprep.subr.mxu0 0.0
    %2562 = vmatpush1.xpose.msra.mxu0 0.0
    %2563 = vmatprep.subr.mxu0 0.0
    %2564 = vmatpush1.xpose.msra.mxu0 0.0
    %2565 = vmatprep.subr.mxu0 0.0
    %2566 = vmatpush1.xpose.msra.mxu0 0.0
    %2567 = vmatprep.subr.mxu0 0.0
    %2568 = vmatpush1.xpose.msra.mxu0 0.0
    %2569 = vmatprep.subr.mxu0 0.0
    %2570 = vmatpush1.xpose.msra.mxu0 0.0
    %2571 = vmatprep.subr.mxu0 0.0
    %2572 = vmatpush1.xpose.msra.mxu0 0.0
    %2573 = vmatprep.subr.mxu0 0.0
    %2574 = vmatpush1.xpose.msra.mxu0 0.0
    %2575 = vmatprep.subr.mxu0 0.0
    %2576 = vmatpush1.xpose.msra.mxu0 0.0
    %2577 = vmatprep.subr.mxu0 0.0
    %2578 = vmatpush1.xpose.msra.mxu0 0.0
    %2579 = vmatprep.subr.mxu0 0.0
    %2580 = vmatpush1.xpose.msra.mxu0 0.0
    %2581 = vmatprep.subr.mxu0 0.0
    %2582 = vmatpush1.xpose.msra.mxu0 0.0
    %2583 = vmatprep.subr.mxu0 0.0
    %2584 = vmatpush1.xpose.msra.mxu0 0.0
    %2585 = vmatprep.subr.mxu0 0.0
    %2586 = vmatpush1.xpose.msra.mxu0 0.0
    %2587 = vmatprep.subr.mxu0 0.0
    %2588 = vmatpush1.xpose.msra.mxu0 0.0
    %2589 = vmatprep.subr.mxu0 0.0
    %2590 = vmatpush1.xpose.msra.mxu0 0.0
    %2591 = vmatprep.subr.mxu0 0.0
    %2592 = vmatpush1.xpose.msra.mxu0 0.0
    %2593 = vmatprep.subr.mxu0 0.0
    %2594 = vmatpush1.xpose.msra.mxu0 0.0
    %2595 = vmatprep.subr.mxu0 0.0
    %2596 = vmatpush1.xpose.msra.mxu0 0.0
    %2597 = vmatprep.subr.mxu0 0.0
    %2598 = vmatpush1.xpose.msra.mxu0 0.0
    %2599 = vmatprep.subr.mxu0 0.0
    %2600 = vmatpush1.xpose.msra.mxu0 0.0
    %2601 = vmatprep.subr.mxu0 0.0
    %2602 = vmatpush1.xpose.msra.mxu0 0.0
    %2603 = vmatprep.subr.mxu0 0.0
    %2604 = vmatpush1.xpose.msra.mxu0 0.0
    %2605 = vmatprep.subr.mxu0 0.0
    %2606 = vmatpush1.xpose.msra.mxu0 0.0
    %2607 = vmatprep.subr.mxu0 0.0
    %2608 = vmatpush1.xpose.msra.mxu0 0.0
    %2609 = vmatprep.subr.mxu0 0.0
    %2610 = vmatpush1.xpose.msra.mxu0 0.0
    %2611 = vmatprep.subr.mxu0 0.0
    %2612 = vmatpush1.xpose.msra.mxu0 0.0
    %2613 = vmatprep.subr.mxu0 0.0
    %2614 = vmatpush1.xpose.msra.mxu0 0.0
    %2615 = vmatprep.subr.mxu0 0.0
    %2616 = vmatpush1.xpose.msra.mxu0 0.0
    %2617 = vmatprep.subr.mxu0 0.0
    %2618 = vmatpush1.xpose.msra.mxu0 0.0
    %2619 = vmatprep.subr.mxu0 0.0
    %2620 = vmatpush1.xpose.msra.mxu0 0.0
    %2621 = vmatprep.subr.mxu0 0.0
    %2622 = vmatpush1.xpose.msra.mxu0 0.0
    %2623 = vmatprep.mubr.f32.mxu0 0.0
    %v2624 = vand.u32 %v2554, 4294901760
    %v2625 = vsub.f32 %v2554, %v2624
    %v2626 = vand.u32 %v2625, 4294901760
    %v2627 = vsub.f32 %v2625, %v2626
    %v2628 = vand.u32 %v2627, 4294901760
    %2629 = vmatmul.mubr.f32.gmra.mrb[0].mxu0 %v2628
    %v2630 = vpop.f32.mrb[0].mxu0
    %v2631 = vadd.f32 0.0, %v2630
    %v2632 = vpop.f32.mrb[0].mxu0
    %2633 = vdwg.mxu0
    %2634 = vmatprep.subr.mxu0 0.0
    %v2635 = vand.u32 %v2556, 4294901760
    %v2636 = vsub.f32 %v2556, %v2635
    %v2637 = vand.u32 %v2636, 4294901760
    %v2638 = vsub.f32 %v2636, %v2637
    %v2639 = vand.u32 %v2638, 4294901760
    %2640 = vmatpush1.xpose.msra.mxu0 %v2639
    %2641 = vmatprep.subr.mxu0 0.0
    %2642 = vmatpush1.xpose.msra.mxu0 0.0
    %2643 = vmatprep.subr.mxu0 0.0
    %2644 = vmatpush1.xpose.msra.mxu0 0.0
    %2645 = vmatprep.subr.mxu0 0.0
    %2646 = vmatpush1.xpose.msra.mxu0 0.0
    %2647 = vmatprep.subr.mxu0 0.0
    %2648 = vmatpush1.xpose.msra.mxu0 0.0
    %2649 = vmatprep.subr.mxu0 0.0
    %2650 = vmatpush1.xpose.msra.mxu0 0.0
    %2651 = vmatprep.subr.mxu0 0.0
    %2652 = vmatpush1.xpose.msra.mxu0 0.0
    %2653 = vmatprep.subr.mxu0 0.0
    %2654 = vmatpush1.xpose.msra.mxu0 0.0
    %2655 = vmatprep.subr.mxu0 0.0
    %2656 = vmatpush1.xpose.msra.mxu0 0.0
    %2657 = vmatprep.subr.mxu0 0.0
    %2658 = vmatpush1.xpose.msra.mxu0 0.0
    %2659 = vmatprep.subr.mxu0 0.0
    %2660 = vmatpush1.xpose.msra.mxu0 0.0
    %2661 = vmatprep.subr.mxu0 0.0
    %2662 = vmatpush1.xpose.msra.mxu0 0.0
    %2663 = vmatprep.subr.mxu0 0.0
    %2664 = vmatpush1.xpose.msra.mxu0 0.0
    %2665 = vmatprep.subr.mxu0 0.0
    %2666 = vmatpush1.xpose.msra.mxu0 0.0
    %2667 = vmatprep.subr.mxu0 0.0
    %2668 = vmatpush1.xpose.msra.mxu0 0.0
    %2669 = vmatprep.subr.mxu0 0.0
    %2670 = vmatpush1.xpose.msra.mxu0 0.0
    %2671 = vmatprep.subr.mxu0 0.0
    %2672 = vmatpush1.xpose.msra.mxu0 0.0
    %2673 = vmatprep.subr.mxu0 0.0
    %2674 = vmatpush1.xpose.msra.mxu0 0.0
    %2675 = vmatprep.subr.mxu0 0.0
    %2676 = vmatpush1.xpose.msra.mxu0 0.0
    %2677 = vmatprep.subr.mxu0 0.0
    %2678 = vmatpush1.xpose.msra.mxu0 0.0
    %2679 = vmatprep.subr.mxu0 0.0
    %2680 = vmatpush1.xpose.msra.mxu0 0.0
    %2681 = vmatprep.subr.mxu0 0.0
    %2682 = vmatpush1.xpose.msra.mxu0 0.0
    %2683 = vmatprep.subr.mxu0 0.0
    %2684 = vmatpush1.xpose.msra.mxu0 0.0
    %2685 = vmatprep.subr.mxu0 0.0
    %2686 = vmatpush1.xpose.msra.mxu0 0.0
    %2687 = vmatprep.subr.mxu0 0.0
    %2688 = vmatpush1.xpose.msra.mxu0 0.0
    %2689 = vmatprep.subr.mxu0 0.0
    %2690 = vmatpush1.xpose.msra.mxu0 0.0
    %2691 = vmatprep.subr.mxu0 0.0
    %2692 = vmatpush1.xpose.msra.mxu0 0.0
    %2693 = vmatprep.subr.mxu0 0.0
    %2694 = vmatpush1.xpose.msra.mxu0 0.0
    %2695 = vmatprep.subr.mxu0 0.0
    %2696 = vmatpush1.xpose.msra.mxu0 0.0
    %2697 = vmatprep.subr.mxu0 0.0
    %2698 = vmatpush1.xpose.msra.mxu0 0.0
    %2699 = vmatprep.subr.mxu0 0.0
    %2700 = vmatpush1.xpose.msra.mxu0 0.0
    %2701 = vmatprep.subr.mxu0 0.0
    %2702 = vmatpush1.xpose.msra.mxu0 0.0
    %2703 = vmatprep.mubr.f32.mxu0 0.0
    %v2704 = vand.u32 %v2554, 4294901760
    %2705 = vmatmul.mubr.f32.gmra.mrb[0].mxu0 %v2704
    %v2706 = vpop.f32.mrb[0].mxu0
    %v2707 = vadd.f32 %v2631, %v2706
    %v2708 = vpop.f32.mrb[0].mxu0
    %2709 = vdwg.mxu0
    %2710 = vmatprep.subr.mxu0 0.0
    %v2711 = vand.u32 %v2556, 4294901760
    %v2712 = vsub.f32 %v2556, %v2711
    %2713 = vmatpush1.xpose.msra.mxu0 %v2712
    %2714 = vmatprep.subr.mxu0 0.0
    %2715 = vmatpush1.xpose.msra.mxu0 0.0
    %2716 = vmatprep.subr.mxu0 0.0
    %2717 = vmatpush1.xpose.msra.mxu0 0.0
    %2718 = vmatprep.subr.mxu0 0.0
    %2719 = vmatpush1.xpose.msra.mxu0 0.0
    %2720 = vmatprep.subr.mxu0 0.0
    %2721 = vmatpush1.xpose.msra.mxu0 0.0
    %2722 = vmatprep.subr.mxu0 0.0
    %2723 = vmatpush1.xpose.msra.mxu0 0.0
    %2724 = vmatprep.subr.mxu0 0.0
    %2725 = vmatpush1.xpose.msra.mxu0 0.0
    %2726 = vmatprep.subr.mxu0 0.0
    %2727 = vmatpush1.xpose.msra.mxu0 0.0
    %2728 = vmatprep.subr.mxu0 0.0
    %2729 = vmatpush1.xpose.msra.mxu0 0.0
    %2730 = vmatprep.subr.mxu0 0.0
    %2731 = vmatpush1.xpose.msra.mxu0 0.0
    %2732 = vmatprep.subr.mxu0 0.0
    %2733 = vmatpush1.xpose.msra.mxu0 0.0
    %2734 = vmatprep.subr.mxu0 0.0
    %2735 = vmatpush1.xpose.msra.mxu0 0.0
    %2736 = vmatprep.subr.mxu0 0.0
    %2737 = vmatpush1.xpose.msra.mxu0 0.0
    %2738 = vmatprep.subr.mxu0 0.0
    %2739 = vmatpush1.xpose.msra.mxu0 0.0
    %2740 = vmatprep.subr.mxu0 0.0
    %2741 = vmatpush1.xpose.msra.mxu0 0.0
    %2742 = vmatprep.subr.mxu0 0.0
    %2743 = vmatpush1.xpose.msra.mxu0 0.0
    %2744 = vmatprep.subr.mxu0 0.0
    %2745 = vmatpush1.xpose.msra.mxu0 0.0
    %2746 = vmatprep.subr.mxu0 0.0
    %2747 = vmatpush1.xpose.msra.mxu0 0.0
    %2748 = vmatprep.subr.mxu0 0.0
    %2749 = vmatpush1.xpose.msra.mxu0 0.0
    %2750 = vmatprep.subr.mxu0 0.0
    %2751 = vmatpush1.xpose.msra.mxu0 0.0
    %2752 = vmatprep.subr.mxu0 0.0
    %2753 = vmatpush1.xpose.msra.mxu0 0.0
    %2754 = vmatprep.subr.mxu0 0.0
    %2755 = vmatpush1.xpose.msra.mxu0 0.0
    %2756 = vmatprep.subr.mxu0 0.0
    %2757 = vmatpush1.xpose.msra.mxu0 0.0
    %2758 = vmatprep.subr.mxu0 0.0
    %2759 = vmatpush1.xpose.msra.mxu0 0.0
    %2760 = vmatprep.subr.mxu0 0.0
    %2761 = vmatpush1.xpose.msra.mxu0 0.0
    %2762 = vmatprep.subr.mxu0 0.0
    %2763 = vmatpush1.xpose.msra.mxu0 0.0
    %2764 = vmatprep.subr.mxu0 0.0
    %2765 = vmatpush1.xpose.msra.mxu0 0.0
    %2766 = vmatprep.subr.mxu0 0.0
    %2767 = vmatpush1.xpose.msra.mxu0 0.0
    %2768 = vmatprep.subr.mxu0 0.0
    %2769 = vmatpush1.xpose.msra.mxu0 0.0
    %2770 = vmatprep.subr.mxu0 0.0
    %2771 = vmatpush1.xpose.msra.mxu0 0.0
    %2772 = vmatprep.subr.mxu0 0.0
    %2773 = vmatpush1.xpose.msra.mxu0 0.0
    %2774 = vmatprep.subr.mxu0 0.0
    %2775 = vmatpush1.xpose.msra.mxu0 0.0
    %2776 = vmatprep.mubr.f32.mxu0 0.0
    %v2777 = vand.u32 %v2554, 4294901760
    %v2778 = vsub.f32 %v2554, %v2777
    %2779 = vmatmul.mubr.f32.gmra.mrb[0].mxu0 %v2778
    %v2780 = vpop.f32.mrb[0].mxu0
    %v2781 = vadd.f32 %v2707, %v2780
    %v2782 = vpop.f32.mrb[0].mxu0
    %2783 = vdwg.mxu0
    %2784 = vmatprep.subr.mxu0 0.0
    %v2785 = vand.u32 %v2556, 4294901760
    %2786 = vmatpush1.xpose.msra.mxu0 %v2785
    %2787 = vmatprep.subr.mxu0 0.0
    %2788 = vmatpush1.xpose.msra.mxu0 0.0
    %2789 = vmatprep.subr.mxu0 0.0
    %2790 = vmatpush1.xpose.msra.mxu0 0.0
    %2791 = vmatprep.subr.mxu0 0.0
    %2792 = vmatpush1.xpose.msra.mxu0 0.0
    %2793 = vmatprep.subr.mxu0 0.0
    %2794 = vmatpush1.xpose.msra.mxu0 0.0
    %2795 = vmatprep.subr.mxu0 0.0
    %2796 = vmatpush1.xpose.msra.mxu0 0.0
    %2797 = vmatprep.subr.mxu0 0.0
    %2798 = vmatpush1.xpose.msra.mxu0 0.0
    %2799 = vmatprep.subr.mxu0 0.0
    %2800 = vmatpush1.xpose.msra.mxu0 0.0
    %2801 = vmatprep.subr.mxu0 0.0
    %2802 = vmatpush1.xpose.msra.mxu0 0.0
    %2803 = vmatprep.subr.mxu0 0.0
    %2804 = vmatpush1.xpose.msra.mxu0 0.0
    %2805 = vmatprep.subr.mxu0 0.0
    %2806 = vmatpush1.xpose.msra.mxu0 0.0
    %2807 = vmatprep.subr.mxu0 0.0
    %2808 = vmatpush1.xpose.msra.mxu0 0.0
    %2809 = vmatprep.subr.mxu0 0.0
    %2810 = vmatpush1.xpose.msra.mxu0 0.0
    %2811 = vmatprep.subr.mxu0 0.0
    %2812 = vmatpush1.xpose.msra.mxu0 0.0
    %2813 = vmatprep.subr.mxu0 0.0
    %2814 = vmatpush1.xpose.msra.mxu0 0.0
    %2815 = vmatprep.subr.mxu0 0.0
    %2816 = vmatpush1.xpose.msra.mxu0 0.0
    %2817 = vmatprep.subr.mxu0 0.0
    %2818 = vmatpush1.xpose.msra.mxu0 0.0
    %2819 = vmatprep.subr.mxu0 0.0
    %2820 = vmatpush1.xpose.msra.mxu0 0.0
    %2821 = vmatprep.subr.mxu0 0.0
    %2822 = vmatpush1.xpose.msra.mxu0 0.0
    %2823 = vmatprep.subr.mxu0 0.0
    %2824 = vmatpush1.xpose.msra.mxu0 0.0
    %2825 = vmatprep.subr.mxu0 0.0
    %2826 = vmatpush1.xpose.msra.mxu0 0.0
    %2827 = vmatprep.subr.mxu0 0.0
    %2828 = vmatpush1.xpose.msra.mxu0 0.0
    %2829 = vmatprep.subr.mxu0 0.0
    %2830 = vmatpush1.xpose.msra.mxu0 0.0
    %2831 = vmatprep.subr.mxu0 0.0
    %2832 = vmatpush1.xpose.msra.mxu0 0.0
    %2833 = vmatprep.subr.mxu0 0.0
    %2834 = vmatpush1.xpose.msra.mxu0 0.0
    %2835 = vmatprep.subr.mxu0 0.0
    %2836 = vmatpush1.xpose.msra.mxu0 0.0
    %2837 = vmatprep.subr.mxu0 0.0
    %2838 = vmatpush1.xpose.msra.mxu0 0.0
    %2839 = vmatprep.subr.mxu0 0.0
    %2840 = vmatpush1.xpose.msra.mxu0 0.0
    %2841 = vmatprep.subr.mxu0 0.0
    %2842 = vmatpush1.xpose.msra.mxu0 0.0
    %2843 = vmatprep.subr.mxu0 0.0
    %2844 = vmatpush1.xpose.msra.mxu0 0.0
    %2845 = vmatprep.subr.mxu0 0.0
    %2846 = vmatpush1.xpose.msra.mxu0 0.0
    %2847 = vmatprep.subr.mxu0 0.0
    %2848 = vmatpush1.xpose.msra.mxu0 0.0
    %2849 = vmatprep.mubr.f32.mxu0 0.0
    %v2850 = vand.u32 %v2554, 4294901760
    %v2851 = vsub.f32 %v2554, %v2850
    %v2852 = vand.u32 %v2851, 4294901760
    %2853 = vmatmul.mubr.f32.gmra.mrb[0].mxu0 %v2852
    %v2854 = vpop.f32.mrb[0].mxu0
    %v2855 = vadd.f32 %v2781, %v2854
    %v2856 = vpop.f32.mrb[0].mxu0
    %2857 = vdwg.mxu0
    %2858 = vmatprep.subr.mxu0 0.0
    %v2859 = vand.u32 %v2556, 4294901760
    %v2860 = vsub.f32 %v2556, %v2859
    %v2861 = vand.u32 %v2860, 4294901760
    %2862 = vmatpush1.xpose.msra.mxu0 %v2861
    %2863 = vmatprep.subr.mxu0 0.0
    %2864 = vmatpush1.xpose.msra.mxu0 0.0
    %2865 = vmatprep.subr.mxu0 0.0
    %2866 = vmatpush1.xpose.msra.mxu0 0.0
    %2867 = vmatprep.subr.mxu0 0.0
    %2868 = vmatpush1.xpose.msra.mxu0 0.0
    %2869 = vmatprep.subr.mxu0 0.0
    %2870 = vmatpush1.xpose.msra.mxu0 0.0
    %2871 = vmatprep.subr.mxu0 0.0
    %2872 = vmatpush1.xpose.msra.mxu0 0.0
    %2873 = vmatprep.subr.mxu0 0.0
    %2874 = vmatpush1.xpose.msra.mxu0 0.0
    %2875 = vmatprep.subr.mxu0 0.0
    %2876 = vmatpush1.xpose.msra.mxu0 0.0
    %2877 = vmatprep.subr.mxu0 0.0
    %2878 = vmatpush1.xpose.msra.mxu0 0.0
    %2879 = vmatprep.subr.mxu0 0.0
    %2880 = vmatpush1.xpose.msra.mxu0 0.0
    %2881 = vmatprep.subr.mxu0 0.0
    %2882 = vmatpush1.xpose.msra.mxu0 0.0
    %2883 = vmatprep.subr.mxu0 0.0
    %2884 = vmatpush1.xpose.msra.mxu0 0.0
    %2885 = vmatprep.subr.mxu0 0.0
    %2886 = vmatpush1.xpose.msra.mxu0 0.0
    %2887 = vmatprep.subr.mxu0 0.0
    %2888 = vmatpush1.xpose.msra.mxu0 0.0
    %2889 = vmatprep.subr.mxu0 0.0
    %2890 = vmatpush1.xpose.msra.mxu0 0.0
    %2891 = vmatprep.subr.mxu0 0.0
    %2892 = vmatpush1.xpose.msra.mxu0 0.0
    %2893 = vmatprep.subr.mxu0 0.0
    %2894 = vmatpush1.xpose.msra.mxu0 0.0
    %2895 = vmatprep.subr.mxu0 0.0
    %2896 = vmatpush1.xpose.msra.mxu0 0.0
    %2897 = vmatprep.subr.mxu0 0.0
    %2898 = vmatpush1.xpose.msra.mxu0 0.0
    %2899 = vmatprep.subr.mxu0 0.0
    %2900 = vmatpush1.xpose.msra.mxu0 0.0
    %2901 = vmatprep.subr.mxu0 0.0
    %2902 = vmatpush1.xpose.msra.mxu0 0.0
    %2903 = vmatprep.subr.mxu0 0.0
    %2904 = vmatpush1.xpose.msra.mxu0 0.0
    %2905 = vmatprep.subr.mxu0 0.0
    %2906 = vmatpush1.xpose.msra.mxu0 0.0
    %2907 = vmatprep.subr.mxu0 0.0
    %2908 = vmatpush1.xpose.msra.mxu0 0.0
    %2909 = vmatprep.subr.mxu0 0.0
    %2910 = vmatpush1.xpose.msra.mxu0 0.0
    %2911 = vmatprep.subr.mxu0 0.0
    %2912 = vmatpush1.xpose.msra.mxu0 0.0
    %2913 = vmatprep.subr.mxu0 0.0
    %2914 = vmatpush1.xpose.msra.mxu0 0.0
    %2915 = vmatprep.subr.mxu0 0.0
    %2916 = vmatpush1.xpose.msra.mxu0 0.0
    %2917 = vmatprep.subr.mxu0 0.0
    %2918 = vmatpush1.xpose.msra.mxu0 0.0
    %2919 = vmatprep.subr.mxu0 0.0
    %2920 = vmatpush1.xpose.msra.mxu0 0.0
    %2921 = vmatprep.subr.mxu0 0.0
    %2922 = vmatpush1.xpose.msra.mxu0 0.0
    %2923 = vmatprep.subr.mxu0 0.0
    %2924 = vmatpush1.xpose.msra.mxu0 0.0
    %2925 = vmatprep.mubr.f32.mxu0 0.0
    %v2926 = vand.u32 %v2554, 4294901760
    %2927 = vmatmul.mubr.f32.gmra.mrb[0].mxu0 %v2926
    %v2928 = vpop.f32.mrb[0].mxu0
    %v2929 = vadd.f32 %v2855, %v2928
    %v2930 = vpop.f32.mrb[0].mxu0
    %2931 = vdwg.mxu0
    %2932 = vmatprep.subr.mxu0 0.0
    %v2933 = vand.u32 %v2556, 4294901760
    %2934 = vmatpush1.xpose.msra.mxu0 %v2933
    %2935 = vmatprep.subr.mxu0 0.0
    %2936 = vmatpush1.xpose.msra.mxu0 0.0
    %2937 = vmatprep.subr.mxu0 0.0
    %2938 = vmatpush1.xpose.msra.mxu0 0.0
    %2939 = vmatprep.subr.mxu0 0.0
    %2940 = vmatpush1.xpose.msra.mxu0 0.0
    %2941 = vmatprep.subr.mxu0 0.0
    %2942 = vmatpush1.xpose.msra.mxu0 0.0
    %2943 = vmatprep.subr.mxu0 0.0
    %2944 = vmatpush1.xpose.msra.mxu0 0.0
    %2945 = vmatprep.subr.mxu0 0.0
    %2946 = vmatpush1.xpose.msra.mxu0 0.0
    %2947 = vmatprep.subr.mxu0 0.0
    %2948 = vmatpush1.xpose.msra.mxu0 0.0
    %2949 = vmatprep.subr.mxu0 0.0
    %2950 = vmatpush1.xpose.msra.mxu0 0.0
    %2951 = vmatprep.subr.mxu0 0.0
    %2952 = vmatpush1.xpose.msra.mxu0 0.0
    %2953 = vmatprep.subr.mxu0 0.0
    %2954 = vmatpush1.xpose.msra.mxu0 0.0
    %2955 = vmatprep.subr.mxu0 0.0
    %2956 = vmatpush1.xpose.msra.mxu0 0.0
    %2957 = vmatprep.subr.mxu0 0.0
    %2958 = vmatpush1.xpose.msra.mxu0 0.0
    %2959 = vmatprep.subr.mxu0 0.0
    %2960 = vmatpush1.xpose.msra.mxu0 0.0
    %2961 = vmatprep.subr.mxu0 0.0
    %2962 = vmatpush1.xpose.msra.mxu0 0.0
    %2963 = vmatprep.subr.mxu0 0.0
    %2964 = vmatpush1.xpose.msra.mxu0 0.0
    %2965 = vmatprep.subr.mxu0 0.0
    %2966 = vmatpush1.xpose.msra.mxu0 0.0
    %2967 = vmatprep.subr.mxu0 0.0
    %2968 = vmatpush1.xpose.msra.mxu0 0.0
    %2969 = vmatprep.subr.mxu0 0.0
    %2970 = vmatpush1.xpose.msra.mxu0 0.0
    %2971 = vmatprep.subr.mxu0 0.0
    %2972 = vmatpush1.xpose.msra.mxu0 0.0
    %2973 = vmatprep.subr.mxu0 0.0
    %2974 = vmatpush1.xpose.msra.mxu0 0.0
    %2975 = vmatprep.subr.mxu0 0.0
    %2976 = vmatpush1.xpose.msra.mxu0 0.0
    %2977 = vmatprep.subr.mxu0 0.0
    %2978 = vmatpush1.xpose.msra.mxu0 0.0
    %2979 = vmatprep.subr.mxu0 0.0
    %2980 = vmatpush1.xpose.msra.mxu0 0.0
    %2981 = vmatprep.subr.mxu0 0.0
    %2982 = vmatpush1.xpose.msra.mxu0 0.0
    %2983 = vmatprep.subr.mxu0 0.0
    %2984 = vmatpush1.xpose.msra.mxu0 0.0
    %2985 = vmatprep.subr.mxu0 0.0
    %2986 = vmatpush1.xpose.msra.mxu0 0.0
    %2987 = vmatprep.subr.mxu0 0.0
    %2988 = vmatpush1.xpose.msra.mxu0 0.0
    %2989 = vmatprep.subr.mxu0 0.0
    %2990 = vmatpush1.xpose.msra.mxu0 0.0
    %2991 = vmatprep.subr.mxu0 0.0
    %2992 = vmatpush1.xpose.msra.mxu0 0.0
    %2993 = vmatprep.subr.mxu0 0.0
    %2994 = vmatpush1.xpose.msra.mxu0 0.0
    %2995 = vmatprep.subr.mxu0 0.0
    %2996 = vmatpush1.xpose.msra.mxu0 0.0
    %2997 = vmatprep.mubr.f32.mxu0 0.0
    %v2998 = vand.u32 %v2554, 4294901760
    %2999 = vmatmul.mubr.f32.gmra.mrb[0].mxu0 %v2998
    %v3000 = vpop.f32.mrb[0].mxu0
    %v3001 = vadd.f32 %v2929, %v3000
    %v3002 = vpop.f32.mrb[0].mxu0
    %3003 = vdwg.mxu0
    %3004 = vrot.lane.b32.xlu0 %v714, 120
    %v3005 = vpop.permute.xlu0 %3004
    %3006 = vrot.lane.b32.xlu0 %v714, 88
    %v3007 = vpop.permute.xlu0 %3006
    %v3008 = vsel %vm720, %v3005, 0
    %v3010 = vsel %vm720, %v3007, 0
    %3012 = vmatprep.subr.mxu0 0.0
    %v3013 = vand.u32 %v3010, 4294901760
    %3014 = vmatpush1.xpose.msra.mxu0 %v3013
    %3015 = vmatprep.subr.mxu0 0.0
    %3016 = vmatpush1.xpose.msra.mxu0 0.0
    %3017 = vmatprep.subr.mxu0 0.0
    %3018 = vmatpush1.xpose.msra.mxu0 0.0
    %3019 = vmatprep.subr.mxu0 0.0
    %3020 = vmatpush1.xpose.msra.mxu0 0.0
    %3021 = vmatprep.subr.mxu0 0.0
    %3022 = vmatpush1.xpose.msra.mxu0 0.0
    %3023 = vmatprep.subr.mxu0 0.0
    %3024 = vmatpush1.xpose.msra.mxu0 0.0
    %3025 = vmatprep.subr.mxu0 0.0
    %3026 = vmatpush1.xpose.msra.mxu0 0.0
    %3027 = vmatprep.subr.mxu0 0.0
    %3028 = vmatpush1.xpose.msra.mxu0 0.0
    %3029 = vmatprep.subr.mxu0 0.0
    %3030 = vmatpush1.xpose.msra.mxu0 0.0
    %3031 = vmatprep.subr.mxu0 0.0
    %3032 = vmatpush1.xpose.msra.mxu0 0.0
    %3033 = vmatprep.subr.mxu0 0.0
    %3034 = vmatpush1.xpose.msra.mxu0 0.0
    %3035 = vmatprep.subr.mxu0 0.0
    %3036 = vmatpush1.xpose.msra.mxu0 0.0
    %3037 = vmatprep.subr.mxu0 0.0
    %3038 = vmatpush1.xpose.msra.mxu0 0.0
    %3039 = vmatprep.subr.mxu0 0.0
    %3040 = vmatpush1.xpose.msra.mxu0 0.0
    %3041 = vmatprep.subr.mxu0 0.0
    %3042 = vmatpush1.xpose.msra.mxu0 0.0
    %3043 = vmatprep.subr.mxu0 0.0
    %3044 = vmatpush1.xpose.msra.mxu0 0.0
    %3045 = vmatprep.subr.mxu0 0.0
    %3046 = vmatpush1.xpose.msra.mxu0 0.0
    %3047 = vmatprep.subr.mxu0 0.0
    %3048 = vmatpush1.xpose.msra.mxu0 0.0
    %3049 = vmatprep.subr.mxu0 0.0
    %3050 = vmatpush1.xpose.msra.mxu0 0.0
    %3051 = vmatprep.subr.mxu0 0.0
    %3052 = vmatpush1.xpose.msra.mxu0 0.0
    %3053 = vmatprep.subr.mxu0 0.0
    %3054 = vmatpush1.xpose.msra.mxu0 0.0
    %3055 = vmatprep.subr.mxu0 0.0
    %3056 = vmatpush1.xpose.msra.mxu0 0.0
    %3057 = vmatprep.subr.mxu0 0.0
    %3058 = vmatpush1.xpose.msra.mxu0 0.0
    %3059 = vmatprep.subr.mxu0 0.0
    %3060 = vmatpush1.xpose.msra.mxu0 0.0
    %3061 = vmatprep.subr.mxu0 0.0
    %3062 = vmatpush1.xpose.msra.mxu0 0.0
    %3063 = vmatprep.subr.mxu0 0.0
    %3064 = vmatpush1.xpose.msra.mxu0 0.0
    %3065 = vmatprep.subr.mxu0 0.0
    %3066 = vmatpush1.xpose.msra.mxu0 0.0
    %3067 = vmatprep.subr.mxu0 0.0
    %3068 = vmatpush1.xpose.msra.mxu0 0.0
    %3069 = vmatprep.subr.mxu0 0.0
    %3070 = vmatpush1.xpose.msra.mxu0 0.0
    %3071 = vmatprep.subr.mxu0 0.0
    %3072 = vmatpush1.xpose.msra.mxu0 0.0
    %3073 = vmatprep.subr.mxu0 0.0
    %3074 = vmatpush1.xpose.msra.mxu0 0.0
    %3075 = vmatprep.subr.mxu0 0.0
    %3076 = vmatpush1.xpose.msra.mxu0 0.0
    %3077 = vmatprep.mubr.f32.mxu0 0.0
    %v3078 = vand.u32 %v3008, 4294901760
    %v3079 = vsub.f32 %v3008, %v3078
    %v3080 = vand.u32 %v3079, 4294901760
    %v3081 = vsub.f32 %v3079, %v3080
    %v3082 = vand.u32 %v3081, 4294901760
    %3083 = vmatmul.mubr.f32.gmra.mrb[0].mxu0 %v3082
    %v3084 = vpop.f32.mrb[0].mxu0
    %v3085 = vadd.f32 0.0, %v3084
    %v3086 = vpop.f32.mrb[0].mxu0
    %3087 = vdwg.mxu0
    %3088 = vmatprep.subr.mxu0 0.0
    %v3089 = vand.u32 %v3010, 4294901760
    %v3090 = vsub.f32 %v3010, %v3089
    %v3091 = vand.u32 %v3090, 4294901760
    %v3092 = vsub.f32 %v3090, %v3091
    %v3093 = vand.u32 %v3092, 4294901760
    %3094 = vmatpush1.xpose.msra.mxu0 %v3093
    %3095 = vmatprep.subr.mxu0 0.0
    %3096 = vmatpush1.xpose.msra.mxu0 0.0
    %3097 = vmatprep.subr.mxu0 0.0
    %3098 = vmatpush1.xpose.msra.mxu0 0.0
    %3099 = vmatprep.subr.mxu0 0.0
    %3100 = vmatpush1.xpose.msra.mxu0 0.0
    %3101 = vmatprep.subr.mxu0 0.0
    %3102 = vmatpush1.xpose.msra.mxu0 0.0
    %3103 = vmatprep.subr.mxu0 0.0
    %3104 = vmatpush1.xpose.msra.mxu0 0.0
    %3105 = vmatprep.subr.mxu0 0.0
    %3106 = vmatpush1.xpose.msra.mxu0 0.0
    %3107 = vmatprep.subr.mxu0 0.0
    %3108 = vmatpush1.xpose.msra.mxu0 0.0
    %3109 = vmatprep.subr.mxu0 0.0
    %3110 = vmatpush1.xpose.msra.mxu0 0.0
    %3111 = vmatprep.subr.mxu0 0.0
    %3112 = vmatpush1.xpose.msra.mxu0 0.0
    %3113 = vmatprep.subr.mxu0 0.0
    %3114 = vmatpush1.xpose.msra.mxu0 0.0
    %3115 = vmatprep.subr.mxu0 0.0
    %3116 = vmatpush1.xpose.msra.mxu0 0.0
    %3117 = vmatprep.subr.mxu0 0.0
    %3118 = vmatpush1.xpose.msra.mxu0 0.0
    %3119 = vmatprep.subr.mxu0 0.0
    %3120 = vmatpush1.xpose.msra.mxu0 0.0
    %3121 = vmatprep.subr.mxu0 0.0
    %3122 = vmatpush1.xpose.msra.mxu0 0.0
    %3123 = vmatprep.subr.mxu0 0.0
    %3124 = vmatpush1.xpose.msra.mxu0 0.0
    %3125 = vmatprep.subr.mxu0 0.0
    %3126 = vmatpush1.xpose.msra.mxu0 0.0
    %3127 = vmatprep.subr.mxu0 0.0
    %3128 = vmatpush1.xpose.msra.mxu0 0.0
    %3129 = vmatprep.subr.mxu0 0.0
    %3130 = vmatpush1.xpose.msra.mxu0 0.0
    %3131 = vmatprep.subr.mxu0 0.0
    %3132 = vmatpush1.xpose.msra.mxu0 0.0
    %3133 = vmatprep.subr.mxu0 0.0
    %3134 = vmatpush1.xpose.msra.mxu0 0.0
    %3135 = vmatprep.subr.mxu0 0.0
    %3136 = vmatpush1.xpose.msra.mxu0 0.0
    %3137 = vmatprep.subr.mxu0 0.0
    %3138 = vmatpush1.xpose.msra.mxu0 0.0
    %3139 = vmatprep.subr.mxu0 0.0
    %3140 = vmatpush1.xpose.msra.mxu0 0.0
    %3141 = vmatprep.subr.mxu0 0.0
    %3142 = vmatpush1.xpose.msra.mxu0 0.0
    %3143 = vmatprep.subr.mxu0 0.0
    %3144 = vmatpush1.xpose.msra.mxu0 0.0
    %3145 = vmatprep.subr.mxu0 0.0
    %3146 = vmatpush1.xpose.msra.mxu0 0.0
    %3147 = vmatprep.subr.mxu0 0.0
    %3148 = vmatpush1.xpose.msra.mxu0 0.0
    %3149 = vmatprep.subr.mxu0 0.0
    %3150 = vmatpush1.xpose.msra.mxu0 0.0
    %3151 = vmatprep.subr.mxu0 0.0
    %3152 = vmatpush1.xpose.msra.mxu0 0.0
    %3153 = vmatprep.subr.mxu0 0.0
    %3154 = vmatpush1.xpose.msra.mxu0 0.0
    %3155 = vmatprep.subr.mxu0 0.0
    %3156 = vmatpush1.xpose.msra.mxu0 0.0
    %3157 = vmatprep.mubr.f32.mxu0 0.0
    %v3158 = vand.u32 %v3008, 4294901760
    %3159 = vmatmul.mubr.f32.gmra.mrb[0].mxu0 %v3158
    %v3160 = vpop.f32.mrb[0].mxu0
    %v3161 = vadd.f32 %v3085, %v3160
    %v3162 = vpop.f32.mrb[0].mxu0
    %3163 = vdwg.mxu0
    %3164 = vmatprep.subr.mxu0 0.0
    %v3165 = vand.u32 %v3010, 4294901760
    %v3166 = vsub.f32 %v3010, %v3165
    %3167 = vmatpush1.xpose.msra.mxu0 %v3166
    %3168 = vmatprep.subr.mxu0 0.0
    %3169 = vmatpush1.xpose.msra.mxu0 0.0
    %3170 = vmatprep.subr.mxu0 0.0
    %3171 = vmatpush1.xpose.msra.mxu0 0.0
    %3172 = vmatprep.subr.mxu0 0.0
    %3173 = vmatpush1.xpose.msra.mxu0 0.0
    %3174 = vmatprep.subr.mxu0 0.0
    %3175 = vmatpush1.xpose.msra.mxu0 0.0
    %3176 = vmatprep.subr.mxu0 0.0
    %3177 = vmatpush1.xpose.msra.mxu0 0.0
    %3178 = vmatprep.subr.mxu0 0.0
    %3179 = vmatpush1.xpose.msra.mxu0 0.0
    %3180 = vmatprep.subr.mxu0 0.0
    %3181 = vmatpush1.xpose.msra.mxu0 0.0
    %3182 = vmatprep.subr.mxu0 0.0
    %3183 = vmatpush1.xpose.msra.mxu0 0.0
    %3184 = vmatprep.subr.mxu0 0.0
    %3185 = vmatpush1.xpose.msra.mxu0 0.0
    %3186 = vmatprep.subr.mxu0 0.0
    %3187 = vmatpush1.xpose.msra.mxu0 0.0
    %3188 = vmatprep.subr.mxu0 0.0
    %3189 = vmatpush1.xpose.msra.mxu0 0.0
    %3190 = vmatprep.subr.mxu0 0.0
    %3191 = vmatpush1.xpose.msra.mxu0 0.0
    %3192 = vmatprep.subr.mxu0 0.0
    %3193 = vmatpush1.xpose.msra.mxu0 0.0
    %3194 = vmatprep.subr.mxu0 0.0
    %3195 = vmatpush1.xpose.msra.mxu0 0.0
    %3196 = vmatprep.subr.mxu0 0.0
    %3197 = vmatpush1.xpose.msra.mxu0 0.0
    %3198 = vmatprep.subr.mxu0 0.0
    %3199 = vmatpush1.xpose.msra.mxu0 0.0
    %3200 = vmatprep.subr.mxu0 0.0
    %3201 = vmatpush1.xpose.msra.mxu0 0.0
    %3202 = vmatprep.subr.mxu0 0.0
    %3203 = vmatpush1.xpose.msra.mxu0 0.0
    %3204 = vmatprep.subr.mxu0 0.0
    %3205 = vmatpush1.xpose.msra.mxu0 0.0
    %3206 = vmatprep.subr.mxu0 0.0
    %3207 = vmatpush1.xpose.msra.mxu0 0.0
    %3208 = vmatprep.subr.mxu0 0.0
    %3209 = vmatpush1.xpose.msra.mxu0 0.0
    %3210 = vmatprep.subr.mxu0 0.0
    %3211 = vmatpush1.xpose.msra.mxu0 0.0
    %3212 = vmatprep.subr.mxu0 0.0
    %3213 = vmatpush1.xpose.msra.mxu0 0.0
    %3214 = vmatprep.subr.mxu0 0.0
    %3215 = vmatpush1.xpose.msra.mxu0 0.0
    %3216 = vmatprep.subr.mxu0 0.0
    %3217 = vmatpush1.xpose.msra.mxu0 0.0
    %3218 = vmatprep.subr.mxu0 0.0
    %3219 = vmatpush1.xpose.msra.mxu0 0.0
    %3220 = vmatprep.subr.mxu0 0.0
    %3221 = vmatpush1.xpose.msra.mxu0 0.0
    %3222 = vmatprep.subr.mxu0 0.0
    %3223 = vmatpush1.xpose.msra.mxu0 0.0
    %3224 = vmatprep.subr.mxu0 0.0
    %3225 = vmatpush1.xpose.msra.mxu0 0.0
    %3226 = vmatprep.subr.mxu0 0.0
    %3227 = vmatpush1.xpose.msra.mxu0 0.0
    %3228 = vmatprep.subr.mxu0 0.0
    %3229 = vmatpush1.xpose.msra.mxu0 0.0
    %3230 = vmatprep.mubr.f32.mxu0 0.0
    %v3231 = vand.u32 %v3008, 4294901760
    %v3232 = vsub.f32 %v3008, %v3231
    %3233 = vmatmul.mubr.f32.gmra.mrb[0].mxu0 %v3232
    %v3234 = vpop.f32.mrb[0].mxu0
    %v3235 = vadd.f32 %v3161, %v3234
    %v3236 = vpop.f32.mrb[0].mxu0
    %3237 = vdwg.mxu0
    %3238 = vmatprep.subr.mxu0 0.0
    %v3239 = vand.u32 %v3010, 4294901760
    %3240 = vmatpush1.xpose.msra.mxu0 %v3239
    %3241 = vmatprep.subr.mxu0 0.0
    %3242 = vmatpush1.xpose.msra.mxu0 0.0
    %3243 = vmatprep.subr.mxu0 0.0
    %3244 = vmatpush1.xpose.msra.mxu0 0.0
    %3245 = vmatprep.subr.mxu0 0.0
    %3246 = vmatpush1.xpose.msra.mxu0 0.0
    %3247 = vmatprep.subr.mxu0 0.0
    %3248 = vmatpush1.xpose.msra.mxu0 0.0
    %3249 = vmatprep.subr.mxu0 0.0
    %3250 = vmatpush1.xpose.msra.mxu0 0.0
    %3251 = vmatprep.subr.mxu0 0.0
    %3252 = vmatpush1.xpose.msra.mxu0 0.0
    %3253 = vmatprep.subr.mxu0 0.0
    %3254 = vmatpush1.xpose.msra.mxu0 0.0
    %3255 = vmatprep.subr.mxu0 0.0
    %3256 = vmatpush1.xpose.msra.mxu0 0.0
    %3257 = vmatprep.subr.mxu0 0.0
    %3258 = vmatpush1.xpose.msra.mxu0 0.0
    %3259 = vmatprep.subr.mxu0 0.0
    %3260 = vmatpush1.xpose.msra.mxu0 0.0
    %3261 = vmatprep.subr.mxu0 0.0
    %3262 = vmatpush1.xpose.msra.mxu0 0.0
    %3263 = vmatprep.subr.mxu0 0.0
    %3264 = vmatpush1.xpose.msra.mxu0 0.0
    %3265 = vmatprep.subr.mxu0 0.0
    %3266 = vmatpush1.xpose.msra.mxu0 0.0
    %3267 = vmatprep.subr.mxu0 0.0
    %3268 = vmatpush1.xpose.msra.mxu0 0.0
    %3269 = vmatprep.subr.mxu0 0.0
    %3270 = vmatpush1.xpose.msra.mxu0 0.0
    %3271 = vmatprep.subr.mxu0 0.0
    %3272 = vmatpush1.xpose.msra.mxu0 0.0
    %3273 = vmatprep.subr.mxu0 0.0
    %3274 = vmatpush1.xpose.msra.mxu0 0.0
    %3275 = vmatprep.subr.mxu0 0.0
    %3276 = vmatpush1.xpose.msra.mxu0 0.0
    %3277 = vmatprep.subr.mxu0 0.0
    %3278 = vmatpush1.xpose.msra.mxu0 0.0
    %3279 = vmatprep.subr.mxu0 0.0
    %3280 = vmatpush1.xpose.msra.mxu0 0.0
    %3281 = vmatprep.subr.mxu0 0.0
    %3282 = vmatpush1.xpose.msra.mxu0 0.0
    %3283 = vmatprep.subr.mxu0 0.0
    %3284 = vmatpush1.xpose.msra.mxu0 0.0
    %3285 = vmatprep.subr.mxu0 0.0
    %3286 = vmatpush1.xpose.msra.mxu0 0.0
    %3287 = vmatprep.subr.mxu0 0.0
    %3288 = vmatpush1.xpose.msra.mxu0 0.0
    %3289 = vmatprep.subr.mxu0 0.0
    %3290 = vmatpush1.xpose.msra.mxu0 0.0
    %3291 = vmatprep.subr.mxu0 0.0
    %3292 = vmatpush1.xpose.msra.mxu0 0.0
    %3293 = vmatprep.subr.mxu0 0.0
    %3294 = vmatpush1.xpose.msra.mxu0 0.0
    %3295 = vmatprep.subr.mxu0 0.0
    %3296 = vmatpush1.xpose.msra.mxu0 0.0
    %3297 = vmatprep.subr.mxu0 0.0
    %3298 = vmatpush1.xpose.msra.mxu0 0.0
    %3299 = vmatprep.subr.mxu0 0.0
    %3300 = vmatpush1.xpose.msra.mxu0 0.0
    %3301 = vmatprep.subr.mxu0 0.0
    %3302 = vmatpush1.xpose.msra.mxu0 0.0
    %3303 = vmatprep.mubr.f32.mxu0 0.0
    %v3304 = vand.u32 %v3008, 4294901760
    %v3305 = vsub.f32 %v3008, %v3304
    %v3306 = vand.u32 %v3305, 4294901760
    %3307 = vmatmul.mubr.f32.gmra.mrb[0].mxu0 %v3306
    %v3308 = vpop.f32.mrb[0].mxu0
    %v3309 = vadd.f32 %v3235, %v3308
    %v3310 = vpop.f32.mrb[0].mxu0
    %3311 = vdwg.mxu0
    %3312 = vmatprep.subr.mxu0 0.0
    %v3313 = vand.u32 %v3010, 4294901760
    %v3314 = vsub.f32 %v3010, %v3313
    %v3315 = vand.u32 %v3314, 4294901760
    %3316 = vmatpush1.xpose.msra.mxu0 %v3315
    %3317 = vmatprep.subr.mxu0 0.0
    %3318 = vmatpush1.xpose.msra.mxu0 0.0
    %3319 = vmatprep.subr.mxu0 0.0
    %3320 = vmatpush1.xpose.msra.mxu0 0.0
    %3321 = vmatprep.subr.mxu0 0.0
    %3322 = vmatpush1.xpose.msra.mxu0 0.0
    %3323 = vmatprep.subr.mxu0 0.0
    %3324 = vmatpush1.xpose.msra.mxu0 0.0
    %3325 = vmatprep.subr.mxu0 0.0
    %3326 = vmatpush1.xpose.msra.mxu0 0.0
    %3327 = vmatprep.subr.mxu0 0.0
    %3328 = vmatpush1.xpose.msra.mxu0 0.0
    %3329 = vmatprep.subr.mxu0 0.0
    %3330 = vmatpush1.xpose.msra.mxu0 0.0
    %3331 = vmatprep.subr.mxu0 0.0
    %3332 = vmatpush1.xpose.msra.mxu0 0.0
    %3333 = vmatprep.subr.mxu0 0.0
    %3334 = vmatpush1.xpose.msra.mxu0 0.0
    %3335 = vmatprep.subr.mxu0 0.0
    %3336 = vmatpush1.xpose.msra.mxu0 0.0
    %3337 = vmatprep.subr.mxu0 0.0
    %3338 = vmatpush1.xpose.msra.mxu0 0.0
    %3339 = vmatprep.subr.mxu0 0.0
    %3340 = vmatpush1.xpose.msra.mxu0 0.0
    %3341 = vmatprep.subr.mxu0 0.0
    %3342 = vmatpush1.xpose.msra.mxu0 0.0
    %3343 = vmatprep.subr.mxu0 0.0
    %3344 = vmatpush1.xpose.msra.mxu0 0.0
    %3345 = vmatprep.subr.mxu0 0.0
    %3346 = vmatpush1.xpose.msra.mxu0 0.0
    %3347 = vmatprep.subr.mxu0 0.0
    %3348 = vmatpush1.xpose.msra.mxu0 0.0
    %3349 = vmatprep.subr.mxu0 0.0
    %3350 = vmatpush1.xpose.msra.mxu0 0.0
    %3351 = vmatprep.subr.mxu0 0.0
    %3352 = vmatpush1.xpose.msra.mxu0 0.0
    %3353 = vmatprep.subr.mxu0 0.0
    %3354 = vmatpush1.xpose.msra.mxu0 0.0
    %3355 = vmatprep.subr.mxu0 0.0
    %3356 = vmatpush1.xpose.msra.mxu0 0.0
    %3357 = vmatprep.subr.mxu0 0.0
    %3358 = vmatpush1.xpose.msra.mxu0 0.0
    %3359 = vmatprep.subr.mxu0 0.0
    %3360 = vmatpush1.xpose.msra.mxu0 0.0
    %3361 = vmatprep.subr.mxu0 0.0
    %3362 = vmatpush1.xpose.msra.mxu0 0.0
    %3363 = vmatprep.subr.mxu0 0.0
    %3364 = vmatpush1.xpose.msra.mxu0 0.0
    %3365 = vmatprep.subr.mxu0 0.0
    %3366 = vmatpush1.xpose.msra.mxu0 0.0
    %3367 = vmatprep.subr.mxu0 0.0
    %3368 = vmatpush1.xpose.msra.mxu0 0.0
    %3369 = vmatprep.subr.mxu0 0.0
    %3370 = vmatpush1.xpose.msra.mxu0 0.0
    %3371 = vmatprep.subr.mxu0 0.0
    %3372 = vmatpush1.xpose.msra.mxu0 0.0
    %3373 = vmatprep.subr.mxu0 0.0
    %3374 = vmatpush1.xpose.msra.mxu0 0.0
    %3375 = vmatprep.subr.mxu0 0.0
    %3376 = vmatpush1.xpose.msra.mxu0 0.0
    %3377 = vmatprep.subr.mxu0 0.0
    %3378 = vmatpush1.xpose.msra.mxu0 0.0
    %3379 = vmatprep.mubr.f32.mxu0 0.0
    %v3380 = vand.u32 %v3008, 4294901760
    %3381 = vmatmul.mubr.f32.gmra.mrb[0].mxu0 %v3380
    %v3382 = vpop.f32.mrb[0].mxu0
    %v3383 = vadd.f32 %v3309, %v3382
    %v3384 = vpop.f32.mrb[0].mxu0
    %3385 = vdwg.mxu0
    %3386 = vmatprep.subr.mxu0 0.0
    %v3387 = vand.u32 %v3010, 4294901760
    %3388 = vmatpush1.xpose.msra.mxu0 %v3387
    %3389 = vmatprep.subr.mxu0 0.0
    %3390 = vmatpush1.xpose.msra.mxu0 0.0
    %3391 = vmatprep.subr.mxu0 0.0
    %3392 = vmatpush1.xpose.msra.mxu0 0.0
    %3393 = vmatprep.subr.mxu0 0.0
    %3394 = vmatpush1.xpose.msra.mxu0 0.0
    %3395 = vmatprep.subr.mxu0 0.0
    %3396 = vmatpush1.xpose.msra.mxu0 0.0
    %3397 = vmatprep.subr.mxu0 0.0
    %3398 = vmatpush1.xpose.msra.mxu0 0.0
    %3399 = vmatprep.subr.mxu0 0.0
    %3400 = vmatpush1.xpose.msra.mxu0 0.0
    %3401 = vmatprep.subr.mxu0 0.0
    %3402 = vmatpush1.xpose.msra.mxu0 0.0
    %3403 = vmatprep.subr.mxu0 0.0
    %3404 = vmatpush1.xpose.msra.mxu0 0.0
    %3405 = vmatprep.subr.mxu0 0.0
    %3406 = vmatpush1.xpose.msra.mxu0 0.0
    %3407 = vmatprep.subr.mxu0 0.0
    %3408 = vmatpush1.xpose.msra.mxu0 0.0
    %3409 = vmatprep.subr.mxu0 0.0
    %3410 = vmatpush1.xpose.msra.mxu0 0.0
    %3411 = vmatprep.subr.mxu0 0.0
    %3412 = vmatpush1.xpose.msra.mxu0 0.0
    %3413 = vmatprep.subr.mxu0 0.0
    %3414 = vmatpush1.xpose.msra.mxu0 0.0
    %3415 = vmatprep.subr.mxu0 0.0
    %3416 = vmatpush1.xpose.msra.mxu0 0.0
    %3417 = vmatprep.subr.mxu0 0.0
    %3418 = vmatpush1.xpose.msra.mxu0 0.0
    %3419 = vmatprep.subr.mxu0 0.0
    %3420 = vmatpush1.xpose.msra.mxu0 0.0
    %3421 = vmatprep.subr.mxu0 0.0
    %3422 = vmatpush1.xpose.msra.mxu0 0.0
    %3423 = vmatprep.subr.mxu0 0.0
    %3424 = vmatpush1.xpose.msra.mxu0 0.0
    %3425 = vmatprep.subr.mxu0 0.0
    %3426 = vmatpush1.xpose.msra.mxu0 0.0
    %3427 = vmatprep.subr.mxu0 0.0
    %3428 = vmatpush1.xpose.msra.mxu0 0.0
    %3429 = vmatprep.subr.mxu0 0.0
    %3430 = vmatpush1.xpose.msra.mxu0 0.0
    %3431 = vmatprep.subr.mxu0 0.0
    %3432 = vmatpush1.xpose.msra.mxu0 0.0
    %3433 = vmatprep.subr.mxu0 0.0
    %3434 = vmatpush1.xpose.msra.mxu0 0.0
    %3435 = vmatprep.subr.mxu0 0.0
    %3436 = vmatpush1.xpose.msra.mxu0 0.0
    %3437 = vmatprep.subr.mxu0 0.0
    %3438 = vmatpush1.xpose.msra.mxu0 0.0
    %3439 = vmatprep.subr.mxu0 0.0
    %3440 = vmatpush1.xpose.msra.mxu0 0.0
    %3441 = vmatprep.subr.mxu0 0.0
    %3442 = vmatpush1.xpose.msra.mxu0 0.0
    %3443 = vmatprep.subr.mxu0 0.0
    %3444 = vmatpush1.xpose.msra.mxu0 0.0
    %3445 = vmatprep.subr.mxu0 0.0
    %3446 = vmatpush1.xpose.msra.mxu0 0.0
    %3447 = vmatprep.subr.mxu0 0.0
    %3448 = vmatpush1.xpose.msra.mxu0 0.0
    %3449 = vmatprep.subr.mxu0 0.0
    %3450 = vmatpush1.xpose.msra.mxu0 0.0
    %3451 = vmatprep.mubr.f32.mxu0 0.0
    %v3452 = vand.u32 %v3008, 4294901760
    %3453 = vmatmul.mubr.f32.gmra.mrb[0].mxu0 %v3452
    %v3454 = vpop.f32.mrb[0].mxu0
    %v3455 = vadd.f32 %v3383, %v3454
    %v3456 = vpop.f32.mrb[0].mxu0
    %3457 = vdwg.mxu0
    %v3458 = vsel %vm720, %v3001, -inf
    %3459 = vmax.xlane.f32.xlu0 %v3458
    %v3460 = vpop.xlane.xlu0 %3459
    %v3461 = vsel %vm720, %v3455, -inf
    %3462 = vmax.xlane.f32.xlu0 %v3461
    %v3463 = vpop.xlane.xlu0 %3462
    %v3464 = vsub.f32 %v3001, %v3460
    %v3465 = vsub.f32 %v3455, %v3463
    %v3466 = vmul.f32 %v3464, 1.442695
    %v3467 = vpow.pop %v3466
    %v3468 = vmul.f32 %v3465, 1.442695
    %v3469 = vpow.pop %v3468
    %v3470 = vsel %vm720, %v3467, 0.0
    %3471 = vadd.xlane.f32.xlu0 %v3470
    %v3472 = vpop.xlane.xlu0 %3471
    %v3473 = vsel %vm720, %v3469, 0.0
    %3474 = vadd.xlane.f32.xlu0 %v3473
    %v3475 = vpop.xlane.xlu0 %3474
    %v3476 = vrcp.pop %v3472
    %v3477 = vrcp.pop %v3475
    %v3478 = vmul.f32 %v3467, %v3476
    %v3479 = vmul.f32 %v3469, %v3477
    %3480 = vrot.lane.b32.xlu0 %v708, 56
    %v3481 = vpop.permute.xlu0 %3480
    %v3484 = vsel %vm720, %v3478, 0
    %3486 = vmatprep.subr.mxu0 0.0
    %v3487 = vand.u32 %v3481, 4294901760
    %3488 = vmatpush1.msra.mxu0 %v3487
    %3489 = vmatprep.subr.mxu0 0.0
    %3490 = vmatpush1.msra.mxu0 0.0
    %3491 = vmatprep.subr.mxu0 0.0
    %3492 = vmatpush1.msra.mxu0 0.0
    %3493 = vmatprep.subr.mxu0 0.0
    %3494 = vmatpush1.msra.mxu0 0.0
    %3495 = vmatprep.subr.mxu0 0.0
    %3496 = vmatpush1.msra.mxu0 0.0
    %3497 = vmatprep.subr.mxu0 0.0
    %3498 = vmatpush1.msra.mxu0 0.0
    %3499 = vmatprep.subr.mxu0 0.0
    %3500 = vmatpush1.msra.mxu0 0.0
    %3501 = vmatprep.subr.mxu0 0.0
    %3502 = vmatpush1.msra.mxu0 0.0
    %3503 = vmatprep.subr.mxu0 0.0
    %3504 = vmatpush1.msra.mxu0 0.0
    %3505 = vmatprep.subr.mxu0 0.0
    %3506 = vmatpush1.msra.mxu0 0.0
    %3507 = vmatprep.subr.mxu0 0.0
    %3508 = vmatpush1.msra.mxu0 0.0
    %3509 = vmatprep.subr.mxu0 0.0
    %3510 = vmatpush1.msra.mxu0 0.0
    %3511 = vmatprep.subr.mxu0 0.0
    %3512 = vmatpush1.msra.mxu0 0.0
    %3513 = vmatprep.subr.mxu0 0.0
    %3514 = vmatpush1.msra.mxu0 0.0
    %3515 = vmatprep.subr.mxu0 0.0
    %3516 = vmatpush1.msra.mxu0 0.0
    %3517 = vmatprep.subr.mxu0 0.0
    %3518 = vmatpush1.msra.mxu0 0.0
    %3519 = vmatprep.subr.mxu0 0.0
    %3520 = vmatpush1.msra.mxu0 0.0
    %3521 = vmatprep.subr.mxu0 0.0
    %3522 = vmatpush1.msra.mxu0 0.0
    %3523 = vmatprep.subr.mxu0 0.0
    %3524 = vmatpush1.msra.mxu0 0.0
    %3525 = vmatprep.subr.mxu0 0.0
    %3526 = vmatpush1.msra.mxu0 0.0
    %3527 = vmatprep.subr.mxu0 0.0
    %3528 = vmatpush1.msra.mxu0 0.0
    %3529 = vmatprep.subr.mxu0 0.0
    %3530 = vmatpush1.msra.mxu0 0.0
    %3531 = vmatprep.subr.mxu0 0.0
    %3532 = vmatpush1.msra.mxu0 0.0
    %3533 = vmatprep.subr.mxu0 0.0
    %3534 = vmatpush1.msra.mxu0 0.0
    %3535 = vmatprep.subr.mxu0 0.0
    %3536 = vmatpush1.msra.mxu0 0.0
    %3537 = vmatprep.subr.mxu0 0.0
    %3538 = vmatpush1.msra.mxu0 0.0
    %3539 = vmatprep.subr.mxu0 0.0
    %3540 = vmatpush1.msra.mxu0 0.0
    %3541 = vmatprep.subr.mxu0 0.0
    %3542 = vmatpush1.msra.mxu0 0.0
    %3543 = vmatprep.subr.mxu0 0.0
    %3544 = vmatpush1.msra.mxu0 0.0
    %3545 = vmatprep.subr.mxu0 0.0
    %3546 = vmatpush1.msra.mxu0 0.0
    %3547 = vmatprep.subr.mxu0 0.0
    %3548 = vmatpush1.msra.mxu0 0.0
    %3549 = vmatprep.subr.mxu0 0.0
    %3550 = vmatpush1.msra.mxu0 0.0
    %3551 = vmatprep.mubr.f32.mxu0 0.0
    %v3552 = vand.u32 %v3484, 4294901760
    %v3553 = vsub.f32 %v3484, %v3552
    %v3554 = vand.u32 %v3553, 4294901760
    %v3555 = vsub.f32 %v3553, %v3554
    %v3556 = vand.u32 %v3555, 4294901760
    %3557 = vmatmul.mubr.f32.gmra.mrb[0].mxu0 %v3556
    %v3558 = vpop.f32.mrb[0].mxu0
    %v3559 = vadd.f32 0.0, %v3558
    %v3560 = vpop.f32.mrb[0].mxu0
    %3561 = vdwg.mxu0
    %3562 = vmatprep.subr.mxu0 0.0
    %v3563 = vand.u32 %v3481, 4294901760
    %v3564 = vsub.f32 %v3481, %v3563
    %v3565 = vand.u32 %v3564, 4294901760
    %v3566 = vsub.f32 %v3564, %v3565
    %v3567 = vand.u32 %v3566, 4294901760
    %3568 = vmatpush1.msra.mxu0 %v3567
    %3569 = vmatprep.subr.mxu0 0.0
    %3570 = vmatpush1.msra.mxu0 0.0
    %3571 = vmatprep.subr.mxu0 0.0
    %3572 = vmatpush1.msra.mxu0 0.0
    %3573 = vmatprep.subr.mxu0 0.0
    %3574 = vmatpush1.msra.mxu0 0.0
    %3575 = vmatprep.subr.mxu0 0.0
    %3576 = vmatpush1.msra.mxu0 0.0
    %3577 = vmatprep.subr.mxu0 0.0
    %3578 = vmatpush1.msra.mxu0 0.0
    %3579 = vmatprep.subr.mxu0 0.0
    %3580 = vmatpush1.msra.mxu0 0.0
    %3581 = vmatprep.subr.mxu0 0.0
    %3582 = vmatpush1.msra.mxu0 0.0
    %3583 = vmatprep.subr.mxu0 0.0
    %3584 = vmatpush1.msra.mxu0 0.0
    %3585 = vmatprep.subr.mxu0 0.0
    %3586 = vmatpush1.msra.mxu0 0.0
    %3587 = vmatprep.subr.mxu0 0.0
    %3588 = vmatpush1.msra.mxu0 0.0
    %3589 = vmatprep.subr.mxu0 0.0
    %3590 = vmatpush1.msra.mxu0 0.0
    %3591 = vmatprep.subr.mxu0 0.0
    %3592 = vmatpush1.msra.mxu0 0.0
    %3593 = vmatprep.subr.mxu0 0.0
    %3594 = vmatpush1.msra.mxu0 0.0
    %3595 = vmatprep.subr.mxu0 0.0
    %3596 = vmatpush1.msra.mxu0 0.0
    %3597 = vmatprep.subr.mxu0 0.0
    %3598 = vmatpush1.msra.mxu0 0.0
    %3599 = vmatprep.subr.mxu0 0.0
    %3600 = vmatpush1.msra.mxu0 0.0
    %3601 = vmatprep.subr.mxu0 0.0
    %3602 = vmatpush1.msra.mxu0 0.0
    %3603 = vmatprep.subr.mxu0 0.0
    %3604 = vmatpush1.msra.mxu0 0.0
    %3605 = vmatprep.subr.mxu0 0.0
    %3606 = vmatpush1.msra.mxu0 0.0
    %3607 = vmatprep.subr.mxu0 0.0
    %3608 = vmatpush1.msra.mxu0 0.0
    %3609 = vmatprep.subr.mxu0 0.0
    %3610 = vmatpush1.msra.mxu0 0.0
    %3611 = vmatprep.subr.mxu0 0.0
    %3612 = vmatpush1.msra.mxu0 0.0
    %3613 = vmatprep.subr.mxu0 0.0
    %3614 = vmatpush1.msra.mxu0 0.0
    %3615 = vmatprep.subr.mxu0 0.0
    %3616 = vmatpush1.msra.mxu0 0.0
    %3617 = vmatprep.subr.mxu0 0.0
    %3618 = vmatpush1.msra.mxu0 0.0
    %3619 = vmatprep.subr.mxu0 0.0
    %3620 = vmatpush1.msra.mxu0 0.0
    %3621 = vmatprep.subr.mxu0 0.0
    %3622 = vmatpush1.msra.mxu0 0.0
    %3623 = vmatprep.subr.mxu0 0.0
    %3624 = vmatpush1.msra.mxu0 0.0
    %3625 = vmatprep.subr.mxu0 0.0
    %3626 = vmatpush1.msra.mxu0 0.0
    %3627 = vmatprep.subr.mxu0 0.0
    %3628 = vmatpush1.msra.mxu0 0.0
    %3629 = vmatprep.subr.mxu0 0.0
    %3630 = vmatpush1.msra.mxu0 0.0
    %3631 = vmatprep.mubr.f32.mxu0 0.0
    %v3632 = vand.u32 %v3484, 4294901760
    %3633 = vmatmul.mubr.f32.gmra.mrb[0].mxu0 %v3632
    %v3634 = vpop.f32.mrb[0].mxu0
    %v3635 = vadd.f32 %v3559, %v3634
    %v3636 = vpop.f32.mrb[0].mxu0
    %3637 = vdwg.mxu0
    %3638 = vmatprep.subr.mxu0 0.0
    %v3639 = vand.u32 %v3481, 4294901760
    %v3640 = vsub.f32 %v3481, %v3639
    %3641 = vmatpush1.msra.mxu0 %v3640
    %3642 = vmatprep.subr.mxu0 0.0
    %3643 = vmatpush1.msra.mxu0 0.0
    %3644 = vmatprep.subr.mxu0 0.0
    %3645 = vmatpush1.msra.mxu0 0.0
    %3646 = vmatprep.subr.mxu0 0.0
    %3647 = vmatpush1.msra.mxu0 0.0
    %3648 = vmatprep.subr.mxu0 0.0
    %3649 = vmatpush1.msra.mxu0 0.0
    %3650 = vmatprep.subr.mxu0 0.0
    %3651 = vmatpush1.msra.mxu0 0.0
    %3652 = vmatprep.subr.mxu0 0.0
    %3653 = vmatpush1.msra.mxu0 0.0
    %3654 = vmatprep.subr.mxu0 0.0
    %3655 = vmatpush1.msra.mxu0 0.0
    %3656 = vmatprep.subr.mxu0 0.0
    %3657 = vmatpush1.msra.mxu0 0.0
    %3658 = vmatprep.subr.mxu0 0.0
    %3659 = vmatpush1.msra.mxu0 0.0
    %3660 = vmatprep.subr.mxu0 0.0
    %3661 = vmatpush1.msra.mxu0 0.0
    %3662 = vmatprep.subr.mxu0 0.0
    %3663 = vmatpush1.msra.mxu0 0.0
    %3664 = vmatprep.subr.mxu0 0.0
    %3665 = vmatpush1.msra.mxu0 0.0
    %3666 = vmatprep.subr.mxu0 0.0
    %3667 = vmatpush1.msra.mxu0 0.0
    %3668 = vmatprep.subr.mxu0 0.0
    %3669 = vmatpush1.msra.mxu0 0.0
    %3670 = vmatprep.subr.mxu0 0.0
    %3671 = vmatpush1.msra.mxu0 0.0
    %3672 = vmatprep.subr.mxu0 0.0
    %3673 = vmatpush1.msra.mxu0 0.0
    %3674 = vmatprep.subr.mxu0 0.0
    %3675 = vmatpush1.msra.mxu0 0.0
    %3676 = vmatprep.subr.mxu0 0.0
    %3677 = vmatpush1.msra.mxu0 0.0
    %3678 = vmatprep.subr.mxu0 0.0
    %3679 = vmatpush1.msra.mxu0 0.0
    %3680 = vmatprep.subr.mxu0 0.0
    %3681 = vmatpush1.msra.mxu0 0.0
    %3682 = vmatprep.subr.mxu0 0.0
    %3683 = vmatpush1.msra.mxu0 0.0
    %3684 = vmatprep.subr.mxu0 0.0
    %3685 = vmatpush1.msra.mxu0 0.0
    %3686 = vmatprep.subr.mxu0 0.0
    %3687 = vmatpush1.msra.mxu0 0.0
    %3688 = vmatprep.subr.mxu0 0.0
    %3689 = vmatpush1.msra.mxu0 0.0
    %3690 = vmatprep.subr.mxu0 0.0
    %3691 = vmatpush1.msra.mxu0 0.0
    %3692 = vmatprep.subr.mxu0 0.0
    %3693 = vmatpush1.msra.mxu0 0.0
    %3694 = vmatprep.subr.mxu0 0.0
    %3695 = vmatpush1.msra.mxu0 0.0
    %3696 = vmatprep.subr.mxu0 0.0
    %3697 = vmatpush1.msra.mxu0 0.0
    %3698 = vmatprep.subr.mxu0 0.0
    %3699 = vmatpush1.msra.mxu0 0.0
    %3700 = vmatprep.subr.mxu0 0.0
    %3701 = vmatpush1.msra.mxu0 0.0
    %3702 = vmatprep.subr.mxu0 0.0
    %3703 = vmatpush1.msra.mxu0 0.0
    %3704 = vmatprep.mubr.f32.mxu0 0.0
    %v3705 = vand.u32 %v3484, 4294901760
    %v3706 = vsub.f32 %v3484, %v3705
    %3707 = vmatmul.mubr.f32.gmra.mrb[0].mxu0 %v3706
    %v3708 = vpop.f32.mrb[0].mxu0
    %v3709 = vadd.f32 %v3635, %v3708
    %v3710 = vpop.f32.mrb[0].mxu0
    %3711 = vdwg.mxu0
    %3712 = vmatprep.subr.mxu0 0.0
    %v3713 = vand.u32 %v3481, 4294901760
    %3714 = vmatpush1.msra.mxu0 %v3713
    %3715 = vmatprep.subr.mxu0 0.0
    %3716 = vmatpush1.msra.mxu0 0.0
    %3717 = vmatprep.subr.mxu0 0.0
    %3718 = vmatpush1.msra.mxu0 0.0
    %3719 = vmatprep.subr.mxu0 0.0
    %3720 = vmatpush1.msra.mxu0 0.0
    %3721 = vmatprep.subr.mxu0 0.0
    %3722 = vmatpush1.msra.mxu0 0.0
    %3723 = vmatprep.subr.mxu0 0.0
    %3724 = vmatpush1.msra.mxu0 0.0
    %3725 = vmatprep.subr.mxu0 0.0
    %3726 = vmatpush1.msra.mxu0 0.0
    %3727 = vmatprep.subr.mxu0 0.0
    %3728 = vmatpush1.msra.mxu0 0.0
    %3729 = vmatprep.subr.mxu0 0.0
    %3730 = vmatpush1.msra.mxu0 0.0
    %3731 = vmatprep.subr.mxu0 0.0
    %3732 = vmatpush1.msra.mxu0 0.0
    %3733 = vmatprep.subr.mxu0 0.0
    %3734 = vmatpush1.msra.mxu0 0.0
    %3735 = vmatprep.subr.mxu0 0.0
    %3736 = vmatpush1.msra.mxu0 0.0
    %3737 = vmatprep.subr.mxu0 0.0
    %3738 = vmatpush1.msra.mxu0 0.0
    %3739 = vmatprep.subr.mxu0 0.0
    %3740 = vmatpush1.msra.mxu0 0.0
    %3741 = vmatprep.subr.mxu0 0.0
    %3742 = vmatpush1.msra.mxu0 0.0
    %3743 = vmatprep.subr.mxu0 0.0
    %3744 = vmatpush1.msra.mxu0 0.0
    %3745 = vmatprep.subr.mxu0 0.0
    %3746 = vmatpush1.msra.mxu0 0.0
    %3747 = vmatprep.subr.mxu0 0.0
    %3748 = vmatpush1.msra.mxu0 0.0
    %3749 = vmatprep.subr.mxu0 0.0
    %3750 = vmatpush1.msra.mxu0 0.0
    %3751 = vmatprep.subr.mxu0 0.0
    %3752 = vmatpush1.msra.mxu0 0.0
    %3753 = vmatprep.subr.mxu0 0.0
    %3754 = vmatpush1.msra.mxu0 0.0
    %3755 = vmatprep.subr.mxu0 0.0
    %3756 = vmatpush1.msra.mxu0 0.0
    %3757 = vmatprep.subr.mxu0 0.0
    %3758 = vmatpush1.msra.mxu0 0.0
    %3759 = vmatprep.subr.mxu0 0.0
    %3760 = vmatpush1.msra.mxu0 0.0
    %3761 = vmatprep.subr.mxu0 0.0
    %3762 = vmatpush1.msra.mxu0 0.0
    %3763 = vmatprep.subr.mxu0 0.0
    %3764 = vmatpush1.msra.mxu0 0.0
    %3765 = vmatprep.subr.mxu0 0.0
    %3766 = vmatpush1.msra.mxu0 0.0
    %3767 = vmatprep.subr.mxu0 0.0
    %3768 = vmatpush1.msra.mxu0 0.0
    %3769 = vmatprep.subr.mxu0 0.0
    %3770 = vmatpush1.msra.mxu0 0.0
    %3771 = vmatprep.subr.mxu0 0.0
    %3772 = vmatpush1.msra.mxu0 0.0
    %3773 = vmatprep.subr.mxu0 0.0
    %3774 = vmatpush1.msra.mxu0 0.0
    %3775 = vmatprep.subr.mxu0 0.0
    %3776 = vmatpush1.msra.mxu0 0.0
    %3777 = vmatprep.mubr.f32.mxu0 0.0
    %v3778 = vand.u32 %v3484, 4294901760
    %v3779 = vsub.f32 %v3484, %v3778
    %v3780 = vand.u32 %v3779, 4294901760
    %3781 = vmatmul.mubr.f32.gmra.mrb[0].mxu0 %v3780
    %v3782 = vpop.f32.mrb[0].mxu0
    %v3783 = vadd.f32 %v3709, %v3782
    %v3784 = vpop.f32.mrb[0].mxu0
    %3785 = vdwg.mxu0
    %3786 = vmatprep.subr.mxu0 0.0
    %v3787 = vand.u32 %v3481, 4294901760
    %v3788 = vsub.f32 %v3481, %v3787
    %v3789 = vand.u32 %v3788, 4294901760
    %3790 = vmatpush1.msra.mxu0 %v3789
    %3791 = vmatprep.subr.mxu0 0.0
    %3792 = vmatpush1.msra.mxu0 0.0
    %3793 = vmatprep.subr.mxu0 0.0
    %3794 = vmatpush1.msra.mxu0 0.0
    %3795 = vmatprep.subr.mxu0 0.0
    %3796 = vmatpush1.msra.mxu0 0.0
    %3797 = vmatprep.subr.mxu0 0.0
    %3798 = vmatpush1.msra.mxu0 0.0
    %3799 = vmatprep.subr.mxu0 0.0
    %3800 = vmatpush1.msra.mxu0 0.0
    %3801 = vmatprep.subr.mxu0 0.0
    %3802 = vmatpush1.msra.mxu0 0.0
    %3803 = vmatprep.subr.mxu0 0.0
    %3804 = vmatpush1.msra.mxu0 0.0
    %3805 = vmatprep.subr.mxu0 0.0
    %3806 = vmatpush1.msra.mxu0 0.0
    %3807 = vmatprep.subr.mxu0 0.0
    %3808 = vmatpush1.msra.mxu0 0.0
    %3809 = vmatprep.subr.mxu0 0.0
    %3810 = vmatpush1.msra.mxu0 0.0
    %3811 = vmatprep.subr.mxu0 0.0
    %3812 = vmatpush1.msra.mxu0 0.0
    %3813 = vmatprep.subr.mxu0 0.0
    %3814 = vmatpush1.msra.mxu0 0.0
    %3815 = vmatprep.subr.mxu0 0.0
    %3816 = vmatpush1.msra.mxu0 0.0
    %3817 = vmatprep.subr.mxu0 0.0
    %3818 = vmatpush1.msra.mxu0 0.0
    %3819 = vmatprep.subr.mxu0 0.0
    %3820 = vmatpush1.msra.mxu0 0.0
    %3821 = vmatprep.subr.mxu0 0.0
    %3822 = vmatpush1.msra.mxu0 0.0
    %3823 = vmatprep.subr.mxu0 0.0
    %3824 = vmatpush1.msra.mxu0 0.0
    %3825 = vmatprep.subr.mxu0 0.0
    %3826 = vmatpush1.msra.mxu0 0.0
    %3827 = vmatprep.subr.mxu0 0.0
    %3828 = vmatpush1.msra.mxu0 0.0
    %3829 = vmatprep.subr.mxu0 0.0
    %3830 = vmatpush1.msra.mxu0 0.0
    %3831 = vmatprep.subr.mxu0 0.0
    %3832 = vmatpush1.msra.mxu0 0.0
    %3833 = vmatprep.subr.mxu0 0.0
    %3834 = vmatpush1.msra.mxu0 0.0
    %3835 = vmatprep.subr.mxu0 0.0
    %3836 = vmatpush1.msra.mxu0 0.0
    %3837 = vmatprep.subr.mxu0 0.0
    %3838 = vmatpush1.msra.mxu0 0.0
    %3839 = vmatprep.subr.mxu0 0.0
    %3840 = vmatpush1.msra.mxu0 0.0
    %3841 = vmatprep.subr.mxu0 0.0
    %3842 = vmatpush1.msra.mxu0 0.0
    %3843 = vmatprep.subr.mxu0 0.0
    %3844 = vmatpush1.msra.mxu0 0.0
    %3845 = vmatprep.subr.mxu0 0.0
    %3846 = vmatpush1.msra.mxu0 0.0
    %3847 = vmatprep.subr.mxu0 0.0
    %3848 = vmatpush1.msra.mxu0 0.0
    %3849 = vmatprep.subr.mxu0 0.0
    %3850 = vmatpush1.msra.mxu0 0.0
    %3851 = vmatprep.subr.mxu0 0.0
    %3852 = vmatpush1.msra.mxu0 0.0
    %3853 = vmatprep.mubr.f32.mxu0 0.0
    %v3854 = vand.u32 %v3484, 4294901760
    %3855 = vmatmul.mubr.f32.gmra.mrb[0].mxu0 %v3854
    %v3856 = vpop.f32.mrb[0].mxu0
    %v3857 = vadd.f32 %v3783, %v3856
    %v3858 = vpop.f32.mrb[0].mxu0
    %3859 = vdwg.mxu0
    %3860 = vmatprep.subr.mxu0 0.0
    %v3861 = vand.u32 %v3481, 4294901760
    %3862 = vmatpush1.msra.mxu0 %v3861
    %3863 = vmatprep.subr.mxu0 0.0
    %3864 = vmatpush1.msra.mxu0 0.0
    %3865 = vmatprep.subr.mxu0 0.0
    %3866 = vmatpush1.msra.mxu0 0.0
    %3867 = vmatprep.subr.mxu0 0.0
    %3868 = vmatpush1.msra.mxu0 0.0
    %3869 = vmatprep.subr.mxu0 0.0
    %3870 = vmatpush1.msra.mxu0 0.0
    %3871 = vmatprep.subr.mxu0 0.0
    %3872 = vmatpush1.msra.mxu0 0.0
    %3873 = vmatprep.subr.mxu0 0.0
    %3874 = vmatpush1.msra.mxu0 0.0
    %3875 = vmatprep.subr.mxu0 0.0
    %3876 = vmatpush1.msra.mxu0 0.0
    %3877 = vmatprep.subr.mxu0 0.0
    %3878 = vmatpush1.msra.mxu0 0.0
    %3879 = vmatprep.subr.mxu0 0.0
    %3880 = vmatpush1.msra.mxu0 0.0
    %3881 = vmatprep.subr.mxu0 0.0
    %3882 = vmatpush1.msra.mxu0 0.0
    %3883 = vmatprep.subr.mxu0 0.0
    %3884 = vmatpush1.msra.mxu0 0.0
    %3885 = vmatprep.subr.mxu0 0.0
    %3886 = vmatpush1.msra.mxu0 0.0
    %3887 = vmatprep.subr.mxu0 0.0
    %3888 = vmatpush1.msra.mxu0 0.0
    %3889 = vmatprep.subr.mxu0 0.0
    %3890 = vmatpush1.msra.mxu0 0.0
    %3891 = vmatprep.subr.mxu0 0.0
    %3892 = vmatpush1.msra.mxu0 0.0
    %3893 = vmatprep.subr.mxu0 0.0
    %3894 = vmatpush1.msra.mxu0 0.0
    %3895 = vmatprep.subr.mxu0 0.0
    %3896 = vmatpush1.msra.mxu0 0.0
    %3897 = vmatprep.subr.mxu0 0.0
    %3898 = vmatpush1.msra.mxu0 0.0
    %3899 = vmatprep.subr.mxu0 0.0
    %3900 = vmatpush1.msra.mxu0 0.0
    %3901 = vmatprep.subr.mxu0 0.0
    %3902 = vmatpush1.msra.mxu0 0.0
    %3903 = vmatprep.subr.mxu0 0.0
    %3904 = vmatpush1.msra.mxu0 0.0
    %3905 = vmatprep.subr.mxu0 0.0
    %3906 = vmatpush1.msra.mxu0 0.0
    %3907 = vmatprep.subr.mxu0 0.0
    %3908 = vmatpush1.msra.mxu0 0.0
    %3909 = vmatprep.subr.mxu0 0.0
    %3910 = vmatpush1.msra.mxu0 0.0
    %3911 = vmatprep.subr.mxu0 0.0
    %3912 = vmatpush1.msra.mxu0 0.0
    %3913 = vmatprep.subr.mxu0 0.0
    %3914 = vmatpush1.msra.mxu0 0.0
    %3915 = vmatprep.subr.mxu0 0.0
    %3916 = vmatpush1.msra.mxu0 0.0
    %3917 = vmatprep.subr.mxu0 0.0
    %3918 = vmatpush1.msra.mxu0 0.0
    %3919 = vmatprep.subr.mxu0 0.0
    %3920 = vmatpush1.msra.mxu0 0.0
    %3921 = vmatprep.subr.mxu0 0.0
    %3922 = vmatpush1.msra.mxu0 0.0
    %3923 = vmatprep.subr.mxu0 0.0
    %3924 = vmatpush1.msra.mxu0 0.0
    %3925 = vmatprep.mubr.f32.mxu0 0.0
    %v3926 = vand.u32 %v3484, 4294901760
    %3927 = vmatmul.mubr.f32.gmra.mrb[0].mxu0 %v3926
    %v3928 = vpop.f32.mrb[0].mxu0
    %v3929 = vadd.f32 %v3857, %v3928
    %v3930 = vpop.f32.mrb[0].mxu0
    %3931 = vdwg.mxu0
    %3932 = vrot.lane.b32.xlu0 %v714, 56
    %v3933 = vpop.permute.xlu0 %3932
    %v3936 = vsel %vm720, %v3479, 0
    %3938 = vmatprep.subr.mxu0 0.0
    %v3939 = vand.u32 %v3933, 4294901760
    %3940 = vmatpush1.msra.mxu0 %v3939
    %3941 = vmatprep.subr.mxu0 0.0
    %3942 = vmatpush1.msra.mxu0 0.0
    %3943 = vmatprep.subr.mxu0 0.0
    %3944 = vmatpush1.msra.mxu0 0.0
    %3945 = vmatprep.subr.mxu0 0.0
    %3946 = vmatpush1.msra.mxu0 0.0
    %3947 = vmatprep.subr.mxu0 0.0
    %3948 = vmatpush1.msra.mxu0 0.0
    %3949 = vmatprep.subr.mxu0 0.0
    %3950 = vmatpush1.msra.mxu0 0.0
    %3951 = vmatprep.subr.mxu0 0.0
    %3952 = vmatpush1.msra.mxu0 0.0
    %3953 = vmatprep.subr.mxu0 0.0
    %3954 = vmatpush1.msra.mxu0 0.0
    %3955 = vmatprep.subr.mxu0 0.0
    %3956 = vmatpush1.msra.mxu0 0.0
    %3957 = vmatprep.subr.mxu0 0.0
    %3958 = vmatpush1.msra.mxu0 0.0
    %3959 = vmatprep.subr.mxu0 0.0
    %3960 = vmatpush1.msra.mxu0 0.0
    %3961 = vmatprep.subr.mxu0 0.0
    %3962 = vmatpush1.msra.mxu0 0.0
    %3963 = vmatprep.subr.mxu0 0.0
    %3964 = vmatpush1.msra.mxu0 0.0
    %3965 = vmatprep.subr.mxu0 0.0
    %3966 = vmatpush1.msra.mxu0 0.0
    %3967 = vmatprep.subr.mxu0 0.0
    %3968 = vmatpush1.msra.mxu0 0.0
    %3969 = vmatprep.subr.mxu0 0.0
    %3970 = vmatpush1.msra.mxu0 0.0
    %3971 = vmatprep.subr.mxu0 0.0
    %3972 = vmatpush1.msra.mxu0 0.0
    %3973 = vmatprep.subr.mxu0 0.0
    %3974 = vmatpush1.msra.mxu0 0.0
    %3975 = vmatprep.subr.mxu0 0.0
    %3976 = vmatpush1.msra.mxu0 0.0
    %3977 = vmatprep.subr.mxu0 0.0
    %3978 = vmatpush1.msra.mxu0 0.0
    %3979 = vmatprep.subr.mxu0 0.0
    %3980 = vmatpush1.msra.mxu0 0.0
    %3981 = vmatprep.subr.mxu0 0.0
    %3982 = vmatpush1.msra.mxu0 0.0
    %3983 = vmatprep.subr.mxu0 0.0
    %3984 = vmatpush1.msra.mxu0 0.0
    %3985 = vmatprep.subr.mxu0 0.0
    %3986 = vmatpush1.msra.mxu0 0.0
    %3987 = vmatprep.subr.mxu0 0.0
    %3988 = vmatpush1.msra.mxu0 0.0
    %3989 = vmatprep.subr.mxu0 0.0
    %3990 = vmatpush1.msra.mxu0 0.0
    %3991 = vmatprep.subr.mxu0 0.0
    %3992 = vmatpush1.msra.mxu0 0.0
    %3993 = vmatprep.subr.mxu0 0.0
    %3994 = vmatpush1.msra.mxu0 0.0
    %3995 = vmatprep.subr.mxu0 0.0
    %3996 = vmatpush1.msra.mxu0 0.0
    %3997 = vmatprep.subr.mxu0 0.0
    %3998 = vmatpush1.msra.mxu0 0.0
    %3999 = vmatprep.subr.mxu0 0.0
    %4000 = vmatpush1.msra.mxu0 0.0
    %4001 = vmatprep.subr.mxu0 0.0
    %4002 = vmatpush1.msra.mxu0 0.0
    %4003 = vmatprep.mubr.f32.mxu0 0.0
    %v4004 = vand.u32 %v3936, 4294901760
    %v4005 = vsub.f32 %v3936, %v4004
    %v4006 = vand.u32 %v4005, 4294901760
    %v4007 = vsub.f32 %v4005, %v4006
    %v4008 = vand.u32 %v4007, 4294901760
    %4009 = vmatmul.mubr.f32.gmra.mrb[0].mxu0 %v4008
    %v4010 = vpop.f32.mrb[0].mxu0
    %v4011 = vadd.f32 0.0, %v4010
    %v4012 = vpop.f32.mrb[0].mxu0
    %4013 = vdwg.mxu0
    %4014 = vmatprep.subr.mxu0 0.0
    %v4015 = vand.u32 %v3933, 4294901760
    %v4016 = vsub.f32 %v3933, %v4015
    %v4017 = vand.u32 %v4016, 4294901760
    %v4018 = vsub.f32 %v4016, %v4017
    %v4019 = vand.u32 %v4018, 4294901760
    %4020 = vmatpush1.msra.mxu0 %v4019
    %4021 = vmatprep.subr.mxu0 0.0
    %4022 = vmatpush1.msra.mxu0 0.0
    %4023 = vmatprep.subr.mxu0 0.0
    %4024 = vmatpush1.msra.mxu0 0.0
    %4025 = vmatprep.subr.mxu0 0.0
    %4026 = vmatpush1.msra.mxu0 0.0
    %4027 = vmatprep.subr.mxu0 0.0
    %4028 = vmatpush1.msra.mxu0 0.0
    %4029 = vmatprep.subr.mxu0 0.0
    %4030 = vmatpush1.msra.mxu0 0.0
    %4031 = vmatprep.subr.mxu0 0.0
    %4032 = vmatpush1.msra.mxu0 0.0
    %4033 = vmatprep.subr.mxu0 0.0
    %4034 = vmatpush1.msra.mxu0 0.0
    %4035 = vmatprep.subr.mxu0 0.0
    %4036 = vmatpush1.msra.mxu0 0.0
    %4037 = vmatprep.subr.mxu0 0.0
    %4038 = vmatpush1.msra.mxu0 0.0
    %4039 = vmatprep.subr.mxu0 0.0
    %4040 = vmatpush1.msra.mxu0 0.0
    %4041 = vmatprep.subr.mxu0 0.0
    %4042 = vmatpush1.msra.mxu0 0.0
    %4043 = vmatprep.subr.mxu0 0.0
    %4044 = vmatpush1.msra.mxu0 0.0
    %4045 = vmatprep.subr.mxu0 0.0
    %4046 = vmatpush1.msra.mxu0 0.0
    %4047 = vmatprep.subr.mxu0 0.0
    %4048 = vmatpush1.msra.mxu0 0.0
    %4049 = vmatprep.subr.mxu0 0.0
    %4050 = vmatpush1.msra.mxu0 0.0
    %4051 = vmatprep.subr.mxu0 0.0
    %4052 = vmatpush1.msra.mxu0 0.0
    %4053 = vmatprep.subr.mxu0 0.0
    %4054 = vmatpush1.msra.mxu0 0.0
    %4055 = vmatprep.subr.mxu0 0.0
    %4056 = vmatpush1.msra.mxu0 0.0
    %4057 = vmatprep.subr.mxu0 0.0
    %4058 = vmatpush1.msra.mxu0 0.0
    %4059 = vmatprep.subr.mxu0 0.0
    %4060 = vmatpush1.msra.mxu0 0.0
    %4061 = vmatprep.subr.mxu0 0.0
    %4062 = vmatpush1.msra.mxu0 0.0
    %4063 = vmatprep.subr.mxu0 0.0
    %4064 = vmatpush1.msra.mxu0 0.0
    %4065 = vmatprep.subr.mxu0 0.0
    %4066 = vmatpush1.msra.mxu0 0.0
    %4067 = vmatprep.subr.mxu0 0.0
    %4068 = vmatpush1.msra.mxu0 0.0
    %4069 = vmatprep.subr.mxu0 0.0
    %4070 = vmatpush1.msra.mxu0 0.0
    %4071 = vmatprep.subr.mxu0 0.0
    %4072 = vmatpush1.msra.mxu0 0.0
    %4073 = vmatprep.subr.mxu0 0.0
    %4074 = vmatpush1.msra.mxu0 0.0
    %4075 = vmatprep.subr.mxu0 0.0
    %4076 = vmatpush1.msra.mxu0 0.0
    %4077 = vmatprep.subr.mxu0 0.0
    %4078 = vmatpush1.msra.mxu0 0.0
    %4079 = vmatprep.subr.mxu0 0.0
    %4080 = vmatpush1.msra.mxu0 0.0
    %4081 = vmatprep.subr.mxu0 0.0
    %4082 = vmatpush1.msra.mxu0 0.0
    %4083 = vmatprep.mubr.f32.mxu0 0.0
    %v4084 = vand.u32 %v3936, 4294901760
    %4085 = vmatmul.mubr.f32.gmra.mrb[0].mxu0 %v4084
    %v4086 = vpop.f32.mrb[0].mxu0
    %v4087 = vadd.f32 %v4011, %v4086
    %v4088 = vpop.f32.mrb[0].mxu0
    %4089 = vdwg.mxu0
    %4090 = vmatprep.subr.mxu0 0.0
    %v4091 = vand.u32 %v3933, 4294901760
    %v4092 = vsub.f32 %v3933, %v4091
    %4093 = vmatpush1.msra.mxu0 %v4092
    %4094 = vmatprep.subr.mxu0 0.0
    %4095 = vmatpush1.msra.mxu0 0.0
    %4096 = vmatprep.subr.mxu0 0.0
    %4097 = vmatpush1.msra.mxu0 0.0
    %4098 = vmatprep.subr.mxu0 0.0
    %4099 = vmatpush1.msra.mxu0 0.0
    %4100 = vmatprep.subr.mxu0 0.0
    %4101 = vmatpush1.msra.mxu0 0.0
    %4102 = vmatprep.subr.mxu0 0.0
    %4103 = vmatpush1.msra.mxu0 0.0
    %4104 = vmatprep.subr.mxu0 0.0
    %4105 = vmatpush1.msra.mxu0 0.0
    %4106 = vmatprep.subr.mxu0 0.0
    %4107 = vmatpush1.msra.mxu0 0.0
    %4108 = vmatprep.subr.mxu0 0.0
    %4109 = vmatpush1.msra.mxu0 0.0
    %4110 = vmatprep.subr.mxu0 0.0
    %4111 = vmatpush1.msra.mxu0 0.0
    %4112 = vmatprep.subr.mxu0 0.0
    %4113 = vmatpush1.msra.mxu0 0.0
    %4114 = vmatprep.subr.mxu0 0.0
    %4115 = vmatpush1.msra.mxu0 0.0
    %4116 = vmatprep.subr.mxu0 0.0
    %4117 = vmatpush1.msra.mxu0 0.0
    %4118 = vmatprep.subr.mxu0 0.0
    %4119 = vmatpush1.msra.mxu0 0.0
    %4120 = vmatprep.subr.mxu0 0.0
    %4121 = vmatpush1.msra.mxu0 0.0
    %4122 = vmatprep.subr.mxu0 0.0
    %4123 = vmatpush1.msra.mxu0 0.0
    %4124 = vmatprep.subr.mxu0 0.0
    %4125 = vmatpush1.msra.mxu0 0.0
    %4126 = vmatprep.subr.mxu0 0.0
    %4127 = vmatpush1.msra.mxu0 0.0
    %4128 = vmatprep.subr.mxu0 0.0
    %4129 = vmatpush1.msra.mxu0 0.0
    %4130 = vmatprep.subr.mxu0 0.0
    %4131 = vmatpush1.msra.mxu0 0.0
    %4132 = vmatprep.subr.mxu0 0.0
    %4133 = vmatpush1.msra.mxu0 0.0
    %4134 = vmatprep.subr.mxu0 0.0
    %4135 = vmatpush1.msra.mxu0 0.0
    %4136 = vmatprep.subr.mxu0 0.0
    %4137 = vmatpush1.msra.mxu0 0.0
    %4138 = vmatprep.subr.mxu0 0.0
    %4139 = vmatpush1.msra.mxu0 0.0
    %4140 = vmatprep.subr.mxu0 0.0
    %4141 = vmatpush1.msra.mxu0 0.0
    %4142 = vmatprep.subr.mxu0 0.0
    %4143 = vmatpush1.msra.mxu0 0.0
    %4144 = vmatprep.subr.mxu0 0.0
    %4145 = vmatpush1.msra.mxu0 0.0
    %4146 = vmatprep.subr.mxu0 0.0
    %4147 = vmatpush1.msra.mxu0 0.0
    %4148 = vmatprep.subr.mxu0 0.0
    %4149 = vmatpush1.msra.mxu0 0.0
    %4150 = vmatprep.subr.mxu0 0.0
    %4151 = vmatpush1.msra.mxu0 0.0
    %4152 = vmatprep.subr.mxu0 0.0
    %4153 = vmatpush1.msra.mxu0 0.0
    %4154 = vmatprep.subr.mxu0 0.0
    %4155 = vmatpush1.msra.mxu0 0.0
    %4156 = vmatprep.mubr.f32.mxu0 0.0
    %v4157 = vand.u32 %v3936, 4294901760
    %v4158 = vsub.f32 %v3936, %v4157
    %4159 = vmatmul.mubr.f32.gmra.mrb[0].mxu0 %v4158
    %v4160 = vpop.f32.mrb[0].mxu0
    %v4161 = vadd.f32 %v4087, %v4160
    %v4162 = vpop.f32.mrb[0].mxu0
    %4163 = vdwg.mxu0
    %4164 = vmatprep.subr.mxu0 0.0
    %v4165 = vand.u32 %v3933, 4294901760
    %4166 = vmatpush1.msra.mxu0 %v4165
    %4167 = vmatprep.subr.mxu0 0.0
    %4168 = vmatpush1.msra.mxu0 0.0
    %4169 = vmatprep.subr.mxu0 0.0
    %4170 = vmatpush1.msra.mxu0 0.0
    %4171 = vmatprep.subr.mxu0 0.0
    %4172 = vmatpush1.msra.mxu0 0.0
    %4173 = vmatprep.subr.mxu0 0.0
    %4174 = vmatpush1.msra.mxu0 0.0
    %4175 = vmatprep.subr.mxu0 0.0
    %4176 = vmatpush1.msra.mxu0 0.0
    %4177 = vmatprep.subr.mxu0 0.0
    %4178 = vmatpush1.msra.mxu0 0.0
    %4179 = vmatprep.subr.mxu0 0.0
    %4180 = vmatpush1.msra.mxu0 0.0
    %4181 = vmatprep.subr.mxu0 0.0
    %4182 = vmatpush1.msra.mxu0 0.0
    %4183 = vmatprep.subr.mxu0 0.0
    %4184 = vmatpush1.msra.mxu0 0.0
    %4185 = vmatprep.subr.mxu0 0.0
    %4186 = vmatpush1.msra.mxu0 0.0
    %4187 = vmatprep.subr.mxu0 0.0
    %4188 = vmatpush1.msra.mxu0 0.0
    %4189 = vmatprep.subr.mxu0 0.0
    %4190 = vmatpush1.msra.mxu0 0.0
    %4191 = vmatprep.subr.mxu0 0.0
    %4192 = vmatpush1.msra.mxu0 0.0
    %4193 = vmatprep.subr.mxu0 0.0
    %4194 = vmatpush1.msra.mxu0 0.0
    %4195 = vmatprep.subr.mxu0 0.0
    %4196 = vmatpush1.msra.mxu0 0.0
    %4197 = vmatprep.subr.mxu0 0.0
    %4198 = vmatpush1.msra.mxu0 0.0
    %4199 = vmatprep.subr.mxu0 0.0
    %4200 = vmatpush1.msra.mxu0 0.0
    %4201 = vmatprep.subr.mxu0 0.0
    %4202 = vmatpush1.msra.mxu0 0.0
    %4203 = vmatprep.subr.mxu0 0.0
    %4204 = vmatpush1.msra.mxu0 0.0
    %4205 = vmatprep.subr.mxu0 0.0
    %4206 = vmatpush1.msra.mxu0 0.0
    %4207 = vmatprep.subr.mxu0 0.0
    %4208 = vmatpush1.msra.mxu0 0.0
    %4209 = vmatprep.subr.mxu0 0.0
    %4210 = vmatpush1.msra.mxu0 0.0
    %4211 = vmatprep.subr.mxu0 0.0
    %4212 = vmatpush1.msra.mxu0 0.0
    %4213 = vmatprep.subr.mxu0 0.0
    %4214 = vmatpush1.msra.mxu0 0.0
    %4215 = vmatprep.subr.mxu0 0.0
    %4216 = vmatpush1.msra.mxu0 0.0
    %4217 = vmatprep.subr.mxu0 0.0
    %4218 = vmatpush1.msra.mxu0 0.0
    %4219 = vmatprep.subr.mxu0 0.0
    %4220 = vmatpush1.msra.mxu0 0.0
    %4221 = vmatprep.subr.mxu0 0.0
    %4222 = vmatpush1.msra.mxu0 0.0
    %4223 = vmatprep.subr.mxu0 0.0
    %4224 = vmatpush1.msra.mxu0 0.0
    %4225 = vmatprep.subr.mxu0 0.0
    %4226 = vmatpush1.msra.mxu0 0.0
    %4227 = vmatprep.subr.mxu0 0.0
    %4228 = vmatpush1.msra.mxu0 0.0
    %4229 = vmatprep.mubr.f32.mxu0 0.0
    %v4230 = vand.u32 %v3936, 4294901760
    %v4231 = vsub.f32 %v3936, %v4230
    %v4232 = vand.u32 %v4231, 4294901760
    %4233 = vmatmul.mubr.f32.gmra.mrb[0].mxu0 %v4232
    %v4234 = vpop.f32.mrb[0].mxu0
    %v4235 = vadd.f32 %v4161, %v4234
    %v4236 = vpop.f32.mrb[0].mxu0
    %4237 = vdwg.mxu0
    %4238 = vmatprep.subr.mxu0 0.0
    %v4239 = vand.u32 %v3933, 4294901760
    %v4240 = vsub.f32 %v3933, %v4239
    %v4241 = vand.u32 %v4240, 4294901760
    %4242 = vmatpush1.msra.mxu0 %v4241
    %4243 = vmatprep.subr.mxu0 0.0
    %4244 = vmatpush1.msra.mxu0 0.0
    %4245 = vmatprep.subr.mxu0 0.0
    %4246 = vmatpush1.msra.mxu0 0.0
    %4247 = vmatprep.subr.mxu0 0.0
    %4248 = vmatpush1.msra.mxu0 0.0
    %4249 = vmatprep.subr.mxu0 0.0
    %4250 = vmatpush1.msra.mxu0 0.0
    %4251 = vmatprep.subr.mxu0 0.0
    %4252 = vmatpush1.msra.mxu0 0.0
    %4253 = vmatprep.subr.mxu0 0.0
    %4254 = vmatpush1.msra.mxu0 0.0
    %4255 = vmatprep.subr.mxu0 0.0
    %4256 = vmatpush1.msra.mxu0 0.0
    %4257 = vmatprep.subr.mxu0 0.0
    %4258 = vmatpush1.msra.mxu0 0.0
    %4259 = vmatprep.subr.mxu0 0.0
    %4260 = vmatpush1.msra.mxu0 0.0
    %4261 = vmatprep.subr.mxu0 0.0
    %4262 = vmatpush1.msra.mxu0 0.0
    %4263 = vmatprep.subr.mxu0 0.0
    %4264 = vmatpush1.msra.mxu0 0.0
    %4265 = vmatprep.subr.mxu0 0.0
    %4266 = vmatpush1.msra.mxu0 0.0
    %4267 = vmatprep.subr.mxu0 0.0
    %4268 = vmatpush1.msra.mxu0 0.0
    %4269 = vmatprep.subr.mxu0 0.0
    %4270 = vmatpush1.msra.mxu0 0.0
    %4271 = vmatprep.subr.mxu0 0.0
    %4272 = vmatpush1.msra.mxu0 0.0
    %4273 = vmatprep.subr.mxu0 0.0
    %4274 = vmatpush1.msra.mxu0 0.0
    %4275 = vmatprep.subr.mxu0 0.0
    %4276 = vmatpush1.msra.mxu0 0.0
    %4277 = vmatprep.subr.mxu0 0.0
    %4278 = vmatpush1.msra.mxu0 0.0
    %4279 = vmatprep.subr.mxu0 0.0
    %4280 = vmatpush1.msra.mxu0 0.0
    %4281 = vmatprep.subr.mxu0 0.0
    %4282 = vmatpush1.msra.mxu0 0.0
    %4283 = vmatprep.subr.mxu0 0.0
    %4284 = vmatpush1.msra.mxu0 0.0
    %4285 = vmatprep.subr.mxu0 0.0
    %4286 = vmatpush1.msra.mxu0 0.0
    %4287 = vmatprep.subr.mxu0 0.0
    %4288 = vmatpush1.msra.mxu0 0.0
    %4289 = vmatprep.subr.mxu0 0.0
    %4290 = vmatpush1.msra.mxu0 0.0
    %4291 = vmatprep.subr.mxu0 0.0
    %4292 = vmatpush1.msra.mxu0 0.0
    %4293 = vmatprep.subr.mxu0 0.0
    %4294 = vmatpush1.msra.mxu0 0.0
    %4295 = vmatprep.subr.mxu0 0.0
    %4296 = vmatpush1.msra.mxu0 0.0
    %4297 = vmatprep.subr.mxu0 0.0
    %4298 = vmatpush1.msra.mxu0 0.0
    %4299 = vmatprep.subr.mxu0 0.0
    %4300 = vmatpush1.msra.mxu0 0.0
    %4301 = vmatprep.subr.mxu0 0.0
    %4302 = vmatpush1.msra.mxu0 0.0
    %4303 = vmatprep.subr.mxu0 0.0
    %4304 = vmatpush1.msra.mxu0 0.0
    %4305 = vmatprep.mubr.f32.mxu0 0.0
    %v4306 = vand.u32 %v3936, 4294901760
    %4307 = vmatmul.mubr.f32.gmra.mrb[0].mxu0 %v4306
    %v4308 = vpop.f32.mrb[0].mxu0
    %v4309 = vadd.f32 %v4235, %v4308
    %v4310 = vpop.f32.mrb[0].mxu0
    %4311 = vdwg.mxu0
    %4312 = vmatprep.subr.mxu0 0.0
    %v4313 = vand.u32 %v3933, 4294901760
    %4314 = vmatpush1.msra.mxu0 %v4313
    %4315 = vmatprep.subr.mxu0 0.0
    %4316 = vmatpush1.msra.mxu0 0.0
    %4317 = vmatprep.subr.mxu0 0.0
    %4318 = vmatpush1.msra.mxu0 0.0
    %4319 = vmatprep.subr.mxu0 0.0
    %4320 = vmatpush1.msra.mxu0 0.0
    %4321 = vmatprep.subr.mxu0 0.0
    %4322 = vmatpush1.msra.mxu0 0.0
    %4323 = vmatprep.subr.mxu0 0.0
    %4324 = vmatpush1.msra.mxu0 0.0
    %4325 = vmatprep.subr.mxu0 0.0
    %4326 = vmatpush1.msra.mxu0 0.0
    %4327 = vmatprep.subr.mxu0 0.0
    %4328 = vmatpush1.msra.mxu0 0.0
    %4329 = vmatprep.subr.mxu0 0.0
    %4330 = vmatpush1.msra.mxu0 0.0
    %4331 = vmatprep.subr.mxu0 0.0
    %4332 = vmatpush1.msra.mxu0 0.0
    %4333 = vmatprep.subr.mxu0 0.0
    %4334 = vmatpush1.msra.mxu0 0.0
    %4335 = vmatprep.subr.mxu0 0.0
    %4336 = vmatpush1.msra.mxu0 0.0
    %4337 = vmatprep.subr.mxu0 0.0
    %4338 = vmatpush1.msra.mxu0 0.0
    %4339 = vmatprep.subr.mxu0 0.0
    %4340 = vmatpush1.msra.mxu0 0.0
    %4341 = vmatprep.subr.mxu0 0.0
    %4342 = vmatpush1.msra.mxu0 0.0
    %4343 = vmatprep.subr.mxu0 0.0
    %4344 = vmatpush1.msra.mxu0 0.0
    %4345 = vmatprep.subr.mxu0 0.0
    %4346 = vmatpush1.msra.mxu0 0.0
    %4347 = vmatprep.subr.mxu0 0.0
    %4348 = vmatpush1.msra.mxu0 0.0
    %4349 = vmatprep.subr.mxu0 0.0
    %4350 = vmatpush1.msra.mxu0 0.0
    %4351 = vmatprep.subr.mxu0 0.0
    %4352 = vmatpush1.msra.mxu0 0.0
    %4353 = vmatprep.subr.mxu0 0.0
    %4354 = vmatpush1.msra.mxu0 0.0
    %4355 = vmatprep.subr.mxu0 0.0
    %4356 = vmatpush1.msra.mxu0 0.0
    %4357 = vmatprep.subr.mxu0 0.0
    %4358 = vmatpush1.msra.mxu0 0.0
    %4359 = vmatprep.subr.mxu0 0.0
    %4360 = vmatpush1.msra.mxu0 0.0
    %4361 = vmatprep.subr.mxu0 0.0
    %4362 = vmatpush1.msra.mxu0 0.0
    %4363 = vmatprep.subr.mxu0 0.0
    %4364 = vmatpush1.msra.mxu0 0.0
    %4365 = vmatprep.subr.mxu0 0.0
    %4366 = vmatpush1.msra.mxu0 0.0
    %4367 = vmatprep.subr.mxu0 0.0
    %4368 = vmatpush1.msra.mxu0 0.0
    %4369 = vmatprep.subr.mxu0 0.0
    %4370 = vmatpush1.msra.mxu0 0.0
    %4371 = vmatprep.subr.mxu0 0.0
    %4372 = vmatpush1.msra.mxu0 0.0
    %4373 = vmatprep.subr.mxu0 0.0
    %4374 = vmatpush1.msra.mxu0 0.0
    %4375 = vmatprep.subr.mxu0 0.0
    %4376 = vmatpush1.msra.mxu0 0.0
    %4377 = vmatprep.mubr.f32.mxu0 0.0
    %v4378 = vand.u32 %v3936, 4294901760
    %4379 = vmatmul.mubr.f32.gmra.mrb[0].mxu0 %v4378
    %v4380 = vpop.f32.mrb[0].mxu0
    %v4381 = vadd.f32 %v4309, %v4380
    %v4382 = vpop.f32.mrb[0].mxu0
    %4383 = vdwg.mxu0
    %4384 = vrot.lane.b32.xlu0 %v708, 112
    %v4385 = vpop.permute.xlu0 %4384
    %4386 = vrot.lane.b32.xlu0 %v708, 80
    %v4387 = vpop.permute.xlu0 %4386
    %v4388 = vsel %vm720, %v4385, 0
    %v4390 = vsel %vm720, %v4387, 0
    %4392 = vmatprep.subr.mxu0 0.0
    %v4393 = vand.u32 %v4390, 4294901760
    %4394 = vmatpush1.xpose.msra.mxu0 %v4393
    %4395 = vmatprep.subr.mxu0 0.0
    %4396 = vmatpush1.xpose.msra.mxu0 0.0
    %4397 = vmatprep.subr.mxu0 0.0
    %4398 = vmatpush1.xpose.msra.mxu0 0.0
    %4399 = vmatprep.subr.mxu0 0.0
    %4400 = vmatpush1.xpose.msra.mxu0 0.0
    %4401 = vmatprep.subr.mxu0 0.0
    %4402 = vmatpush1.xpose.msra.mxu0 0.0
    %4403 = vmatprep.subr.mxu0 0.0
    %4404 = vmatpush1.xpose.msra.mxu0 0.0
    %4405 = vmatprep.subr.mxu0 0.0
    %4406 = vmatpush1.xpose.msra.mxu0 0.0
    %4407 = vmatprep.subr.mxu0 0.0
    %4408 = vmatpush1.xpose.msra.mxu0 0.0
    %4409 = vmatprep.subr.mxu0 0.0
    %4410 = vmatpush1.xpose.msra.mxu0 0.0
    %4411 = vmatprep.subr.mxu0 0.0
    %4412 = vmatpush1.xpose.msra.mxu0 0.0
    %4413 = vmatprep.subr.mxu0 0.0
    %4414 = vmatpush1.xpose.msra.mxu0 0.0
    %4415 = vmatprep.subr.mxu0 0.0
    %4416 = vmatpush1.xpose.msra.mxu0 0.0
    %4417 = vmatprep.subr.mxu0 0.0
    %4418 = vmatpush1.xpose.msra.mxu0 0.0
    %4419 = vmatprep.subr.mxu0 0.0
    %4420 = vmatpush1.xpose.msra.mxu0 0.0
    %4421 = vmatprep.subr.mxu0 0.0
    %4422 = vmatpush1.xpose.msra.mxu0 0.0
    %4423 = vmatprep.subr.mxu0 0.0
    %4424 = vmatpush1.xpose.msra.mxu0 0.0
    %4425 = vmatprep.subr.mxu0 0.0
    %4426 = vmatpush1.xpose.msra.mxu0 0.0
    %4427 = vmatprep.subr.mxu0 0.0
    %4428 = vmatpush1.xpose.msra.mxu0 0.0
    %4429 = vmatprep.subr.mxu0 0.0
    %4430 = vmatpush1.xpose.msra.mxu0 0.0
    %4431 = vmatprep.subr.mxu0 0.0
    %4432 = vmatpush1.xpose.msra.mxu0 0.0
    %4433 = vmatprep.subr.mxu0 0.0
    %4434 = vmatpush1.xpose.msra.mxu0 0.0
    %4435 = vmatprep.subr.mxu0 0.0
    %4436 = vmatpush1.xpose.msra.mxu0 0.0
    %4437 = vmatprep.subr.mxu0 0.0
    %4438 = vmatpush1.xpose.msra.mxu0 0.0
    %4439 = vmatprep.subr.mxu0 0.0
    %4440 = vmatpush1.xpose.msra.mxu0 0.0
    %4441 = vmatprep.subr.mxu0 0.0
    %4442 = vmatpush1.xpose.msra.mxu0 0.0
    %4443 = vmatprep.subr.mxu0 0.0
    %4444 = vmatpush1.xpose.msra.mxu0 0.0
    %4445 = vmatprep.subr.mxu0 0.0
    %4446 = vmatpush1.xpose.msra.mxu0 0.0
    %4447 = vmatprep.subr.mxu0 0.0
    %4448 = vmatpush1.xpose.msra.mxu0 0.0
    %4449 = vmatprep.subr.mxu0 0.0
    %4450 = vmatpush1.xpose.msra.mxu0 0.0
    %4451 = vmatprep.subr.mxu0 0.0
    %4452 = vmatpush1.xpose.msra.mxu0 0.0
    %4453 = vmatprep.subr.mxu0 0.0
    %4454 = vmatpush1.xpose.msra.mxu0 0.0
    %4455 = vmatprep.subr.mxu0 0.0
    %4456 = vmatpush1.xpose.msra.mxu0 0.0
    %4457 = vmatprep.mubr.f32.mxu0 0.0
    %v4458 = vand.u32 %v4388, 4294901760
    %v4459 = vsub.f32 %v4388, %v4458
    %v4460 = vand.u32 %v4459, 4294901760
    %v4461 = vsub.f32 %v4459, %v4460
    %v4462 = vand.u32 %v4461, 4294901760
    %4463 = vmatmul.mubr.f32.gmra.mrb[0].mxu0 %v4462
    %v4464 = vpop.f32.mrb[0].mxu0
    %v4465 = vadd.f32 0.0, %v4464
    %v4466 = vpop.f32.mrb[0].mxu0
    %4467 = vdwg.mxu0
    %4468 = vmatprep.subr.mxu0 0.0
    %v4469 = vand.u32 %v4390, 4294901760
    %v4470 = vsub.f32 %v4390, %v4469
    %v4471 = vand.u32 %v4470, 4294901760
    %v4472 = vsub.f32 %v4470, %v4471
    %v4473 = vand.u32 %v4472, 4294901760
    %4474 = vmatpush1.xpose.msra.mxu0 %v4473
    %4475 = vmatprep.subr.mxu0 0.0
    %4476 = vmatpush1.xpose.msra.mxu0 0.0
    %4477 = vmatprep.subr.mxu0 0.0
    %4478 = vmatpush1.xpose.msra.mxu0 0.0
    %4479 = vmatprep.subr.mxu0 0.0
    %4480 = vmatpush1.xpose.msra.mxu0 0.0
    %4481 = vmatprep.subr.mxu0 0.0
    %4482 = vmatpush1.xpose.msra.mxu0 0.0
    %4483 = vmatprep.subr.mxu0 0.0
    %4484 = vmatpush1.xpose.msra.mxu0 0.0
    %4485 = vmatprep.subr.mxu0 0.0
    %4486 = vmatpush1.xpose.msra.mxu0 0.0
    %4487 = vmatprep.subr.mxu0 0.0
    %4488 = vmatpush1.xpose.msra.mxu0 0.0
    %4489 = vmatprep.subr.mxu0 0.0
    %4490 = vmatpush1.xpose.msra.mxu0 0.0
    %4491 = vmatprep.subr.mxu0 0.0
    %4492 = vmatpush1.xpose.msra.mxu0 0.0
    %4493 = vmatprep.subr.mxu0 0.0
    %4494 = vmatpush1.xpose.msra.mxu0 0.0
    %4495 = vmatprep.subr.mxu0 0.0
    %4496 = vmatpush1.xpose.msra.mxu0 0.0
    %4497 = vmatprep.subr.mxu0 0.0
    %4498 = vmatpush1.xpose.msra.mxu0 0.0
    %4499 = vmatprep.subr.mxu0 0.0
    %4500 = vmatpush1.xpose.msra.mxu0 0.0
    %4501 = vmatprep.subr.mxu0 0.0
    %4502 = vmatpush1.xpose.msra.mxu0 0.0
    %4503 = vmatprep.subr.mxu0 0.0
    %4504 = vmatpush1.xpose.msra.mxu0 0.0
    %4505 = vmatprep.subr.mxu0 0.0
    %4506 = vmatpush1.xpose.msra.mxu0 0.0
    %4507 = vmatprep.subr.mxu0 0.0
    %4508 = vmatpush1.xpose.msra.mxu0 0.0
    %4509 = vmatprep.subr.mxu0 0.0
    %4510 = vmatpush1.xpose.msra.mxu0 0.0
    %4511 = vmatprep.subr.mxu0 0.0
    %4512 = vmatpush1.xpose.msra.mxu0 0.0
    %4513 = vmatprep.subr.mxu0 0.0
    %4514 = vmatpush1.xpose.msra.mxu0 0.0
    %4515 = vmatprep.subr.mxu0 0.0
    %4516 = vmatpush1.xpose.msra.mxu0 0.0
    %4517 = vmatprep.subr.mxu0 0.0
    %4518 = vmatpush1.xpose.msra.mxu0 0.0
    %4519 = vmatprep.subr.mxu0 0.0
    %4520 = vmatpush1.xpose.msra.mxu0 0.0
    %4521 = vmatprep.subr.mxu0 0.0
    %4522 = vmatpush1.xpose.msra.mxu0 0.0
    %4523 = vmatprep.subr.mxu0 0.0
    %4524 = vmatpush1.xpose.msra.mxu0 0.0
    %4525 = vmatprep.subr.mxu0 0.0
    %4526 = vmatpush1.xpose.msra.mxu0 0.0
    %4527 = vmatprep.subr.mxu0 0.0
    %4528 = vmatpush1.xpose.msra.mxu0 0.0
    %4529 = vmatprep.subr.mxu0 0.0
    %4530 = vmatpush1.xpose.msra.mxu0 0.0
    %4531 = vmatprep.subr.mxu0 0.0
    %4532 = vmatpush1.xpose.msra.mxu0 0.0
    %4533 = vmatprep.subr.mxu0 0.0
    %4534 = vmatpush1.xpose.msra.mxu0 0.0
    %4535 = vmatprep.subr.mxu0 0.0
    %4536 = vmatpush1.xpose.msra.mxu0 0.0
    %4537 = vmatprep.mubr.f32.mxu0 0.0
    %v4538 = vand.u32 %v4388, 4294901760
    %4539 = vmatmul.mubr.f32.gmra.mrb[0].mxu0 %v4538
    %v4540 = vpop.f32.mrb[0].mxu0
    %v4541 = vadd.f32 %v4465, %v4540
    %v4542 = vpop.f32.mrb[0].mxu0
    %4543 = vdwg.mxu0
    %4544 = vmatprep.subr.mxu0 0.0
    %v4545 = vand.u32 %v4390, 4294901760
    %v4546 = vsub.f32 %v4390, %v4545
    %4547 = vmatpush1.xpose.msra.mxu0 %v4546
    %4548 = vmatprep.subr.mxu0 0.0
    %4549 = vmatpush1.xpose.msra.mxu0 0.0
    %4550 = vmatprep.subr.mxu0 0.0
    %4551 = vmatpush1.xpose.msra.mxu0 0.0
    %4552 = vmatprep.subr.mxu0 0.0
    %4553 = vmatpush1.xpose.msra.mxu0 0.0
    %4554 = vmatprep.subr.mxu0 0.0
    %4555 = vmatpush1.xpose.msra.mxu0 0.0
    %4556 = vmatprep.subr.mxu0 0.0
    %4557 = vmatpush1.xpose.msra.mxu0 0.0
    %4558 = vmatprep.subr.mxu0 0.0
    %4559 = vmatpush1.xpose.msra.mxu0 0.0
    %4560 = vmatprep.subr.mxu0 0.0
    %4561 = vmatpush1.xpose.msra.mxu0 0.0
    %4562 = vmatprep.subr.mxu0 0.0
    %4563 = vmatpush1.xpose.msra.mxu0 0.0
    %4564 = vmatprep.subr.mxu0 0.0
    %4565 = vmatpush1.xpose.msra.mxu0 0.0
    %4566 = vmatprep.subr.mxu0 0.0
    %4567 = vmatpush1.xpose.msra.mxu0 0.0
    %4568 = vmatprep.subr.mxu0 0.0
    %4569 = vmatpush1.xpose.msra.mxu0 0.0
    %4570 = vmatprep.subr.mxu0 0.0
    %4571 = vmatpush1.xpose.msra.mxu0 0.0
    %4572 = vmatprep.subr.mxu0 0.0
    %4573 = vmatpush1.xpose.msra.mxu0 0.0
    %4574 = vmatprep.subr.mxu0 0.0
    %4575 = vmatpush1.xpose.msra.mxu0 0.0
    %4576 = vmatprep.subr.mxu0 0.0
    %4577 = vmatpush1.xpose.msra.mxu0 0.0
    %4578 = vmatprep.subr.mxu0 0.0
    %4579 = vmatpush1.xpose.msra.mxu0 0.0
    %4580 = vmatprep.subr.mxu0 0.0
    %4581 = vmatpush1.xpose.msra.mxu0 0.0
    %4582 = vmatprep.subr.mxu0 0.0
    %4583 = vmatpush1.xpose.msra.mxu0 0.0
    %4584 = vmatprep.subr.mxu0 0.0
    %4585 = vmatpush1.xpose.msra.mxu0 0.0
    %4586 = vmatprep.subr.mxu0 0.0
    %4587 = vmatpush1.xpose.msra.mxu0 0.0
    %4588 = vmatprep.subr.mxu0 0.0
    %4589 = vmatpush1.xpose.msra.mxu0 0.0
    %4590 = vmatprep.subr.mxu0 0.0
    %4591 = vmatpush1.xpose.msra.mxu0 0.0
    %4592 = vmatprep.subr.mxu0 0.0
    %4593 = vmatpush1.xpose.msra.mxu0 0.0
    %4594 = vmatprep.subr.mxu0 0.0
    %4595 = vmatpush1.xpose.msra.mxu0 0.0
    %4596 = vmatprep.subr.mxu0 0.0
    %4597 = vmatpush1.xpose.msra.mxu0 0.0
    %4598 = vmatprep.subr.mxu0 0.0
    %4599 = vmatpush1.xpose.msra.mxu0 0.0
    %4600 = vmatprep.subr.mxu0 0.0
    %4601 = vmatpush1.xpose.msra.mxu0 0.0
    %4602 = vmatprep.subr.mxu0 0.0
    %4603 = vmatpush1.xpose.msra.mxu0 0.0
    %4604 = vmatprep.subr.mxu0 0.0
    %4605 = vmatpush1.xpose.msra.mxu0 0.0
    %4606 = vmatprep.subr.mxu0 0.0
    %4607 = vmatpush1.xpose.msra.mxu0 0.0
    %4608 = vmatprep.subr.mxu0 0.0
    %4609 = vmatpush1.xpose.msra.mxu0 0.0
    %4610 = vmatprep.mubr.f32.mxu0 0.0
    %v4611 = vand.u32 %v4388, 4294901760
    %v4612 = vsub.f32 %v4388, %v4611
    %4613 = vmatmul.mubr.f32.gmra.mrb[0].mxu0 %v4612
    %v4614 = vpop.f32.mrb[0].mxu0
    %v4615 = vadd.f32 %v4541, %v4614
    %v4616 = vpop.f32.mrb[0].mxu0
    %4617 = vdwg.mxu0
    %4618 = vmatprep.subr.mxu0 0.0
    %v4619 = vand.u32 %v4390, 4294901760
    %4620 = vmatpush1.xpose.msra.mxu0 %v4619
    %4621 = vmatprep.subr.mxu0 0.0
    %4622 = vmatpush1.xpose.msra.mxu0 0.0
    %4623 = vmatprep.subr.mxu0 0.0
    %4624 = vmatpush1.xpose.msra.mxu0 0.0
    %4625 = vmatprep.subr.mxu0 0.0
    %4626 = vmatpush1.xpose.msra.mxu0 0.0
    %4627 = vmatprep.subr.mxu0 0.0
    %4628 = vmatpush1.xpose.msra.mxu0 0.0
    %4629 = vmatprep.subr.mxu0 0.0
    %4630 = vmatpush1.xpose.msra.mxu0 0.0
    %4631 = vmatprep.subr.mxu0 0.0
    %4632 = vmatpush1.xpose.msra.mxu0 0.0
    %4633 = vmatprep.subr.mxu0 0.0
    %4634 = vmatpush1.xpose.msra.mxu0 0.0
    %4635 = vmatprep.subr.mxu0 0.0
    %4636 = vmatpush1.xpose.msra.mxu0 0.0
    %4637 = vmatprep.subr.mxu0 0.0
    %4638 = vmatpush1.xpose.msra.mxu0 0.0
    %4639 = vmatprep.subr.mxu0 0.0
    %4640 = vmatpush1.xpose.msra.mxu0 0.0
    %4641 = vmatprep.subr.mxu0 0.0
    %4642 = vmatpush1.xpose.msra.mxu0 0.0
    %4643 = vmatprep.subr.mxu0 0.0
    %4644 = vmatpush1.xpose.msra.mxu0 0.0
    %4645 = vmatprep.subr.mxu0 0.0
    %4646 = vmatpush1.xpose.msra.mxu0 0.0
    %4647 = vmatprep.subr.mxu0 0.0
    %4648 = vmatpush1.xpose.msra.mxu0 0.0
    %4649 = vmatprep.subr.mxu0 0.0
    %4650 = vmatpush1.xpose.msra.mxu0 0.0
    %4651 = vmatprep.subr.mxu0 0.0
    %4652 = vmatpush1.xpose.msra.mxu0 0.0
    %4653 = vmatprep.subr.mxu0 0.0
    %4654 = vmatpush1.xpose.msra.mxu0 0.0
    %4655 = vmatprep.subr.mxu0 0.0
    %4656 = vmatpush1.xpose.msra.mxu0 0.0
    %4657 = vmatprep.subr.mxu0 0.0
    %4658 = vmatpush1.xpose.msra.mxu0 0.0
    %4659 = vmatprep.subr.mxu0 0.0
    %4660 = vmatpush1.xpose.msra.mxu0 0.0
    %4661 = vmatprep.subr.mxu0 0.0
    %4662 = vmatpush1.xpose.msra.mxu0 0.0
    %4663 = vmatprep.subr.mxu0 0.0
    %4664 = vmatpush1.xpose.msra.mxu0 0.0
    %4665 = vmatprep.subr.mxu0 0.0
    %4666 = vmatpush1.xpose.msra.mxu0 0.0
    %4667 = vmatprep.subr.mxu0 0.0
    %4668 = vmatpush1.xpose.msra.mxu0 0.0
    %4669 = vmatprep.subr.mxu0 0.0
    %4670 = vmatpush1.xpose.msra.mxu0 0.0
    %4671 = vmatprep.subr.mxu0 0.0
    %4672 = vmatpush1.xpose.msra.mxu0 0.0
    %4673 = vmatprep.subr.mxu0 0.0
    %4674 = vmatpush1.xpose.msra.mxu0 0.0
    %4675 = vmatprep.subr.mxu0 0.0
    %4676 = vmatpush1.xpose.msra.mxu0 0.0
    %4677 = vmatprep.subr.mxu0 0.0
    %4678 = vmatpush1.xpose.msra.mxu0 0.0
    %4679 = vmatprep.subr.mxu0 0.0
    %4680 = vmatpush1.xpose.msra.mxu0 0.0
    %4681 = vmatprep.subr.mxu0 0.0
    %4682 = vmatpush1.xpose.msra.mxu0 0.0
    %4683 = vmatprep.mubr.f32.mxu0 0.0
    %v4684 = vand.u32 %v4388, 4294901760
    %v4685 = vsub.f32 %v4388, %v4684
    %v4686 = vand.u32 %v4685, 4294901760
    %4687 = vmatmul.mubr.f32.gmra.mrb[0].mxu0 %v4686
    %v4688 = vpop.f32.mrb[0].mxu0
    %v4689 = vadd.f32 %v4615, %v4688
    %v4690 = vpop.f32.mrb[0].mxu0
    %4691 = vdwg.mxu0
    %4692 = vmatprep.subr.mxu0 0.0
    %v4693 = vand.u32 %v4390, 4294901760
    %v4694 = vsub.f32 %v4390, %v4693
    %v4695 = vand.u32 %v4694, 4294901760
    %4696 = vmatpush1.xpose.msra.mxu0 %v4695
    %4697 = vmatprep.subr.mxu0 0.0
    %4698 = vmatpush1.xpose.msra.mxu0 0.0
    %4699 = vmatprep.subr.mxu0 0.0
    %4700 = vmatpush1.xpose.msra.mxu0 0.0
    %4701 = vmatprep.subr.mxu0 0.0
    %4702 = vmatpush1.xpose.msra.mxu0 0.0
    %4703 = vmatprep.subr.mxu0 0.0
    %4704 = vmatpush1.xpose.msra.mxu0 0.0
    %4705 = vmatprep.subr.mxu0 0.0
    %4706 = vmatpush1.xpose.msra.mxu0 0.0
    %4707 = vmatprep.subr.mxu0 0.0
    %4708 = vmatpush1.xpose.msra.mxu0 0.0
    %4709 = vmatprep.subr.mxu0 0.0
    %4710 = vmatpush1.xpose.msra.mxu0 0.0
    %4711 = vmatprep.subr.mxu0 0.0
    %4712 = vmatpush1.xpose.msra.mxu0 0.0
    %4713 = vmatprep.subr.mxu0 0.0
    %4714 = vmatpush1.xpose.msra.mxu0 0.0
    %4715 = vmatprep.subr.mxu0 0.0
    %4716 = vmatpush1.xpose.msra.mxu0 0.0
    %4717 = vmatprep.subr.mxu0 0.0
    %4718 = vmatpush1.xpose.msra.mxu0 0.0
    %4719 = vmatprep.subr.mxu0 0.0
    %4720 = vmatpush1.xpose.msra.mxu0 0.0
    %4721 = vmatprep.subr.mxu0 0.0
    %4722 = vmatpush1.xpose.msra.mxu0 0.0
    %4723 = vmatprep.subr.mxu0 0.0
    %4724 = vmatpush1.xpose.msra.mxu0 0.0
    %4725 = vmatprep.subr.mxu0 0.0
    %4726 = vmatpush1.xpose.msra.mxu0 0.0
    %4727 = vmatprep.subr.mxu0 0.0
    %4728 = vmatpush1.xpose.msra.mxu0 0.0
    %4729 = vmatprep.subr.mxu0 0.0
    %4730 = vmatpush1.xpose.msra.mxu0 0.0
    %4731 = vmatprep.subr.mxu0 0.0
    %4732 = vmatpush1.xpose.msra.mxu0 0.0
    %4733 = vmatprep.subr.mxu0 0.0
    %4734 = vmatpush1.xpose.msra.mxu0 0.0
    %4735 = vmatprep.subr.mxu0 0.0
    %4736 = vmatpush1.xpose.msra.mxu0 0.0
    %4737 = vmatprep.subr.mxu0 0.0
    %4738 = vmatpush1.xpose.msra.mxu0 0.0
    %4739 = vmatprep.subr.mxu0 0.0
    %4740 = vmatpush1.xpose.msra.mxu0 0.0
    %4741 = vmatprep.subr.mxu0 0.0
    %4742 = vmatpush1.xpose.msra.mxu0 0.0
    %4743 = vmatprep.subr.mxu0 0.0
    %4744 = vmatpush1.xpose.msra.mxu0 0.0
    %4745 = vmatprep.subr.mxu0 0.0
    %4746 = vmatpush1.xpose.msra.mxu0 0.0
    %4747 = vmatprep.subr.mxu0 0.0
    %4748 = vmatpush1.xpose.msra.mxu0 0.0
    %4749 = vmatprep.subr.mxu0 0.0
    %4750 = vmatpush1.xpose.msra.mxu0 0.0
    %4751 = vmatprep.subr.mxu0 0.0
    %4752 = vmatpush1.xpose.msra.mxu0 0.0
    %4753 = vmatprep.subr.mxu0 0.0
    %4754 = vmatpush1.xpose.msra.mxu0 0.0
    %4755 = vmatprep.subr.mxu0 0.0
    %4756 = vmatpush1.xpose.msra.mxu0 0.0
    %4757 = vmatprep.subr.mxu0 0.0
    %4758 = vmatpush1.xpose.msra.mxu0 0.0
    %4759 = vmatprep.mubr.f32.mxu0 0.0
    %v4760 = vand.u32 %v4388, 4294901760
    %4761 = vmatmul.mubr.f32.gmra.mrb[0].mxu0 %v4760
    %v4762 = vpop.f32.mrb[0].mxu0
    %v4763 = vadd.f32 %v4689, %v4762
    %v4764 = vpop.f32.mrb[0].mxu0
    %4765 = vdwg.mxu0
    %4766 = vmatprep.subr.mxu0 0.0
    %v4767 = vand.u32 %v4390, 4294901760
    %4768 = vmatpush1.xpose.msra.mxu0 %v4767
    %4769 = vmatprep.subr.mxu0 0.0
    %4770 = vmatpush1.xpose.msra.mxu0 0.0
    %4771 = vmatprep.subr.mxu0 0.0
    %4772 = vmatpush1.xpose.msra.mxu0 0.0
    %4773 = vmatprep.subr.mxu0 0.0
    %4774 = vmatpush1.xpose.msra.mxu0 0.0
    %4775 = vmatprep.subr.mxu0 0.0
    %4776 = vmatpush1.xpose.msra.mxu0 0.0
    %4777 = vmatprep.subr.mxu0 0.0
    %4778 = vmatpush1.xpose.msra.mxu0 0.0
    %4779 = vmatprep.subr.mxu0 0.0
    %4780 = vmatpush1.xpose.msra.mxu0 0.0
    %4781 = vmatprep.subr.mxu0 0.0
    %4782 = vmatpush1.xpose.msra.mxu0 0.0
    %4783 = vmatprep.subr.mxu0 0.0
    %4784 = vmatpush1.xpose.msra.mxu0 0.0
    %4785 = vmatprep.subr.mxu0 0.0
    %4786 = vmatpush1.xpose.msra.mxu0 0.0
    %4787 = vmatprep.subr.mxu0 0.0
    %4788 = vmatpush1.xpose.msra.mxu0 0.0
    %4789 = vmatprep.subr.mxu0 0.0
    %4790 = vmatpush1.xpose.msra.mxu0 0.0
    %4791 = vmatprep.subr.mxu0 0.0
    %4792 = vmatpush1.xpose.msra.mxu0 0.0
    %4793 = vmatprep.subr.mxu0 0.0
    %4794 = vmatpush1.xpose.msra.mxu0 0.0
    %4795 = vmatprep.subr.mxu0 0.0
    %4796 = vmatpush1.xpose.msra.mxu0 0.0
    %4797 = vmatprep.subr.mxu0 0.0
    %4798 = vmatpush1.xpose.msra.mxu0 0.0
    %4799 = vmatprep.subr.mxu0 0.0
    %4800 = vmatpush1.xpose.msra.mxu0 0.0
    %4801 = vmatprep.subr.mxu0 0.0
    %4802 = vmatpush1.xpose.msra.mxu0 0.0
    %4803 = vmatprep.subr.mxu0 0.0
    %4804 = vmatpush1.xpose.msra.mxu0 0.0
    %4805 = vmatprep.subr.mxu0 0.0
    %4806 = vmatpush1.xpose.msra.mxu0 0.0
    %4807 = vmatprep.subr.mxu0 0.0
    %4808 = vmatpush1.xpose.msra.mxu0 0.0
    %4809 = vmatprep.subr.mxu0 0.0
    %4810 = vmatpush1.xpose.msra.mxu0 0.0
    %4811 = vmatprep.subr.mxu0 0.0
    %4812 = vmatpush1.xpose.msra.mxu0 0.0
    %4813 = vmatprep.subr.mxu0 0.0
    %4814 = vmatpush1.xpose.msra.mxu0 0.0
    %4815 = vmatprep.subr.mxu0 0.0
    %4816 = vmatpush1.xpose.msra.mxu0 0.0
    %4817 = vmatprep.subr.mxu0 0.0
    %4818 = vmatpush1.xpose.msra.mxu0 0.0
    %4819 = vmatprep.subr.mxu0 0.0
    %4820 = vmatpush1.xpose.msra.mxu0 0.0
    %4821 = vmatprep.subr.mxu0 0.0
    %4822 = vmatpush1.xpose.msra.mxu0 0.0
    %4823 = vmatprep.subr.mxu0 0.0
    %4824 = vmatpush1.xpose.msra.mxu0 0.0
    %4825 = vmatprep.subr.mxu0 0.0
    %4826 = vmatpush1.xpose.msra.mxu0 0.0
    %4827 = vmatprep.subr.mxu0 0.0
    %4828 = vmatpush1.xpose.msra.mxu0 0.0
    %4829 = vmatprep.subr.mxu0 0.0
    %4830 = vmatpush1.xpose.msra.mxu0 0.0
    %4831 = vmatprep.mubr.f32.mxu0 0.0
    %v4832 = vand.u32 %v4388, 4294901760
    %4833 = vmatmul.mubr.f32.gmra.mrb[0].mxu0 %v4832
    %v4834 = vpop.f32.mrb[0].mxu0
    %v4835 = vadd.f32 %v4763, %v4834
    %v4836 = vpop.f32.mrb[0].mxu0
    %4837 = vdwg.mxu0
    %4838 = vrot.lane.b32.xlu0 %v714, 112
    %v4839 = vpop.permute.xlu0 %4838
    %4840 = vrot.lane.b32.xlu0 %v714, 80
    %v4841 = vpop.permute.xlu0 %4840
    %v4842 = vsel %vm720, %v4839, 0
    %v4844 = vsel %vm720, %v4841, 0
    %4846 = vmatprep.subr.mxu0 0.0
    %v4847 = vand.u32 %v4844, 4294901760
    %4848 = vmatpush1.xpose.msra.mxu0 %v4847
    %4849 = vmatprep.subr.mxu0 0.0
    %4850 = vmatpush1.xpose.msra.mxu0 0.0
    %4851 = vmatprep.subr.mxu0 0.0
    %4852 = vmatpush1.xpose.msra.mxu0 0.0
    %4853 = vmatprep.subr.mxu0 0.0
    %4854 = vmatpush1.xpose.msra.mxu0 0.0
    %4855 = vmatprep.subr.mxu0 0.0
    %4856 = vmatpush1.xpose.msra.mxu0 0.0
    %4857 = vmatprep.subr.mxu0 0.0
    %4858 = vmatpush1.xpose.msra.mxu0 0.0
    %4859 = vmatprep.subr.mxu0 0.0
    %4860 = vmatpush1.xpose.msra.mxu0 0.0
    %4861 = vmatprep.subr.mxu0 0.0
    %4862 = vmatpush1.xpose.msra.mxu0 0.0
    %4863 = vmatprep.subr.mxu0 0.0
    %4864 = vmatpush1.xpose.msra.mxu0 0.0
    %4865 = vmatprep.subr.mxu0 0.0
    %4866 = vmatpush1.xpose.msra.mxu0 0.0
    %4867 = vmatprep.subr.mxu0 0.0
    %4868 = vmatpush1.xpose.msra.mxu0 0.0
    %4869 = vmatprep.subr.mxu0 0.0
    %4870 = vmatpush1.xpose.msra.mxu0 0.0
    %4871 = vmatprep.subr.mxu0 0.0
    %4872 = vmatpush1.xpose.msra.mxu0 0.0
    %4873 = vmatprep.subr.mxu0 0.0
    %4874 = vmatpush1.xpose.msra.mxu0 0.0
    %4875 = vmatprep.subr.mxu0 0.0
    %4876 = vmatpush1.xpose.msra.mxu0 0.0
    %4877 = vmatprep.subr.mxu0 0.0
    %4878 = vmatpush1.xpose.msra.mxu0 0.0
    %4879 = vmatprep.subr.mxu0 0.0
    %4880 = vmatpush1.xpose.msra.mxu0 0.0
    %4881 = vmatprep.subr.mxu0 0.0
    %4882 = vmatpush1.xpose.msra.mxu0 0.0
    %4883 = vmatprep.subr.mxu0 0.0
    %4884 = vmatpush1.xpose.msra.mxu0 0.0
    %4885 = vmatprep.subr.mxu0 0.0
    %4886 = vmatpush1.xpose.msra.mxu0 0.0
    %4887 = vmatprep.subr.mxu0 0.0
    %4888 = vmatpush1.xpose.msra.mxu0 0.0
    %4889 = vmatprep.subr.mxu0 0.0
    %4890 = vmatpush1.xpose.msra.mxu0 0.0
    %4891 = vmatprep.subr.mxu0 0.0
    %4892 = vmatpush1.xpose.msra.mxu0 0.0
    %4893 = vmatprep.subr.mxu0 0.0
    %4894 = vmatpush1.xpose.msra.mxu0 0.0
    %4895 = vmatprep.subr.mxu0 0.0
    %4896 = vmatpush1.xpose.msra.mxu0 0.0
    %4897 = vmatprep.subr.mxu0 0.0
    %4898 = vmatpush1.xpose.msra.mxu0 0.0
    %4899 = vmatprep.subr.mxu0 0.0
    %4900 = vmatpush1.xpose.msra.mxu0 0.0
    %4901 = vmatprep.subr.mxu0 0.0
    %4902 = vmatpush1.xpose.msra.mxu0 0.0
    %4903 = vmatprep.subr.mxu0 0.0
    %4904 = vmatpush1.xpose.msra.mxu0 0.0
    %4905 = vmatprep.subr.mxu0 0.0
    %4906 = vmatpush1.xpose.msra.mxu0 0.0
    %4907 = vmatprep.subr.mxu0 0.0
    %4908 = vmatpush1.xpose.msra.mxu0 0.0
    %4909 = vmatprep.subr.mxu0 0.0
    %4910 = vmatpush1.xpose.msra.mxu0 0.0
    %4911 = vmatprep.mubr.f32.mxu0 0.0
    %v4912 = vand.u32 %v4842, 4294901760
    %v4913 = vsub.f32 %v4842, %v4912
    %v4914 = vand.u32 %v4913, 4294901760
    %v4915 = vsub.f32 %v4913, %v4914
    %v4916 = vand.u32 %v4915, 4294901760
    %4917 = vmatmul.mubr.f32.gmra.mrb[0].mxu0 %v4916
    %v4918 = vpop.f32.mrb[0].mxu0
    %v4919 = vadd.f32 0.0, %v4918
    %v4920 = vpop.f32.mrb[0].mxu0
    %4921 = vdwg.mxu0
    %4922 = vmatprep.subr.mxu0 0.0
    %v4923 = vand.u32 %v4844, 4294901760
    %v4924 = vsub.f32 %v4844, %v4923
    %v4925 = vand.u32 %v4924, 4294901760
    %v4926 = vsub.f32 %v4924, %v4925
    %v4927 = vand.u32 %v4926, 4294901760
    %4928 = vmatpush1.xpose.msra.mxu0 %v4927
    %4929 = vmatprep.subr.mxu0 0.0
    %4930 = vmatpush1.xpose.msra.mxu0 0.0
    %4931 = vmatprep.subr.mxu0 0.0
    %4932 = vmatpush1.xpose.msra.mxu0 0.0
    %4933 = vmatprep.subr.mxu0 0.0
    %4934 = vmatpush1.xpose.msra.mxu0 0.0
    %4935 = vmatprep.subr.mxu0 0.0
    %4936 = vmatpush1.xpose.msra.mxu0 0.0
    %4937 = vmatprep.subr.mxu0 0.0
    %4938 = vmatpush1.xpose.msra.mxu0 0.0
    %4939 = vmatprep.subr.mxu0 0.0
    %4940 = vmatpush1.xpose.msra.mxu0 0.0
    %4941 = vmatprep.subr.mxu0 0.0
    %4942 = vmatpush1.xpose.msra.mxu0 0.0
    %4943 = vmatprep.subr.mxu0 0.0
    %4944 = vmatpush1.xpose.msra.mxu0 0.0
    %4945 = vmatprep.subr.mxu0 0.0
    %4946 = vmatpush1.xpose.msra.mxu0 0.0
    %4947 = vmatprep.subr.mxu0 0.0
    %4948 = vmatpush1.xpose.msra.mxu0 0.0
    %4949 = vmatprep.subr.mxu0 0.0
    %4950 = vmatpush1.xpose.msra.mxu0 0.0
    %4951 = vmatprep.subr.mxu0 0.0
    %4952 = vmatpush1.xpose.msra.mxu0 0.0
    %4953 = vmatprep.subr.mxu0 0.0
    %4954 = vmatpush1.xpose.msra.mxu0 0.0
    %4955 = vmatprep.subr.mxu0 0.0
    %4956 = vmatpush1.xpose.msra.mxu0 0.0
    %4957 = vmatprep.subr.mxu0 0.0
    %4958 = vmatpush1.xpose.msra.mxu0 0.0
    %4959 = vmatprep.subr.mxu0 0.0
    %4960 = vmatpush1.xpose.msra.mxu0 0.0
    %4961 = vmatprep.subr.mxu0 0.0
    %4962 = vmatpush1.xpose.msra.mxu0 0.0
    %4963 = vmatprep.subr.mxu0 0.0
    %4964 = vmatpush1.xpose.msra.mxu0 0.0
    %4965 = vmatprep.subr.mxu0 0.0
    %4966 = vmatpush1.xpose.msra.mxu0 0.0
    %4967 = vmatprep.subr.mxu0 0.0
    %4968 = vmatpush1.xpose.msra.mxu0 0.0
    %4969 = vmatprep.subr.mxu0 0.0
    %4970 = vmatpush1.xpose.msra.mxu0 0.0
    %4971 = vmatprep.subr.mxu0 0.0
    %4972 = vmatpush1.xpose.msra.mxu0 0.0
    %4973 = vmatprep.subr.mxu0 0.0
    %4974 = vmatpush1.xpose.msra.mxu0 0.0
    %4975 = vmatprep.subr.mxu0 0.0
    %4976 = vmatpush1.xpose.msra.mxu0 0.0
    %4977 = vmatprep.subr.mxu0 0.0
    %4978 = vmatpush1.xpose.msra.mxu0 0.0
    %4979 = vmatprep.subr.mxu0 0.0
    %4980 = vmatpush1.xpose.msra.mxu0 0.0
    %4981 = vmatprep.subr.mxu0 0.0
    %4982 = vmatpush1.xpose.msra.mxu0 0.0
    %4983 = vmatprep.subr.mxu0 0.0
    %4984 = vmatpush1.xpose.msra.mxu0 0.0
    %4985 = vmatprep.subr.mxu0 0.0
    %4986 = vmatpush1.xpose.msra.mxu0 0.0
    %4987 = vmatprep.subr.mxu0 0.0
    %4988 = vmatpush1.xpose.msra.mxu0 0.0
    %4989 = vmatprep.subr.mxu0 0.0
    %4990 = vmatpush1.xpose.msra.mxu0 0.0
    %4991 = vmatprep.mubr.f32.mxu0 0.0
    %v4992 = vand.u32 %v4842, 4294901760
    %4993 = vmatmul.mubr.f32.gmra.mrb[0].mxu0 %v4992
    %v4994 = vpop.f32.mrb[0].mxu0
    %v4995 = vadd.f32 %v4919, %v4994
    %v4996 = vpop.f32.mrb[0].mxu0
    %4997 = vdwg.mxu0
    %4998 = vmatprep.subr.mxu0 0.0
    %v4999 = vand.u32 %v4844, 4294901760
    %v5000 = vsub.f32 %v4844, %v4999
    %5001 = vmatpush1.xpose.msra.mxu0 %v5000
    %5002 = vmatprep.subr.mxu0 0.0
    %5003 = vmatpush1.xpose.msra.mxu0 0.0
    %5004 = vmatprep.subr.mxu0 0.0
    %5005 = vmatpush1.xpose.msra.mxu0 0.0
    %5006 = vmatprep.subr.mxu0 0.0
    %5007 = vmatpush1.xpose.msra.mxu0 0.0
    %5008 = vmatprep.subr.mxu0 0.0
    %5009 = vmatpush1.xpose.msra.mxu0 0.0
    %5010 = vmatprep.subr.mxu0 0.0
    %5011 = vmatpush1.xpose.msra.mxu0 0.0
    %5012 = vmatprep.subr.mxu0 0.0
    %5013 = vmatpush1.xpose.msra.mxu0 0.0
    %5014 = vmatprep.subr.mxu0 0.0
    %5015 = vmatpush1.xpose.msra.mxu0 0.0
    %5016 = vmatprep.subr.mxu0 0.0
    %5017 = vmatpush1.xpose.msra.mxu0 0.0
    %5018 = vmatprep.subr.mxu0 0.0
    %5019 = vmatpush1.xpose.msra.mxu0 0.0
    %5020 = vmatprep.subr.mxu0 0.0
    %5021 = vmatpush1.xpose.msra.mxu0 0.0
    %5022 = vmatprep.subr.mxu0 0.0
    %5023 = vmatpush1.xpose.msra.mxu0 0.0
    %5024 = vmatprep.subr.mxu0 0.0
    %5025 = vmatpush1.xpose.msra.mxu0 0.0
    %5026 = vmatprep.subr.mxu0 0.0
    %5027 = vmatpush1.xpose.msra.mxu0 0.0
    %5028 = vmatprep.subr.mxu0 0.0
    %5029 = vmatpush1.xpose.msra.mxu0 0.0
    %5030 = vmatprep.subr.mxu0 0.0
    %5031 = vmatpush1.xpose.msra.mxu0 0.0
    %5032 = vmatprep.subr.mxu0 0.0
    %5033 = vmatpush1.xpose.msra.mxu0 0.0
    %5034 = vmatprep.subr.mxu0 0.0
    %5035 = vmatpush1.xpose.msra.mxu0 0.0
    %5036 = vmatprep.subr.mxu0 0.0
    %5037 = vmatpush1.xpose.msra.mxu0 0.0
    %5038 = vmatprep.subr.mxu0 0.0
    %5039 = vmatpush1.xpose.msra.mxu0 0.0
    %5040 = vmatprep.subr.mxu0 0.0
    %5041 = vmatpush1.xpose.msra.mxu0 0.0
    %5042 = vmatprep.subr.mxu0 0.0
    %5043 = vmatpush1.xpose.msra.mxu0 0.0
    %5044 = vmatprep.subr.mxu0 0.0
    %5045 = vmatpush1.xpose.msra.mxu0 0.0
    %5046 = vmatprep.subr.mxu0 0.0
    %5047 = vmatpush1.xpose.msra.mxu0 0.0
    %5048 = vmatprep.subr.mxu0 0.0
    %5049 = vmatpush1.xpose.msra.mxu0 0.0
    %5050 = vmatprep.subr.mxu0 0.0
    %5051 = vmatpush1.xpose.msra.mxu0 0.0
    %5052 = vmatprep.subr.mxu0 0.0
    %5053 = vmatpush1.xpose.msra.mxu0 0.0
    %5054 = vmatprep.subr.mxu0 0.0
    %5055 = vmatpush1.xpose.msra.mxu0 0.0
    %5056 = vmatprep.subr.mxu0 0.0
    %5057 = vmatpush1.xpose.msra.mxu0 0.0
    %5058 = vmatprep.subr.mxu0 0.0
    %5059 = vmatpush1.xpose.msra.mxu0 0.0
    %5060 = vmatprep.subr.mxu0 0.0
    %5061 = vmatpush1.xpose.msra.mxu0 0.0
    %5062 = vmatprep.subr.mxu0 0.0
    %5063 = vmatpush1.xpose.msra.mxu0 0.0
    %5064 = vmatprep.mubr.f32.mxu0 0.0
    %v5065 = vand.u32 %v4842, 4294901760
    %v5066 = vsub.f32 %v4842, %v5065
    %5067 = vmatmul.mubr.f32.gmra.mrb[0].mxu0 %v5066
    %v5068 = vpop.f32.mrb[0].mxu0
    %v5069 = vadd.f32 %v4995, %v5068
    %v5070 = vpop.f32.mrb[0].mxu0
    %5071 = vdwg.mxu0
    %5072 = vmatprep.subr.mxu0 0.0
    %v5073 = vand.u32 %v4844, 4294901760
    %5074 = vmatpush1.xpose.msra.mxu0 %v5073
    %5075 = vmatprep.subr.mxu0 0.0
    %5076 = vmatpush1.xpose.msra.mxu0 0.0
    %5077 = vmatprep.subr.mxu0 0.0
    %5078 = vmatpush1.xpose.msra.mxu0 0.0
    %5079 = vmatprep.subr.mxu0 0.0
    %5080 = vmatpush1.xpose.msra.mxu0 0.0
    %5081 = vmatprep.subr.mxu0 0.0
    %5082 = vmatpush1.xpose.msra.mxu0 0.0
    %5083 = vmatprep.subr.mxu0 0.0
    %5084 = vmatpush1.xpose.msra.mxu0 0.0
    %5085 = vmatprep.subr.mxu0 0.0
    %5086 = vmatpush1.xpose.msra.mxu0 0.0
    %5087 = vmatprep.subr.mxu0 0.0
    %5088 = vmatpush1.xpose.msra.mxu0 0.0
    %5089 = vmatprep.subr.mxu0 0.0
    %5090 = vmatpush1.xpose.msra.mxu0 0.0
    %5091 = vmatprep.subr.mxu0 0.0
    %5092 = vmatpush1.xpose.msra.mxu0 0.0
    %5093 = vmatprep.subr.mxu0 0.0
    %5094 = vmatpush1.xpose.msra.mxu0 0.0
    %5095 = vmatprep.subr.mxu0 0.0
    %5096 = vmatpush1.xpose.msra.mxu0 0.0
    %5097 = vmatprep.subr.mxu0 0.0
    %5098 = vmatpush1.xpose.msra.mxu0 0.0
    %5099 = vmatprep.subr.mxu0 0.0
    %5100 = vmatpush1.xpose.msra.mxu0 0.0
    %5101 = vmatprep.subr.mxu0 0.0
    %5102 = vmatpush1.xpose.msra.mxu0 0.0
    %5103 = vmatprep.subr.mxu0 0.0
    %5104 = vmatpush1.xpose.msra.mxu0 0.0
    %5105 = vmatprep.subr.mxu0 0.0
    %5106 = vmatpush1.xpose.msra.mxu0 0.0
    %5107 = vmatprep.subr.mxu0 0.0
    %5108 = vmatpush1.xpose.msra.mxu0 0.0
    %5109 = vmatprep.subr.mxu0 0.0
    %5110 = vmatpush1.xpose.msra.mxu0 0.0
    %5111 = vmatprep.subr.mxu0 0.0
    %5112 = vmatpush1.xpose.msra.mxu0 0.0
    %5113 = vmatprep.subr.mxu0 0.0
    %5114 = vmatpush1.xpose.msra.mxu0 0.0
    %5115 = vmatprep.subr.mxu0 0.0
    %5116 = vmatpush1.xpose.msra.mxu0 0.0
    %5117 = vmatprep.subr.mxu0 0.0
    %5118 = vmatpush1.xpose.msra.mxu0 0.0
    %5119 = vmatprep.subr.mxu0 0.0
    %5120 = vmatpush1.xpose.msra.mxu0 0.0
    %5121 = vmatprep.subr.mxu0 0.0
    %5122 = vmatpush1.xpose.msra.mxu0 0.0
    %5123 = vmatprep.subr.mxu0 0.0
    %5124 = vmatpush1.xpose.msra.mxu0 0.0
    %5125 = vmatprep.subr.mxu0 0.0
    %5126 = vmatpush1.xpose.msra.mxu0 0.0
    %5127 = vmatprep.subr.mxu0 0.0
    %5128 = vmatpush1.xpose.msra.mxu0 0.0
    %5129 = vmatprep.subr.mxu0 0.0
    %5130 = vmatpush1.xpose.msra.mxu0 0.0
    %5131 = vmatprep.subr.mxu0 0.0
    %5132 = vmatpush1.xpose.msra.mxu0 0.0
    %5133 = vmatprep.subr.mxu0 0.0
    %5134 = vmatpush1.xpose.msra.mxu0 0.0
    %5135 = vmatprep.subr.mxu0 0.0
    %5136 = vmatpush1.xpose.msra.mxu0 0.0
    %5137 = vmatprep.mubr.f32.mxu0 0.0
    %v5138 = vand.u32 %v4842, 4294901760
    %v5139 = vsub.f32 %v4842, %v5138
    %v5140 = vand.u32 %v5139, 4294901760
    %5141 = vmatmul.mubr.f32.gmra.mrb[0].mxu0 %v5140
    %v5142 = vpop.f32.mrb[0].mxu0
    %v5143 = vadd.f32 %v5069, %v5142
    %v5144 = vpop.f32.mrb[0].mxu0
    %5145 = vdwg.mxu0
    %5146 = vmatprep.subr.mxu0 0.0
    %v5147 = vand.u32 %v4844, 4294901760
    %v5148 = vsub.f32 %v4844, %v5147
    %v5149 = vand.u32 %v5148, 4294901760
    %5150 = vmatpush1.xpose.msra.mxu0 %v5149
    %5151 = vmatprep.subr.mxu0 0.0
    %5152 = vmatpush1.xpose.msra.mxu0 0.0
    %5153 = vmatprep.subr.mxu0 0.0
    %5154 = vmatpush1.xpose.msra.mxu0 0.0
    %5155 = vmatprep.subr.mxu0 0.0
    %5156 = vmatpush1.xpose.msra.mxu0 0.0
    %5157 = vmatprep.subr.mxu0 0.0
    %5158 = vmatpush1.xpose.msra.mxu0 0.0
    %5159 = vmatprep.subr.mxu0 0.0
    %5160 = vmatpush1.xpose.msra.mxu0 0.0
    %5161 = vmatprep.subr.mxu0 0.0
    %5162 = vmatpush1.xpose.msra.mxu0 0.0
    %5163 = vmatprep.subr.mxu0 0.0
    %5164 = vmatpush1.xpose.msra.mxu0 0.0
    %5165 = vmatprep.subr.mxu0 0.0
    %5166 = vmatpush1.xpose.msra.mxu0 0.0
    %5167 = vmatprep.subr.mxu0 0.0
    %5168 = vmatpush1.xpose.msra.mxu0 0.0
    %5169 = vmatprep.subr.mxu0 0.0
    %5170 = vmatpush1.xpose.msra.mxu0 0.0
    %5171 = vmatprep.subr.mxu0 0.0
    %5172 = vmatpush1.xpose.msra.mxu0 0.0
    %5173 = vmatprep.subr.mxu0 0.0
    %5174 = vmatpush1.xpose.msra.mxu0 0.0
    %5175 = vmatprep.subr.mxu0 0.0
    %5176 = vmatpush1.xpose.msra.mxu0 0.0
    %5177 = vmatprep.subr.mxu0 0.0
    %5178 = vmatpush1.xpose.msra.mxu0 0.0
    %5179 = vmatprep.subr.mxu0 0.0
    %5180 = vmatpush1.xpose.msra.mxu0 0.0
    %5181 = vmatprep.subr.mxu0 0.0
    %5182 = vmatpush1.xpose.msra.mxu0 0.0
    %5183 = vmatprep.subr.mxu0 0.0
    %5184 = vmatpush1.xpose.msra.mxu0 0.0
    %5185 = vmatprep.subr.mxu0 0.0
    %5186 = vmatpush1.xpose.msra.mxu0 0.0
    %5187 = vmatprep.subr.mxu0 0.0
    %5188 = vmatpush1.xpose.msra.mxu0 0.0
    %5189 = vmatprep.subr.mxu0 0.0
    %5190 = vmatpush1.xpose.msra.mxu0 0.0
    %5191 = vmatprep.subr.mxu0 0.0
    %5192 = vmatpush1.xpose.msra.mxu0 0.0
    %5193 = vmatprep.subr.mxu0 0.0
    %5194 = vmatpush1.xpose.msra.mxu0 0.0
    %5195 = vmatprep.subr.mxu0 0.0
    %5196 = vmatpush1.xpose.msra.mxu0 0.0
    %5197 = vmatprep.subr.mxu0 0.0
    %5198 = vmatpush1.xpose.msra.mxu0 0.0
    %5199 = vmatprep.subr.mxu0 0.0
    %5200 = vmatpush1.xpose.msra.mxu0 0.0
    %5201 = vmatprep.subr.mxu0 0.0
    %5202 = vmatpush1.xpose.msra.mxu0 0.0
    %5203 = vmatprep.subr.mxu0 0.0
    %5204 = vmatpush1.xpose.msra.mxu0 0.0
    %5205 = vmatprep.subr.mxu0 0.0
    %5206 = vmatpush1.xpose.msra.mxu0 0.0
    %5207 = vmatprep.subr.mxu0 0.0
    %5208 = vmatpush1.xpose.msra.mxu0 0.0
    %5209 = vmatprep.subr.mxu0 0.0
    %5210 = vmatpush1.xpose.msra.mxu0 0.0
    %5211 = vmatprep.subr.mxu0 0.0
    %5212 = vmatpush1.xpose.msra.mxu0 0.0
    %5213 = vmatprep.mubr.f32.mxu0 0.0
    %v5214 = vand.u32 %v4842, 4294901760
    %5215 = vmatmul.mubr.f32.gmra.mrb[0].mxu0 %v5214
    %v5216 = vpop.f32.mrb[0].mxu0
    %v5217 = vadd.f32 %v5143, %v5216
    %v5218 = vpop.f32.mrb[0].mxu0
    %5219 = vdwg.mxu0
    %5220 = vmatprep.subr.mxu0 0.0
    %v5221 = vand.u32 %v4844, 4294901760
    %5222 = vmatpush1.xpose.msra.mxu0 %v5221
    %5223 = vmatprep.subr.mxu0 0.0
    %5224 = vmatpush1.xpose.msra.mxu0 0.0
    %5225 = vmatprep.subr.mxu0 0.0
    %5226 = vmatpush1.xpose.msra.mxu0 0.0
    %5227 = vmatprep.subr.mxu0 0.0
    %5228 = vmatpush1.xpose.msra.mxu0 0.0
    %5229 = vmatprep.subr.mxu0 0.0
    %5230 = vmatpush1.xpose.msra.mxu0 0.0
    %5231 = vmatprep.subr.mxu0 0.0
    %5232 = vmatpush1.xpose.msra.mxu0 0.0
    %5233 = vmatprep.subr.mxu0 0.0
    %5234 = vmatpush1.xpose.msra.mxu0 0.0
    %5235 = vmatprep.subr.mxu0 0.0
    %5236 = vmatpush1.xpose.msra.mxu0 0.0
    %5237 = vmatprep.subr.mxu0 0.0
    %5238 = vmatpush1.xpose.msra.mxu0 0.0
    %5239 = vmatprep.subr.mxu0 0.0
    %5240 = vmatpush1.xpose.msra.mxu0 0.0
    %5241 = vmatprep.subr.mxu0 0.0
    %5242 = vmatpush1.xpose.msra.mxu0 0.0
    %5243 = vmatprep.subr.mxu0 0.0
    %5244 = vmatpush1.xpose.msra.mxu0 0.0
    %5245 = vmatprep.subr.mxu0 0.0
    %5246 = vmatpush1.xpose.msra.mxu0 0.0
    %5247 = vmatprep.subr.mxu0 0.0
    %5248 = vmatpush1.xpose.msra.mxu0 0.0
    %5249 = vmatprep.subr.mxu0 0.0
    %5250 = vmatpush1.xpose.msra.mxu0 0.0
    %5251 = vmatprep.subr.mxu0 0.0
    %5252 = vmatpush1.xpose.msra.mxu0 0.0
    %5253 = vmatprep.subr.mxu0 0.0
    %5254 = vmatpush1.xpose.msra.mxu0 0.0
    %5255 = vmatprep.subr.mxu0 0.0
    %5256 = vmatpush1.xpose.msra.mxu0 0.0
    %5257 = vmatprep.subr.mxu0 0.0
    %5258 = vmatpush1.xpose.msra.mxu0 0.0
    %5259 = vmatprep.subr.mxu0 0.0
    %5260 = vmatpush1.xpose.msra.mxu0 0.0
    %5261 = vmatprep.subr.mxu0 0.0
    %5262 = vmatpush1.xpose.msra.mxu0 0.0
    %5263 = vmatprep.subr.mxu0 0.0
    %5264 = vmatpush1.xpose.msra.mxu0 0.0
    %5265 = vmatprep.subr.mxu0 0.0
    %5266 = vmatpush1.xpose.msra.mxu0 0.0
    %5267 = vmatprep.subr.mxu0 0.0
    %5268 = vmatpush1.xpose.msra.mxu0 0.0
    %5269 = vmatprep.subr.mxu0 0.0
    %5270 = vmatpush1.xpose.msra.mxu0 0.0
    %5271 = vmatprep.subr.mxu0 0.0
    %5272 = vmatpush1.xpose.msra.mxu0 0.0
    %5273 = vmatprep.subr.mxu0 0.0
    %5274 = vmatpush1.xpose.msra.mxu0 0.0
    %5275 = vmatprep.subr.mxu0 0.0
    %5276 = vmatpush1.xpose.msra.mxu0 0.0
    %5277 = vmatprep.subr.mxu0 0.0
    %5278 = vmatpush1.xpose.msra.mxu0 0.0
    %5279 = vmatprep.subr.mxu0 0.0
    %5280 = vmatpush1.xpose.msra.mxu0 0.0
    %5281 = vmatprep.subr.mxu0 0.0
    %5282 = vmatpush1.xpose.msra.mxu0 0.0
    %5283 = vmatprep.subr.mxu0 0.0
    %5284 = vmatpush1.xpose.msra.mxu0 0.0
    %5285 = vmatprep.mubr.f32.mxu0 0.0
    %v5286 = vand.u32 %v4842, 4294901760
    %5287 = vmatmul.mubr.f32.gmra.mrb[0].mxu0 %v5286
    %v5288 = vpop.f32.mrb[0].mxu0
    %v5289 = vadd.f32 %v5217, %v5288
    %v5290 = vpop.f32.mrb[0].mxu0
    %5291 = vdwg.mxu0
    %v5292 = vsel %vm720, %v4835, -inf
    %5293 = vmax.xlane.f32.xlu0 %v5292
    %v5294 = vpop.xlane.xlu0 %5293
    %v5295 = vsel %vm720, %v5289, -inf
    %5296 = vmax.xlane.f32.xlu0 %v5295
    %v5297 = vpop.xlane.xlu0 %5296
    %v5298 = vsub.f32 %v4835, %v5294
    %v5299 = vsub.f32 %v5289, %v5297
    %v5300 = vmul.f32 %v5298, 1.442695
    %v5301 = vpow.pop %v5300
    %v5302 = vmul.f32 %v5299, 1.442695
    %v5303 = vpow.pop %v5302
    %v5304 = vsel %vm720, %v5301, 0.0
    %5305 = vadd.xlane.f32.xlu0 %v5304
    %v5306 = vpop.xlane.xlu0 %5305
    %v5307 = vsel %vm720, %v5303, 0.0
    %5308 = vadd.xlane.f32.xlu0 %v5307
    %v5309 = vpop.xlane.xlu0 %5308
    %v5310 = vrcp.pop %v5306
    %v5311 = vrcp.pop %v5309
    %v5312 = vmul.f32 %v5301, %v5310
    %v5313 = vmul.f32 %v5303, %v5311
    %5314 = vrot.lane.b32.xlu0 %v708, 48
    %v5315 = vpop.permute.xlu0 %5314
    %v5318 = vsel %vm720, %v5312, 0
    %5320 = vmatprep.subr.mxu0 0.0
    %v5321 = vand.u32 %v5315, 4294901760
    %5322 = vmatpush1.msra.mxu0 %v5321
    %5323 = vmatprep.subr.mxu0 0.0
    %5324 = vmatpush1.msra.mxu0 0.0
    %5325 = vmatprep.subr.mxu0 0.0
    %5326 = vmatpush1.msra.mxu0 0.0
    %5327 = vmatprep.subr.mxu0 0.0
    %5328 = vmatpush1.msra.mxu0 0.0
    %5329 = vmatprep.subr.mxu0 0.0
    %5330 = vmatpush1.msra.mxu0 0.0
    %5331 = vmatprep.subr.mxu0 0.0
    %5332 = vmatpush1.msra.mxu0 0.0
    %5333 = vmatprep.subr.mxu0 0.0
    %5334 = vmatpush1.msra.mxu0 0.0
    %5335 = vmatprep.subr.mxu0 0.0
    %5336 = vmatpush1.msra.mxu0 0.0
    %5337 = vmatprep.subr.mxu0 0.0
    %5338 = vmatpush1.msra.mxu0 0.0
    %5339 = vmatprep.subr.mxu0 0.0
    %5340 = vmatpush1.msra.mxu0 0.0
    %5341 = vmatprep.subr.mxu0 0.0
    %5342 = vmatpush1.msra.mxu0 0.0
    %5343 = vmatprep.subr.mxu0 0.0
    %5344 = vmatpush1.msra.mxu0 0.0
    %5345 = vmatprep.subr.mxu0 0.0
    %5346 = vmatpush1.msra.mxu0 0.0
    %5347 = vmatprep.subr.mxu0 0.0
    %5348 = vmatpush1.msra.mxu0 0.0
    %5349 = vmatprep.subr.mxu0 0.0
    %5350 = vmatpush1.msra.mxu0 0.0
    %5351 = vmatprep.subr.mxu0 0.0
    %5352 = vmatpush1.msra.mxu0 0.0
    %5353 = vmatprep.subr.mxu0 0.0
    %5354 = vmatpush1.msra.mxu0 0.0
    %5355 = vmatprep.subr.mxu0 0.0
    %5356 = vmatpush1.msra.mxu0 0.0
    %5357 = vmatprep.subr.mxu0 0.0
    %5358 = vmatpush1.msra.mxu0 0.0
    %5359 = vmatprep.subr.mxu0 0.0
    %5360 = vmatpush1.msra.mxu0 0.0
    %5361 = vmatprep.subr.mxu0 0.0
    %5362 = vmatpush1.msra.mxu0 0.0
    %5363 = vmatprep.subr.mxu0 0.0
    %5364 = vmatpush1.msra.mxu0 0.0
    %5365 = vmatprep.subr.mxu0 0.0
    %5366 = vmatpush1.msra.mxu0 0.0
    %5367 = vmatprep.subr.mxu0 0.0
    %5368 = vmatpush1.msra.mxu0 0.0
    %5369 = vmatprep.subr.mxu0 0.0
    %5370 = vmatpush1.msra.mxu0 0.0
    %5371 = vmatprep.subr.mxu0 0.0
    %5372 = vmatpush1.msra.mxu0 0.0
    %5373 = vmatprep.subr.mxu0 0.0
    %5374 = vmatpush1.msra.mxu0 0.0
    %5375 = vmatprep.subr.mxu0 0.0
    %5376 = vmatpush1.msra.mxu0 0.0
    %5377 = vmatprep.subr.mxu0 0.0
    %5378 = vmatpush1.msra.mxu0 0.0
    %5379 = vmatprep.subr.mxu0 0.0
    %5380 = vmatpush1.msra.mxu0 0.0
    %5381 = vmatprep.subr.mxu0 0.0
    %5382 = vmatpush1.msra.mxu0 0.0
    %5383 = vmatprep.subr.mxu0 0.0
    %5384 = vmatpush1.msra.mxu0 0.0
    %5385 = vmatprep.mubr.f32.mxu0 0.0
    %v5386 = vand.u32 %v5318, 4294901760
    %v5387 = vsub.f32 %v5318, %v5386
    %v5388 = vand.u32 %v5387, 4294901760
    %v5389 = vsub.f32 %v5387, %v5388
    %v5390 = vand.u32 %v5389, 4294901760
    %5391 = vmatmul.mubr.f32.gmra.mrb[0].mxu0 %v5390
    %v5392 = vpop.f32.mrb[0].mxu0
    %v5393 = vadd.f32 0.0, %v5392
    %v5394 = vpop.f32.mrb[0].mxu0
    %5395 = vdwg.mxu0
    %5396 = vmatprep.subr.mxu0 0.0
    %v5397 = vand.u32 %v5315, 4294901760
    %v5398 = vsub.f32 %v5315, %v5397
    %v5399 = vand.u32 %v5398, 4294901760
    %v5400 = vsub.f32 %v5398, %v5399
    %v5401 = vand.u32 %v5400, 4294901760
    %5402 = vmatpush1.msra.mxu0 %v5401
    %5403 = vmatprep.subr.mxu0 0.0
    %5404 = vmatpush1.msra.mxu0 0.0
    %5405 = vmatprep.subr.mxu0 0.0
    %5406 = vmatpush1.msra.mxu0 0.0
    %5407 = vmatprep.subr.mxu0 0.0
    %5408 = vmatpush1.msra.mxu0 0.0
    %5409 = vmatprep.subr.mxu0 0.0
    %5410 = vmatpush1.msra.mxu0 0.0
    %5411 = vmatprep.subr.mxu0 0.0
    %5412 = vmatpush1.msra.mxu0 0.0
    %5413 = vmatprep.subr.mxu0 0.0
    %5414 = vmatpush1.msra.mxu0 0.0
    %5415 = vmatprep.subr.mxu0 0.0
    %5416 = vmatpush1.msra.mxu0 0.0
    %5417 = vmatprep.subr.mxu0 0.0
    %5418 = vmatpush1.msra.mxu0 0.0
    %5419 = vmatprep.subr.mxu0 0.0
    %5420 = vmatpush1.msra.mxu0 0.0
    %5421 = vmatprep.subr.mxu0 0.0
    %5422 = vmatpush1.msra.mxu0 0.0
    %5423 = vmatprep.subr.mxu0 0.0
    %5424 = vmatpush1.msra.mxu0 0.0
    %5425 = vmatprep.subr.mxu0 0.0
    %5426 = vmatpush1.msra.mxu0 0.0
    %5427 = vmatprep.subr.mxu0 0.0
    %5428 = vmatpush1.msra.mxu0 0.0
    %5429 = vmatprep.subr.mxu0 0.0
    %5430 = vmatpush1.msra.mxu0 0.0
    %5431 = vmatprep.subr.mxu0 0.0
    %5432 = vmatpush1.msra.mxu0 0.0
    %5433 = vmatprep.subr.mxu0 0.0
    %5434 = vmatpush1.msra.mxu0 0.0
    %5435 = vmatprep.subr.mxu0 0.0
    %5436 = vmatpush1.msra.mxu0 0.0
    %5437 = vmatprep.subr.mxu0 0.0
    %5438 = vmatpush1.msra.mxu0 0.0
    %5439 = vmatprep.subr.mxu0 0.0
    %5440 = vmatpush1.msra.mxu0 0.0
    %5441 = vmatprep.subr.mxu0 0.0
    %5442 = vmatpush1.msra.mxu0 0.0
    %5443 = vmatprep.subr.mxu0 0.0
    %5444 = vmatpush1.msra.mxu0 0.0
    %5445 = vmatprep.subr.mxu0 0.0
    %5446 = vmatpush1.msra.mxu0 0.0
    %5447 = vmatprep.subr.mxu0 0.0
    %5448 = vmatpush1.msra.mxu0 0.0
    %5449 = vmatprep.subr.mxu0 0.0
    %5450 = vmatpush1.msra.mxu0 0.0
    %5451 = vmatprep.subr.mxu0 0.0
    %5452 = vmatpush1.msra.mxu0 0.0
    %5453 = vmatprep.subr.mxu0 0.0
    %5454 = vmatpush1.msra.mxu0 0.0
    %5455 = vmatprep.subr.mxu0 0.0
    %5456 = vmatpush1.msra.mxu0 0.0
    %5457 = vmatprep.subr.mxu0 0.0
    %5458 = vmatpush1.msra.mxu0 0.0
    %5459 = vmatprep.subr.mxu0 0.0
    %5460 = vmatpush1.msra.mxu0 0.0
    %5461 = vmatprep.subr.mxu0 0.0
    %5462 = vmatpush1.msra.mxu0 0.0
    %5463 = vmatprep.subr.mxu0 0.0
    %5464 = vmatpush1.msra.mxu0 0.0
    %5465 = vmatprep.mubr.f32.mxu0 0.0
    %v5466 = vand.u32 %v5318, 4294901760
    %5467 = vmatmul.mubr.f32.gmra.mrb[0].mxu0 %v5466
    %v5468 = vpop.f32.mrb[0].mxu0
    %v5469 = vadd.f32 %v5393, %v5468
    %v5470 = vpop.f32.mrb[0].mxu0
    %5471 = vdwg.mxu0
    %5472 = vmatprep.subr.mxu0 0.0
    %v5473 = vand.u32 %v5315, 4294901760
    %v5474 = vsub.f32 %v5315, %v5473
    %5475 = vmatpush1.msra.mxu0 %v5474
    %5476 = vmatprep.subr.mxu0 0.0
    %5477 = vmatpush1.msra.mxu0 0.0
    %5478 = vmatprep.subr.mxu0 0.0
    %5479 = vmatpush1.msra.mxu0 0.0
    %5480 = vmatprep.subr.mxu0 0.0
    %5481 = vmatpush1.msra.mxu0 0.0
    %5482 = vmatprep.subr.mxu0 0.0
    %5483 = vmatpush1.msra.mxu0 0.0
    %5484 = vmatprep.subr.mxu0 0.0
    %5485 = vmatpush1.msra.mxu0 0.0
    %5486 = vmatprep.subr.mxu0 0.0
    %5487 = vmatpush1.msra.mxu0 0.0
    %5488 = vmatprep.subr.mxu0 0.0
    %5489 = vmatpush1.msra.mxu0 0.0
    %5490 = vmatprep.subr.mxu0 0.0
    %5491 = vmatpush1.msra.mxu0 0.0
    %5492 = vmatprep.subr.mxu0 0.0
    %5493 = vmatpush1.msra.mxu0 0.0
    %5494 = vmatprep.subr.mxu0 0.0
    %5495 = vmatpush1.msra.mxu0 0.0
    %5496 = vmatprep.subr.mxu0 0.0
    %5497 = vmatpush1.msra.mxu0 0.0
    %5498 = vmatprep.subr.mxu0 0.0
    %5499 = vmatpush1.msra.mxu0 0.0
    %5500 = vmatprep.subr.mxu0 0.0
    %5501 = vmatpush1.msra.mxu0 0.0
    %5502 = vmatprep.subr.mxu0 0.0
    %5503 = vmatpush1.msra.mxu0 0.0
    %5504 = vmatprep.subr.mxu0 0.0
    %5505 = vmatpush1.msra.mxu0 0.0
    %5506 = vmatprep.subr.mxu0 0.0
    %5507 = vmatpush1.msra.mxu0 0.0
    %5508 = vmatprep.subr.mxu0 0.0
    %5509 = vmatpush1.msra.mxu0 0.0
    %5510 = vmatprep.subr.mxu0 0.0
    %5511 = vmatpush1.msra.mxu0 0.0
    %5512 = vmatprep.subr.mxu0 0.0
    %5513 = vmatpush1.msra.mxu0 0.0
    %5514 = vmatprep.subr.mxu0 0.0
    %5515 = vmatpush1.msra.mxu0 0.0
    %5516 = vmatprep.subr.mxu0 0.0
    %5517 = vmatpush1.msra.mxu0 0.0
    %5518 = vmatprep.subr.mxu0 0.0
    %5519 = vmatpush1.msra.mxu0 0.0
    %5520 = vmatprep.subr.mxu0 0.0
    %5521 = vmatpush1.msra.mxu0 0.0
    %5522 = vmatprep.subr.mxu0 0.0
    %5523 = vmatpush1.msra.mxu0 0.0
    %5524 = vmatprep.subr.mxu0 0.0
    %5525 = vmatpush1.msra.mxu0 0.0
    %5526 = vmatprep.subr.mxu0 0.0
    %5527 = vmatpush1.msra.mxu0 0.0
    %5528 = vmatprep.subr.mxu0 0.0
    %5529 = vmatpush1.msra.mxu0 0.0
    %5530 = vmatprep.subr.mxu0 0.0
    %5531 = vmatpush1.msra.mxu0 0.0
    %5532 = vmatprep.subr.mxu0 0.0
    %5533 = vmatpush1.msra.mxu0 0.0
    %5534 = vmatprep.subr.mxu0 0.0
    %5535 = vmatpush1.msra.mxu0 0.0
    %5536 = vmatprep.subr.mxu0 0.0
    %5537 = vmatpush1.msra.mxu0 0.0
    %5538 = vmatprep.mubr.f32.mxu0 0.0
    %v5539 = vand.u32 %v5318, 4294901760
    %v5540 = vsub.f32 %v5318, %v5539
    %5541 = vmatmul.mubr.f32.gmra.mrb[0].mxu0 %v5540
    %v5542 = vpop.f32.mrb[0].mxu0
    %v5543 = vadd.f32 %v5469, %v5542
    %v5544 = vpop.f32.mrb[0].mxu0
    %5545 = vdwg.mxu0
    %5546 = vmatprep.subr.mxu0 0.0
    %v5547 = vand.u32 %v5315, 4294901760
    %5548 = vmatpush1.msra.mxu0 %v5547
    %5549 = vmatprep.subr.mxu0 0.0
    %5550 = vmatpush1.msra.mxu0 0.0
    %5551 = vmatprep.subr.mxu0 0.0
    %5552 = vmatpush1.msra.mxu0 0.0
    %5553 = vmatprep.subr.mxu0 0.0
    %5554 = vmatpush1.msra.mxu0 0.0
    %5555 = vmatprep.subr.mxu0 0.0
    %5556 = vmatpush1.msra.mxu0 0.0
    %5557 = vmatprep.subr.mxu0 0.0
    %5558 = vmatpush1.msra.mxu0 0.0
    %5559 = vmatprep.subr.mxu0 0.0
    %5560 = vmatpush1.msra.mxu0 0.0
    %5561 = vmatprep.subr.mxu0 0.0
    %5562 = vmatpush1.msra.mxu0 0.0
    %5563 = vmatprep.subr.mxu0 0.0
    %5564 = vmatpush1.msra.mxu0 0.0
    %5565 = vmatprep.subr.mxu0 0.0
    %5566 = vmatpush1.msra.mxu0 0.0
    %5567 = vmatprep.subr.mxu0 0.0
    %5568 = vmatpush1.msra.mxu0 0.0
    %5569 = vmatprep.subr.mxu0 0.0
    %5570 = vmatpush1.msra.mxu0 0.0
    %5571 = vmatprep.subr.mxu0 0.0
    %5572 = vmatpush1.msra.mxu0 0.0
    %5573 = vmatprep.subr.mxu0 0.0
    %5574 = vmatpush1.msra.mxu0 0.0
    %5575 = vmatprep.subr.mxu0 0.0
    %5576 = vmatpush1.msra.mxu0 0.0
    %5577 = vmatprep.subr.mxu0 0.0
    %5578 = vmatpush1.msra.mxu0 0.0
    %5579 = vmatprep.subr.mxu0 0.0
    %5580 = vmatpush1.msra.mxu0 0.0
    %5581 = vmatprep.subr.mxu0 0.0
    %5582 = vmatpush1.msra.mxu0 0.0
    %5583 = vmatprep.subr.mxu0 0.0
    %5584 = vmatpush1.msra.mxu0 0.0
    %5585 = vmatprep.subr.mxu0 0.0
    %5586 = vmatpush1.msra.mxu0 0.0
    %5587 = vmatprep.subr.mxu0 0.0
    %5588 = vmatpush1.msra.mxu0 0.0
    %5589 = vmatprep.subr.mxu0 0.0
    %5590 = vmatpush1.msra.mxu0 0.0
    %5591 = vmatprep.subr.mxu0 0.0
    %5592 = vmatpush1.msra.mxu0 0.0
    %5593 = vmatprep.subr.mxu0 0.0
    %5594 = vmatpush1.msra.mxu0 0.0
    %5595 = vmatprep.subr.mxu0 0.0
    %5596 = vmatpush1.msra.mxu0 0.0
    %5597 = vmatprep.subr.mxu0 0.0
    %5598 = vmatpush1.msra.mxu0 0.0
    %5599 = vmatprep.subr.mxu0 0.0
    %5600 = vmatpush1.msra.mxu0 0.0
    %5601 = vmatprep.subr.mxu0 0.0
    %5602 = vmatpush1.msra.mxu0 0.0
    %5603 = vmatprep.subr.mxu0 0.0
    %5604 = vmatpush1.msra.mxu0 0.0
    %5605 = vmatprep.subr.mxu0 0.0
    %5606 = vmatpush1.msra.mxu0 0.0
    %5607 = vmatprep.subr.mxu0 0.0
    %5608 = vmatpush1.msra.mxu0 0.0
    %5609 = vmatprep.subr.mxu0 0.0
    %5610 = vmatpush1.msra.mxu0 0.0
    %5611 = vmatprep.mubr.f32.mxu0 0.0
    %v5612 = vand.u32 %v5318, 4294901760
    %v5613 = vsub.f32 %v5318, %v5612
    %v5614 = vand.u32 %v5613, 4294901760
    %5615 = vmatmul.mubr.f32.gmra.mrb[0].mxu0 %v5614
    %v5616 = vpop.f32.mrb[0].mxu0
    %v5617 = vadd.f32 %v5543, %v5616
    %v5618 = vpop.f32.mrb[0].mxu0
    %5619 = vdwg.mxu0
    %5620 = vmatprep.subr.mxu0 0.0
    %v5621 = vand.u32 %v5315, 4294901760
    %v5622 = vsub.f32 %v5315, %v5621
    %v5623 = vand.u32 %v5622, 4294901760
    %5624 = vmatpush1.msra.mxu0 %v5623
    %5625 = vmatprep.subr.mxu0 0.0
    %5626 = vmatpush1.msra.mxu0 0.0
    %5627 = vmatprep.subr.mxu0 0.0
    %5628 = vmatpush1.msra.mxu0 0.0
    %5629 = vmatprep.subr.mxu0 0.0
    %5630 = vmatpush1.msra.mxu0 0.0
    %5631 = vmatprep.subr.mxu0 0.0
    %5632 = vmatpush1.msra.mxu0 0.0
    %5633 = vmatprep.subr.mxu0 0.0
    %5634 = vmatpush1.msra.mxu0 0.0
    %5635 = vmatprep.subr.mxu0 0.0
    %5636 = vmatpush1.msra.mxu0 0.0
    %5637 = vmatprep.subr.mxu0 0.0
    %5638 = vmatpush1.msra.mxu0 0.0
    %5639 = vmatprep.subr.mxu0 0.0
    %5640 = vmatpush1.msra.mxu0 0.0
    %5641 = vmatprep.subr.mxu0 0.0
    %5642 = vmatpush1.msra.mxu0 0.0
    %5643 = vmatprep.subr.mxu0 0.0
    %5644 = vmatpush1.msra.mxu0 0.0
    %5645 = vmatprep.subr.mxu0 0.0
    %5646 = vmatpush1.msra.mxu0 0.0
    %5647 = vmatprep.subr.mxu0 0.0
    %5648 = vmatpush1.msra.mxu0 0.0
    %5649 = vmatprep.subr.mxu0 0.0
    %5650 = vmatpush1.msra.mxu0 0.0
    %5651 = vmatprep.subr.mxu0 0.0
    %5652 = vmatpush1.msra.mxu0 0.0
    %5653 = vmatprep.subr.mxu0 0.0
    %5654 = vmatpush1.msra.mxu0 0.0
    %5655 = vmatprep.subr.mxu0 0.0
    %5656 = vmatpush1.msra.mxu0 0.0
    %5657 = vmatprep.subr.mxu0 0.0
    %5658 = vmatpush1.msra.mxu0 0.0
    %5659 = vmatprep.subr.mxu0 0.0
    %5660 = vmatpush1.msra.mxu0 0.0
    %5661 = vmatprep.subr.mxu0 0.0
    %5662 = vmatpush1.msra.mxu0 0.0
    %5663 = vmatprep.subr.mxu0 0.0
    %5664 = vmatpush1.msra.mxu0 0.0
    %5665 = vmatprep.subr.mxu0 0.0
    %5666 = vmatpush1.msra.mxu0 0.0
    %5667 = vmatprep.subr.mxu0 0.0
    %5668 = vmatpush1.msra.mxu0 0.0
    %5669 = vmatprep.subr.mxu0 0.0
    %5670 = vmatpush1.msra.mxu0 0.0
    %5671 = vmatprep.subr.mxu0 0.0
    %5672 = vmatpush1.msra.mxu0 0.0
    %5673 = vmatprep.subr.mxu0 0.0
    %5674 = vmatpush1.msra.mxu0 0.0
    %5675 = vmatprep.subr.mxu0 0.0
    %5676 = vmatpush1.msra.mxu0 0.0
    %5677 = vmatprep.subr.mxu0 0.0
    %5678 = vmatpush1.msra.mxu0 0.0
    %5679 = vmatprep.subr.mxu0 0.0
    %5680 = vmatpush1.msra.mxu0 0.0
    %5681 = vmatprep.subr.mxu0 0.0
    %5682 = vmatpush1.msra.mxu0 0.0
    %5683 = vmatprep.subr.mxu0 0.0
    %5684 = vmatpush1.msra.mxu0 0.0
    %5685 = vmatprep.subr.mxu0 0.0
    %5686 = vmatpush1.msra.mxu0 0.0
    %5687 = vmatprep.mubr.f32.mxu0 0.0
    %v5688 = vand.u32 %v5318, 4294901760
    %5689 = vmatmul.mubr.f32.gmra.mrb[0].mxu0 %v5688
    %v5690 = vpop.f32.mrb[0].mxu0
    %v5691 = vadd.f32 %v5617, %v5690
    %v5692 = vpop.f32.mrb[0].mxu0
    %5693 = vdwg.mxu0
    %5694 = vmatprep.subr.mxu0 0.0
    %v5695 = vand.u32 %v5315, 4294901760
    %5696 = vmatpush1.msra.mxu0 %v5695
    %5697 = vmatprep.subr.mxu0 0.0
    %5698 = vmatpush1.msra.mxu0 0.0
    %5699 = vmatprep.subr.mxu0 0.0
    %5700 = vmatpush1.msra.mxu0 0.0
    %5701 = vmatprep.subr.mxu0 0.0
    %5702 = vmatpush1.msra.mxu0 0.0
    %5703 = vmatprep.subr.mxu0 0.0
    %5704 = vmatpush1.msra.mxu0 0.0
    %5705 = vmatprep.subr.mxu0 0.0
    %5706 = vmatpush1.msra.mxu0 0.0
    %5707 = vmatprep.subr.mxu0 0.0
    %5708 = vmatpush1.msra.mxu0 0.0
    %5709 = vmatprep.subr.mxu0 0.0
    %5710 = vmatpush1.msra.mxu0 0.0
    %5711 = vmatprep.subr.mxu0 0.0
    %5712 = vmatpush1.msra.mxu0 0.0
    %5713 = vmatprep.subr.mxu0 0.0
    %5714 = vmatpush1.msra.mxu0 0.0
    %5715 = vmatprep.subr.mxu0 0.0
    %5716 = vmatpush1.msra.mxu0 0.0
    %5717 = vmatprep.subr.mxu0 0.0
    %5718 = vmatpush1.msra.mxu0 0.0
    %5719 = vmatprep.subr.mxu0 0.0
    %5720 = vmatpush1.msra.mxu0 0.0
    %5721 = vmatprep.subr.mxu0 0.0
    %5722 = vmatpush1.msra.mxu0 0.0
    %5723 = vmatprep.subr.mxu0 0.0
    %5724 = vmatpush1.msra.mxu0 0.0
    %5725 = vmatprep.subr.mxu0 0.0
    %5726 = vmatpush1.msra.mxu0 0.0
    %5727 = vmatprep.subr.mxu0 0.0
    %5728 = vmatpush1.msra.mxu0 0.0
    %5729 = vmatprep.subr.mxu0 0.0
    %5730 = vmatpush1.msra.mxu0 0.0
    %5731 = vmatprep.subr.mxu0 0.0
    %5732 = vmatpush1.msra.mxu0 0.0
    %5733 = vmatprep.subr.mxu0 0.0
    %5734 = vmatpush1.msra.mxu0 0.0
    %5735 = vmatprep.subr.mxu0 0.0
    %5736 = vmatpush1.msra.mxu0 0.0
    %5737 = vmatprep.subr.mxu0 0.0
    %5738 = vmatpush1.msra.mxu0 0.0
    %5739 = vmatprep.subr.mxu0 0.0
    %5740 = vmatpush1.msra.mxu0 0.0
    %5741 = vmatprep.subr.mxu0 0.0
    %5742 = vmatpush1.msra.mxu0 0.0
    %5743 = vmatprep.subr.mxu0 0.0
    %5744 = vmatpush1.msra.mxu0 0.0
    %5745 = vmatprep.subr.mxu0 0.0
    %5746 = vmatpush1.msra.mxu0 0.0
    %5747 = vmatprep.subr.mxu0 0.0
    %5748 = vmatpush1.msra.mxu0 0.0
    %5749 = vmatprep.subr.mxu0 0.0
    %5750 = vmatpush1.msra.mxu0 0.0
    %5751 = vmatprep.subr.mxu0 0.0
    %5752 = vmatpush1.msra.mxu0 0.0
    %5753 = vmatprep.subr.mxu0 0.0
    %5754 = vmatpush1.msra.mxu0 0.0
    %5755 = vmatprep.subr.mxu0 0.0
    %5756 = vmatpush1.msra.mxu0 0.0
    %5757 = vmatprep.subr.mxu0 0.0
    %5758 = vmatpush1.msra.mxu0 0.0
    %5759 = vmatprep.mubr.f32.mxu0 0.0
    %v5760 = vand.u32 %v5318, 4294901760
    %5761 = vmatmul.mubr.f32.gmra.mrb[0].mxu0 %v5760
    %v5762 = vpop.f32.mrb[0].mxu0
    %v5763 = vadd.f32 %v5691, %v5762
    %v5764 = vpop.f32.mrb[0].mxu0
    %5765 = vdwg.mxu0
    %5766 = vrot.lane.b32.xlu0 %v714, 48
    %v5767 = vpop.permute.xlu0 %5766
    %v5770 = vsel %vm720, %v5313, 0
    %5772 = vmatprep.subr.mxu0 0.0
    %v5773 = vand.u32 %v5767, 4294901760
    %5774 = vmatpush1.msra.mxu0 %v5773
    %5775 = vmatprep.subr.mxu0 0.0
    %5776 = vmatpush1.msra.mxu0 0.0
    %5777 = vmatprep.subr.mxu0 0.0
    %5778 = vmatpush1.msra.mxu0 0.0
    %5779 = vmatprep.subr.mxu0 0.0
    %5780 = vmatpush1.msra.mxu0 0.0
    %5781 = vmatprep.subr.mxu0 0.0
    %5782 = vmatpush1.msra.mxu0 0.0
    %5783 = vmatprep.subr.mxu0 0.0
    %5784 = vmatpush1.msra.mxu0 0.0
    %5785 = vmatprep.subr.mxu0 0.0
    %5786 = vmatpush1.msra.mxu0 0.0
    %5787 = vmatprep.subr.mxu0 0.0
    %5788 = vmatpush1.msra.mxu0 0.0
    %5789 = vmatprep.subr.mxu0 0.0
    %5790 = vmatpush1.msra.mxu0 0.0
    %5791 = vmatprep.subr.mxu0 0.0
    %5792 = vmatpush1.msra.mxu0 0.0
    %5793 = vmatprep.subr.mxu0 0.0
    %5794 = vmatpush1.msra.mxu0 0.0
    %5795 = vmatprep.subr.mxu0 0.0
    %5796 = vmatpush1.msra.mxu0 0.0
    %5797 = vmatprep.subr.mxu0 0.0
    %5798 = vmatpush1.msra.mxu0 0.0
    %5799 = vmatprep.subr.mxu0 0.0
    %5800 = vmatpush1.msra.mxu0 0.0
    %5801 = vmatprep.subr.mxu0 0.0
    %5802 = vmatpush1.msra.mxu0 0.0
    %5803 = vmatprep.subr.mxu0 0.0
    %5804 = vmatpush1.msra.mxu0 0.0
    %5805 = vmatprep.subr.mxu0 0.0
    %5806 = vmatpush1.msra.mxu0 0.0
    %5807 = vmatprep.subr.mxu0 0.0
    %5808 = vmatpush1.msra.mxu0 0.0
    %5809 = vmatprep.subr.mxu0 0.0
    %5810 = vmatpush1.msra.mxu0 0.0
    %5811 = vmatprep.subr.mxu0 0.0
    %5812 = vmatpush1.msra.mxu0 0.0
    %5813 = vmatprep.subr.mxu0 0.0
    %5814 = vmatpush1.msra.mxu0 0.0
    %5815 = vmatprep.subr.mxu0 0.0
    %5816 = vmatpush1.msra.mxu0 0.0
    %5817 = vmatprep.subr.mxu0 0.0
    %5818 = vmatpush1.msra.mxu0 0.0
    %5819 = vmatprep.subr.mxu0 0.0
    %5820 = vmatpush1.msra.mxu0 0.0
    %5821 = vmatprep.subr.mxu0 0.0
    %5822 = vmatpush1.msra.mxu0 0.0
    %5823 = vmatprep.subr.mxu0 0.0
    %5824 = vmatpush1.msra.mxu0 0.0
    %5825 = vmatprep.subr.mxu0 0.0
    %5826 = vmatpush1.msra.mxu0 0.0
    %5827 = vmatprep.subr.mxu0 0.0
    %5828 = vmatpush1.msra.mxu0 0.0
    %5829 = vmatprep.subr.mxu0 0.0
    %5830 = vmatpush1.msra.mxu0 0.0
    %5831 = vmatprep.subr.mxu0 0.0
    %5832 = vmatpush1.msra.mxu0 0.0
    %5833 = vmatprep.subr.mxu0 0.0
    %5834 = vmatpush1.msra.mxu0 0.0
    %5835 = vmatprep.subr.mxu0 0.0
    %5836 = vmatpush1.msra.mxu0 0.0
    %5837 = vmatprep.mubr.f32.mxu0 0.0
    %v5838 = vand.u32 %v5770, 4294901760
    %v5839 = vsub.f32 %v5770, %v5838
    %v5840 = vand.u32 %v5839, 4294901760
    %v5841 = vsub.f32 %v5839, %v5840
    %v5842 = vand.u32 %v5841, 4294901760
    %5843 = vmatmul.mubr.f32.gmra.mrb[0].mxu0 %v5842
    %v5844 = vpop.f32.mrb[0].mxu0
    %v5845 = vadd.f32 0.0, %v5844
    %v5846 = vpop.f32.mrb[0].mxu0
    %5847 = vdwg.mxu0
    %5848 = vmatprep.subr.mxu0 0.0
    %v5849 = vand.u32 %v5767, 4294901760
    %v5850 = vsub.f32 %v5767, %v5849
    %v5851 = vand.u32 %v5850, 4294901760
    %v5852 = vsub.f32 %v5850, %v5851
    %v5853 = vand.u32 %v5852, 4294901760
    %5854 = vmatpush1.msra.mxu0 %v5853
    %5855 = vmatprep.subr.mxu0 0.0
    %5856 = vmatpush1.msra.mxu0 0.0
    %5857 = vmatprep.subr.mxu0 0.0
    %5858 = vmatpush1.msra.mxu0 0.0
    %5859 = vmatprep.subr.mxu0 0.0
    %5860 = vmatpush1.msra.mxu0 0.0
    %5861 = vmatprep.subr.mxu0 0.0
    %5862 = vmatpush1.msra.mxu0 0.0
    %5863 = vmatprep.subr.mxu0 0.0
    %5864 = vmatpush1.msra.mxu0 0.0
    %5865 = vmatprep.subr.mxu0 0.0
    %5866 = vmatpush1.msra.mxu0 0.0
    %5867 = vmatprep.subr.mxu0 0.0
    %5868 = vmatpush1.msra.mxu0 0.0
    %5869 = vmatprep.subr.mxu0 0.0
    %5870 = vmatpush1.msra.mxu0 0.0
    %5871 = vmatprep.subr.mxu0 0.0
    %5872 = vmatpush1.msra.mxu0 0.0
    %5873 = vmatprep.subr.mxu0 0.0
    %5874 = vmatpush1.msra.mxu0 0.0
    %5875 = vmatprep.subr.mxu0 0.0
    %5876 = vmatpush1.msra.mxu0 0.0
    %5877 = vmatprep.subr.mxu0 0.0
    %5878 = vmatpush1.msra.mxu0 0.0
    %5879 = vmatprep.subr.mxu0 0.0
    %5880 = vmatpush1.msra.mxu0 0.0
    %5881 = vmatprep.subr.mxu0 0.0
    %5882 = vmatpush1.msra.mxu0 0.0
    %5883 = vmatprep.subr.mxu0 0.0
    %5884 = vmatpush1.msra.mxu0 0.0
    %5885 = vmatprep.subr.mxu0 0.0
    %5886 = vmatpush1.msra.mxu0 0.0
    %5887 = vmatprep.subr.mxu0 0.0
    %5888 = vmatpush1.msra.mxu0 0.0
    %5889 = vmatprep.subr.mxu0 0.0
    %5890 = vmatpush1.msra.mxu0 0.0
    %5891 = vmatprep.subr.mxu0 0.0
    %5892 = vmatpush1.msra.mxu0 0.0
    %5893 = vmatprep.subr.mxu0 0.0
    %5894 = vmatpush1.msra.mxu0 0.0
    %5895 = vmatprep.subr.mxu0 0.0
    %5896 = vmatpush1.msra.mxu0 0.0
    %5897 = vmatprep.subr.mxu0 0.0
    %5898 = vmatpush1.msra.mxu0 0.0
    %5899 = vmatprep.subr.mxu0 0.0
    %5900 = vmatpush1.msra.mxu0 0.0
    %5901 = vmatprep.subr.mxu0 0.0
    %5902 = vmatpush1.msra.mxu0 0.0
    %5903 = vmatprep.subr.mxu0 0.0
    %5904 = vmatpush1.msra.mxu0 0.0
    %5905 = vmatprep.subr.mxu0 0.0
    %5906 = vmatpush1.msra.mxu0 0.0
    %5907 = vmatprep.subr.mxu0 0.0
    %5908 = vmatpush1.msra.mxu0 0.0
    %5909 = vmatprep.subr.mxu0 0.0
    %5910 = vmatpush1.msra.mxu0 0.0
    %5911 = vmatprep.subr.mxu0 0.0
    %5912 = vmatpush1.msra.mxu0 0.0
    %5913 = vmatprep.subr.mxu0 0.0
    %5914 = vmatpush1.msra.mxu0 0.0
    %5915 = vmatprep.subr.mxu0 0.0
    %5916 = vmatpush1.msra.mxu0 0.0
    %5917 = vmatprep.mubr.f32.mxu0 0.0
    %v5918 = vand.u32 %v5770, 4294901760
    %5919 = vmatmul.mubr.f32.gmra.mrb[0].mxu0 %v5918
    %v5920 = vpop.f32.mrb[0].mxu0
    %v5921 = vadd.f32 %v5845, %v5920
    %v5922 = vpop.f32.mrb[0].mxu0
    %5923 = vdwg.mxu0
    %5924 = vmatprep.subr.mxu0 0.0
    %v5925 = vand.u32 %v5767, 4294901760
    %v5926 = vsub.f32 %v5767, %v5925
    %5927 = vmatpush1.msra.mxu0 %v5926
    %5928 = vmatprep.subr.mxu0 0.0
    %5929 = vmatpush1.msra.mxu0 0.0
    %5930 = vmatprep.subr.mxu0 0.0
    %5931 = vmatpush1.msra.mxu0 0.0
    %5932 = vmatprep.subr.mxu0 0.0
    %5933 = vmatpush1.msra.mxu0 0.0
    %5934 = vmatprep.subr.mxu0 0.0
    %5935 = vmatpush1.msra.mxu0 0.0
    %5936 = vmatprep.subr.mxu0 0.0
    %5937 = vmatpush1.msra.mxu0 0.0
    %5938 = vmatprep.subr.mxu0 0.0
    %5939 = vmatpush1.msra.mxu0 0.0
    %5940 = vmatprep.subr.mxu0 0.0
    %5941 = vmatpush1.msra.mxu0 0.0
    %5942 = vmatprep.subr.mxu0 0.0
    %5943 = vmatpush1.msra.mxu0 0.0
    %5944 = vmatprep.subr.mxu0 0.0
    %5945 = vmatpush1.msra.mxu0 0.0
    %5946 = vmatprep.subr.mxu0 0.0
    %5947 = vmatpush1.msra.mxu0 0.0
    %5948 = vmatprep.subr.mxu0 0.0
    %5949 = vmatpush1.msra.mxu0 0.0
    %5950 = vmatprep.subr.mxu0 0.0
    %5951 = vmatpush1.msra.mxu0 0.0
    %5952 = vmatprep.subr.mxu0 0.0
    %5953 = vmatpush1.msra.mxu0 0.0
    %5954 = vmatprep.subr.mxu0 0.0
    %5955 = vmatpush1.msra.mxu0 0.0
    %5956 = vmatprep.subr.mxu0 0.0
    %5957 = vmatpush1.msra.mxu0 0.0
    %5958 = vmatprep.subr.mxu0 0.0
    %5959 = vmatpush1.msra.mxu0 0.0
    %5960 = vmatprep.subr.mxu0 0.0
    %5961 = vmatpush1.msra.mxu0 0.0
    %5962 = vmatprep.subr.mxu0 0.0
    %5963 = vmatpush1.msra.mxu0 0.0
    %5964 = vmatprep.subr.mxu0 0.0
    %5965 = vmatpush1.msra.mxu0 0.0
    %5966 = vmatprep.subr.mxu0 0.0
    %5967 = vmatpush1.msra.mxu0 0.0
    %5968 = vmatprep.subr.mxu0 0.0
    %5969 = vmatpush1.msra.mxu0 0.0
    %5970 = vmatprep.subr.mxu0 0.0
    %5971 = vmatpush1.msra.mxu0 0.0
    %5972 = vmatprep.subr.mxu0 0.0
    %5973 = vmatpush1.msra.mxu0 0.0
    %5974 = vmatprep.subr.mxu0 0.0
    %5975 = vmatpush1.msra.mxu0 0.0
    %5976 = vmatprep.subr.mxu0 0.0
    %5977 = vmatpush1.msra.mxu0 0.0
    %5978 = vmatprep.subr.mxu0 0.0
    %5979 = vmatpush1.msra.mxu0 0.0
    %5980 = vmatprep.subr.mxu0 0.0
    %5981 = vmatpush1.msra.mxu0 0.0
    %5982 = vmatprep.subr.mxu0 0.0
    %5983 = vmatpush1.msra.mxu0 0.0
    %5984 = vmatprep.subr.mxu0 0.0
    %5985 = vmatpush1.msra.mxu0 0.0
    %5986 = vmatprep.subr.mxu0 0.0
    %5987 = vmatpush1.msra.mxu0 0.0
    %5988 = vmatprep.subr.mxu0 0.0
    %5989 = vmatpush1.msra.mxu0 0.0
    %5990 = vmatprep.mubr.f32.mxu0 0.0
    %v5991 = vand.u32 %v5770, 4294901760
    %v5992 = vsub.f32 %v5770, %v5991
    %5993 = vmatmul.mubr.f32.gmra.mrb[0].mxu0 %v5992
    %v5994 = vpop.f32.mrb[0].mxu0
    %v5995 = vadd.f32 %v5921, %v5994
    %v5996 = vpop.f32.mrb[0].mxu0
    %5997 = vdwg.mxu0
    %5998 = vmatprep.subr.mxu0 0.0
    %v5999 = vand.u32 %v5767, 4294901760
    %6000 = vmatpush1.msra.mxu0 %v5999
    %6001 = vmatprep.subr.mxu0 0.0
    %6002 = vmatpush1.msra.mxu0 0.0
    %6003 = vmatprep.subr.mxu0 0.0
    %6004 = vmatpush1.msra.mxu0 0.0
    %6005 = vmatprep.subr.mxu0 0.0
    %6006 = vmatpush1.msra.mxu0 0.0
    %6007 = vmatprep.subr.mxu0 0.0
    %6008 = vmatpush1.msra.mxu0 0.0
    %6009 = vmatprep.subr.mxu0 0.0
    %6010 = vmatpush1.msra.mxu0 0.0
    %6011 = vmatprep.subr.mxu0 0.0
    %6012 = vmatpush1.msra.mxu0 0.0
    %6013 = vmatprep.subr.mxu0 0.0
    %6014 = vmatpush1.msra.mxu0 0.0
    %6015 = vmatprep.subr.mxu0 0.0
    %6016 = vmatpush1.msra.mxu0 0.0
    %6017 = vmatprep.subr.mxu0 0.0
    %6018 = vmatpush1.msra.mxu0 0.0
    %6019 = vmatprep.subr.mxu0 0.0
    %6020 = vmatpush1.msra.mxu0 0.0
    %6021 = vmatprep.subr.mxu0 0.0
    %6022 = vmatpush1.msra.mxu0 0.0
    %6023 = vmatprep.subr.mxu0 0.0
    %6024 = vmatpush1.msra.mxu0 0.0
    %6025 = vmatprep.subr.mxu0 0.0
    %6026 = vmatpush1.msra.mxu0 0.0
    %6027 = vmatprep.subr.mxu0 0.0
    %6028 = vmatpush1.msra.mxu0 0.0
    %6029 = vmatprep.subr.mxu0 0.0
    %6030 = vmatpush1.msra.mxu0 0.0
    %6031 = vmatprep.subr.mxu0 0.0
    %6032 = vmatpush1.msra.mxu0 0.0
    %6033 = vmatprep.subr.mxu0 0.0
    %6034 = vmatpush1.msra.mxu0 0.0
    %6035 = vmatprep.subr.mxu0 0.0
    %6036 = vmatpush1.msra.mxu0 0.0
    %6037 = vmatprep.subr.mxu0 0.0
    %6038 = vmatpush1.msra.mxu0 0.0
    %6039 = vmatprep.subr.mxu0 0.0
    %6040 = vmatpush1.msra.mxu0 0.0
    %6041 = vmatprep.subr.mxu0 0.0
    %6042 = vmatpush1.msra.mxu0 0.0
    %6043 = vmatprep.subr.mxu0 0.0
    %6044 = vmatpush1.msra.mxu0 0.0
    %6045 = vmatprep.subr.mxu0 0.0
    %6046 = vmatpush1.msra.mxu0 0.0
    %6047 = vmatprep.subr.mxu0 0.0
    %6048 = vmatpush1.msra.mxu0 0.0
    %6049 = vmatprep.subr.mxu0 0.0
    %6050 = vmatpush1.msra.mxu0 0.0
    %6051 = vmatprep.subr.mxu0 0.0
    %6052 = vmatpush1.msra.mxu0 0.0
    %6053 = vmatprep.subr.mxu0 0.0
    %6054 = vmatpush1.msra.mxu0 0.0
    %6055 = vmatprep.subr.mxu0 0.0
    %6056 = vmatpush1.msra.mxu0 0.0
    %6057 = vmatprep.subr.mxu0 0.0
    %6058 = vmatpush1.msra.mxu0 0.0
    %6059 = vmatprep.subr.mxu0 0.0
    %6060 = vmatpush1.msra.mxu0 0.0
    %6061 = vmatprep.subr.mxu0 0.0
    %6062 = vmatpush1.msra.mxu0 0.0
    %6063 = vmatprep.mubr.f32.mxu0 0.0
    %v6064 = vand.u32 %v5770, 4294901760
    %v6065 = vsub.f32 %v5770, %v6064
    %v6066 = vand.u32 %v6065, 4294901760
    %6067 = vmatmul.mubr.f32.gmra.mrb[0].mxu0 %v6066
    %v6068 = vpop.f32.mrb[0].mxu0
    %v6069 = vadd.f32 %v5995, %v6068
    %v6070 = vpop.f32.mrb[0].mxu0
    %6071 = vdwg.mxu0
    %6072 = vmatprep.subr.mxu0 0.0
    %v6073 = vand.u32 %v5767, 4294901760
    %v6074 = vsub.f32 %v5767, %v6073
    %v6075 = vand.u32 %v6074, 4294901760
    %6076 = vmatpush1.msra.mxu0 %v6075
    %6077 = vmatprep.subr.mxu0 0.0
    %6078 = vmatpush1.msra.mxu0 0.0
    %6079 = vmatprep.subr.mxu0 0.0
    %6080 = vmatpush1.msra.mxu0 0.0
    %6081 = vmatprep.subr.mxu0 0.0
    %6082 = vmatpush1.msra.mxu0 0.0
    %6083 = vmatprep.subr.mxu0 0.0
    %6084 = vmatpush1.msra.mxu0 0.0
    %6085 = vmatprep.subr.mxu0 0.0
    %6086 = vmatpush1.msra.mxu0 0.0
    %6087 = vmatprep.subr.mxu0 0.0
    %6088 = vmatpush1.msra.mxu0 0.0
    %6089 = vmatprep.subr.mxu0 0.0
    %6090 = vmatpush1.msra.mxu0 0.0
    %6091 = vmatprep.subr.mxu0 0.0
    %6092 = vmatpush1.msra.mxu0 0.0
    %6093 = vmatprep.subr.mxu0 0.0
    %6094 = vmatpush1.msra.mxu0 0.0
    %6095 = vmatprep.subr.mxu0 0.0
    %6096 = vmatpush1.msra.mxu0 0.0
    %6097 = vmatprep.subr.mxu0 0.0
    %6098 = vmatpush1.msra.mxu0 0.0
    %6099 = vmatprep.subr.mxu0 0.0
    %6100 = vmatpush1.msra.mxu0 0.0
    %6101 = vmatprep.subr.mxu0 0.0
    %6102 = vmatpush1.msra.mxu0 0.0
    %6103 = vmatprep.subr.mxu0 0.0
    %6104 = vmatpush1.msra.mxu0 0.0
    %6105 = vmatprep.subr.mxu0 0.0
    %6106 = vmatpush1.msra.mxu0 0.0
    %6107 = vmatprep.subr.mxu0 0.0
    %6108 = vmatpush1.msra.mxu0 0.0
    %6109 = vmatprep.subr.mxu0 0.0
    %6110 = vmatpush1.msra.mxu0 0.0
    %6111 = vmatprep.subr.mxu0 0.0
    %6112 = vmatpush1.msra.mxu0 0.0
    %6113 = vmatprep.subr.mxu0 0.0
    %6114 = vmatpush1.msra.mxu0 0.0
    %6115 = vmatprep.subr.mxu0 0.0
    %6116 = vmatpush1.msra.mxu0 0.0
    %6117 = vmatprep.subr.mxu0 0.0
    %6118 = vmatpush1.msra.mxu0 0.0
    %6119 = vmatprep.subr.mxu0 0.0
    %6120 = vmatpush1.msra.mxu0 0.0
    %6121 = vmatprep.subr.mxu0 0.0
    %6122 = vmatpush1.msra.mxu0 0.0
    %6123 = vmatprep.subr.mxu0 0.0
    %6124 = vmatpush1.msra.mxu0 0.0
    %6125 = vmatprep.subr.mxu0 0.0
    %6126 = vmatpush1.msra.mxu0 0.0
    %6127 = vmatprep.subr.mxu0 0.0
    %6128 = vmatpush1.msra.mxu0 0.0
    %6129 = vmatprep.subr.mxu0 0.0
    %6130 = vmatpush1.msra.mxu0 0.0
    %6131 = vmatprep.subr.mxu0 0.0
    %6132 = vmatpush1.msra.mxu0 0.0
    %6133 = vmatprep.subr.mxu0 0.0
    %6134 = vmatpush1.msra.mxu0 0.0
    %6135 = vmatprep.subr.mxu0 0.0
    %6136 = vmatpush1.msra.mxu0 0.0
    %6137 = vmatprep.subr.mxu0 0.0
    %6138 = vmatpush1.msra.mxu0 0.0
    %6139 = vmatprep.mubr.f32.mxu0 0.0
    %v6140 = vand.u32 %v5770, 4294901760
    %6141 = vmatmul.mubr.f32.gmra.mrb[0].mxu0 %v6140
    %v6142 = vpop.f32.mrb[0].mxu0
    %v6143 = vadd.f32 %v6069, %v6142
    %v6144 = vpop.f32.mrb[0].mxu0
    %6145 = vdwg.mxu0
    %6146 = vmatprep.subr.mxu0 0.0
    %v6147 = vand.u32 %v5767, 4294901760
    %6148 = vmatpush1.msra.mxu0 %v6147
    %6149 = vmatprep.subr.mxu0 0.0
    %6150 = vmatpush1.msra.mxu0 0.0
    %6151 = vmatprep.subr.mxu0 0.0
    %6152 = vmatpush1.msra.mxu0 0.0
    %6153 = vmatprep.subr.mxu0 0.0
    %6154 = vmatpush1.msra.mxu0 0.0
    %6155 = vmatprep.subr.mxu0 0.0
    %6156 = vmatpush1.msra.mxu0 0.0
    %6157 = vmatprep.subr.mxu0 0.0
    %6158 = vmatpush1.msra.mxu0 0.0
    %6159 = vmatprep.subr.mxu0 0.0
    %6160 = vmatpush1.msra.mxu0 0.0
    %6161 = vmatprep.subr.mxu0 0.0
    %6162 = vmatpush1.msra.mxu0 0.0
    %6163 = vmatprep.subr.mxu0 0.0
    %6164 = vmatpush1.msra.mxu0 0.0
    %6165 = vmatprep.subr.mxu0 0.0
    %6166 = vmatpush1.msra.mxu0 0.0
    %6167 = vmatprep.subr.mxu0 0.0
    %6168 = vmatpush1.msra.mxu0 0.0
    %6169 = vmatprep.subr.mxu0 0.0
    %6170 = vmatpush1.msra.mxu0 0.0
    %6171 = vmatprep.subr.mxu0 0.0
    %6172 = vmatpush1.msra.mxu0 0.0
    %6173 = vmatprep.subr.mxu0 0.0
    %6174 = vmatpush1.msra.mxu0 0.0
    %6175 = vmatprep.subr.mxu0 0.0
    %6176 = vmatpush1.msra.mxu0 0.0
    %6177 = vmatprep.subr.mxu0 0.0
    %6178 = vmatpush1.msra.mxu0 0.0
    %6179 = vmatprep.subr.mxu0 0.0
    %6180 = vmatpush1.msra.mxu0 0.0
    %6181 = vmatprep.subr.mxu0 0.0
    %6182 = vmatpush1.msra.mxu0 0.0
    %6183 = vmatprep.subr.mxu0 0.0
    %6184 = vmatpush1.msra.mxu0 0.0
    %6185 = vmatprep.subr.mxu0 0.0
    %6186 = vmatpush1.msra.mxu0 0.0
    %6187 = vmatprep.subr.mxu0 0.0
    %6188 = vmatpush1.msra.mxu0 0.0
    %6189 = vmatprep.subr.mxu0 0.0
    %6190 = vmatpush1.msra.mxu0 0.0
    %6191 = vmatprep.subr.mxu0 0.0
    %6192 = vmatpush1.msra.mxu0 0.0
    %6193 = vmatprep.subr.mxu0 0.0
    %6194 = vmatpush1.msra.mxu0 0.0
    %6195 = vmatprep.subr.mxu0 0.0
    %6196 = vmatpush1.msra.mxu0 0.0
    %6197 = vmatprep.subr.mxu0 0.0
    %6198 = vmatpush1.msra.mxu0 0.0
    %6199 = vmatprep.subr.mxu0 0.0
    %6200 = vmatpush1.msra.mxu0 0.0
    %6201 = vmatprep.subr.mxu0 0.0
    %6202 = vmatpush1.msra.mxu0 0.0
    %6203 = vmatprep.subr.mxu0 0.0
    %6204 = vmatpush1.msra.mxu0 0.0
    %6205 = vmatprep.subr.mxu0 0.0
    %6206 = vmatpush1.msra.mxu0 0.0
    %6207 = vmatprep.subr.mxu0 0.0
    %6208 = vmatpush1.msra.mxu0 0.0
    %6209 = vmatprep.subr.mxu0 0.0
    %6210 = vmatpush1.msra.mxu0 0.0
    %6211 = vmatprep.mubr.f32.mxu0 0.0
    %v6212 = vand.u32 %v5770, 4294901760
    %6213 = vmatmul.mubr.f32.gmra.mrb[0].mxu0 %v6212
    %v6214 = vpop.f32.mrb[0].mxu0
    %v6215 = vadd.f32 %v6143, %v6214
    %v6216 = vpop.f32.mrb[0].mxu0
    %6217 = vdwg.mxu0
    %6218 = vrot.lane.b32.xlu0 %v708, 104
    %v6219 = vpop.permute.xlu0 %6218
    %6220 = vrot.lane.b32.xlu0 %v708, 72
    %v6221 = vpop.permute.xlu0 %6220
    %v6222 = vsel %vm720, %v6219, 0
    %v6224 = vsel %vm720, %v6221, 0
    %6226 = vmatprep.subr.mxu0 0.0
    %v6227 = vand.u32 %v6224, 4294901760
    %6228 = vmatpush1.xpose.msra.mxu0 %v6227
    %6229 = vmatprep.subr.mxu0 0.0
    %6230 = vmatpush1.xpose.msra.mxu0 0.0
    %6231 = vmatprep.subr.mxu0 0.0
    %6232 = vmatpush1.xpose.msra.mxu0 0.0
    %6233 = vmatprep.subr.mxu0 0.0
    %6234 = vmatpush1.xpose.msra.mxu0 0.0
    %6235 = vmatprep.subr.mxu0 0.0
    %6236 = vmatpush1.xpose.msra.mxu0 0.0
    %6237 = vmatprep.subr.mxu0 0.0
    %6238 = vmatpush1.xpose.msra.mxu0 0.0
    %6239 = vmatprep.subr.mxu0 0.0
    %6240 = vmatpush1.xpose.msra.mxu0 0.0
    %6241 = vmatprep.subr.mxu0 0.0
    %6242 = vmatpush1.xpose.msra.mxu0 0.0
    %6243 = vmatprep.subr.mxu0 0.0
    %6244 = vmatpush1.xpose.msra.mxu0 0.0
    %6245 = vmatprep.subr.mxu0 0.0
    %6246 = vmatpush1.xpose.msra.mxu0 0.0
    %6247 = vmatprep.subr.mxu0 0.0
    %6248 = vmatpush1.xpose.msra.mxu0 0.0
    %6249 = vmatprep.subr.mxu0 0.0
    %6250 = vmatpush1.xpose.msra.mxu0 0.0
    %6251 = vmatprep.subr.mxu0 0.0
    %6252 = vmatpush1.xpose.msra.mxu0 0.0
    %6253 = vmatprep.subr.mxu0 0.0
    %6254 = vmatpush1.xpose.msra.mxu0 0.0
    %6255 = vmatprep.subr.mxu0 0.0
    %6256 = vmatpush1.xpose.msra.mxu0 0.0
    %6257 = vmatprep.subr.mxu0 0.0
    %6258 = vmatpush1.xpose.msra.mxu0 0.0
    %6259 = vmatprep.subr.mxu0 0.0
    %6260 = vmatpush1.xpose.msra.mxu0 0.0
    %6261 = vmatprep.subr.mxu0 0.0
    %6262 = vmatpush1.xpose.msra.mxu0 0.0
    %6263 = vmatprep.subr.mxu0 0.0
    %6264 = vmatpush1.xpose.msra.mxu0 0.0
    %6265 = vmatprep.subr.mxu0 0.0
    %6266 = vmatpush1.xpose.msra.mxu0 0.0
    %6267 = vmatprep.subr.mxu0 0.0
    %6268 = vmatpush1.xpose.msra.mxu0 0.0
    %6269 = vmatprep.subr.mxu0 0.0
    %6270 = vmatpush1.xpose.msra.mxu0 0.0
    %6271 = vmatprep.subr.mxu0 0.0
    %6272 = vmatpush1.xpose.msra.mxu0 0.0
    %6273 = vmatprep.subr.mxu0 0.0
    %6274 = vmatpush1.xpose.msra.mxu0 0.0
    %6275 = vmatprep.subr.mxu0 0.0
    %6276 = vmatpush1.xpose.msra.mxu0 0.0
    %6277 = vmatprep.subr.mxu0 0.0
    %6278 = vmatpush1.xpose.msra.mxu0 0.0
    %6279 = vmatprep.subr.mxu0 0.0
    %6280 = vmatpush1.xpose.msra.mxu0 0.0
    %6281 = vmatprep.subr.mxu0 0.0
    %6282 = vmatpush1.xpose.msra.mxu0 0.0
    %6283 = vmatprep.subr.mxu0 0.0
    %6284 = vmatpush1.xpose.msra.mxu0 0.0
    %6285 = vmatprep.subr.mxu0 0.0
    %6286 = vmatpush1.xpose.msra.mxu0 0.0
    %6287 = vmatprep.subr.mxu0 0.0
    %6288 = vmatpush1.xpose.msra.mxu0 0.0
    %6289 = vmatprep.subr.mxu0 0.0
    %6290 = vmatpush1.xpose.msra.mxu0 0.0
    %6291 = vmatprep.mubr.f32.mxu0 0.0
    %v6292 = vand.u32 %v6222, 4294901760
    %v6293 = vsub.f32 %v6222, %v6292
    %v6294 = vand.u32 %v6293, 4294901760
    %v6295 = vsub.f32 %v6293, %v6294
    %v6296 = vand.u32 %v6295, 4294901760
    %6297 = vmatmul.mubr.f32.gmra.mrb[0].mxu0 %v6296
    %v6298 = vpop.f32.mrb[0].mxu0
    %v6299 = vadd.f32 0.0, %v6298
    %v6300 = vpop.f32.mrb[0].mxu0
    %6301 = vdwg.mxu0
    %6302 = vmatprep.subr.mxu0 0.0
    %v6303 = vand.u32 %v6224, 4294901760
    %v6304 = vsub.f32 %v6224, %v6303
    %v6305 = vand.u32 %v6304, 4294901760
    %v6306 = vsub.f32 %v6304, %v6305
    %v6307 = vand.u32 %v6306, 4294901760
    %6308 = vmatpush1.xpose.msra.mxu0 %v6307
    %6309 = vmatprep.subr.mxu0 0.0
    %6310 = vmatpush1.xpose.msra.mxu0 0.0
    %6311 = vmatprep.subr.mxu0 0.0
    %6312 = vmatpush1.xpose.msra.mxu0 0.0
    %6313 = vmatprep.subr.mxu0 0.0
    %6314 = vmatpush1.xpose.msra.mxu0 0.0
    %6315 = vmatprep.subr.mxu0 0.0
    %6316 = vmatpush1.xpose.msra.mxu0 0.0
    %6317 = vmatprep.subr.mxu0 0.0
    %6318 = vmatpush1.xpose.msra.mxu0 0.0
    %6319 = vmatprep.subr.mxu0 0.0
    %6320 = vmatpush1.xpose.msra.mxu0 0.0
    %6321 = vmatprep.subr.mxu0 0.0
    %6322 = vmatpush1.xpose.msra.mxu0 0.0
    %6323 = vmatprep.subr.mxu0 0.0
    %6324 = vmatpush1.xpose.msra.mxu0 0.0
    %6325 = vmatprep.subr.mxu0 0.0
    %6326 = vmatpush1.xpose.msra.mxu0 0.0
    %6327 = vmatprep.subr.mxu0 0.0
    %6328 = vmatpush1.xpose.msra.mxu0 0.0
    %6329 = vmatprep.subr.mxu0 0.0
    %6330 = vmatpush1.xpose.msra.mxu0 0.0
    %6331 = vmatprep.subr.mxu0 0.0
    %6332 = vmatpush1.xpose.msra.mxu0 0.0
    %6333 = vmatprep.subr.mxu0 0.0
    %6334 = vmatpush1.xpose.msra.mxu0 0.0
    %6335 = vmatprep.subr.mxu0 0.0
    %6336 = vmatpush1.xpose.msra.mxu0 0.0
    %6337 = vmatprep.subr.mxu0 0.0
    %6338 = vmatpush1.xpose.msra.mxu0 0.0
    %6339 = vmatprep.subr.mxu0 0.0
    %6340 = vmatpush1.xpose.msra.mxu0 0.0
    %6341 = vmatprep.subr.mxu0 0.0
    %6342 = vmatpush1.xpose.msra.mxu0 0.0
    %6343 = vmatprep.subr.mxu0 0.0
    %6344 = vmatpush1.xpose.msra.mxu0 0.0
    %6345 = vmatprep.subr.mxu0 0.0
    %6346 = vmatpush1.xpose.msra.mxu0 0.0
    %6347 = vmatprep.subr.mxu0 0.0
    %6348 = vmatpush1.xpose.msra.mxu0 0.0
    %6349 = vmatprep.subr.mxu0 0.0
    %6350 = vmatpush1.xpose.msra.mxu0 0.0
    %6351 = vmatprep.subr.mxu0 0.0
    %6352 = vmatpush1.xpose.msra.mxu0 0.0
    %6353 = vmatprep.subr.mxu0 0.0
    %6354 = vmatpush1.xpose.msra.mxu0 0.0
    %6355 = vmatprep.subr.mxu0 0.0
    %6356 = vmatpush1.xpose.msra.mxu0 0.0
    %6357 = vmatprep.subr.mxu0 0.0
    %6358 = vmatpush1.xpose.msra.mxu0 0.0
    %6359 = vmatprep.subr.mxu0 0.0
    %6360 = vmatpush1.xpose.msra.mxu0 0.0
    %6361 = vmatprep.subr.mxu0 0.0
    %6362 = vmatpush1.xpose.msra.mxu0 0.0
    %6363 = vmatprep.subr.mxu0 0.0
    %6364 = vmatpush1.xpose.msra.mxu0 0.0
    %6365 = vmatprep.subr.mxu0 0.0
    %6366 = vmatpush1.xpose.msra.mxu0 0.0
    %6367 = vmatprep.subr.mxu0 0.0
    %6368 = vmatpush1.xpose.msra.mxu0 0.0
    %6369 = vmatprep.subr.mxu0 0.0
    %6370 = vmatpush1.xpose.msra.mxu0 0.0
    %6371 = vmatprep.mubr.f32.mxu0 0.0
    %v6372 = vand.u32 %v6222, 4294901760
    %6373 = vmatmul.mubr.f32.gmra.mrb[0].mxu0 %v6372
    %v6374 = vpop.f32.mrb[0].mxu0
    %v6375 = vadd.f32 %v6299, %v6374
    %v6376 = vpop.f32.mrb[0].mxu0
    %6377 = vdwg.mxu0
    %6378 = vmatprep.subr.mxu0 0.0
    %v6379 = vand.u32 %v6224, 4294901760
    %v6380 = vsub.f32 %v6224, %v6379
    %6381 = vmatpush1.xpose.msra.mxu0 %v6380
    %6382 = vmatprep.subr.mxu0 0.0
    %6383 = vmatpush1.xpose.msra.mxu0 0.0
    %6384 = vmatprep.subr.mxu0 0.0
    %6385 = vmatpush1.xpose.msra.mxu0 0.0
    %6386 = vmatprep.subr.mxu0 0.0
    %6387 = vmatpush1.xpose.msra.mxu0 0.0
    %6388 = vmatprep.subr.mxu0 0.0
    %6389 = vmatpush1.xpose.msra.mxu0 0.0
    %6390 = vmatprep.subr.mxu0 0.0
    %6391 = vmatpush1.xpose.msra.mxu0 0.0
    %6392 = vmatprep.subr.mxu0 0.0
    %6393 = vmatpush1.xpose.msra.mxu0 0.0
    %6394 = vmatprep.subr.mxu0 0.0
    %6395 = vmatpush1.xpose.msra.mxu0 0.0
    %6396 = vmatprep.subr.mxu0 0.0
    %6397 = vmatpush1.xpose.msra.mxu0 0.0
    %6398 = vmatprep.subr.mxu0 0.0
    %6399 = vmatpush1.xpose.msra.mxu0 0.0
    %6400 = vmatprep.subr.mxu0 0.0
    %6401 = vmatpush1.xpose.msra.mxu0 0.0
    %6402 = vmatprep.subr.mxu0 0.0
    %6403 = vmatpush1.xpose.msra.mxu0 0.0
    %6404 = vmatprep.subr.mxu0 0.0
    %6405 = vmatpush1.xpose.msra.mxu0 0.0
    %6406 = vmatprep.subr.mxu0 0.0
    %6407 = vmatpush1.xpose.msra.mxu0 0.0
    %6408 = vmatprep.subr.mxu0 0.0
    %6409 = vmatpush1.xpose.msra.mxu0 0.0
    %6410 = vmatprep.subr.mxu0 0.0
    %6411 = vmatpush1.xpose.msra.mxu0 0.0
    %6412 = vmatprep.subr.mxu0 0.0
    %6413 = vmatpush1.xpose.msra.mxu0 0.0
    %6414 = vmatprep.subr.mxu0 0.0
    %6415 = vmatpush1.xpose.msra.mxu0 0.0
    %6416 = vmatprep.subr.mxu0 0.0
    %6417 = vmatpush1.xpose.msra.mxu0 0.0
    %6418 = vmatprep.subr.mxu0 0.0
    %6419 = vmatpush1.xpose.msra.mxu0 0.0
    %6420 = vmatprep.subr.mxu0 0.0
    %6421 = vmatpush1.xpose.msra.mxu0 0.0
    %6422 = vmatprep.subr.mxu0 0.0
    %6423 = vmatpush1.xpose.msra.mxu0 0.0
    %6424 = vmatprep.subr.mxu0 0.0
    %6425 = vmatpush1.xpose.msra.mxu0 0.0
    %6426 = vmatprep.subr.mxu0 0.0
    %6427 = vmatpush1.xpose.msra.mxu0 0.0
    %6428 = vmatprep.subr.mxu0 0.0
    %6429 = vmatpush1.xpose.msra.mxu0 0.0
    %6430 = vmatprep.subr.mxu0 0.0
    %6431 = vmatpush1.xpose.msra.mxu0 0.0
    %6432 = vmatprep.subr.mxu0 0.0
    %6433 = vmatpush1.xpose.msra.mxu0 0.0
    %6434 = vmatprep.subr.mxu0 0.0
    %6435 = vmatpush1.xpose.msra.mxu0 0.0
    %6436 = vmatprep.subr.mxu0 0.0
    %6437 = vmatpush1.xpose.msra.mxu0 0.0
    %6438 = vmatprep.subr.mxu0 0.0
    %6439 = vmatpush1.xpose.msra.mxu0 0.0
    %6440 = vmatprep.subr.mxu0 0.0
    %6441 = vmatpush1.xpose.msra.mxu0 0.0
    %6442 = vmatprep.subr.mxu0 0.0
    %6443 = vmatpush1.xpose.msra.mxu0 0.0
    %6444 = vmatprep.mubr.f32.mxu0 0.0
    %v6445 = vand.u32 %v6222, 4294901760
    %v6446 = vsub.f32 %v6222, %v6445
    %6447 = vmatmul.mubr.f32.gmra.mrb[0].mxu0 %v6446
    %v6448 = vpop.f32.mrb[0].mxu0
    %v6449 = vadd.f32 %v6375, %v6448
    %v6450 = vpop.f32.mrb[0].mxu0
    %6451 = vdwg.mxu0
    %6452 = vmatprep.subr.mxu0 0.0
    %v6453 = vand.u32 %v6224, 4294901760
    %6454 = vmatpush1.xpose.msra.mxu0 %v6453
    %6455 = vmatprep.subr.mxu0 0.0
    %6456 = vmatpush1.xpose.msra.mxu0 0.0
    %6457 = vmatprep.subr.mxu0 0.0
    %6458 = vmatpush1.xpose.msra.mxu0 0.0
    %6459 = vmatprep.subr.mxu0 0.0
    %6460 = vmatpush1.xpose.msra.mxu0 0.0
    %6461 = vmatprep.subr.mxu0 0.0
    %6462 = vmatpush1.xpose.msra.mxu0 0.0
    %6463 = vmatprep.subr.mxu0 0.0
    %6464 = vmatpush1.xpose.msra.mxu0 0.0
    %6465 = vmatprep.subr.mxu0 0.0
    %6466 = vmatpush1.xpose.msra.mxu0 0.0
    %6467 = vmatprep.subr.mxu0 0.0
    %6468 = vmatpush1.xpose.msra.mxu0 0.0
    %6469 = vmatprep.subr.mxu0 0.0
    %6470 = vmatpush1.xpose.msra.mxu0 0.0
    %6471 = vmatprep.subr.mxu0 0.0
    %6472 = vmatpush1.xpose.msra.mxu0 0.0
    %6473 = vmatprep.subr.mxu0 0.0
    %6474 = vmatpush1.xpose.msra.mxu0 0.0
    %6475 = vmatprep.subr.mxu0 0.0
    %6476 = vmatpush1.xpose.msra.mxu0 0.0
    %6477 = vmatprep.subr.mxu0 0.0
    %6478 = vmatpush1.xpose.msra.mxu0 0.0
    %6479 = vmatprep.subr.mxu0 0.0
    %6480 = vmatpush1.xpose.msra.mxu0 0.0
    %6481 = vmatprep.subr.mxu0 0.0
    %6482 = vmatpush1.xpose.msra.mxu0 0.0
    %6483 = vmatprep.subr.mxu0 0.0
    %6484 = vmatpush1.xpose.msra.mxu0 0.0
    %6485 = vmatprep.subr.mxu0 0.0
    %6486 = vmatpush1.xpose.msra.mxu0 0.0
    %6487 = vmatprep.subr.mxu0 0.0
    %6488 = vmatpush1.xpose.msra.mxu0 0.0
    %6489 = vmatprep.subr.mxu0 0.0
    %6490 = vmatpush1.xpose.msra.mxu0 0.0
    %6491 = vmatprep.subr.mxu0 0.0
    %6492 = vmatpush1.xpose.msra.mxu0 0.0
    %6493 = vmatprep.subr.mxu0 0.0
    %6494 = vmatpush1.xpose.msra.mxu0 0.0
    %6495 = vmatprep.subr.mxu0 0.0
    %6496 = vmatpush1.xpose.msra.mxu0 0.0
    %6497 = vmatprep.subr.mxu0 0.0
    %6498 = vmatpush1.xpose.msra.mxu0 0.0
    %6499 = vmatprep.subr.mxu0 0.0
    %6500 = vmatpush1.xpose.msra.mxu0 0.0
    %6501 = vmatprep.subr.mxu0 0.0
    %6502 = vmatpush1.xpose.msra.mxu0 0.0
    %6503 = vmatprep.subr.mxu0 0.0
    %6504 = vmatpush1.xpose.msra.mxu0 0.0
    %6505 = vmatprep.subr.mxu0 0.0
    %6506 = vmatpush1.xpose.msra.mxu0 0.0
    %6507 = vmatprep.subr.mxu0 0.0
    %6508 = vmatpush1.xpose.msra.mxu0 0.0
    %6509 = vmatprep.subr.mxu0 0.0
    %6510 = vmatpush1.xpose.msra.mxu0 0.0
    %6511 = vmatprep.subr.mxu0 0.0
    %6512 = vmatpush1.xpose.msra.mxu0 0.0
    %6513 = vmatprep.subr.mxu0 0.0
    %6514 = vmatpush1.xpose.msra.mxu0 0.0
    %6515 = vmatprep.subr.mxu0 0.0
    %6516 = vmatpush1.xpose.msra.mxu0 0.0
    %6517 = vmatprep.mubr.f32.mxu0 0.0
    %v6518 = vand.u32 %v6222, 4294901760
    %v6519 = vsub.f32 %v6222, %v6518
    %v6520 = vand.u32 %v6519, 4294901760
    %6521 = vmatmul.mubr.f32.gmra.mrb[0].mxu0 %v6520
    %v6522 = vpop.f32.mrb[0].mxu0
    %v6523 = vadd.f32 %v6449, %v6522
    %v6524 = vpop.f32.mrb[0].mxu0
    %6525 = vdwg.mxu0
    %6526 = vmatprep.subr.mxu0 0.0
    %v6527 = vand.u32 %v6224, 4294901760
    %v6528 = vsub.f32 %v6224, %v6527
    %v6529 = vand.u32 %v6528, 4294901760
    %6530 = vmatpush1.xpose.msra.mxu0 %v6529
    %6531 = vmatprep.subr.mxu0 0.0
    %6532 = vmatpush1.xpose.msra.mxu0 0.0
    %6533 = vmatprep.subr.mxu0 0.0
    %6534 = vmatpush1.xpose.msra.mxu0 0.0
    %6535 = vmatprep.subr.mxu0 0.0
    %6536 = vmatpush1.xpose.msra.mxu0 0.0
    %6537 = vmatprep.subr.mxu0 0.0
    %6538 = vmatpush1.xpose.msra.mxu0 0.0
    %6539 = vmatprep.subr.mxu0 0.0
    %6540 = vmatpush1.xpose.msra.mxu0 0.0
    %6541 = vmatprep.subr.mxu0 0.0
    %6542 = vmatpush1.xpose.msra.mxu0 0.0
    %6543 = vmatprep.subr.mxu0 0.0
    %6544 = vmatpush1.xpose.msra.mxu0 0.0
    %6545 = vmatprep.subr.mxu0 0.0
    %6546 = vmatpush1.xpose.msra.mxu0 0.0
    %6547 = vmatprep.subr.mxu0 0.0
    %6548 = vmatpush1.xpose.msra.mxu0 0.0
    %6549 = vmatprep.subr.mxu0 0.0
    %6550 = vmatpush1.xpose.msra.mxu0 0.0
    %6551 = vmatprep.subr.mxu0 0.0
    %6552 = vmatpush1.xpose.msra.mxu0 0.0
    %6553 = vmatprep.subr.mxu0 0.0
    %6554 = vmatpush1.xpose.msra.mxu0 0.0
    %6555 = vmatprep.subr.mxu0 0.0
    %6556 = vmatpush1.xpose.msra.mxu0 0.0
    %6557 = vmatprep.subr.mxu0 0.0
    %6558 = vmatpush1.xpose.msra.mxu0 0.0
    %6559 = vmatprep.subr.mxu0 0.0
    %6560 = vmatpush1.xpose.msra.mxu0 0.0
    %6561 = vmatprep.subr.mxu0 0.0
    %6562 = vmatpush1.xpose.msra.mxu0 0.0
    %6563 = vmatprep.subr.mxu0 0.0
    %6564 = vmatpush1.xpose.msra.mxu0 0.0
    %6565 = vmatprep.subr.mxu0 0.0
    %6566 = vmatpush1.xpose.msra.mxu0 0.0
    %6567 = vmatprep.subr.mxu0 0.0
    %6568 = vmatpush1.xpose.msra.mxu0 0.0
    %6569 = vmatprep.subr.mxu0 0.0
    %6570 = vmatpush1.xpose.msra.mxu0 0.0
    %6571 = vmatprep.subr.mxu0 0.0
    %6572 = vmatpush1.xpose.msra.mxu0 0.0
    %6573 = vmatprep.subr.mxu0 0.0
    %6574 = vmatpush1.xpose.msra.mxu0 0.0
    %6575 = vmatprep.subr.mxu0 0.0
    %6576 = vmatpush1.xpose.msra.mxu0 0.0
    %6577 = vmatprep.subr.mxu0 0.0
    %6578 = vmatpush1.xpose.msra.mxu0 0.0
    %6579 = vmatprep.subr.mxu0 0.0
    %6580 = vmatpush1.xpose.msra.mxu0 0.0
    %6581 = vmatprep.subr.mxu0 0.0
    %6582 = vmatpush1.xpose.msra.mxu0 0.0
    %6583 = vmatprep.subr.mxu0 0.0
    %6584 = vmatpush1.xpose.msra.mxu0 0.0
    %6585 = vmatprep.subr.mxu0 0.0
    %6586 = vmatpush1.xpose.msra.mxu0 0.0
    %6587 = vmatprep.subr.mxu0 0.0
    %6588 = vmatpush1.xpose.msra.mxu0 0.0
    %6589 = vmatprep.subr.mxu0 0.0
    %6590 = vmatpush1.xpose.msra.mxu0 0.0
    %6591 = vmatprep.subr.mxu0 0.0
    %6592 = vmatpush1.xpose.msra.mxu0 0.0
    %6593 = vmatprep.mubr.f32.mxu0 0.0
    %v6594 = vand.u32 %v6222, 4294901760
    %6595 = vmatmul.mubr.f32.gmra.mrb[0].mxu0 %v6594
    %v6596 = vpop.f32.mrb[0].mxu0
    %v6597 = vadd.f32 %v6523, %v6596
    %v6598 = vpop.f32.mrb[0].mxu0
    %6599 = vdwg.mxu0
    %6600 = vmatprep.subr.mxu0 0.0
    %v6601 = vand.u32 %v6224, 4294901760
    %6602 = vmatpush1.xpose.msra.mxu0 %v6601
    %6603 = vmatprep.subr.mxu0 0.0
    %6604 = vmatpush1.xpose.msra.mxu0 0.0
    %6605 = vmatprep.subr.mxu0 0.0
    %6606 = vmatpush1.xpose.msra.mxu0 0.0
    %6607 = vmatprep.subr.mxu0 0.0
    %6608 = vmatpush1.xpose.msra.mxu0 0.0
    %6609 = vmatprep.subr.mxu0 0.0
    %6610 = vmatpush1.xpose.msra.mxu0 0.0
    %6611 = vmatprep.subr.mxu0 0.0
    %6612 = vmatpush1.xpose.msra.mxu0 0.0
    %6613 = vmatprep.subr.mxu0 0.0
    %6614 = vmatpush1.xpose.msra.mxu0 0.0
    %6615 = vmatprep.subr.mxu0 0.0
    %6616 = vmatpush1.xpose.msra.mxu0 0.0
    %6617 = vmatprep.subr.mxu0 0.0
    %6618 = vmatpush1.xpose.msra.mxu0 0.0
    %6619 = vmatprep.subr.mxu0 0.0
    %6620 = vmatpush1.xpose.msra.mxu0 0.0
    %6621 = vmatprep.subr.mxu0 0.0
    %6622 = vmatpush1.xpose.msra.mxu0 0.0
    %6623 = vmatprep.subr.mxu0 0.0
    %6624 = vmatpush1.xpose.msra.mxu0 0.0
    %6625 = vmatprep.subr.mxu0 0.0
    %6626 = vmatpush1.xpose.msra.mxu0 0.0
    %6627 = vmatprep.subr.mxu0 0.0
    %6628 = vmatpush1.xpose.msra.mxu0 0.0
    %6629 = vmatprep.subr.mxu0 0.0
    %6630 = vmatpush1.xpose.msra.mxu0 0.0
    %6631 = vmatprep.subr.mxu0 0.0
    %6632 = vmatpush1.xpose.msra.mxu0 0.0
    %6633 = vmatprep.subr.mxu0 0.0
    %6634 = vmatpush1.xpose.msra.mxu0 0.0
    %6635 = vmatprep.subr.mxu0 0.0
    %6636 = vmatpush1.xpose.msra.mxu0 0.0
    %6637 = vmatprep.subr.mxu0 0.0
    %6638 = vmatpush1.xpose.msra.mxu0 0.0
    %6639 = vmatprep.subr.mxu0 0.0
    %6640 = vmatpush1.xpose.msra.mxu0 0.0
    %6641 = vmatprep.subr.mxu0 0.0
    %6642 = vmatpush1.xpose.msra.mxu0 0.0
    %6643 = vmatprep.subr.mxu0 0.0
    %6644 = vmatpush1.xpose.msra.mxu0 0.0
    %6645 = vmatprep.subr.mxu0 0.0
    %6646 = vmatpush1.xpose.msra.mxu0 0.0
    %6647 = vmatprep.subr.mxu0 0.0
    %6648 = vmatpush1.xpose.msra.mxu0 0.0
    %6649 = vmatprep.subr.mxu0 0.0
    %6650 = vmatpush1.xpose.msra.mxu0 0.0
    %6651 = vmatprep.subr.mxu0 0.0
    %6652 = vmatpush1.xpose.msra.mxu0 0.0
    %6653 = vmatprep.subr.mxu0 0.0
    %6654 = vmatpush1.xpose.msra.mxu0 0.0
    %6655 = vmatprep.subr.mxu0 0.0
    %6656 = vmatpush1.xpose.msra.mxu0 0.0
    %6657 = vmatprep.subr.mxu0 0.0
    %6658 = vmatpush1.xpose.msra.mxu0 0.0
    %6659 = vmatprep.subr.mxu0 0.0
    %6660 = vmatpush1.xpose.msra.mxu0 0.0
    %6661 = vmatprep.subr.mxu0 0.0
    %6662 = vmatpush1.xpose.msra.mxu0 0.0
    %6663 = vmatprep.subr.mxu0 0.0
    %6664 = vmatpush1.xpose.msra.mxu0 0.0
    %6665 = vmatprep.mubr.f32.mxu0 0.0
    %v6666 = vand.u32 %v6222, 4294901760
    %6667 = vmatmul.mubr.f32.gmra.mrb[0].mxu0 %v6666
    %v6668 = vpop.f32.mrb[0].mxu0
    %v6669 = vadd.f32 %v6597, %v6668
    %v6670 = vpop.f32.mrb[0].mxu0
    %6671 = vdwg.mxu0
    %6672 = vrot.lane.b32.xlu0 %v714, 104
    %v6673 = vpop.permute.xlu0 %6672
    %6674 = vrot.lane.b32.xlu0 %v714, 72
    %v6675 = vpop.permute.xlu0 %6674
    %v6676 = vsel %vm720, %v6673, 0
    %v6678 = vsel %vm720, %v6675, 0
    %6680 = vmatprep.subr.mxu0 0.0
    %v6681 = vand.u32 %v6678, 4294901760
    %6682 = vmatpush1.xpose.msra.mxu0 %v6681
    %6683 = vmatprep.subr.mxu0 0.0
    %6684 = vmatpush1.xpose.msra.mxu0 0.0
    %6685 = vmatprep.subr.mxu0 0.0
    %6686 = vmatpush1.xpose.msra.mxu0 0.0
    %6687 = vmatprep.subr.mxu0 0.0
    %6688 = vmatpush1.xpose.msra.mxu0 0.0
    %6689 = vmatprep.subr.mxu0 0.0
    %6690 = vmatpush1.xpose.msra.mxu0 0.0
    %6691 = vmatprep.subr.mxu0 0.0
    %6692 = vmatpush1.xpose.msra.mxu0 0.0
    %6693 = vmatprep.subr.mxu0 0.0
    %6694 = vmatpush1.xpose.msra.mxu0 0.0
    %6695 = vmatprep.subr.mxu0 0.0
    %6696 = vmatpush1.xpose.msra.mxu0 0.0
    %6697 = vmatprep.subr.mxu0 0.0
    %6698 = vmatpush1.xpose.msra.mxu0 0.0
    %6699 = vmatprep.subr.mxu0 0.0
    %6700 = vmatpush1.xpose.msra.mxu0 0.0
    %6701 = vmatprep.subr.mxu0 0.0
    %6702 = vmatpush1.xpose.msra.mxu0 0.0
    %6703 = vmatprep.subr.mxu0 0.0
    %6704 = vmatpush1.xpose.msra.mxu0 0.0
    %6705 = vmatprep.subr.mxu0 0.0
    %6706 = vmatpush1.xpose.msra.mxu0 0.0
    %6707 = vmatprep.subr.mxu0 0.0
    %6708 = vmatpush1.xpose.msra.mxu0 0.0
    %6709 = vmatprep.subr.mxu0 0.0
    %6710 = vmatpush1.xpose.msra.mxu0 0.0
    %6711 = vmatprep.subr.mxu0 0.0
    %6712 = vmatpush1.xpose.msra.mxu0 0.0
    %6713 = vmatprep.subr.mxu0 0.0
    %6714 = vmatpush1.xpose.msra.mxu0 0.0
    %6715 = vmatprep.subr.mxu0 0.0
    %6716 = vmatpush1.xpose.msra.mxu0 0.0
    %6717 = vmatprep.subr.mxu0 0.0
    %6718 = vmatpush1.xpose.msra.mxu0 0.0
    %6719 = vmatprep.subr.mxu0 0.0
    %6720 = vmatpush1.xpose.msra.mxu0 0.0
    %6721 = vmatprep.subr.mxu0 0.0
    %6722 = vmatpush1.xpose.msra.mxu0 0.0
    %6723 = vmatprep.subr.mxu0 0.0
    %6724 = vmatpush1.xpose.msra.mxu0 0.0
    %6725 = vmatprep.subr.mxu0 0.0
    %6726 = vmatpush1.xpose.msra.mxu0 0.0
    %6727 = vmatprep.subr.mxu0 0.0
    %6728 = vmatpush1.xpose.msra.mxu0 0.0
    %6729 = vmatprep.subr.mxu0 0.0
    %6730 = vmatpush1.xpose.msra.mxu0 0.0
    %6731 = vmatprep.subr.mxu0 0.0
    %6732 = vmatpush1.xpose.msra.mxu0 0.0
    %6733 = vmatprep.subr.mxu0 0.0
    %6734 = vmatpush1.xpose.msra.mxu0 0.0
    %6735 = vmatprep.subr.mxu0 0.0
    %6736 = vmatpush1.xpose.msra.mxu0 0.0
    %6737 = vmatprep.subr.mxu0 0.0
    %6738 = vmatpush1.xpose.msra.mxu0 0.0
    %6739 = vmatprep.subr.mxu0 0.0
    %6740 = vmatpush1.xpose.msra.mxu0 0.0
    %6741 = vmatprep.subr.mxu0 0.0
    %6742 = vmatpush1.xpose.msra.mxu0 0.0
    %6743 = vmatprep.subr.mxu0 0.0
    %6744 = vmatpush1.xpose.msra.mxu0 0.0
    %6745 = vmatprep.mubr.f32.mxu0 0.0
    %v6746 = vand.u32 %v6676, 4294901760
    %v6747 = vsub.f32 %v6676, %v6746
    %v6748 = vand.u32 %v6747, 4294901760
    %v6749 = vsub.f32 %v6747, %v6748
    %v6750 = vand.u32 %v6749, 4294901760
    %6751 = vmatmul.mubr.f32.gmra.mrb[0].mxu0 %v6750
    %v6752 = vpop.f32.mrb[0].mxu0
    %v6753 = vadd.f32 0.0, %v6752
    %v6754 = vpop.f32.mrb[0].mxu0
    %6755 = vdwg.mxu0
    %6756 = vmatprep.subr.mxu0 0.0
    %v6757 = vand.u32 %v6678, 4294901760
    %v6758 = vsub.f32 %v6678, %v6757
    %v6759 = vand.u32 %v6758, 4294901760
    %v6760 = vsub.f32 %v6758, %v6759
    %v6761 = vand.u32 %v6760, 4294901760
    %6762 = vmatpush1.xpose.msra.mxu0 %v6761
    %6763 = vmatprep.subr.mxu0 0.0
    %6764 = vmatpush1.xpose.msra.mxu0 0.0
    %6765 = vmatprep.subr.mxu0 0.0
    %6766 = vmatpush1.xpose.msra.mxu0 0.0
    %6767 = vmatprep.subr.mxu0 0.0
    %6768 = vmatpush1.xpose.msra.mxu0 0.0
    %6769 = vmatprep.subr.mxu0 0.0
    %6770 = vmatpush1.xpose.msra.mxu0 0.0
    %6771 = vmatprep.subr.mxu0 0.0
    %6772 = vmatpush1.xpose.msra.mxu0 0.0
    %6773 = vmatprep.subr.mxu0 0.0
    %6774 = vmatpush1.xpose.msra.mxu0 0.0
    %6775 = vmatprep.subr.mxu0 0.0
    %6776 = vmatpush1.xpose.msra.mxu0 0.0
    %6777 = vmatprep.subr.mxu0 0.0
    %6778 = vmatpush1.xpose.msra.mxu0 0.0
    %6779 = vmatprep.subr.mxu0 0.0
    %6780 = vmatpush1.xpose.msra.mxu0 0.0
    %6781 = vmatprep.subr.mxu0 0.0
    %6782 = vmatpush1.xpose.msra.mxu0 0.0
    %6783 = vmatprep.subr.mxu0 0.0
    %6784 = vmatpush1.xpose.msra.mxu0 0.0
    %6785 = vmatprep.subr.mxu0 0.0
    %6786 = vmatpush1.xpose.msra.mxu0 0.0
    %6787 = vmatprep.subr.mxu0 0.0
    %6788 = vmatpush1.xpose.msra.mxu0 0.0
    %6789 = vmatprep.subr.mxu0 0.0
    %6790 = vmatpush1.xpose.msra.mxu0 0.0
    %6791 = vmatprep.subr.mxu0 0.0
    %6792 = vmatpush1.xpose.msra.mxu0 0.0
    %6793 = vmatprep.subr.mxu0 0.0
    %6794 = vmatpush1.xpose.msra.mxu0 0.0
    %6795 = vmatprep.subr.mxu0 0.0
    %6796 = vmatpush1.xpose.msra.mxu0 0.0
    %6797 = vmatprep.subr.mxu0 0.0
    %6798 = vmatpush1.xpose.msra.mxu0 0.0
    %6799 = vmatprep.subr.mxu0 0.0
    %6800 = vmatpush1.xpose.msra.mxu0 0.0
    %6801 = vmatprep.subr.mxu0 0.0
    %6802 = vmatpush1.xpose.msra.mxu0 0.0
    %6803 = vmatprep.subr.mxu0 0.0
    %6804 = vmatpush1.xpose.msra.mxu0 0.0
    %6805 = vmatprep.subr.mxu0 0.0
    %6806 = vmatpush1.xpose.msra.mxu0 0.0
    %6807 = vmatprep.subr.mxu0 0.0
    %6808 = vmatpush1.xpose.msra.mxu0 0.0
    %6809 = vmatprep.subr.mxu0 0.0
    %6810 = vmatpush1.xpose.msra.mxu0 0.0
    %6811 = vmatprep.subr.mxu0 0.0
    %6812 = vmatpush1.xpose.msra.mxu0 0.0
    %6813 = vmatprep.subr.mxu0 0.0
    %6814 = vmatpush1.xpose.msra.mxu0 0.0
    %6815 = vmatprep.subr.mxu0 0.0
    %6816 = vmatpush1.xpose.msra.mxu0 0.0
    %6817 = vmatprep.subr.mxu0 0.0
    %6818 = vmatpush1.xpose.msra.mxu0 0.0
    %6819 = vmatprep.subr.mxu0 0.0
    %6820 = vmatpush1.xpose.msra.mxu0 0.0
    %6821 = vmatprep.subr.mxu0 0.0
    %6822 = vmatpush1.xpose.msra.mxu0 0.0
    %6823 = vmatprep.subr.mxu0 0.0
    %6824 = vmatpush1.xpose.msra.mxu0 0.0
    %6825 = vmatprep.mubr.f32.mxu0 0.0
    %v6826 = vand.u32 %v6676, 4294901760
    %6827 = vmatmul.mubr.f32.gmra.mrb[0].mxu0 %v6826
    %v6828 = vpop.f32.mrb[0].mxu0
    %v6829 = vadd.f32 %v6753, %v6828
    %v6830 = vpop.f32.mrb[0].mxu0
    %6831 = vdwg.mxu0
    %6832 = vmatprep.subr.mxu0 0.0
    %v6833 = vand.u32 %v6678, 4294901760
    %v6834 = vsub.f32 %v6678, %v6833
    %6835 = vmatpush1.xpose.msra.mxu0 %v6834
    %6836 = vmatprep.subr.mxu0 0.0
    %6837 = vmatpush1.xpose.msra.mxu0 0.0
    %6838 = vmatprep.subr.mxu0 0.0
    %6839 = vmatpush1.xpose.msra.mxu0 0.0
    %6840 = vmatprep.subr.mxu0 0.0
    %6841 = vmatpush1.xpose.msra.mxu0 0.0
    %6842 = vmatprep.subr.mxu0 0.0
    %6843 = vmatpush1.xpose.msra.mxu0 0.0
    %6844 = vmatprep.subr.mxu0 0.0
    %6845 = vmatpush1.xpose.msra.mxu0 0.0
    %6846 = vmatprep.subr.mxu0 0.0
    %6847 = vmatpush1.xpose.msra.mxu0 0.0
    %6848 = vmatprep.subr.mxu0 0.0
    %6849 = vmatpush1.xpose.msra.mxu0 0.0
    %6850 = vmatprep.subr.mxu0 0.0
    %6851 = vmatpush1.xpose.msra.mxu0 0.0
    %6852 = vmatprep.subr.mxu0 0.0
    %6853 = vmatpush1.xpose.msra.mxu0 0.0
    %6854 = vmatprep.subr.mxu0 0.0
    %6855 = vmatpush1.xpose.msra.mxu0 0.0
    %6856 = vmatprep.subr.mxu0 0.0
    %6857 = vmatpush1.xpose.msra.mxu0 0.0
    %6858 = vmatprep.subr.mxu0 0.0
    %6859 = vmatpush1.xpose.msra.mxu0 0.0
    %6860 = vmatprep.subr.mxu0 0.0
    %6861 = vmatpush1.xpose.msra.mxu0 0.0
    %6862 = vmatprep.subr.mxu0 0.0
    %6863 = vmatpush1.xpose.msra.mxu0 0.0
    %6864 = vmatprep.subr.mxu0 0.0
    %6865 = vmatpush1.xpose.msra.mxu0 0.0
    %6866 = vmatprep.subr.mxu0 0.0
    %6867 = vmatpush1.xpose.msra.mxu0 0.0
    %6868 = vmatprep.subr.mxu0 0.0
    %6869 = vmatpush1.xpose.msra.mxu0 0.0
    %6870 = vmatprep.subr.mxu0 0.0
    %6871 = vmatpush1.xpose.msra.mxu0 0.0
    %6872 = vmatprep.subr.mxu0 0.0
    %6873 = vmatpush1.xpose.msra.mxu0 0.0
    %6874 = vmatprep.subr.mxu0 0.0
    %6875 = vmatpush1.xpose.msra.mxu0 0.0
    %6876 = vmatprep.subr.mxu0 0.0
    %6877 = vmatpush1.xpose.msra.mxu0 0.0
    %6878 = vmatprep.subr.mxu0 0.0
    %6879 = vmatpush1.xpose.msra.mxu0 0.0
    %6880 = vmatprep.subr.mxu0 0.0
    %6881 = vmatpush1.xpose.msra.mxu0 0.0
    %6882 = vmatprep.subr.mxu0 0.0
    %6883 = vmatpush1.xpose.msra.mxu0 0.0
    %6884 = vmatprep.subr.mxu0 0.0
    %6885 = vmatpush1.xpose.msra.mxu0 0.0
    %6886 = vmatprep.subr.mxu0 0.0
    %6887 = vmatpush1.xpose.msra.mxu0 0.0
    %6888 = vmatprep.subr.mxu0 0.0
    %6889 = vmatpush1.xpose.msra.mxu0 0.0
    %6890 = vmatprep.subr.mxu0 0.0
    %6891 = vmatpush1.xpose.msra.mxu0 0.0
    %6892 = vmatprep.subr.mxu0 0.0
    %6893 = vmatpush1.xpose.msra.mxu0 0.0
    %6894 = vmatprep.subr.mxu0 0.0
    %6895 = vmatpush1.xpose.msra.mxu0 0.0
    %6896 = vmatprep.subr.mxu0 0.0
    %6897 = vmatpush1.xpose.msra.mxu0 0.0
    %6898 = vmatprep.mubr.f32.mxu0 0.0
    %v6899 = vand.u32 %v6676, 4294901760
    %v6900 = vsub.f32 %v6676, %v6899
    %6901 = vmatmul.mubr.f32.gmra.mrb[0].mxu0 %v6900
    %v6902 = vpop.f32.mrb[0].mxu0
    %v6903 = vadd.f32 %v6829, %v6902
    %v6904 = vpop.f32.mrb[0].mxu0
    %6905 = vdwg.mxu0
    %6906 = vmatprep.subr.mxu0 0.0
    %v6907 = vand.u32 %v6678, 4294901760
    %6908 = vmatpush1.xpose.msra.mxu0 %v6907
    %6909 = vmatprep.subr.mxu0 0.0
    %6910 = vmatpush1.xpose.msra.mxu0 0.0
    %6911 = vmatprep.subr.mxu0 0.0
    %6912 = vmatpush1.xpose.msra.mxu0 0.0
    %6913 = vmatprep.subr.mxu0 0.0
    %6914 = vmatpush1.xpose.msra.mxu0 0.0
    %6915 = vmatprep.subr.mxu0 0.0
    %6916 = vmatpush1.xpose.msra.mxu0 0.0
    %6917 = vmatprep.subr.mxu0 0.0
    %6918 = vmatpush1.xpose.msra.mxu0 0.0
    %6919 = vmatprep.subr.mxu0 0.0
    %6920 = vmatpush1.xpose.msra.mxu0 0.0
    %6921 = vmatprep.subr.mxu0 0.0
    %6922 = vmatpush1.xpose.msra.mxu0 0.0
    %6923 = vmatprep.subr.mxu0 0.0
    %6924 = vmatpush1.xpose.msra.mxu0 0.0
    %6925 = vmatprep.subr.mxu0 0.0
    %6926 = vmatpush1.xpose.msra.mxu0 0.0
    %6927 = vmatprep.subr.mxu0 0.0
    %6928 = vmatpush1.xpose.msra.mxu0 0.0
    %6929 = vmatprep.subr.mxu0 0.0
    %6930 = vmatpush1.xpose.msra.mxu0 0.0
    %6931 = vmatprep.subr.mxu0 0.0
    %6932 = vmatpush1.xpose.msra.mxu0 0.0
    %6933 = vmatprep.subr.mxu0 0.0
    %6934 = vmatpush1.xpose.msra.mxu0 0.0
    %6935 = vmatprep.subr.mxu0 0.0
    %6936 = vmatpush1.xpose.msra.mxu0 0.0
    %6937 = vmatprep.subr.mxu0 0.0
    %6938 = vmatpush1.xpose.msra.mxu0 0.0
    %6939 = vmatprep.subr.mxu0 0.0
    %6940 = vmatpush1.xpose.msra.mxu0 0.0
    %6941 = vmatprep.subr.mxu0 0.0
    %6942 = vmatpush1.xpose.msra.mxu0 0.0
    %6943 = vmatprep.subr.mxu0 0.0
    %6944 = vmatpush1.xpose.msra.mxu0 0.0
    %6945 = vmatprep.subr.mxu0 0.0
    %6946 = vmatpush1.xpose.msra.mxu0 0.0
    %6947 = vmatprep.subr.mxu0 0.0
    %6948 = vmatpush1.xpose.msra.mxu0 0.0
    %6949 = vmatprep.subr.mxu0 0.0
    %6950 = vmatpush1.xpose.msra.mxu0 0.0
    %6951 = vmatprep.subr.mxu0 0.0
    %6952 = vmatpush1.xpose.msra.mxu0 0.0
    %6953 = vmatprep.subr.mxu0 0.0
    %6954 = vmatpush1.xpose.msra.mxu0 0.0
    %6955 = vmatprep.subr.mxu0 0.0
    %6956 = vmatpush1.xpose.msra.mxu0 0.0
    %6957 = vmatprep.subr.mxu0 0.0
    %6958 = vmatpush1.xpose.msra.mxu0 0.0
    %6959 = vmatprep.subr.mxu0 0.0
    %6960 = vmatpush1.xpose.msra.mxu0 0.0
    %6961 = vmatprep.subr.mxu0 0.0
    %6962 = vmatpush1.xpose.msra.mxu0 0.0
    %6963 = vmatprep.subr.mxu0 0.0
    %6964 = vmatpush1.xpose.msra.mxu0 0.0
    %6965 = vmatprep.subr.mxu0 0.0
    %6966 = vmatpush1.xpose.msra.mxu0 0.0
    %6967 = vmatprep.subr.mxu0 0.0
    %6968 = vmatpush1.xpose.msra.mxu0 0.0
    %6969 = vmatprep.subr.mxu0 0.0
    %6970 = vmatpush1.xpose.msra.mxu0 0.0
    %6971 = vmatprep.mubr.f32.mxu0 0.0
    %v6972 = vand.u32 %v6676, 4294901760
    %v6973 = vsub.f32 %v6676, %v6972
    %v6974 = vand.u32 %v6973, 4294901760
    %6975 = vmatmul.mubr.f32.gmra.mrb[0].mxu0 %v6974
    %v6976 = vpop.f32.mrb[0].mxu0
    %v6977 = vadd.f32 %v6903, %v6976
    %v6978 = vpop.f32.mrb[0].mxu0
    %6979 = vdwg.mxu0
    %6980 = vmatprep.subr.mxu0 0.0
    %v6981 = vand.u32 %v6678, 4294901760
    %v6982 = vsub.f32 %v6678, %v6981
    %v6983 = vand.u32 %v6982, 4294901760
    %6984 = vmatpush1.xpose.msra.mxu0 %v6983
    %6985 = vmatprep.subr.mxu0 0.0
    %6986 = vmatpush1.xpose.msra.mxu0 0.0
    %6987 = vmatprep.subr.mxu0 0.0
    %6988 = vmatpush1.xpose.msra.mxu0 0.0
    %6989 = vmatprep.subr.mxu0 0.0
    %6990 = vmatpush1.xpose.msra.mxu0 0.0
    %6991 = vmatprep.subr.mxu0 0.0
    %6992 = vmatpush1.xpose.msra.mxu0 0.0
    %6993 = vmatprep.subr.mxu0 0.0
    %6994 = vmatpush1.xpose.msra.mxu0 0.0
    %6995 = vmatprep.subr.mxu0 0.0
    %6996 = vmatpush1.xpose.msra.mxu0 0.0
    %6997 = vmatprep.subr.mxu0 0.0
    %6998 = vmatpush1.xpose.msra.mxu0 0.0
    %6999 = vmatprep.subr.mxu0 0.0
    %7000 = vmatpush1.xpose.msra.mxu0 0.0
    %7001 = vmatprep.subr.mxu0 0.0
    %7002 = vmatpush1.xpose.msra.mxu0 0.0
    %7003 = vmatprep.subr.mxu0 0.0
    %7004 = vmatpush1.xpose.msra.mxu0 0.0
    %7005 = vmatprep.subr.mxu0 0.0
    %7006 = vmatpush1.xpose.msra.mxu0 0.0
    %7007 = vmatprep.subr.mxu0 0.0
    %7008 = vmatpush1.xpose.msra.mxu0 0.0
    %7009 = vmatprep.subr.mxu0 0.0
    %7010 = vmatpush1.xpose.msra.mxu0 0.0
    %7011 = vmatprep.subr.mxu0 0.0
    %7012 = vmatpush1.xpose.msra.mxu0 0.0
    %7013 = vmatprep.subr.mxu0 0.0
    %7014 = vmatpush1.xpose.msra.mxu0 0.0
    %7015 = vmatprep.subr.mxu0 0.0
    %7016 = vmatpush1.xpose.msra.mxu0 0.0
    %7017 = vmatprep.subr.mxu0 0.0
    %7018 = vmatpush1.xpose.msra.mxu0 0.0
    %7019 = vmatprep.subr.mxu0 0.0
    %7020 = vmatpush1.xpose.msra.mxu0 0.0
    %7021 = vmatprep.subr.mxu0 0.0
    %7022 = vmatpush1.xpose.msra.mxu0 0.0
    %7023 = vmatprep.subr.mxu0 0.0
    %7024 = vmatpush1.xpose.msra.mxu0 0.0
    %7025 = vmatprep.subr.mxu0 0.0
    %7026 = vmatpush1.xpose.msra.mxu0 0.0
    %7027 = vmatprep.subr.mxu0 0.0
    %7028 = vmatpush1.xpose.msra.mxu0 0.0
    %7029 = vmatprep.subr.mxu0 0.0
    %7030 = vmatpush1.xpose.msra.mxu0 0.0
    %7031 = vmatprep.subr.mxu0 0.0
    %7032 = vmatpush1.xpose.msra.mxu0 0.0
    %7033 = vmatprep.subr.mxu0 0.0
    %7034 = vmatpush1.xpose.msra.mxu0 0.0
    %7035 = vmatprep.subr.mxu0 0.0
    %7036 = vmatpush1.xpose.msra.mxu0 0.0
    %7037 = vmatprep.subr.mxu0 0.0
    %7038 = vmatpush1.xpose.msra.mxu0 0.0
    %7039 = vmatprep.subr.mxu0 0.0
    %7040 = vmatpush1.xpose.msra.mxu0 0.0
    %7041 = vmatprep.subr.mxu0 0.0
    %7042 = vmatpush1.xpose.msra.mxu0 0.0
    %7043 = vmatprep.subr.mxu0 0.0
    %7044 = vmatpush1.xpose.msra.mxu0 0.0
    %7045 = vmatprep.subr.mxu0 0.0
    %7046 = vmatpush1.xpose.msra.mxu0 0.0
    %7047 = vmatprep.mubr.f32.mxu0 0.0
    %v7048 = vand.u32 %v6676, 4294901760
    %7049 = vmatmul.mubr.f32.gmra.mrb[0].mxu0 %v7048
    %v7050 = vpop.f32.mrb[0].mxu0
    %v7051 = vadd.f32 %v6977, %v7050
    %v7052 = vpop.f32.mrb[0].mxu0
    %7053 = vdwg.mxu0
    %7054 = vmatprep.subr.mxu0 0.0
    %v7055 = vand.u32 %v6678, 4294901760
    %7056 = vmatpush1.xpose.msra.mxu0 %v7055
    %7057 = vmatprep.subr.mxu0 0.0
    %7058 = vmatpush1.xpose.msra.mxu0 0.0
    %7059 = vmatprep.subr.mxu0 0.0
    %7060 = vmatpush1.xpose.msra.mxu0 0.0
    %7061 = vmatprep.subr.mxu0 0.0
    %7062 = vmatpush1.xpose.msra.mxu0 0.0
    %7063 = vmatprep.subr.mxu0 0.0
    %7064 = vmatpush1.xpose.msra.mxu0 0.0
    %7065 = vmatprep.subr.mxu0 0.0
    %7066 = vmatpush1.xpose.msra.mxu0 0.0
    %7067 = vmatprep.subr.mxu0 0.0
    %7068 = vmatpush1.xpose.msra.mxu0 0.0
    %7069 = vmatprep.subr.mxu0 0.0
    %7070 = vmatpush1.xpose.msra.mxu0 0.0
    %7071 = vmatprep.subr.mxu0 0.0
    %7072 = vmatpush1.xpose.msra.mxu0 0.0
    %7073 = vmatprep.subr.mxu0 0.0
    %7074 = vmatpush1.xpose.msra.mxu0 0.0
    %7075 = vmatprep.subr.mxu0 0.0
    %7076 = vmatpush1.xpose.msra.mxu0 0.0
    %7077 = vmatprep.subr.mxu0 0.0
    %7078 = vmatpush1.xpose.msra.mxu0 0.0
    %7079 = vmatprep.subr.mxu0 0.0
    %7080 = vmatpush1.xpose.msra.mxu0 0.0
    %7081 = vmatprep.subr.mxu0 0.0
    %7082 = vmatpush1.xpose.msra.mxu0 0.0
    %7083 = vmatprep.subr.mxu0 0.0
    %7084 = vmatpush1.xpose.msra.mxu0 0.0
    %7085 = vmatprep.subr.mxu0 0.0
    %7086 = vmatpush1.xpose.msra.mxu0 0.0
    %7087 = vmatprep.subr.mxu0 0.0
    %7088 = vmatpush1.xpose.msra.mxu0 0.0
    %7089 = vmatprep.subr.mxu0 0.0
    %7090 = vmatpush1.xpose.msra.mxu0 0.0
    %7091 = vmatprep.subr.mxu0 0.0
    %7092 = vmatpush1.xpose.msra.mxu0 0.0
    %7093 = vmatprep.subr.mxu0 0.0
    %7094 = vmatpush1.xpose.msra.mxu0 0.0
    %7095 = vmatprep.subr.mxu0 0.0
    %7096 = vmatpush1.xpose.msra.mxu0 0.0
    %7097 = vmatprep.subr.mxu0 0.0
    %7098 = vmatpush1.xpose.msra.mxu0 0.0
    %7099 = vmatprep.subr.mxu0 0.0
    %7100 = vmatpush1.xpose.msra.mxu0 0.0
    %7101 = vmatprep.subr.mxu0 0.0
    %7102 = vmatpush1.xpose.msra.mxu0 0.0
    %7103 = vmatprep.subr.mxu0 0.0
    %7104 = vmatpush1.xpose.msra.mxu0 0.0
    %7105 = vmatprep.subr.mxu0 0.0
    %7106 = vmatpush1.xpose.msra.mxu0 0.0
    %7107 = vmatprep.subr.mxu0 0.0
    %7108 = vmatpush1.xpose.msra.mxu0 0.0
    %7109 = vmatprep.subr.mxu0 0.0
    %7110 = vmatpush1.xpose.msra.mxu0 0.0
    %7111 = vmatprep.subr.mxu0 0.0
    %7112 = vmatpush1.xpose.msra.mxu0 0.0
    %7113 = vmatprep.subr.mxu0 0.0
    %7114 = vmatpush1.xpose.msra.mxu0 0.0
    %7115 = vmatprep.subr.mxu0 0.0
    %7116 = vmatpush1.xpose.msra.mxu0 0.0
    %7117 = vmatprep.subr.mxu0 0.0
    %7118 = vmatpush1.xpose.msra.mxu0 0.0
    %7119 = vmatprep.mubr.f32.mxu0 0.0
    %v7120 = vand.u32 %v6676, 4294901760
    %7121 = vmatmul.mubr.f32.gmra.mrb[0].mxu0 %v7120
    %v7122 = vpop.f32.mrb[0].mxu0
    %v7123 = vadd.f32 %v7051, %v7122
    %v7124 = vpop.f32.mrb[0].mxu0
    %7125 = vdwg.mxu0
    %v7126 = vsel %vm720, %v6669, -inf
    %7127 = vmax.xlane.f32.xlu0 %v7126
    %v7128 = vpop.xlane.xlu0 %7127
    %v7129 = vsel %vm720, %v7123, -inf
    %7130 = vmax.xlane.f32.xlu0 %v7129
    %v7131 = vpop.xlane.xlu0 %7130
    %v7132 = vsub.f32 %v6669, %v7128
    %v7133 = vsub.f32 %v7123, %v7131
    %v7134 = vmul.f32 %v7132, 1.442695
    %v7135 = vpow.pop %v7134
    %v7136 = vmul.f32 %v7133, 1.442695
    %v7137 = vpow.pop %v7136
    %v7138 = vsel %vm720, %v7135, 0.0
    %7139 = vadd.xlane.f32.xlu0 %v7138
    %v7140 = vpop.xlane.xlu0 %7139
    %v7141 = vsel %vm720, %v7137, 0.0
    %7142 = vadd.xlane.f32.xlu0 %v7141
    %v7143 = vpop.xlane.xlu0 %7142
    %v7144 = vrcp.pop %v7140
    %v7145 = vrcp.pop %v7143
    %v7146 = vmul.f32 %v7135, %v7144
    %v7147 = vmul.f32 %v7137, %v7145
    %7148 = vrot.lane.b32.xlu0 %v708, 40
    %v7149 = vpop.permute.xlu0 %7148
    %v7152 = vsel %vm720, %v7146, 0
    %7154 = vmatprep.subr.mxu0 0.0
    %v7155 = vand.u32 %v7149, 4294901760
    %7156 = vmatpush1.msra.mxu0 %v7155
    %7157 = vmatprep.subr.mxu0 0.0
    %7158 = vmatpush1.msra.mxu0 0.0
    %7159 = vmatprep.subr.mxu0 0.0
    %7160 = vmatpush1.msra.mxu0 0.0
    %7161 = vmatprep.subr.mxu0 0.0
    %7162 = vmatpush1.msra.mxu0 0.0
    %7163 = vmatprep.subr.mxu0 0.0
    %7164 = vmatpush1.msra.mxu0 0.0
    %7165 = vmatprep.subr.mxu0 0.0
    %7166 = vmatpush1.msra.mxu0 0.0
    %7167 = vmatprep.subr.mxu0 0.0
    %7168 = vmatpush1.msra.mxu0 0.0
    %7169 = vmatprep.subr.mxu0 0.0
    %7170 = vmatpush1.msra.mxu0 0.0
    %7171 = vmatprep.subr.mxu0 0.0
    %7172 = vmatpush1.msra.mxu0 0.0
    %7173 = vmatprep.subr.mxu0 0.0
    %7174 = vmatpush1.msra.mxu0 0.0
    %7175 = vmatprep.subr.mxu0 0.0
    %7176 = vmatpush1.msra.mxu0 0.0
    %7177 = vmatprep.subr.mxu0 0.0
    %7178 = vmatpush1.msra.mxu0 0.0
    %7179 = vmatprep.subr.mxu0 0.0
    %7180 = vmatpush1.msra.mxu0 0.0
    %7181 = vmatprep.subr.mxu0 0.0
    %7182 = vmatpush1.msra.mxu0 0.0
    %7183 = vmatprep.subr.mxu0 0.0
    %7184 = vmatpush1.msra.mxu0 0.0
    %7185 = vmatprep.subr.mxu0 0.0
    %7186 = vmatpush1.msra.mxu0 0.0
    %7187 = vmatprep.subr.mxu0 0.0
    %7188 = vmatpush1.msra.mxu0 0.0
    %7189 = vmatprep.subr.mxu0 0.0
    %7190 = vmatpush1.msra.mxu0 0.0
    %7191 = vmatprep.subr.mxu0 0.0
    %7192 = vmatpush1.msra.mxu0 0.0
    %7193 = vmatprep.subr.mxu0 0.0
    %7194 = vmatpush1.msra.mxu0 0.0
    %7195 = vmatprep.subr.mxu0 0.0
    %7196 = vmatpush1.msra.mxu0 0.0
    %7197 = vmatprep.subr.mxu0 0.0
    %7198 = vmatpush1.msra.mxu0 0.0
    %7199 = vmatprep.subr.mxu0 0.0
    %7200 = vmatpush1.msra.mxu0 0.0
    %7201 = vmatprep.subr.mxu0 0.0
    %7202 = vmatpush1.msra.mxu0 0.0
    %7203 = vmatprep.subr.mxu0 0.0
    %7204 = vmatpush1.msra.mxu0 0.0
    %7205 = vmatprep.subr.mxu0 0.0
    %7206 = vmatpush1.msra.mxu0 0.0
    %7207 = vmatprep.subr.mxu0 0.0
    %7208 = vmatpush1.msra.mxu0 0.0
    %7209 = vmatprep.subr.mxu0 0.0
    %7210 = vmatpush1.msra.mxu0 0.0
    %7211 = vmatprep.subr.mxu0 0.0
    %7212 = vmatpush1.msra.mxu0 0.0
    %7213 = vmatprep.subr.mxu0 0.0
    %7214 = vmatpush1.msra.mxu0 0.0
    %7215 = vmatprep.subr.mxu0 0.0
    %7216 = vmatpush1.msra.mxu0 0.0
    %7217 = vmatprep.subr.mxu0 0.0
    %7218 = vmatpush1.msra.mxu0 0.0
    %7219 = vmatprep.mubr.f32.mxu0 0.0
    %v7220 = vand.u32 %v7152, 4294901760
    %v7221 = vsub.f32 %v7152, %v7220
    %v7222 = vand.u32 %v7221, 4294901760
    %v7223 = vsub.f32 %v7221, %v7222
    %v7224 = vand.u32 %v7223, 4294901760
    %7225 = vmatmul.mubr.f32.gmra.mrb[0].mxu0 %v7224
    %v7226 = vpop.f32.mrb[0].mxu0
    %v7227 = vadd.f32 0.0, %v7226
    %v7228 = vpop.f32.mrb[0].mxu0
    %7229 = vdwg.mxu0
    %7230 = vmatprep.subr.mxu0 0.0
    %v7231 = vand.u32 %v7149, 4294901760
    %v7232 = vsub.f32 %v7149, %v7231
    %v7233 = vand.u32 %v7232, 4294901760
    %v7234 = vsub.f32 %v7232, %v7233
    %v7235 = vand.u32 %v7234, 4294901760
    %7236 = vmatpush1.msra.mxu0 %v7235
    %7237 = vmatprep.subr.mxu0 0.0
    %7238 = vmatpush1.msra.mxu0 0.0
    %7239 = vmatprep.subr.mxu0 0.0
    %7240 = vmatpush1.msra.mxu0 0.0
    %7241 = vmatprep.subr.mxu0 0.0
    %7242 = vmatpush1.msra.mxu0 0.0
    %7243 = vmatprep.subr.mxu0 0.0
    %7244 = vmatpush1.msra.mxu0 0.0
    %7245 = vmatprep.subr.mxu0 0.0
    %7246 = vmatpush1.msra.mxu0 0.0
    %7247 = vmatprep.subr.mxu0 0.0
    %7248 = vmatpush1.msra.mxu0 0.0
    %7249 = vmatprep.subr.mxu0 0.0
    %7250 = vmatpush1.msra.mxu0 0.0
    %7251 = vmatprep.subr.mxu0 0.0
    %7252 = vmatpush1.msra.mxu0 0.0
    %7253 = vmatprep.subr.mxu0 0.0
    %7254 = vmatpush1.msra.mxu0 0.0
    %7255 = vmatprep.subr.mxu0 0.0
    %7256 = vmatpush1.msra.mxu0 0.0
    %7257 = vmatprep.subr.mxu0 0.0
    %7258 = vmatpush1.msra.mxu0 0.0
    %7259 = vmatprep.subr.mxu0 0.0
    %7260 = vmatpush1.msra.mxu0 0.0
    %7261 = vmatprep.subr.mxu0 0.0
    %7262 = vmatpush1.msra.mxu0 0.0
    %7263 = vmatprep.subr.mxu0 0.0
    %7264 = vmatpush1.msra.mxu0 0.0
    %7265 = vmatprep.subr.mxu0 0.0
    %7266 = vmatpush1.msra.mxu0 0.0
    %7267 = vmatprep.subr.mxu0 0.0
    %7268 = vmatpush1.msra.mxu0 0.0
    %7269 = vmatprep.subr.mxu0 0.0
    %7270 = vmatpush1.msra.mxu0 0.0
    %7271 = vmatprep.subr.mxu0 0.0
    %7272 = vmatpush1.msra.mxu0 0.0
    %7273 = vmatprep.subr.mxu0 0.0
    %7274 = vmatpush1.msra.mxu0 0.0
    %7275 = vmatprep.subr.mxu0 0.0
    %7276 = vmatpush1.msra.mxu0 0.0
    %7277 = vmatprep.subr.mxu0 0.0
    %7278 = vmatpush1.msra.mxu0 0.0
    %7279 = vmatprep.subr.mxu0 0.0
    %7280 = vmatpush1.msra.mxu0 0.0
    %7281 = vmatprep.subr.mxu0 0.0
    %7282 = vmatpush1.msra.mxu0 0.0
    %7283 = vmatprep.subr.mxu0 0.0
    %7284 = vmatpush1.msra.mxu0 0.0
    %7285 = vmatprep.subr.mxu0 0.0
    %7286 = vmatpush1.msra.mxu0 0.0
    %7287 = vmatprep.subr.mxu0 0.0
    %7288 = vmatpush1.msra.mxu0 0.0
    %7289 = vmatprep.subr.mxu0 0.0
    %7290 = vmatpush1.msra.mxu0 0.0
    %7291 = vmatprep.subr.mxu0 0.0
    %7292 = vmatpush1.msra.mxu0 0.0
    %7293 = vmatprep.subr.mxu0 0.0
    %7294 = vmatpush1.msra.mxu0 0.0
    %7295 = vmatprep.subr.mxu0 0.0
    %7296 = vmatpush1.msra.mxu0 0.0
    %7297 = vmatprep.subr.mxu0 0.0
    %7298 = vmatpush1.msra.mxu0 0.0
    %7299 = vmatprep.mubr.f32.mxu0 0.0
    %v7300 = vand.u32 %v7152, 4294901760
    %7301 = vmatmul.mubr.f32.gmra.mrb[0].mxu0 %v7300
    %v7302 = vpop.f32.mrb[0].mxu0
    %v7303 = vadd.f32 %v7227, %v7302
    %v7304 = vpop.f32.mrb[0].mxu0
    %7305 = vdwg.mxu0
    %7306 = vmatprep.subr.mxu0 0.0
    %v7307 = vand.u32 %v7149, 4294901760
    %v7308 = vsub.f32 %v7149, %v7307
    %7309 = vmatpush1.msra.mxu0 %v7308
    %7310 = vmatprep.subr.mxu0 0.0
    %7311 = vmatpush1.msra.mxu0 0.0
    %7312 = vmatprep.subr.mxu0 0.0
    %7313 = vmatpush1.msra.mxu0 0.0
    %7314 = vmatprep.subr.mxu0 0.0
    %7315 = vmatpush1.msra.mxu0 0.0
    %7316 = vmatprep.subr.mxu0 0.0
    %7317 = vmatpush1.msra.mxu0 0.0
    %7318 = vmatprep.subr.mxu0 0.0
    %7319 = vmatpush1.msra.mxu0 0.0
    %7320 = vmatprep.subr.mxu0 0.0
    %7321 = vmatpush1.msra.mxu0 0.0
    %7322 = vmatprep.subr.mxu0 0.0
    %7323 = vmatpush1.msra.mxu0 0.0
    %7324 = vmatprep.subr.mxu0 0.0
    %7325 = vmatpush1.msra.mxu0 0.0
    %7326 = vmatprep.subr.mxu0 0.0
    %7327 = vmatpush1.msra.mxu0 0.0
    %7328 = vmatprep.subr.mxu0 0.0
    %7329 = vmatpush1.msra.mxu0 0.0
    %7330 = vmatprep.subr.mxu0 0.0
    %7331 = vmatpush1.msra.mxu0 0.0
    %7332 = vmatprep.subr.mxu0 0.0
    %7333 = vmatpush1.msra.mxu0 0.0
    %7334 = vmatprep.subr.mxu0 0.0
    %7335 = vmatpush1.msra.mxu0 0.0
    %7336 = vmatprep.subr.mxu0 0.0
    %7337 = vmatpush1.msra.mxu0 0.0
    %7338 = vmatprep.subr.mxu0 0.0
    %7339 = vmatpush1.msra.mxu0 0.0
    %7340 = vmatprep.subr.mxu0 0.0
    %7341 = vmatpush1.msra.mxu0 0.0
    %7342 = vmatprep.subr.mxu0 0.0
    %7343 = vmatpush1.msra.mxu0 0.0
    %7344 = vmatprep.subr.mxu0 0.0
    %7345 = vmatpush1.msra.mxu0 0.0
    %7346 = vmatprep.subr.mxu0 0.0
    %7347 = vmatpush1.msra.mxu0 0.0
    %7348 = vmatprep.subr.mxu0 0.0
    %7349 = vmatpush1.msra.mxu0 0.0
    %7350 = vmatprep.subr.mxu0 0.0
    %7351 = vmatpush1.msra.mxu0 0.0
    %7352 = vmatprep.subr.mxu0 0.0
    %7353 = vmatpush1.msra.mxu0 0.0
    %7354 = vmatprep.subr.mxu0 0.0
    %7355 = vmatpush1.msra.mxu0 0.0
    %7356 = vmatprep.subr.mxu0 0.0
    %7357 = vmatpush1.msra.mxu0 0.0
    %7358 = vmatprep.subr.mxu0 0.0
    %7359 = vmatpush1.msra.mxu0 0.0
    %7360 = vmatprep.subr.mxu0 0.0
    %7361 = vmatpush1.msra.mxu0 0.0
    %7362 = vmatprep.subr.mxu0 0.0
    %7363 = vmatpush1.msra.mxu0 0.0
    %7364 = vmatprep.subr.mxu0 0.0
    %7365 = vmatpush1.msra.mxu0 0.0
    %7366 = vmatprep.subr.mxu0 0.0
    %7367 = vmatpush1.msra.mxu0 0.0
    %7368 = vmatprep.subr.mxu0 0.0
    %7369 = vmatpush1.msra.mxu0 0.0
    %7370 = vmatprep.subr.mxu0 0.0
    %7371 = vmatpush1.msra.mxu0 0.0
    %7372 = vmatprep.mubr.f32.mxu0 0.0
    %v7373 = vand.u32 %v7152, 4294901760
    %v7374 = vsub.f32 %v7152, %v7373
    %7375 = vmatmul.mubr.f32.gmra.mrb[0].mxu0 %v7374
    %v7376 = vpop.f32.mrb[0].mxu0
    %v7377 = vadd.f32 %v7303, %v7376
    %v7378 = vpop.f32.mrb[0].mxu0
    %7379 = vdwg.mxu0
    %7380 = vmatprep.subr.mxu0 0.0
    %v7381 = vand.u32 %v7149, 4294901760
    %7382 = vmatpush1.msra.mxu0 %v7381
    %7383 = vmatprep.subr.mxu0 0.0
    %7384 = vmatpush1.msra.mxu0 0.0
    %7385 = vmatprep.subr.mxu0 0.0
    %7386 = vmatpush1.msra.mxu0 0.0
    %7387 = vmatprep.subr.mxu0 0.0
    %7388 = vmatpush1.msra.mxu0 0.0
    %7389 = vmatprep.subr.mxu0 0.0
    %7390 = vmatpush1.msra.mxu0 0.0
    %7391 = vmatprep.subr.mxu0 0.0
    %7392 = vmatpush1.msra.mxu0 0.0
    %7393 = vmatprep.subr.mxu0 0.0
    %7394 = vmatpush1.msra.mxu0 0.0
    %7395 = vmatprep.subr.mxu0 0.0
    %7396 = vmatpush1.msra.mxu0 0.0
    %7397 = vmatprep.subr.mxu0 0.0
    %7398 = vmatpush1.msra.mxu0 0.0
    %7399 = vmatprep.subr.mxu0 0.0
    %7400 = vmatpush1.msra.mxu0 0.0
    %7401 = vmatprep.subr.mxu0 0.0
    %7402 = vmatpush1.msra.mxu0 0.0
    %7403 = vmatprep.subr.mxu0 0.0
    %7404 = vmatpush1.msra.mxu0 0.0
    %7405 = vmatprep.subr.mxu0 0.0
    %7406 = vmatpush1.msra.mxu0 0.0
    %7407 = vmatprep.subr.mxu0 0.0
    %7408 = vmatpush1.msra.mxu0 0.0
    %7409 = vmatprep.subr.mxu0 0.0
    %7410 = vmatpush1.msra.mxu0 0.0
    %7411 = vmatprep.subr.mxu0 0.0
    %7412 = vmatpush1.msra.mxu0 0.0
    %7413 = vmatprep.subr.mxu0 0.0
    %7414 = vmatpush1.msra.mxu0 0.0
    %7415 = vmatprep.subr.mxu0 0.0
    %7416 = vmatpush1.msra.mxu0 0.0
    %7417 = vmatprep.subr.mxu0 0.0
    %7418 = vmatpush1.msra.mxu0 0.0
    %7419 = vmatprep.subr.mxu0 0.0
    %7420 = vmatpush1.msra.mxu0 0.0
    %7421 = vmatprep.subr.mxu0 0.0
    %7422 = vmatpush1.msra.mxu0 0.0
    %7423 = vmatprep.subr.mxu0 0.0
    %7424 = vmatpush1.msra.mxu0 0.0
    %7425 = vmatprep.subr.mxu0 0.0
    %7426 = vmatpush1.msra.mxu0 0.0
    %7427 = vmatprep.subr.mxu0 0.0
    %7428 = vmatpush1.msra.mxu0 0.0
    %7429 = vmatprep.subr.mxu0 0.0
    %7430 = vmatpush1.msra.mxu0 0.0
    %7431 = vmatprep.subr.mxu0 0.0
    %7432 = vmatpush1.msra.mxu0 0.0
    %7433 = vmatprep.subr.mxu0 0.0
    %7434 = vmatpush1.msra.mxu0 0.0
    %7435 = vmatprep.subr.mxu0 0.0
    %7436 = vmatpush1.msra.mxu0 0.0
    %7437 = vmatprep.subr.mxu0 0.0
    %7438 = vmatpush1.msra.mxu0 0.0
    %7439 = vmatprep.subr.mxu0 0.0
    %7440 = vmatpush1.msra.mxu0 0.0
    %7441 = vmatprep.subr.mxu0 0.0
    %7442 = vmatpush1.msra.mxu0 0.0
    %7443 = vmatprep.subr.mxu0 0.0
    %7444 = vmatpush1.msra.mxu0 0.0
    %7445 = vmatprep.mubr.f32.mxu0 0.0
    %v7446 = vand.u32 %v7152, 4294901760
    %v7447 = vsub.f32 %v7152, %v7446
    %v7448 = vand.u32 %v7447, 4294901760
    %7449 = vmatmul.mubr.f32.gmra.mrb[0].mxu0 %v7448
    %v7450 = vpop.f32.mrb[0].mxu0
    %v7451 = vadd.f32 %v7377, %v7450
    %v7452 = vpop.f32.mrb[0].mxu0
    %7453 = vdwg.mxu0
    %7454 = vmatprep.subr.mxu0 0.0
    %v7455 = vand.u32 %v7149, 4294901760
    %v7456 = vsub.f32 %v7149, %v7455
    %v7457 = vand.u32 %v7456, 4294901760
    %7458 = vmatpush1.msra.mxu0 %v7457
    %7459 = vmatprep.subr.mxu0 0.0
    %7460 = vmatpush1.msra.mxu0 0.0
    %7461 = vmatprep.subr.mxu0 0.0
    %7462 = vmatpush1.msra.mxu0 0.0
    %7463 = vmatprep.subr.mxu0 0.0
    %7464 = vmatpush1.msra.mxu0 0.0
    %7465 = vmatprep.subr.mxu0 0.0
    %7466 = vmatpush1.msra.mxu0 0.0
    %7467 = vmatprep.subr.mxu0 0.0
    %7468 = vmatpush1.msra.mxu0 0.0
    %7469 = vmatprep.subr.mxu0 0.0
    %7470 = vmatpush1.msra.mxu0 0.0
    %7471 = vmatprep.subr.mxu0 0.0
    %7472 = vmatpush1.msra.mxu0 0.0
    %7473 = vmatprep.subr.mxu0 0.0
    %7474 = vmatpush1.msra.mxu0 0.0
    %7475 = vmatprep.subr.mxu0 0.0
    %7476 = vmatpush1.msra.mxu0 0.0
    %7477 = vmatprep.subr.mxu0 0.0
    %7478 = vmatpush1.msra.mxu0 0.0
    %7479 = vmatprep.subr.mxu0 0.0
    %7480 = vmatpush1.msra.mxu0 0.0
    %7481 = vmatprep.subr.mxu0 0.0
    %7482 = vmatpush1.msra.mxu0 0.0
    %7483 = vmatprep.subr.mxu0 0.0
    %7484 = vmatpush1.msra.mxu0 0.0
    %7485 = vmatprep.subr.mxu0 0.0
    %7486 = vmatpush1.msra.mxu0 0.0
    %7487 = vmatprep.subr.mxu0 0.0
    %7488 = vmatpush1.msra.mxu0 0.0
    %7489 = vmatprep.subr.mxu0 0.0
    %7490 = vmatpush1.msra.mxu0 0.0
    %7491 = vmatprep.subr.mxu0 0.0
    %7492 = vmatpush1.msra.mxu0 0.0
    %7493 = vmatprep.subr.mxu0 0.0
    %7494 = vmatpush1.msra.mxu0 0.0
    %7495 = vmatprep.subr.mxu0 0.0
    %7496 = vmatpush1.msra.mxu0 0.0
    %7497 = vmatprep.subr.mxu0 0.0
    %7498 = vmatpush1.msra.mxu0 0.0
    %7499 = vmatprep.subr.mxu0 0.0
    %7500 = vmatpush1.msra.mxu0 0.0
    %7501 = vmatprep.subr.mxu0 0.0
    %7502 = vmatpush1.msra.mxu0 0.0
    %7503 = vmatprep.subr.mxu0 0.0
    %7504 = vmatpush1.msra.mxu0 0.0
    %7505 = vmatprep.subr.mxu0 0.0
    %7506 = vmatpush1.msra.mxu0 0.0
    %7507 = vmatprep.subr.mxu0 0.0
    %7508 = vmatpush1.msra.mxu0 0.0
    %7509 = vmatprep.subr.mxu0 0.0
    %7510 = vmatpush1.msra.mxu0 0.0
    %7511 = vmatprep.subr.mxu0 0.0
    %7512 = vmatpush1.msra.mxu0 0.0
    %7513 = vmatprep.subr.mxu0 0.0
    %7514 = vmatpush1.msra.mxu0 0.0
    %7515 = vmatprep.subr.mxu0 0.0
    %7516 = vmatpush1.msra.mxu0 0.0
    %7517 = vmatprep.subr.mxu0 0.0
    %7518 = vmatpush1.msra.mxu0 0.0
    %7519 = vmatprep.subr.mxu0 0.0
    %7520 = vmatpush1.msra.mxu0 0.0
    %7521 = vmatprep.mubr.f32.mxu0 0.0
    %v7522 = vand.u32 %v7152, 4294901760
    %7523 = vmatmul.mubr.f32.gmra.mrb[0].mxu0 %v7522
    %v7524 = vpop.f32.mrb[0].mxu0
    %v7525 = vadd.f32 %v7451, %v7524
    %v7526 = vpop.f32.mrb[0].mxu0
    %7527 = vdwg.mxu0
    %7528 = vmatprep.subr.mxu0 0.0
    %v7529 = vand.u32 %v7149, 4294901760
    %7530 = vmatpush1.msra.mxu0 %v7529
    %7531 = vmatprep.subr.mxu0 0.0
    %7532 = vmatpush1.msra.mxu0 0.0
    %7533 = vmatprep.subr.mxu0 0.0
    %7534 = vmatpush1.msra.mxu0 0.0
    %7535 = vmatprep.subr.mxu0 0.0
    %7536 = vmatpush1.msra.mxu0 0.0
    %7537 = vmatprep.subr.mxu0 0.0
    %7538 = vmatpush1.msra.mxu0 0.0
    %7539 = vmatprep.subr.mxu0 0.0
    %7540 = vmatpush1.msra.mxu0 0.0
    %7541 = vmatprep.subr.mxu0 0.0
    %7542 = vmatpush1.msra.mxu0 0.0
    %7543 = vmatprep.subr.mxu0 0.0
    %7544 = vmatpush1.msra.mxu0 0.0
    %7545 = vmatprep.subr.mxu0 0.0
    %7546 = vmatpush1.msra.mxu0 0.0
    %7547 = vmatprep.subr.mxu0 0.0
    %7548 = vmatpush1.msra.mxu0 0.0
    %7549 = vmatprep.subr.mxu0 0.0
    %7550 = vmatpush1.msra.mxu0 0.0
    %7551 = vmatprep.subr.mxu0 0.0
    %7552 = vmatpush1.msra.mxu0 0.0
    %7553 = vmatprep.subr.mxu0 0.0
    %7554 = vmatpush1.msra.mxu0 0.0
    %7555 = vmatprep.subr.mxu0 0.0
    %7556 = vmatpush1.msra.mxu0 0.0
    %7557 = vmatprep.subr.mxu0 0.0
    %7558 = vmatpush1.msra.mxu0 0.0
    %7559 = vmatprep.subr.mxu0 0.0
    %7560 = vmatpush1.msra.mxu0 0.0
    %7561 = vmatprep.subr.mxu0 0.0
    %7562 = vmatpush1.msra.mxu0 0.0
    %7563 = vmatprep.subr.mxu0 0.0
    %7564 = vmatpush1.msra.mxu0 0.0
    %7565 = vmatprep.subr.mxu0 0.0
    %7566 = vmatpush1.msra.mxu0 0.0
    %7567 = vmatprep.subr.mxu0 0.0
    %7568 = vmatpush1.msra.mxu0 0.0
    %7569 = vmatprep.subr.mxu0 0.0
    %7570 = vmatpush1.msra.mxu0 0.0
    %7571 = vmatprep.subr.mxu0 0.0
    %7572 = vmatpush1.msra.mxu0 0.0
    %7573 = vmatprep.subr.mxu0 0.0
    %7574 = vmatpush1.msra.mxu0 0.0
    %7575 = vmatprep.subr.mxu0 0.0
    %7576 = vmatpush1.msra.mxu0 0.0
    %7577 = vmatprep.subr.mxu0 0.0
    %7578 = vmatpush1.msra.mxu0 0.0
    %7579 = vmatprep.subr.mxu0 0.0
    %7580 = vmatpush1.msra.mxu0 0.0
    %7581 = vmatprep.subr.mxu0 0.0
    %7582 = vmatpush1.msra.mxu0 0.0
    %7583 = vmatprep.subr.mxu0 0.0
    %7584 = vmatpush1.msra.mxu0 0.0
    %7585 = vmatprep.subr.mxu0 0.0
    %7586 = vmatpush1.msra.mxu0 0.0
    %7587 = vmatprep.subr.mxu0 0.0
    %7588 = vmatpush1.msra.mxu0 0.0
    %7589 = vmatprep.subr.mxu0 0.0
    %7590 = vmatpush1.msra.mxu0 0.0
    %7591 = vmatprep.subr.mxu0 0.0
    %7592 = vmatpush1.msra.mxu0 0.0
    %7593 = vmatprep.mubr.f32.mxu0 0.0
    %v7594 = vand.u32 %v7152, 4294901760
    %7595 = vmatmul.mubr.f32.gmra.mrb[0].mxu0 %v7594
    %v7596 = vpop.f32.mrb[0].mxu0
    %v7597 = vadd.f32 %v7525, %v7596
    %v7598 = vpop.f32.mrb[0].mxu0
    %7599 = vdwg.mxu0
    %7600 = vrot.lane.b32.xlu0 %v714, 40
    %v7601 = vpop.permute.xlu0 %7600
    %v7604 = vsel %vm720, %v7147, 0
    %7606 = vmatprep.subr.mxu0 0.0
    %v7607 = vand.u32 %v7601, 4294901760
    %7608 = vmatpush1.msra.mxu0 %v7607
    %7609 = vmatprep.subr.mxu0 0.0
    %7610 = vmatpush1.msra.mxu0 0.0
    %7611 = vmatprep.subr.mxu0 0.0
    %7612 = vmatpush1.msra.mxu0 0.0
    %7613 = vmatprep.subr.mxu0 0.0
    %7614 = vmatpush1.msra.mxu0 0.0
    %7615 = vmatprep.subr.mxu0 0.0
    %7616 = vmatpush1.msra.mxu0 0.0
    %7617 = vmatprep.subr.mxu0 0.0
    %7618 = vmatpush1.msra.mxu0 0.0
    %7619 = vmatprep.subr.mxu0 0.0
    %7620 = vmatpush1.msra.mxu0 0.0
    %7621 = vmatprep.subr.mxu0 0.0
    %7622 = vmatpush1.msra.mxu0 0.0
    %7623 = vmatprep.subr.mxu0 0.0
    %7624 = vmatpush1.msra.mxu0 0.0
    %7625 = vmatprep.subr.mxu0 0.0
    %7626 = vmatpush1.msra.mxu0 0.0
    %7627 = vmatprep.subr.mxu0 0.0
    %7628 = vmatpush1.msra.mxu0 0.0
    %7629 = vmatprep.subr.mxu0 0.0
    %7630 = vmatpush1.msra.mxu0 0.0
    %7631 = vmatprep.subr.mxu0 0.0
    %7632 = vmatpush1.msra.mxu0 0.0
    %7633 = vmatprep.subr.mxu0 0.0
    %7634 = vmatpush1.msra.mxu0 0.0
    %7635 = vmatprep.subr.mxu0 0.0
    %7636 = vmatpush1.msra.mxu0 0.0
    %7637 = vmatprep.subr.mxu0 0.0
    %7638 = vmatpush1.msra.mxu0 0.0
    %7639 = vmatprep.subr.mxu0 0.0
    %7640 = vmatpush1.msra.mxu0 0.0
    %7641 = vmatprep.subr.mxu0 0.0
    %7642 = vmatpush1.msra.mxu0 0.0
    %7643 = vmatprep.subr.mxu0 0.0
    %7644 = vmatpush1.msra.mxu0 0.0
    %7645 = vmatprep.subr.mxu0 0.0
    %7646 = vmatpush1.msra.mxu0 0.0
    %7647 = vmatprep.subr.mxu0 0.0
    %7648 = vmatpush1.msra.mxu0 0.0
    %7649 = vmatprep.subr.mxu0 0.0
    %7650 = vmatpush1.msra.mxu0 0.0
    %7651 = vmatprep.subr.mxu0 0.0
    %7652 = vmatpush1.msra.mxu0 0.0
    %7653 = vmatprep.subr.mxu0 0.0
    %7654 = vmatpush1.msra.mxu0 0.0
    %7655 = vmatprep.subr.mxu0 0.0
    %7656 = vmatpush1.msra.mxu0 0.0
    %7657 = vmatprep.subr.mxu0 0.0
    %7658 = vmatpush1.msra.mxu0 0.0
    %7659 = vmatprep.subr.mxu0 0.0
    %7660 = vmatpush1.msra.mxu0 0.0
    %7661 = vmatprep.subr.mxu0 0.0
    %7662 = vmatpush1.msra.mxu0 0.0
    %7663 = vmatprep.subr.mxu0 0.0
    %7664 = vmatpush1.msra.mxu0 0.0
    %7665 = vmatprep.subr.mxu0 0.0
    %7666 = vmatpush1.msra.mxu0 0.0
    %7667 = vmatprep.subr.mxu0 0.0
    %7668 = vmatpush1.msra.mxu0 0.0
    %7669 = vmatprep.subr.mxu0 0.0
    %7670 = vmatpush1.msra.mxu0 0.0
    %7671 = vmatprep.mubr.f32.mxu0 0.0
    %v7672 = vand.u32 %v7604, 4294901760
    %v7673 = vsub.f32 %v7604, %v7672
    %v7674 = vand.u32 %v7673, 4294901760
    %v7675 = vsub.f32 %v7673, %v7674
    %v7676 = vand.u32 %v7675, 4294901760
    %7677 = vmatmul.mubr.f32.gmra.mrb[0].mxu0 %v7676
    %v7678 = vpop.f32.mrb[0].mxu0
    %v7679 = vadd.f32 0.0, %v7678
    %v7680 = vpop.f32.mrb[0].mxu0
    %7681 = vdwg.mxu0
    %7682 = vmatprep.subr.mxu0 0.0
    %v7683 = vand.u32 %v7601, 4294901760
    %v7684 = vsub.f32 %v7601, %v7683
    %v7685 = vand.u32 %v7684, 4294901760
    %v7686 = vsub.f32 %v7684, %v7685
    %v7687 = vand.u32 %v7686, 4294901760
    %7688 = vmatpush1.msra.mxu0 %v7687
    %7689 = vmatprep.subr.mxu0 0.0
    %7690 = vmatpush1.msra.mxu0 0.0
    %7691 = vmatprep.subr.mxu0 0.0
    %7692 = vmatpush1.msra.mxu0 0.0
    %7693 = vmatprep.subr.mxu0 0.0
    %7694 = vmatpush1.msra.mxu0 0.0
    %7695 = vmatprep.subr.mxu0 0.0
    %7696 = vmatpush1.msra.mxu0 0.0
    %7697 = vmatprep.subr.mxu0 0.0
    %7698 = vmatpush1.msra.mxu0 0.0
    %7699 = vmatprep.subr.mxu0 0.0
    %7700 = vmatpush1.msra.mxu0 0.0
    %7701 = vmatprep.subr.mxu0 0.0
    %7702 = vmatpush1.msra.mxu0 0.0
    %7703 = vmatprep.subr.mxu0 0.0
    %7704 = vmatpush1.msra.mxu0 0.0
    %7705 = vmatprep.subr.mxu0 0.0
    %7706 = vmatpush1.msra.mxu0 0.0
    %7707 = vmatprep.subr.mxu0 0.0
    %7708 = vmatpush1.msra.mxu0 0.0
    %7709 = vmatprep.subr.mxu0 0.0
    %7710 = vmatpush1.msra.mxu0 0.0
    %7711 = vmatprep.subr.mxu0 0.0
    %7712 = vmatpush1.msra.mxu0 0.0
    %7713 = vmatprep.subr.mxu0 0.0
    %7714 = vmatpush1.msra.mxu0 0.0
    %7715 = vmatprep.subr.mxu0 0.0
    %7716 = vmatpush1.msra.mxu0 0.0
    %7717 = vmatprep.subr.mxu0 0.0
    %7718 = vmatpush1.msra.mxu0 0.0
    %7719 = vmatprep.subr.mxu0 0.0
    %7720 = vmatpush1.msra.mxu0 0.0
    %7721 = vmatprep.subr.mxu0 0.0
    %7722 = vmatpush1.msra.mxu0 0.0
    %7723 = vmatprep.subr.mxu0 0.0
    %7724 = vmatpush1.msra.mxu0 0.0
    %7725 = vmatprep.subr.mxu0 0.0
    %7726 = vmatpush1.msra.mxu0 0.0
    %7727 = vmatprep.subr.mxu0 0.0
    %7728 = vmatpush1.msra.mxu0 0.0
    %7729 = vmatprep.subr.mxu0 0.0
    %7730 = vmatpush1.msra.mxu0 0.0
    %7731 = vmatprep.subr.mxu0 0.0
    %7732 = vmatpush1.msra.mxu0 0.0
    %7733 = vmatprep.subr.mxu0 0.0
    %7734 = vmatpush1.msra.mxu0 0.0
    %7735 = vmatprep.subr.mxu0 0.0
    %7736 = vmatpush1.msra.mxu0 0.0
    %7737 = vmatprep.subr.mxu0 0.0
    %7738 = vmatpush1.msra.mxu0 0.0
    %7739 = vmatprep.subr.mxu0 0.0
    %7740 = vmatpush1.msra.mxu0 0.0
    %7741 = vmatprep.subr.mxu0 0.0
    %7742 = vmatpush1.msra.mxu0 0.0
    %7743 = vmatprep.subr.mxu0 0.0
    %7744 = vmatpush1.msra.mxu0 0.0
    %7745 = vmatprep.subr.mxu0 0.0
    %7746 = vmatpush1.msra.mxu0 0.0
    %7747 = vmatprep.subr.mxu0 0.0
    %7748 = vmatpush1.msra.mxu0 0.0
    %7749 = vmatprep.subr.mxu0 0.0
    %7750 = vmatpush1.msra.mxu0 0.0
    %7751 = vmatprep.mubr.f32.mxu0 0.0
    %v7752 = vand.u32 %v7604, 4294901760
    %7753 = vmatmul.mubr.f32.gmra.mrb[0].mxu0 %v7752
    %v7754 = vpop.f32.mrb[0].mxu0
    %v7755 = vadd.f32 %v7679, %v7754
    %v7756 = vpop.f32.mrb[0].mxu0
    %7757 = vdwg.mxu0
    %7758 = vmatprep.subr.mxu0 0.0
    %v7759 = vand.u32 %v7601, 4294901760
    %v7760 = vsub.f32 %v7601, %v7759
    %7761 = vmatpush1.msra.mxu0 %v7760
    %7762 = vmatprep.subr.mxu0 0.0
    %7763 = vmatpush1.msra.mxu0 0.0
    %7764 = vmatprep.subr.mxu0 0.0
    %7765 = vmatpush1.msra.mxu0 0.0
    %7766 = vmatprep.subr.mxu0 0.0
    %7767 = vmatpush1.msra.mxu0 0.0
    %7768 = vmatprep.subr.mxu0 0.0
    %7769 = vmatpush1.msra.mxu0 0.0
    %7770 = vmatprep.subr.mxu0 0.0
    %7771 = vmatpush1.msra.mxu0 0.0
    %7772 = vmatprep.subr.mxu0 0.0
    %7773 = vmatpush1.msra.mxu0 0.0
    %7774 = vmatprep.subr.mxu0 0.0
    %7775 = vmatpush1.msra.mxu0 0.0
    %7776 = vmatprep.subr.mxu0 0.0
    %7777 = vmatpush1.msra.mxu0 0.0
    %7778 = vmatprep.subr.mxu0 0.0
    %7779 = vmatpush1.msra.mxu0 0.0
    %7780 = vmatprep.subr.mxu0 0.0
    %7781 = vmatpush1.msra.mxu0 0.0
    %7782 = vmatprep.subr.mxu0 0.0
    %7783 = vmatpush1.msra.mxu0 0.0
    %7784 = vmatprep.subr.mxu0 0.0
    %7785 = vmatpush1.msra.mxu0 0.0
    %7786 = vmatprep.subr.mxu0 0.0
    %7787 = vmatpush1.msra.mxu0 0.0
    %7788 = vmatprep.subr.mxu0 0.0
    %7789 = vmatpush1.msra.mxu0 0.0
    %7790 = vmatprep.subr.mxu0 0.0
    %7791 = vmatpush1.msra.mxu0 0.0
    %7792 = vmatprep.subr.mxu0 0.0
    %7793 = vmatpush1.msra.mxu0 0.0
    %7794 = vmatprep.subr.mxu0 0.0
    %7795 = vmatpush1.msra.mxu0 0.0
    %7796 = vmatprep.subr.mxu0 0.0
    %7797 = vmatpush1.msra.mxu0 0.0
    %7798 = vmatprep.subr.mxu0 0.0
    %7799 = vmatpush1.msra.mxu0 0.0
    %7800 = vmatprep.subr.mxu0 0.0
    %7801 = vmatpush1.msra.mxu0 0.0
    %7802 = vmatprep.subr.mxu0 0.0
    %7803 = vmatpush1.msra.mxu0 0.0
    %7804 = vmatprep.subr.mxu0 0.0
    %7805 = vmatpush1.msra.mxu0 0.0
    %7806 = vmatprep.subr.mxu0 0.0
    %7807 = vmatpush1.msra.mxu0 0.0
    %7808 = vmatprep.subr.mxu0 0.0
    %7809 = vmatpush1.msra.mxu0 0.0
    %7810 = vmatprep.subr.mxu0 0.0
    %7811 = vmatpush1.msra.mxu0 0.0
    %7812 = vmatprep.subr.mxu0 0.0
    %7813 = vmatpush1.msra.mxu0 0.0
    %7814 = vmatprep.subr.mxu0 0.0
    %7815 = vmatpush1.msra.mxu0 0.0
    %7816 = vmatprep.subr.mxu0 0.0
    %7817 = vmatpush1.msra.mxu0 0.0
    %7818 = vmatprep.subr.mxu0 0.0
    %7819 = vmatpush1.msra.mxu0 0.0
    %7820 = vmatprep.subr.mxu0 0.0
    %7821 = vmatpush1.msra.mxu0 0.0
    %7822 = vmatprep.subr.mxu0 0.0
    %7823 = vmatpush1.msra.mxu0 0.0
    %7824 = vmatprep.mubr.f32.mxu0 0.0
    %v7825 = vand.u32 %v7604, 4294901760
    %v7826 = vsub.f32 %v7604, %v7825
    %7827 = vmatmul.mubr.f32.gmra.mrb[0].mxu0 %v7826
    %v7828 = vpop.f32.mrb[0].mxu0
    %v7829 = vadd.f32 %v7755, %v7828
    %v7830 = vpop.f32.mrb[0].mxu0
    %7831 = vdwg.mxu0
    %7832 = vmatprep.subr.mxu0 0.0
    %v7833 = vand.u32 %v7601, 4294901760
    %7834 = vmatpush1.msra.mxu0 %v7833
    %7835 = vmatprep.subr.mxu0 0.0
    %7836 = vmatpush1.msra.mxu0 0.0
    %7837 = vmatprep.subr.mxu0 0.0
    %7838 = vmatpush1.msra.mxu0 0.0
    %7839 = vmatprep.subr.mxu0 0.0
    %7840 = vmatpush1.msra.mxu0 0.0
    %7841 = vmatprep.subr.mxu0 0.0
    %7842 = vmatpush1.msra.mxu0 0.0
    %7843 = vmatprep.subr.mxu0 0.0
    %7844 = vmatpush1.msra.mxu0 0.0
    %7845 = vmatprep.subr.mxu0 0.0
    %7846 = vmatpush1.msra.mxu0 0.0
    %7847 = vmatprep.subr.mxu0 0.0
    %7848 = vmatpush1.msra.mxu0 0.0
    %7849 = vmatprep.subr.mxu0 0.0
    %7850 = vmatpush1.msra.mxu0 0.0
    %7851 = vmatprep.subr.mxu0 0.0
    %7852 = vmatpush1.msra.mxu0 0.0
    %7853 = vmatprep.subr.mxu0 0.0
    %7854 = vmatpush1.msra.mxu0 0.0
    %7855 = vmatprep.subr.mxu0 0.0
    %7856 = vmatpush1.msra.mxu0 0.0
    %7857 = vmatprep.subr.mxu0 0.0
    %7858 = vmatpush1.msra.mxu0 0.0
    %7859 = vmatprep.subr.mxu0 0.0
    %7860 = vmatpush1.msra.mxu0 0.0
    %7861 = vmatprep.subr.mxu0 0.0
    %7862 = vmatpush1.msra.mxu0 0.0
    %7863 = vmatprep.subr.mxu0 0.0
    %7864 = vmatpush1.msra.mxu0 0.0
    %7865 = vmatprep.subr.mxu0 0.0
    %7866 = vmatpush1.msra.mxu0 0.0
    %7867 = vmatprep.subr.mxu0 0.0
    %7868 = vmatpush1.msra.mxu0 0.0
    %7869 = vmatprep.subr.mxu0 0.0
    %7870 = vmatpush1.msra.mxu0 0.0
    %7871 = vmatprep.subr.mxu0 0.0
    %7872 = vmatpush1.msra.mxu0 0.0
    %7873 = vmatprep.subr.mxu0 0.0
    %7874 = vmatpush1.msra.mxu0 0.0
    %7875 = vmatprep.subr.mxu0 0.0
    %7876 = vmatpush1.msra.mxu0 0.0
    %7877 = vmatprep.subr.mxu0 0.0
    %7878 = vmatpush1.msra.mxu0 0.0
    %7879 = vmatprep.subr.mxu0 0.0
    %7880 = vmatpush1.msra.mxu0 0.0
    %7881 = vmatprep.subr.mxu0 0.0
    %7882 = vmatpush1.msra.mxu0 0.0
    %7883 = vmatprep.subr.mxu0 0.0
    %7884 = vmatpush1.msra.mxu0 0.0
    %7885 = vmatprep.subr.mxu0 0.0
    %7886 = vmatpush1.msra.mxu0 0.0
    %7887 = vmatprep.subr.mxu0 0.0
    %7888 = vmatpush1.msra.mxu0 0.0
    %7889 = vmatprep.subr.mxu0 0.0
    %7890 = vmatpush1.msra.mxu0 0.0
    %7891 = vmatprep.subr.mxu0 0.0
    %7892 = vmatpush1.msra.mxu0 0.0
    %7893 = vmatprep.subr.mxu0 0.0
    %7894 = vmatpush1.msra.mxu0 0.0
    %7895 = vmatprep.subr.mxu0 0.0
    %7896 = vmatpush1.msra.mxu0 0.0
    %7897 = vmatprep.mubr.f32.mxu0 0.0
    %v7898 = vand.u32 %v7604, 4294901760
    %v7899 = vsub.f32 %v7604, %v7898
    %v7900 = vand.u32 %v7899, 4294901760
    %7901 = vmatmul.mubr.f32.gmra.mrb[0].mxu0 %v7900
    %v7902 = vpop.f32.mrb[0].mxu0
    %v7903 = vadd.f32 %v7829, %v7902
    %v7904 = vpop.f32.mrb[0].mxu0
    %7905 = vdwg.mxu0
    %7906 = vmatprep.subr.mxu0 0.0
    %v7907 = vand.u32 %v7601, 4294901760
    %v7908 = vsub.f32 %v7601, %v7907
    %v7909 = vand.u32 %v7908, 4294901760
    %7910 = vmatpush1.msra.mxu0 %v7909
    %7911 = vmatprep.subr.mxu0 0.0
    %7912 = vmatpush1.msra.mxu0 0.0
    %7913 = vmatprep.subr.mxu0 0.0
    %7914 = vmatpush1.msra.mxu0 0.0
    %7915 = vmatprep.subr.mxu0 0.0
    %7916 = vmatpush1.msra.mxu0 0.0
    %7917 = vmatprep.subr.mxu0 0.0
    %7918 = vmatpush1.msra.mxu0 0.0
    %7919 = vmatprep.subr.mxu0 0.0
    %7920 = vmatpush1.msra.mxu0 0.0
    %7921 = vmatprep.subr.mxu0 0.0
    %7922 = vmatpush1.msra.mxu0 0.0
    %7923 = vmatprep.subr.mxu0 0.0
    %7924 = vmatpush1.msra.mxu0 0.0
    %7925 = vmatprep.subr.mxu0 0.0
    %7926 = vmatpush1.msra.mxu0 0.0
    %7927 = vmatprep.subr.mxu0 0.0
    %7928 = vmatpush1.msra.mxu0 0.0
    %7929 = vmatprep.subr.mxu0 0.0
    %7930 = vmatpush1.msra.mxu0 0.0
    %7931 = vmatprep.subr.mxu0 0.0
    %7932 = vmatpush1.msra.mxu0 0.0
    %7933 = vmatprep.subr.mxu0 0.0
    %7934 = vmatpush1.msra.mxu0 0.0
    %7935 = vmatprep.subr.mxu0 0.0
    %7936 = vmatpush1.msra.mxu0 0.0
    %7937 = vmatprep.subr.mxu0 0.0
    %7938 = vmatpush1.msra.mxu0 0.0
    %7939 = vmatprep.subr.mxu0 0.0
    %7940 = vmatpush1.msra.mxu0 0.0
    %7941 = vmatprep.subr.mxu0 0.0
    %7942 = vmatpush1.msra.mxu0 0.0
    %7943 = vmatprep.subr.mxu0 0.0
    %7944 = vmatpush1.msra.mxu0 0.0
    %7945 = vmatprep.subr.mxu0 0.0
    %7946 = vmatpush1.msra.mxu0 0.0
    %7947 = vmatprep.subr.mxu0 0.0
    %7948 = vmatpush1.msra.mxu0 0.0
    %7949 = vmatprep.subr.mxu0 0.0
    %7950 = vmatpush1.msra.mxu0 0.0
    %7951 = vmatprep.subr.mxu0 0.0
    %7952 = vmatpush1.msra.mxu0 0.0
    %7953 = vmatprep.subr.mxu0 0.0
    %7954 = vmatpush1.msra.mxu0 0.0
    %7955 = vmatprep.subr.mxu0 0.0
    %7956 = vmatpush1.msra.mxu0 0.0
    %7957 = vmatprep.subr.mxu0 0.0
    %7958 = vmatpush1.msra.mxu0 0.0
    %7959 = vmatprep.subr.mxu0 0.0
    %7960 = vmatpush1.msra.mxu0 0.0
    %7961 = vmatprep.subr.mxu0 0.0
    %7962 = vmatpush1.msra.mxu0 0.0
    %7963 = vmatprep.subr.mxu0 0.0
    %7964 = vmatpush1.msra.mxu0 0.0
    %7965 = vmatprep.subr.mxu0 0.0
    %7966 = vmatpush1.msra.mxu0 0.0
    %7967 = vmatprep.subr.mxu0 0.0
    %7968 = vmatpush1.msra.mxu0 0.0
    %7969 = vmatprep.subr.mxu0 0.0
    %7970 = vmatpush1.msra.mxu0 0.0
    %7971 = vmatprep.subr.mxu0 0.0
    %7972 = vmatpush1.msra.mxu0 0.0
    %7973 = vmatprep.mubr.f32.mxu0 0.0
    %v7974 = vand.u32 %v7604, 4294901760
    %7975 = vmatmul.mubr.f32.gmra.mrb[0].mxu0 %v7974
    %v7976 = vpop.f32.mrb[0].mxu0
    %v7977 = vadd.f32 %v7903, %v7976
    %v7978 = vpop.f32.mrb[0].mxu0
    %7979 = vdwg.mxu0
    %7980 = vmatprep.subr.mxu0 0.0
    %v7981 = vand.u32 %v7601, 4294901760
    %7982 = vmatpush1.msra.mxu0 %v7981
    %7983 = vmatprep.subr.mxu0 0.0
    %7984 = vmatpush1.msra.mxu0 0.0
    %7985 = vmatprep.subr.mxu0 0.0
    %7986 = vmatpush1.msra.mxu0 0.0
    %7987 = vmatprep.subr.mxu0 0.0
    %7988 = vmatpush1.msra.mxu0 0.0
    %7989 = vmatprep.subr.mxu0 0.0
    %7990 = vmatpush1.msra.mxu0 0.0
    %7991 = vmatprep.subr.mxu0 0.0
    %7992 = vmatpush1.msra.mxu0 0.0
    %7993 = vmatprep.subr.mxu0 0.0
    %7994 = vmatpush1.msra.mxu0 0.0
    %7995 = vmatprep.subr.mxu0 0.0
    %7996 = vmatpush1.msra.mxu0 0.0
    %7997 = vmatprep.subr.mxu0 0.0
    %7998 = vmatpush1.msra.mxu0 0.0
    %7999 = vmatprep.subr.mxu0 0.0
    %8000 = vmatpush1.msra.mxu0 0.0
    %8001 = vmatprep.subr.mxu0 0.0
    %8002 = vmatpush1.msra.mxu0 0.0
    %8003 = vmatprep.subr.mxu0 0.0
    %8004 = vmatpush1.msra.mxu0 0.0
    %8005 = vmatprep.subr.mxu0 0.0
    %8006 = vmatpush1.msra.mxu0 0.0
    %8007 = vmatprep.subr.mxu0 0.0
    %8008 = vmatpush1.msra.mxu0 0.0
    %8009 = vmatprep.subr.mxu0 0.0
    %8010 = vmatpush1.msra.mxu0 0.0
    %8011 = vmatprep.subr.mxu0 0.0
    %8012 = vmatpush1.msra.mxu0 0.0
    %8013 = vmatprep.subr.mxu0 0.0
    %8014 = vmatpush1.msra.mxu0 0.0
    %8015 = vmatprep.subr.mxu0 0.0
    %8016 = vmatpush1.msra.mxu0 0.0
    %8017 = vmatprep.subr.mxu0 0.0
    %8018 = vmatpush1.msra.mxu0 0.0
    %8019 = vmatprep.subr.mxu0 0.0
    %8020 = vmatpush1.msra.mxu0 0.0
    %8021 = vmatprep.subr.mxu0 0.0
    %8022 = vmatpush1.msra.mxu0 0.0
    %8023 = vmatprep.subr.mxu0 0.0
    %8024 = vmatpush1.msra.mxu0 0.0
    %8025 = vmatprep.subr.mxu0 0.0
    %8026 = vmatpush1.msra.mxu0 0.0
    %8027 = vmatprep.subr.mxu0 0.0
    %8028 = vmatpush1.msra.mxu0 0.0
    %8029 = vmatprep.subr.mxu0 0.0
    %8030 = vmatpush1.msra.mxu0 0.0
    %8031 = vmatprep.subr.mxu0 0.0
    %8032 = vmatpush1.msra.mxu0 0.0
    %8033 = vmatprep.subr.mxu0 0.0
    %8034 = vmatpush1.msra.mxu0 0.0
    %8035 = vmatprep.subr.mxu0 0.0
    %8036 = vmatpush1.msra.mxu0 0.0
    %8037 = vmatprep.subr.mxu0 0.0
    %8038 = vmatpush1.msra.mxu0 0.0
    %8039 = vmatprep.subr.mxu0 0.0
    %8040 = vmatpush1.msra.mxu0 0.0
    %8041 = vmatprep.subr.mxu0 0.0
    %8042 = vmatpush1.msra.mxu0 0.0
    %8043 = vmatprep.subr.mxu0 0.0
    %8044 = vmatpush1.msra.mxu0 0.0
    %8045 = vmatprep.mubr.f32.mxu0 0.0
    %v8046 = vand.u32 %v7604, 4294901760
    %8047 = vmatmul.mubr.f32.gmra.mrb[0].mxu0 %v8046
    %v8048 = vpop.f32.mrb[0].mxu0
    %v8049 = vadd.f32 %v7977, %v8048
    %v8050 = vpop.f32.mrb[0].mxu0
    %8051 = vdwg.mxu0
    %8054 = vrot.lane.b32.xlu0 %v3929, 8
    %v8055 = vpop.permute.xlu0 %8054
    %8056 = vrot.lane.b32.xlu0 %v4381, 8
    %v8057 = vpop.permute.xlu0 %8056
    %8062 = vrot.lane.b32.xlu0 %v5763, 16
    %v8063 = vpop.permute.xlu0 %8062
    %8064 = vrot.lane.b32.xlu0 %v6215, 16
    %v8065 = vpop.permute.xlu0 %8064
    %8070 = vrot.lane.b32.xlu0 %v7597, 24
    %v8071 = vpop.permute.xlu0 %8070
    %8072 = vrot.lane.b32.xlu0 %v8049, 24
    %v8073 = vpop.permute.xlu0 %8072
    %v8076 = vsel %vm720, %v2095, %v8055
    %v8077 = vsel %vm720, %v2547, %v8057
    %vm8078 = vcmask 130048
    %v8079 = vsel %vm8078, %v8076, %v8063
    %v8080 = vsel %vm8078, %v8077, %v8065
    %vm8081 = vcmask 195584
    %v8082 = vsel %vm8081, %v8079, %v8071
    %v8083 = vsel %vm8081, %v8080, %v8073
    %v8084 = vld [vmem:[%s2] sm:$0xff]
    %v8085 = vld [vmem:[%s2 + $0x8] sm:$0xff]
    %v8086 = vld [vmem:[%s2 + $0x10] sm:$0xff]
    %v8087 = vld [vmem:[%s2 + $0x18] sm:$0xff]
    %vm8088 = vcmask 261120
    %v8090 = vsel %vm8088, %v8082, 0
    %v8093 = vsel %vm8088, %v8083, 0
    %8095 = vmatprep.subr.mxu0 0.0
    %v8096 = vand.u32 %v8084, 4294901760
    %8097 = vmatpush1.msra.mxu0 %v8096
    %8098 = vmatprep.subr.mxu0 0.0
    %v8099 = vand.u32 %v8085, 4294901760
    %8100 = vmatpush1.msra.mxu0 %v8099
    %8101 = vmatprep.subr.mxu0 0.0
    %v8102 = vand.u32 %v8086, 4294901760
    %8103 = vmatpush1.msra.mxu0 %v8102
    %8104 = vmatprep.subr.mxu0 0.0
    %v8105 = vand.u32 %v8087, 4294901760
    %8106 = vmatpush1.msra.mxu0 %v8105
    %8107 = vmatprep.subr.mxu0 0.0
    %8108 = vmatpush1.msra.mxu0 0.0
    %8109 = vmatprep.subr.mxu0 0.0
    %8110 = vmatpush1.msra.mxu0 0.0
    %8111 = vmatprep.subr.mxu0 0.0
    %8112 = vmatpush1.msra.mxu0 0.0
    %8113 = vmatprep.subr.mxu0 0.0
    %8114 = vmatpush1.msra.mxu0 0.0
    %8115 = vmatprep.subr.mxu0 0.0
    %8116 = vmatpush1.msra.mxu0 0.0
    %8117 = vmatprep.subr.mxu0 0.0
    %8118 = vmatpush1.msra.mxu0 0.0
    %8119 = vmatprep.subr.mxu0 0.0
    %8120 = vmatpush1.msra.mxu0 0.0
    %8121 = vmatprep.subr.mxu0 0.0
    %8122 = vmatpush1.msra.mxu0 0.0
    %8123 = vmatprep.subr.mxu0 0.0
    %8124 = vmatpush1.msra.mxu0 0.0
    %8125 = vmatprep.subr.mxu0 0.0
    %8126 = vmatpush1.msra.mxu0 0.0
    %8127 = vmatprep.subr.mxu0 0.0
    %8128 = vmatpush1.msra.mxu0 0.0
    %8129 = vmatprep.subr.mxu0 0.0
    %8130 = vmatpush1.msra.mxu0 0.0
    %8131 = vmatprep.subr.mxu0 0.0
    %8132 = vmatpush1.msra.mxu0 0.0
    %8133 = vmatprep.subr.mxu0 0.0
    %8134 = vmatpush1.msra.mxu0 0.0
    %8135 = vmatprep.subr.mxu0 0.0
    %8136 = vmatpush1.msra.mxu0 0.0
    %8137 = vmatprep.subr.mxu0 0.0
    %8138 = vmatpush1.msra.mxu0 0.0
    %8139 = vmatprep.subr.mxu0 0.0
    %8140 = vmatpush1.msra.mxu0 0.0
    %8141 = vmatprep.subr.mxu0 0.0
    %8142 = vmatpush1.msra.mxu0 0.0
    %8143 = vmatprep.subr.mxu0 0.0
    %8144 = vmatpush1.msra.mxu0 0.0
    %8145 = vmatprep.subr.mxu0 0.0
    %8146 = vmatpush1.msra.mxu0 0.0
    %8147 = vmatprep.subr.mxu0 0.0
    %8148 = vmatpush1.msra.mxu0 0.0
    %8149 = vmatprep.subr.mxu0 0.0
    %8150 = vmatpush1.msra.mxu0 0.0
    %8151 = vmatprep.subr.mxu0 0.0
    %8152 = vmatpush1.msra.mxu0 0.0
    %8153 = vmatprep.subr.mxu0 0.0
    %8154 = vmatpush1.msra.mxu0 0.0
    %8155 = vmatprep.subr.mxu0 0.0
    %8156 = vmatpush1.msra.mxu0 0.0
    %8157 = vmatprep.subr.mxu0 0.0
    %8158 = vmatpush1.msra.mxu0 0.0
    %8159 = vmatprep.subr.mxu0 0.0
    %8160 = vmatpush1.msra.mxu0 0.0
    %8161 = vmatprep.subr.mxu0 0.0
    %8162 = vmatpush1.msra.mxu0 0.0
    %8163 = vmatprep.mubr.f32.mxu0 0.0
    %v8164 = vand.u32 %v8090, 4294901760
    %v8165 = vsub.f32 %v8090, %v8164
    %v8166 = vand.u32 %v8165, 4294901760
    %v8167 = vsub.f32 %v8165, %v8166
    %v8168 = vand.u32 %v8167, 4294901760
    %8169 = vmatmul.mubr.f32.gmra.mrb[0].mxu0 %v8168
    %v8170 = vpop.f32.mrb[0].mxu0
    %v8171 = vadd.f32 0.0, %v8170
    %v8172 = vpop.f32.mrb[0].mxu0
    %8173 = vmatprep.mubr.f32.mxu0 0.0
    %v8174 = vand.u32 %v8093, 4294901760
    %v8175 = vsub.f32 %v8093, %v8174
    %v8176 = vand.u32 %v8175, 4294901760
    %v8177 = vsub.f32 %v8175, %v8176
    %v8178 = vand.u32 %v8177, 4294901760
    %8179 = vmatmul.mubr.f32.gmra.mrb[0].mxu0 %v8178
    %v8180 = vpop.f32.mrb[0].mxu0
    %v8181 = vadd.f32 0.0, %v8180
    %v8182 = vpop.f32.mrb[0].mxu0
    %8183 = vdwg.mxu0
    %8184 = vmatprep.subr.mxu0 0.0
    %v8185 = vand.u32 %v8084, 4294901760
    %v8186 = vsub.f32 %v8084, %v8185
    %v8187 = vand.u32 %v8186, 4294901760
    %v8188 = vsub.f32 %v8186, %v8187
    %v8189 = vand.u32 %v8188, 4294901760
    %8190 = vmatpush1.msra.mxu0 %v8189
    %8191 = vmatprep.subr.mxu0 0.0
    %v8192 = vand.u32 %v8085, 4294901760
    %v8193 = vsub.f32 %v8085, %v8192
    %v8194 = vand.u32 %v8193, 4294901760
    %v8195 = vsub.f32 %v8193, %v8194
    %v8196 = vand.u32 %v8195, 4294901760
    %8197 = vmatpush1.msra.mxu0 %v8196
    %8198 = vmatprep.subr.mxu0 0.0
    %v8199 = vand.u32 %v8086, 4294901760
    %v8200 = vsub.f32 %v8086, %v8199
    %v8201 = vand.u32 %v8200, 4294901760
    %v8202 = vsub.f32 %v8200, %v8201
    %v8203 = vand.u32 %v8202, 4294901760
    %8204 = vmatpush1.msra.mxu0 %v8203
    %8205 = vmatprep.subr.mxu0 0.0
    %v8206 = vand.u32 %v8087, 4294901760
    %v8207 = vsub.f32 %v8087, %v8206
    %v8208 = vand.u32 %v8207, 4294901760
    %v8209 = vsub.f32 %v8207, %v8208
    %v8210 = vand.u32 %v8209, 4294901760
    %8211 = vmatpush1.msra.mxu0 %v8210
    %8212 = vmatprep.subr.mxu0 0.0
    %8213 = vmatpush1.msra.mxu0 0.0
    %8214 = vmatprep.subr.mxu0 0.0
    %8215 = vmatpush1.msra.mxu0 0.0
    %8216 = vmatprep.subr.mxu0 0.0
    %8217 = vmatpush1.msra.mxu0 0.0
    %8218 = vmatprep.subr.mxu0 0.0
    %8219 = vmatpush1.msra.mxu0 0.0
    %8220 = vmatprep.subr.mxu0 0.0
    %8221 = vmatpush1.msra.mxu0 0.0
    %8222 = vmatprep.subr.mxu0 0.0
    %8223 = vmatpush1.msra.mxu0 0.0
    %8224 = vmatprep.subr.mxu0 0.0
    %8225 = vmatpush1.msra.mxu0 0.0
    %8226 = vmatprep.subr.mxu0 0.0
    %8227 = vmatpush1.msra.mxu0 0.0
    %8228 = vmatprep.subr.mxu0 0.0
    %8229 = vmatpush1.msra.mxu0 0.0
    %8230 = vmatprep.subr.mxu0 0.0
    %8231 = vmatpush1.msra.mxu0 0.0
    %8232 = vmatprep.subr.mxu0 0.0
    %8233 = vmatpush1.msra.mxu0 0.0
    %8234 = vmatprep.subr.mxu0 0.0
    %8235 = vmatpush1.msra.mxu0 0.0
    %8236 = vmatprep.subr.mxu0 0.0
    %8237 = vmatpush1.msra.mxu0 0.0
    %8238 = vmatprep.subr.mxu0 0.0
    %8239 = vmatpush1.msra.mxu0 0.0
    %8240 = vmatprep.subr.mxu0 0.0
    %8241 = vmatpush1.msra.mxu0 0.0
    %8242 = vmatprep.subr.mxu0 0.0
    %8243 = vmatpush1.msra.mxu0 0.0
    %8244 = vmatprep.subr.mxu0 0.0
    %8245 = vmatpush1.msra.mxu0 0.0
    %8246 = vmatprep.subr.mxu0 0.0
    %8247 = vmatpush1.msra.mxu0 0.0
    %8248 = vmatprep.subr.mxu0 0.0
    %8249 = vmatpush1.msra.mxu0 0.0
    %8250 = vmatprep.subr.mxu0 0.0
    %8251 = vmatpush1.msra.mxu0 0.0
    %8252 = vmatprep.subr.mxu0 0.0
    %8253 = vmatpush1.msra.mxu0 0.0
    %8254 = vmatprep.subr.mxu0 0.0
    %8255 = vmatpush1.msra.mxu0 0.0
    %8256 = vmatprep.subr.mxu0 0.0
    %8257 = vmatpush1.msra.mxu0 0.0
    %8258 = vmatprep.subr.mxu0 0.0
    %8259 = vmatpush1.msra.mxu0 0.0
    %8260 = vmatprep.subr.mxu0 0.0
    %8261 = vmatpush1.msra.mxu0 0.0
    %8262 = vmatprep.subr.mxu0 0.0
    %8263 = vmatpush1.msra.mxu0 0.0
    %8264 = vmatprep.subr.mxu0 0.0
    %8265 = vmatpush1.msra.mxu0 0.0
    %8266 = vmatprep.subr.mxu0 0.0
    %8267 = vmatpush1.msra.mxu0 0.0
    %8268 = vmatprep.mubr.f32.mxu0 0.0
    %v8269 = vand.u32 %v8090, 4294901760
    %8270 = vmatmul.mubr.f32.gmra.mrb[0].mxu0 %v8269
    %v8271 = vpop.f32.mrb[0].mxu0
    %v8272 = vadd.f32 %v8171, %v8271
    %v8273 = vpop.f32.mrb[0].mxu0
    %8274 = vmatprep.mubr.f32.mxu0 0.0
    %v8275 = vand.u32 %v8093, 4294901760
    %8276 = vmatmul.mubr.f32.gmra.mrb[0].mxu0 %v8275
    %v8277 = vpop.f32.mrb[0].mxu0
    %v8278 = vadd.f32 %v8181, %v8277
    %v8279 = vpop.f32.mrb[0].mxu0
    %8280 = vdwg.mxu0
    %8281 = vmatprep.subr.mxu0 0.0
    %v8282 = vand.u32 %v8084, 4294901760
    %v8283 = vsub.f32 %v8084, %v8282
    %8284 = vmatpush1.msra.mxu0 %v8283
    %8285 = vmatprep.subr.mxu0 0.0
    %v8286 = vand.u32 %v8085, 4294901760
    %v8287 = vsub.f32 %v8085, %v8286
    %8288 = vmatpush1.msra.mxu0 %v8287
    %8289 = vmatprep.subr.mxu0 0.0
    %v8290 = vand.u32 %v8086, 4294901760
    %v8291 = vsub.f32 %v8086, %v8290
    %8292 = vmatpush1.msra.mxu0 %v8291
    %8293 = vmatprep.subr.mxu0 0.0
    %v8294 = vand.u32 %v8087, 4294901760
    %v8295 = vsub.f32 %v8087, %v8294
    %8296 = vmatpush1.msra.mxu0 %v8295
    %8297 = vmatprep.subr.mxu0 0.0
    %8298 = vmatpush1.msra.mxu0 0.0
    %8299 = vmatprep.subr.mxu0 0.0
    %8300 = vmatpush1.msra.mxu0 0.0
    %8301 = vmatprep.subr.mxu0 0.0
    %8302 = vmatpush1.msra.mxu0 0.0
    %8303 = vmatprep.subr.mxu0 0.0
    %8304 = vmatpush1.msra.mxu0 0.0
    %8305 = vmatprep.subr.mxu0 0.0
    %8306 = vmatpush1.msra.mxu0 0.0
    %8307 = vmatprep.subr.mxu0 0.0
    %8308 = vmatpush1.msra.mxu0 0.0
    %8309 = vmatprep.subr.mxu0 0.0
    %8310 = vmatpush1.msra.mxu0 0.0
    %8311 = vmatprep.subr.mxu0 0.0
    %8312 = vmatpush1.msra.mxu0 0.0
    %8313 = vmatprep.subr.mxu0 0.0
    %8314 = vmatpush1.msra.mxu0 0.0
    %8315 = vmatprep.subr.mxu0 0.0
    %8316 = vmatpush1.msra.mxu0 0.0
    %8317 = vmatprep.subr.mxu0 0.0
    %8318 = vmatpush1.msra.mxu0 0.0
    %8319 = vmatprep.subr.mxu0 0.0
    %8320 = vmatpush1.msra.mxu0 0.0
    %8321 = vmatprep.subr.mxu0 0.0
    %8322 = vmatpush1.msra.mxu0 0.0
    %8323 = vmatprep.subr.mxu0 0.0
    %8324 = vmatpush1.msra.mxu0 0.0
    %8325 = vmatprep.subr.mxu0 0.0
    %8326 = vmatpush1.msra.mxu0 0.0
    %8327 = vmatprep.subr.mxu0 0.0
    %8328 = vmatpush1.msra.mxu0 0.0
    %8329 = vmatprep.subr.mxu0 0.0
    %8330 = vmatpush1.msra.mxu0 0.0
    %8331 = vmatprep.subr.mxu0 0.0
    %8332 = vmatpush1.msra.mxu0 0.0
    %8333 = vmatprep.subr.mxu0 0.0
    %8334 = vmatpush1.msra.mxu0 0.0
    %8335 = vmatprep.subr.mxu0 0.0
    %8336 = vmatpush1.msra.mxu0 0.0
    %8337 = vmatprep.subr.mxu0 0.0
    %8338 = vmatpush1.msra.mxu0 0.0
    %8339 = vmatprep.subr.mxu0 0.0
    %8340 = vmatpush1.msra.mxu0 0.0
    %8341 = vmatprep.subr.mxu0 0.0
    %8342 = vmatpush1.msra.mxu0 0.0
    %8343 = vmatprep.subr.mxu0 0.0
    %8344 = vmatpush1.msra.mxu0 0.0
    %8345 = vmatprep.subr.mxu0 0.0
    %8346 = vmatpush1.msra.mxu0 0.0
    %8347 = vmatprep.subr.mxu0 0.0
    %8348 = vmatpush1.msra.mxu0 0.0
    %8349 = vmatprep.subr.mxu0 0.0
    %8350 = vmatpush1.msra.mxu0 0.0
    %8351 = vmatprep.subr.mxu0 0.0
    %8352 = vmatpush1.msra.mxu0 0.0
    %8353 = vmatprep.mubr.f32.mxu0 0.0
    %v8354 = vand.u32 %v8090, 4294901760
    %v8355 = vsub.f32 %v8090, %v8354
    %8356 = vmatmul.mubr.f32.gmra.mrb[0].mxu0 %v8355
    %v8357 = vpop.f32.mrb[0].mxu0
    %v8358 = vadd.f32 %v8272, %v8357
    %v8359 = vpop.f32.mrb[0].mxu0
    %8360 = vmatprep.mubr.f32.mxu0 0.0
    %v8361 = vand.u32 %v8093, 4294901760
    %v8362 = vsub.f32 %v8093, %v8361
    %8363 = vmatmul.mubr.f32.gmra.mrb[0].mxu0 %v8362
    %v8364 = vpop.f32.mrb[0].mxu0
    %v8365 = vadd.f32 %v8278, %v8364
    %v8366 = vpop.f32.mrb[0].mxu0
    %8367 = vdwg.mxu0
    %8368 = vmatprep.subr.mxu0 0.0
    %v8369 = vand.u32 %v8084, 4294901760
    %8370 = vmatpush1.msra.mxu0 %v8369
    %8371 = vmatprep.subr.mxu0 0.0
    %v8372 = vand.u32 %v8085, 4294901760
    %8373 = vmatpush1.msra.mxu0 %v8372
    %8374 = vmatprep.subr.mxu0 0.0
    %v8375 = vand.u32 %v8086, 4294901760
    %8376 = vmatpush1.msra.mxu0 %v8375
    %8377 = vmatprep.subr.mxu0 0.0
    %v8378 = vand.u32 %v8087, 4294901760
    %8379 = vmatpush1.msra.mxu0 %v8378
    %8380 = vmatprep.subr.mxu0 0.0
    %8381 = vmatpush1.msra.mxu0 0.0
    %8382 = vmatprep.subr.mxu0 0.0
    %8383 = vmatpush1.msra.mxu0 0.0
    %8384 = vmatprep.subr.mxu0 0.0
    %8385 = vmatpush1.msra.mxu0 0.0
    %8386 = vmatprep.subr.mxu0 0.0
    %8387 = vmatpush1.msra.mxu0 0.0
    %8388 = vmatprep.subr.mxu0 0.0
    %8389 = vmatpush1.msra.mxu0 0.0
    %8390 = vmatprep.subr.mxu0 0.0
    %8391 = vmatpush1.msra.mxu0 0.0
    %8392 = vmatprep.subr.mxu0 0.0
    %8393 = vmatpush1.msra.mxu0 0.0
    %8394 = vmatprep.subr.mxu0 0.0
    %8395 = vmatpush1.msra.mxu0 0.0
    %8396 = vmatprep.subr.mxu0 0.0
    %8397 = vmatpush1.msra.mxu0 0.0
    %8398 = vmatprep.subr.mxu0 0.0
    %8399 = vmatpush1.msra.mxu0 0.0
    %8400 = vmatprep.subr.mxu0 0.0
    %8401 = vmatpush1.msra.mxu0 0.0
    %8402 = vmatprep.subr.mxu0 0.0
    %8403 = vmatpush1.msra.mxu0 0.0
    %8404 = vmatprep.subr.mxu0 0.0
    %8405 = vmatpush1.msra.mxu0 0.0
    %8406 = vmatprep.subr.mxu0 0.0
    %8407 = vmatpush1.msra.mxu0 0.0
    %8408 = vmatprep.subr.mxu0 0.0
    %8409 = vmatpush1.msra.mxu0 0.0
    %8410 = vmatprep.subr.mxu0 0.0
    %8411 = vmatpush1.msra.mxu0 0.0
    %8412 = vmatprep.subr.mxu0 0.0
    %8413 = vmatpush1.msra.mxu0 0.0
    %8414 = vmatprep.subr.mxu0 0.0
    %8415 = vmatpush1.msra.mxu0 0.0
    %8416 = vmatprep.subr.mxu0 0.0
    %8417 = vmatpush1.msra.mxu0 0.0
    %8418 = vmatprep.subr.mxu0 0.0
    %8419 = vmatpush1.msra.mxu0 0.0
    %8420 = vmatprep.subr.mxu0 0.0
    %8421 = vmatpush1.msra.mxu0 0.0
    %8422 = vmatprep.subr.mxu0 0.0
    %8423 = vmatpush1.msra.mxu0 0.0
    %8424 = vmatprep.subr.mxu0 0.0
    %8425 = vmatpush1.msra.mxu0 0.0
    %8426 = vmatprep.subr.mxu0 0.0
    %8427 = vmatpush1.msra.mxu0 0.0
    %8428 = vmatprep.subr.mxu0 0.0
    %8429 = vmatpush1.msra.mxu0 0.0
    %8430 = vmatprep.subr.mxu0 0.0
    %8431 = vmatpush1.msra.mxu0 0.0
    %8432 = vmatprep.subr.mxu0 0.0
    %8433 = vmatpush1.msra.mxu0 0.0
    %8434 = vmatprep.subr.mxu0 0.0
    %8435 = vmatpush1.msra.mxu0 0.0
    %8436 = vmatprep.mubr.f32.mxu0 0.0
    %v8437 = vand.u32 %v8090, 4294901760
    %v8438 = vsub.f32 %v8090, %v8437
    %v8439 = vand.u32 %v8438, 4294901760
    %8440 = vmatmul.mubr.f32.gmra.mrb[0].mxu0 %v8439
    %v8441 = vpop.f32.mrb[0].mxu0
    %v8442 = vadd.f32 %v8358, %v8441
    %v8443 = vpop.f32.mrb[0].mxu0
    %8444 = vmatprep.mubr.f32.mxu0 0.0
    %v8445 = vand.u32 %v8093, 4294901760
    %v8446 = vsub.f32 %v8093, %v8445
    %v8447 = vand.u32 %v8446, 4294901760
    %8448 = vmatmul.mubr.f32.gmra.mrb[0].mxu0 %v8447
    %v8449 = vpop.f32.mrb[0].mxu0
    %v8450 = vadd.f32 %v8365, %v8449
    %v8451 = vpop.f32.mrb[0].mxu0
    %8452 = vdwg.mxu0
    %8453 = vmatprep.subr.mxu0 0.0
    %v8454 = vand.u32 %v8084, 4294901760
    %v8455 = vsub.f32 %v8084, %v8454
    %v8456 = vand.u32 %v8455, 4294901760
    %8457 = vmatpush1.msra.mxu0 %v8456
    %8458 = vmatprep.subr.mxu0 0.0
    %v8459 = vand.u32 %v8085, 4294901760
    %v8460 = vsub.f32 %v8085, %v8459
    %v8461 = vand.u32 %v8460, 4294901760
    %8462 = vmatpush1.msra.mxu0 %v8461
    %8463 = vmatprep.subr.mxu0 0.0
    %v8464 = vand.u32 %v8086, 4294901760
    %v8465 = vsub.f32 %v8086, %v8464
    %v8466 = vand.u32 %v8465, 4294901760
    %8467 = vmatpush1.msra.mxu0 %v8466
    %8468 = vmatprep.subr.mxu0 0.0
    %v8469 = vand.u32 %v8087, 4294901760
    %v8470 = vsub.f32 %v8087, %v8469
    %v8471 = vand.u32 %v8470, 4294901760
    %8472 = vmatpush1.msra.mxu0 %v8471
    %8473 = vmatprep.subr.mxu0 0.0
    %8474 = vmatpush1.msra.mxu0 0.0
    %8475 = vmatprep.subr.mxu0 0.0
    %8476 = vmatpush1.msra.mxu0 0.0
    %8477 = vmatprep.subr.mxu0 0.0
    %8478 = vmatpush1.msra.mxu0 0.0
    %8479 = vmatprep.subr.mxu0 0.0
    %8480 = vmatpush1.msra.mxu0 0.0
    %8481 = vmatprep.subr.mxu0 0.0
    %8482 = vmatpush1.msra.mxu0 0.0
    %8483 = vmatprep.subr.mxu0 0.0
    %8484 = vmatpush1.msra.mxu0 0.0
    %8485 = vmatprep.subr.mxu0 0.0
    %8486 = vmatpush1.msra.mxu0 0.0
    %8487 = vmatprep.subr.mxu0 0.0
    %8488 = vmatpush1.msra.mxu0 0.0
    %8489 = vmatprep.subr.mxu0 0.0
    %8490 = vmatpush1.msra.mxu0 0.0
    %8491 = vmatprep.subr.mxu0 0.0
    %8492 = vmatpush1.msra.mxu0 0.0
    %8493 = vmatprep.subr.mxu0 0.0
    %8494 = vmatpush1.msra.mxu0 0.0
    %8495 = vmatprep.subr.mxu0 0.0
    %8496 = vmatpush1.msra.mxu0 0.0
    %8497 = vmatprep.subr.mxu0 0.0
    %8498 = vmatpush1.msra.mxu0 0.0
    %8499 = vmatprep.subr.mxu0 0.0
    %8500 = vmatpush1.msra.mxu0 0.0
    %8501 = vmatprep.subr.mxu0 0.0
    %8502 = vmatpush1.msra.mxu0 0.0
    %8503 = vmatprep.subr.mxu0 0.0
    %8504 = vmatpush1.msra.mxu0 0.0
    %8505 = vmatprep.subr.mxu0 0.0
    %8506 = vmatpush1.msra.mxu0 0.0
    %8507 = vmatprep.subr.mxu0 0.0
    %8508 = vmatpush1.msra.mxu0 0.0
    %8509 = vmatprep.subr.mxu0 0.0
    %8510 = vmatpush1.msra.mxu0 0.0
    %8511 = vmatprep.subr.mxu0 0.0
    %8512 = vmatpush1.msra.mxu0 0.0
    %8513 = vmatprep.subr.mxu0 0.0
    %8514 = vmatpush1.msra.mxu0 0.0
    %8515 = vmatprep.subr.mxu0 0.0
    %8516 = vmatpush1.msra.mxu0 0.0
    %8517 = vmatprep.subr.mxu0 0.0
    %8518 = vmatpush1.msra.mxu0 0.0
    %8519 = vmatprep.subr.mxu0 0.0
    %8520 = vmatpush1.msra.mxu0 0.0
    %8521 = vmatprep.subr.mxu0 0.0
    %8522 = vmatpush1.msra.mxu0 0.0
    %8523 = vmatprep.subr.mxu0 0.0
    %8524 = vmatpush1.msra.mxu0 0.0
    %8525 = vmatprep.subr.mxu0 0.0
    %8526 = vmatpush1.msra.mxu0 0.0
    %8527 = vmatprep.subr.mxu0 0.0
    %8528 = vmatpush1.msra.mxu0 0.0
    %8529 = vmatprep.mubr.f32.mxu0 0.0
    %v8530 = vand.u32 %v8090, 4294901760
    %8531 = vmatmul.mubr.f32.gmra.mrb[0].mxu0 %v8530
    %v8532 = vpop.f32.mrb[0].mxu0
    %v8533 = vadd.f32 %v8442, %v8532
    %v8534 = vpop.f32.mrb[0].mxu0
    %8535 = vmatprep.mubr.f32.mxu0 0.0
    %v8536 = vand.u32 %v8093, 4294901760
    %8537 = vmatmul.mubr.f32.gmra.mrb[0].mxu0 %v8536
    %v8538 = vpop.f32.mrb[0].mxu0
    %v8539 = vadd.f32 %v8450, %v8538
    %v8540 = vpop.f32.mrb[0].mxu0
    %8541 = vdwg.mxu0
    %8542 = vmatprep.subr.mxu0 0.0
    %v8543 = vand.u32 %v8084, 4294901760
    %8544 = vmatpush1.msra.mxu0 %v8543
    %8545 = vmatprep.subr.mxu0 0.0
    %v8546 = vand.u32 %v8085, 4294901760
    %8547 = vmatpush1.msra.mxu0 %v8546
    %8548 = vmatprep.subr.mxu0 0.0
    %v8549 = vand.u32 %v8086, 4294901760
    %8550 = vmatpush1.msra.mxu0 %v8549
    %8551 = vmatprep.subr.mxu0 0.0
    %v8552 = vand.u32 %v8087, 4294901760
    %8553 = vmatpush1.msra.mxu0 %v8552
    %8554 = vmatprep.subr.mxu0 0.0
    %8555 = vmatpush1.msra.mxu0 0.0
    %8556 = vmatprep.subr.mxu0 0.0
    %8557 = vmatpush1.msra.mxu0 0.0
    %8558 = vmatprep.subr.mxu0 0.0
    %8559 = vmatpush1.msra.mxu0 0.0
    %8560 = vmatprep.subr.mxu0 0.0
    %8561 = vmatpush1.msra.mxu0 0.0
    %8562 = vmatprep.subr.mxu0 0.0
    %8563 = vmatpush1.msra.mxu0 0.0
    %8564 = vmatprep.subr.mxu0 0.0
    %8565 = vmatpush1.msra.mxu0 0.0
    %8566 = vmatprep.subr.mxu0 0.0
    %8567 = vmatpush1.msra.mxu0 0.0
    %8568 = vmatprep.subr.mxu0 0.0
    %8569 = vmatpush1.msra.mxu0 0.0
    %8570 = vmatprep.subr.mxu0 0.0
    %8571 = vmatpush1.msra.mxu0 0.0
    %8572 = vmatprep.subr.mxu0 0.0
    %8573 = vmatpush1.msra.mxu0 0.0
    %8574 = vmatprep.subr.mxu0 0.0
    %8575 = vmatpush1.msra.mxu0 0.0
    %8576 = vmatprep.subr.mxu0 0.0
    %8577 = vmatpush1.msra.mxu0 0.0
    %8578 = vmatprep.subr.mxu0 0.0
    %8579 = vmatpush1.msra.mxu0 0.0
    %8580 = vmatprep.subr.mxu0 0.0
    %8581 = vmatpush1.msra.mxu0 0.0
    %8582 = vmatprep.subr.mxu0 0.0
    %8583 = vmatpush1.msra.mxu0 0.0
    %8584 = vmatprep.subr.mxu0 0.0
    %8585 = vmatpush1.msra.mxu0 0.0
    %8586 = vmatprep.subr.mxu0 0.0
    %8587 = vmatpush1.msra.mxu0 0.0
    %8588 = vmatprep.subr.mxu0 0.0
    %8589 = vmatpush1.msra.mxu0 0.0
    %8590 = vmatprep.subr.mxu0 0.0
    %8591 = vmatpush1.msra.mxu0 0.0
    %8592 = vmatprep.subr.mxu0 0.0
    %8593 = vmatpush1.msra.mxu0 0.0
    %8594 = vmatprep.subr.mxu0 0.0
    %8595 = vmatpush1.msra.mxu0 0.0
    %8596 = vmatprep.subr.mxu0 0.0
    %8597 = vmatpush1.msra.mxu0 0.0
    %8598 = vmatprep.subr.mxu0 0.0
    %8599 = vmatpush1.msra.mxu0 0.0
    %8600 = vmatprep.subr.mxu0 0.0
    %8601 = vmatpush1.msra.mxu0 0.0
    %8602 = vmatprep.subr.mxu0 0.0
    %8603 = vmatpush1.msra.mxu0 0.0
    %8604 = vmatprep.subr.mxu0 0.0
    %8605 = vmatpush1.msra.mxu0 0.0
    %8606 = vmatprep.subr.mxu0 0.0
    %8607 = vmatpush1.msra.mxu0 0.0
    %8608 = vmatprep.subr.mxu0 0.0
    %8609 = vmatpush1.msra.mxu0 0.0
    %8610 = vmatprep.mubr.f32.mxu0 0.0
    %v8611 = vand.u32 %v8090, 4294901760
    %8612 = vmatmul.mubr.f32.gmra.mrb[0].mxu0 %v8611
    %v8613 = vpop.f32.mrb[0].mxu0
    %v8614 = vadd.f32 %v8533, %v8613
    %v8615 = vpop.f32.mrb[0].mxu0
    %8616 = vmatprep.mubr.f32.mxu0 0.0
    %v8617 = vand.u32 %v8093, 4294901760
    %8618 = vmatmul.mubr.f32.gmra.mrb[0].mxu0 %v8617
    %v8619 = vpop.f32.mrb[0].mxu0
    %v8620 = vadd.f32 %v8539, %v8619
    %v8621 = vpop.f32.mrb[0].mxu0
    %8622 = vdwg.mxu0
    %8623 = vst [vmem:[#allocation2] sm:$0xff] %v8614
    %8624 = vst [vmem:[#allocation2 + $0x8] sm:$0xff] %v8620
    // Predicated region
    $region14: #{tpu_custom_call.1} parent=1 // pred_check
      _
    $region15: #{tpu_custom_call.1} parent=1 // pred_check_branch
      %8626 = sbr.rel (0) target = $region17
    $region16: #{tpu_custom_call.1} parent=1 // pred_region
      %s8628 = ssub.s32 256, 256
      %8629 = vsyncadd [#allocation3], %s8628
      %s8630 = sshll.u32 [#allocation2], 4
      %s8631 = int_to_ptr.vmem [resolvable:$true] %s8630
      %8636 = dma.vmem_to_hbm [thread:$0]  %s8631, 256, %s3, [#allocation3], 128, 128, 8
    $region17: #{tpu_custom_call.1} parent=1 // pred_fallthru
      _
    // Predicated region
    $region18: #{tpu_custom_call.1} parent=1 // pred_check
      _
    $region19: #{tpu_custom_call.1} parent=1 // pred_check_branch
      %8638 = sbr.rel (0) target = $region21
    $region20: #{tpu_custom_call.1} parent=1 // pred_region
      %8639 = dma.done [#allocation3], 256
    $region21: #{tpu_custom_call.1} parent=1 // pred_fallthru
      _
    %8640 = vsyncpa [#allocation3], 1

</llo_original>
